<compile_context>
chip_gen: v6e
topology: v6e:2x2x1
jax: 0.10.0
libtpu: 0.0.40
codegen_flags: <defaults>
</compile_context>

<pallas_src>
from functools import partial

import numpy as np
import jax
import jax.numpy as jnp
from jax.experimental import pallas as pl
from jax.experimental.pallas import tpu as pltpu

_A = np.float32(1.0) / np.float32(np.sqrt(2.0))
_HAAR = float(np.float32(_A * _A))  # db1 2-D filter magnitude (all entries are +-_HAAR)


# --------------------------------------------------------------------------------------
# Kernel 1: cv1 (1x1 conv + folded BN + SiLU) -> cv2 (3x3 'same' conv + folded BN + SiLU)
# --------------------------------------------------------------------------------------
def _front_kernel(x_ref, w1_ref, b1_ref, w2_ref, b2_ref, o_ref, xpad, *, H, W):
    c1 = x_ref.shape[-1]
    c2 = o_ref.shape[-1]
    # cv1: 1x1 conv (BN scale folded into w1) + SiLU
    xr = x_ref[0].reshape(H * W, c1).astype(jnp.bfloat16)
    y1 = jnp.dot(xr, w1_ref[...], preferred_element_type=jnp.float32) + b1_ref[...]
    y1 = y1 * jax.nn.sigmoid(y1)
    # zero-padded copy in VMEM (no host-side pad, no HBM im2col tensor)
    xpad[...] = jnp.zeros((H + 2, W + 2, c2), jnp.float32)
    xpad[1:H + 1, 1:W + 1, :] = y1.reshape(H, W, c2)
    # cv2: 3x3 'same' conv as 9 accumulated MXU dots (f32 accumulator) + SiLU
    acc = jnp.zeros((H * W, c2), jnp.float32) + b2_ref[...]
    for t in range(9):
        dh, dw = t // 3, t % 3
        tap = xpad[dh:dh + H, dw:dw + W, :].reshape(H * W, c2).astype(jnp.bfloat16)
        acc = acc + jnp.dot(tap, w2_ref[t], preferred_element_type=jnp.float32)
    y2 = acc * jax.nn.sigmoid(acc)
    o_ref[0] = y2.reshape(H, W, c2)


def fused_cv1_cv2(x, w1, b1, w2, b2):
    N, H, W, c1 = x.shape
    c2 = w1.shape[1]
    return pl.pallas_call(
        partial(_front_kernel, H=H, W=W),
        grid=(N,),
        in_specs=[
            pl.BlockSpec((1, H, W, c1), lambda n: (n, 0, 0, 0)),
            pl.BlockSpec((c1, c2), lambda n: (0, 0)),
            pl.BlockSpec((1, c2), lambda n: (0, 0)),
            pl.BlockSpec((9, c2, c2), lambda n: (0, 0, 0)),
            pl.BlockSpec((1, c2), lambda n: (0, 0)),
        ],
        out_specs=pl.BlockSpec((1, H, W, c2), lambda n: (n, 0, 0, 0)),
        out_shape=jax.ShapeDtypeStruct((N, H, W, c2), jnp.float32),
        scratch_shapes=[pltpu.VMEM((H + 2, W + 2, c2), jnp.float32)],
        compiler_params=pltpu.CompilerParams(dimension_semantics=("parallel",)),
    )(x, w1, b1, w2, b2)


# --------------------------------------------------------------------------------------
# Kernel 2: wavelet branch of WTConv2d (single level, db1):
#   Haar WT -> depthwise 3x3 on 4*c2 subband channels -> grouped 1x1 (+0.1 scale) -> IWT
# The input/output live in the parity-split layout (N, H/2, 2, W/2, 2*c2), which is a
# free row-major reshape of NHWC, so no strided-slice / interleave HBM copies are needed.
# --------------------------------------------------------------------------------------
def _wavelet_kernel(x_ref, me_ref, mo_ref, wdw_ref, bdw_ref,
                    we_ref, be_ref, wo_ref, bo_ref, o_ref, xpad, *, h2, w2, C):
    c4 = 4 * C
    # forward Haar: even/odd input rows @ butterfly matrices -> [LL|LH|HL|HH] channels
    e = x_ref[0, :, 0, :, :].reshape(h2 * w2, 2 * C).astype(jnp.bfloat16)
    o = x_ref[0, :, 1, :, :].reshape(h2 * w2, 2 * C).astype(jnp.bfloat16)
    xw = (jnp.dot(e, me_ref[...], preferred_element_type=jnp.float32)
          + jnp.dot(o, mo_ref[...], preferred_element_type=jnp.float32))
    # depthwise 3x3 'same' on the 4*c2 subband channels (+ bias)
    xpad[...] = jnp.zeros((h2 + 2, w2 + 2, c4), jnp.float32)
    xpad[1:h2 + 1, 1:w2 + 1, :] = xw.reshape(h2, w2, c4)
    acc = jnp.zeros((h2, w2, c4), jnp.float32) + bdw_ref[0]
    for t in range(9):
        dh, dw = t // 3, t % 3
        acc = acc + xpad[dh:dh + h2, dw:dw + w2, :] * wdw_ref[t]
    # grouped 1x1 (groups=8) + wavelet_scale + inverse Haar, folded into two matmuls
    # that directly produce the even-row / odd-row halves of the reconstruction.
    rows = acc.reshape(h2 * w2, c4).astype(jnp.bfloat16)
    ye = jnp.dot(rows, we_ref[...], preferred_element_type=jnp.float32) + be_ref[...]
    yo = jnp.dot(rows, wo_ref[...], preferred_element_type=jnp.float32) + bo_ref[...]
    o_ref[0, :, 0, :, :] = ye.reshape(h2, w2, 2 * C)
    o_ref[0, :, 1, :, :] = yo.reshape(h2, w2, 2 * C)


def wavelet_path(x2, p):
    N, H, W, c2 = x2.shape
    h2, w2, c4 = H // 2, W // 2, 4 * c2
    x2p = x2.reshape(N, h2, 2, w2, 2 * c2)  # free row-major reshape (pixel "unshuffle")
    out = pl.pallas_call(
        partial(_wavelet_kernel, h2=h2, w2=w2, C=c2),
        grid=(N,),
        in_specs=[
            pl.BlockSpec((1, h2, 2, w2, 2 * c2), lambda n: (n, 0, 0, 0, 0)),
            pl.BlockSpec((2 * c2, c4), lambda n: (0, 0)),
            pl.BlockSpec((2 * c2, c4), lambda n: (0, 0)),
            pl.BlockSpec((9, c4), lambda n: (0, 0)),
            pl.BlockSpec((1, c4), lambda n: (0, 0)),
            pl.BlockSpec((c4, 2 * c2), lambda n: (0, 0)),
            pl.BlockSpec((1, 2 * c2), lambda n: (0, 0)),
            pl.BlockSpec((c4, 2 * c2), lambda n: (0, 0)),
            pl.BlockSpec((1, 2 * c2), lambda n: (0, 0)),
        ],
        out_specs=pl.BlockSpec((1, h2, 2, w2, 2 * c2), lambda n: (n, 0, 0, 0, 0)),
        out_shape=jax.ShapeDtypeStruct((N, h2, 2, w2, 2 * c2), jnp.float32),
        scratch_shapes=[pltpu.VMEM((h2 + 2, w2 + 2, c4), jnp.float32)],
        compiler_params=pltpu.CompilerParams(dimension_semantics=("parallel",)),
    )(x2p, p["haar_e"], p["haar_o"], p["wdw_wav"], p["bdw_wav"],
      p["wpw_even"], p["bpw_even"], p["wpw_odd"], p["bpw_odd"])
    return out.reshape(N, H, W, c2)  # free reshape back; the interleave is implicit


# --------------------------------------------------------------------------------------
# Kernel 3: base depthwise 3x3 (+bias) + wavelet result, pointwise c2->c3, fused shortcut
#           (1x1 conv with folded BN) and final residual ReLU.
# --------------------------------------------------------------------------------------
def _tail_kernel(x2_ref, xtag_ref, x_ref, wdw_ref, bdw_ref,
                 wpw_ref, wsc_ref, bsc_ref, o_ref, xpad, *, H, W):
    c2 = x2_ref.shape[-1]
    c1 = x_ref.shape[-1]
    c3 = o_ref.shape[-1]
    # base depthwise 3x3 + bias (base_scale == 1.0 is identity)
    xpad[...] = jnp.zeros((H + 2, W + 2, c2), jnp.float32)
    xpad[1:H + 1, 1:W + 1, :] = x2_ref[0]
    acc = jnp.zeros((H, W, c2), jnp.float32) + bdw_ref[0]
    for t in range(9):
        dh, dw = t // 3, t % 3
        acc = acc + xpad[dh:dh + H, dw:dw + W, :] * wdw_ref[t]
    # (base + wavelet) -> pointwise c2->c3, + shortcut (1x1 + folded BN), ReLU
    z = (acc + xtag_ref[0]).reshape(H * W, c2).astype(jnp.bfloat16)
    xr = x_ref[0].reshape(H * W, c1).astype(jnp.bfloat16)
    y = (jnp.dot(z, wpw_ref[...], preferred_element_type=jnp.float32)
         + jnp.dot(xr, wsc_ref[...], preferred_element_type=jnp.float32)
         + bsc_ref[...])
    o_ref[0] = jnp.maximum(y, 0.0).reshape(H, W, c3)


def tail_block(x2, x_tag, x, p):
    N, H, W, c2 = x2.shape
    c1 = x.shape[-1]
    c3 = p["w_pw"].shape[1]
    return pl.pallas_call(
        partial(_tail_kernel, H=H, W=W),
        grid=(N,),
        in_specs=[
            pl.BlockSpec((1, H, W, c2), lambda n: (n, 0, 0, 0)),
            pl.BlockSpec((1, H, W, c2), lambda n: (n, 0, 0, 0)),
            pl.BlockSpec((1, H, W, c1), lambda n: (n, 0, 0, 0)),
            pl.BlockSpec((9, c2), lambda n: (0, 0)),
            pl.BlockSpec((1, c2), lambda n: (0, 0)),
            pl.BlockSpec((c2, c3), lambda n: (0, 0)),
            pl.BlockSpec((c1, c3), lambda n: (0, 0)),
            pl.BlockSpec((1, c3), lambda n: (0, 0)),
        ],
        out_specs=pl.BlockSpec((1, H, W, c3), lambda n: (n, 0, 0, 0)),
        out_shape=jax.ShapeDtypeStruct((N, H, W, c3), jnp.float32),
        scratch_shapes=[pltpu.VMEM((H + 2, W + 2, c2), jnp.float32)],
        compiler_params=pltpu.CompilerParams(dimension_semantics=("parallel",)),
    )(x2, x_tag, x, p["wdw_base"], p["bdw_base"], p["w_pw"], p["w_sc"], p["b_sc"])


# --------------------------------------------------------------------------------------
# Parameters (deterministic, in-script); BN / scale / inverse-Haar folded at init.
# --------------------------------------------------------------------------------------
def init_params(key, c1, c2, e=4, eps=1e-5):
    c3 = e * c2
    c4 = 4 * c2
    ks = list(jax.random.split(key, 24))

    def nrm(shape, s=0.2):
        return s * jax.random.normal(ks.pop(), shape, dtype=jnp.float32)

    def bn(c):  # inference-mode BatchNorm -> per-channel scale / bias
        gamma = 1.0 + 0.1 * jax.random.normal(ks.pop(), (c,), dtype=jnp.float32)
        beta = nrm((c,), 0.1)
        mean = nrm((c,), 0.1)
        var = 1.0 + 0.1 * jnp.abs(jax.random.normal(ks.pop(), (c,), dtype=jnp.float32))
        s = gamma / jnp.sqrt(var + eps)
        return s, beta - mean * s

    p = {}

    # cv1: 1x1 conv (no bias) + BN + SiLU  -> fold BN scale into the weight
    w_cv1 = nrm((c1, c2))
    s1, b1 = bn(c2)
    p["w1"] = (w_cv1 * s1[None, :]).astype(jnp.bfloat16)
    p["b1"] = b1.reshape(1, c2)

    # cv2: 3x3 conv (no bias) + BN + SiLU
    w_cv2 = nrm((3, 3, c2, c2))  # (kh, kw, cin, cout)
    s2, b2 = bn(c2)
    p["w2"] = (w_cv2 * s2[None, None, None, :]).reshape(9, c2, c2).astype(jnp.bfloat16)
    p["b2"] = b2.reshape(1, c2)

    # WTConv2d.base_conv: depthwise 3x3 + bias (base_scale init 1.0 -> identity)
    p["wdw_base"] = nrm((3, 3, c2)).reshape(9, c2)
    p["bdw_base"] = nrm((c2,), 0.1).reshape(1, c2)

    # ---- wavelet branch ------------------------------------------------------------
    # PyTorch uses interleaved subband channels (ch = 4*c + s); we keep the activation in
    # block-concat order (ch = s*c2 + c) and permute the weights once here.
    perm = (4 * jnp.arange(c2)[None, :] + jnp.arange(4)[:, None]).reshape(-1)

    wav_dw_int = nrm((3, 3, c4)).reshape(9, c4)   # depthwise 3x3 on 4*c2 channels + bias
    wav_db_int = nrm((c4,), 0.1)
    p["wdw_wav"] = wav_dw_int[:, perm]
    p["bdw_wav"] = wav_db_int[perm].reshape(1, c4)

    # grouped 1x1 conv (groups=8) as a block-diagonal matmul in interleaved order
    g = 8
    cpg = c4 // g
    blocks = nrm((g, cpg, cpg))
    wpw_int = jnp.zeros((c4, c4), jnp.float32)
    for gi in range(g):
        wpw_int = wpw_int.at[gi * cpg:(gi + 1) * cpg, gi * cpg:(gi + 1) * cpg].set(blocks[gi])
    bpw_int = nrm((c4,), 0.1)
    wav_scale = 0.1 * jnp.ones((c4,), jnp.float32)  # _ScaleModule(init_scale=0.1)

    wpw_blk = wpw_int[perm][:, perm] * wav_scale[perm][None, :]
    bpw_blk = bpw_int[perm] * wav_scale[perm]

    # Haar butterfly (symmetric): HB[p, s], p = 2*a + b spatial parity, s = subband index
    HB = jnp.array([[1.0, 1.0, 1.0, 1.0],
                    [1.0, 1.0, -1.0, -1.0],
                    [1.0, -1.0, 1.0, -1.0],
                    [1.0, -1.0, -1.0, 1.0]], jnp.float32)
    eye_c = jnp.eye(c2, dtype=jnp.float32)

    def expand(m):  # (r, k) sign matrix -> (r*c2, k*c2), identity over channels
        r, k = m.shape
        return (m[:, None, :, None] * eye_c[None, :, None, :]).reshape(r * c2, k * c2)

    # forward WT: [x(a,0)|x(a,1)] (2*c2) -> [LL|LH|HL|HH] (4*c2), one matrix per row parity
    p["haar_e"] = expand(_HAAR * HB[0:2, :]).astype(jnp.bfloat16)
    p["haar_o"] = expand(_HAAR * HB[2:4, :]).astype(jnp.bfloat16)
    # inverse WT folded together with the grouped 1x1 + wavelet scale
    m_iwt = expand(_HAAR * HB)                 # [LL|LH|HL|HH] -> [y00|y01|y10|y11]
    w_total = wpw_blk @ m_iwt
    b_total = bpw_blk @ m_iwt
    p["wpw_even"] = w_total[:, :2 * c2].astype(jnp.bfloat16)
    p["wpw_odd"] = w_total[:, 2 * c2:].astype(jnp.bfloat16)
    p["bpw_even"] = b_total[:2 * c2].reshape(1, 2 * c2)
    p["bpw_odd"] = b_total[2 * c2:].reshape(1, 2 * c2)

    # cv3.pointwise: 1x1 conv c2 -> c3, no bias
    p["w_pw"] = nrm((c2, c3)).astype(jnp.bfloat16)

    # shortcut: 1x1 conv + BN (no activation)
    w_sc = nrm((c1, c3))
    ssc, bsc = bn(c3)
    p["w_sc"] = (w_sc * ssc[None, :]).astype(jnp.bfloat16)
    p["b_sc"] = bsc.reshape(1, c3)
    return p


# --------------------------------------------------------------------------------------
# Full ResNetBlock forward
# --------------------------------------------------------------------------------------
def resnet_block_forward(x_nchw, params):
    x = jnp.transpose(x_nchw, (0, 2, 3, 1)).astype(jnp.float32)   # NCHW -> NHWC
    x2 = fused_cv1_cv2(x, params["w1"], params["b1"], params["w2"], params["b2"])
    x_tag = wavelet_path(x2, params)
    out = tail_block(x2, x_tag, x, params)
    return jnp.transpose(out, (0, 3, 1, 2))                       # back to NCHW


if __name__ == "__main__":
    N, c1, H, W = 2, 4, 16, 16
    c2, e = 8, 4      # c2 even so that 4*c2 is divisible by groups=8
    key = jax.random.PRNGKey(0)
    kx, kp = jax.random.split(key)
    x = jax.random.normal(kx, (N, c1, H, W), dtype=jnp.float32)
    params = init_params(kp, c1, c2, e=e)

    out = jax.jit(resnet_block_forward)(x, params)
    out = jax.block_until_ready(out)

    assert out.shape == (N, e * c2, H, W)
    assert bool(jnp.all(out >= 0.0))          # ReLU output
    assert bool(jnp.all(jnp.isfinite(out)))
    print("KERNEL_OK")
</pallas_src>

<mosaic_0001>
module attributes {stable_mosaic.version = 11 : i64} {
  func.func @_front_kernel(%arg0: i32, %arg1: memref<1x16x16x4xf32, #tpu.memory_space<vmem>>, %arg2: memref<4x8xbf16, #tpu.memory_space<vmem>>, %arg3: memref<1x8xf32, #tpu.memory_space<vmem>>, %arg4: memref<9x8x8xbf16, #tpu.memory_space<vmem>>, %arg5: memref<1x8xf32, #tpu.memory_space<vmem>>, %arg6: memref<1x16x16x8xf32, #tpu.memory_space<vmem>>, %arg7: memref<18x18x8xf32, #tpu.memory_space<vmem>>) attributes {dimension_semantics = [#tpu.dimension_semantics<parallel>], iteration_bounds = array<i64: 2>, scalar_prefetch = 0 : i64, scratch_operands = 1 : i64, tpu.core_type = #tpu.core_type<tc>, window_params = [{transform_indices = @transform_0, window_bounds = array<i64: 1, 16, 16, 4>}, {pipeline_mode = #tpu.pipeline_mode<synchronous>, transform_indices = @transform_1, window_bounds = array<i64: 4, 8>}, {pipeline_mode = #tpu.pipeline_mode<synchronous>, transform_indices = @transform_2, window_bounds = array<i64: 1, 8>}, {pipeline_mode = #tpu.pipeline_mode<synchronous>, transform_indices = @transform_3, window_bounds = array<i64: 9, 8, 8>}, {pipeline_mode = #tpu.pipeline_mode<synchronous>, transform_indices = @transform_4, window_bounds = array<i64: 1, 8>}, {transform_indices = @transform_5, window_bounds = array<i64: 1, 16, 16, 8>}]} {
    %c0 = arith.constant 0 : index
    %c0_0 = arith.constant 0 : index
    %c0_1 = arith.constant 0 : index
    %c0_2 = arith.constant 0 : index
    %0 = vector.load %arg1[%c0, %c0_0, %c0_1, %c0_2] : memref<1x16x16x4xf32, #tpu.memory_space<vmem>>, vector<1x16x16x4xf32>
    %1 = vector.shape_cast %0 : vector<1x16x16x4xf32> to vector<16x16x4xf32>
    %2 = vector.shape_cast %1 : vector<16x16x4xf32> to vector<256x4xf32>
    %3 = arith.truncf %2 : vector<256x4xf32> to vector<256x4xbf16>
    %c0_3 = arith.constant 0 : index
    %c0_4 = arith.constant 0 : index
    %4 = vector.load %arg2[%c0_3, %c0_4] : memref<4x8xbf16, #tpu.memory_space<vmem>>, vector<4x8xbf16>
    %cst = arith.constant dense<0.000000e+00> : vector<256x8xf32>
    %5 = tpu.matmul %3, %4, %cst {dimension_numbers = #tpu.dot_dimension_numbers<[1], [0], [0], [1], [0, 0, 1, 1], [], []>} : vector<256x4xbf16>, vector<4x8xbf16>, vector<256x8xf32> -> vector<256x8xf32>
    %c0_5 = arith.constant 0 : index
    %c0_6 = arith.constant 0 : index
    %6 = vector.load %arg3[%c0_5, %c0_6] : memref<1x8xf32, #tpu.memory_space<vmem>>, vector<1x8xf32>
    %7 = vector.broadcast %6 : vector<1x8xf32> to vector<256x8xf32>
    %8 = arith.addf %5, %7 : vector<256x8xf32>
    %9 = arith.negf %8 : vector<256x8xf32>
    %10 = math.exp %9 : vector<256x8xf32>
    %cst_7 = arith.constant 1.000000e+00 : f32
    %11 = vector.broadcast %cst_7 : f32 to vector<256x8xf32>
    %12 = arith.addf %11, %10 : vector<256x8xf32>
    %13 = arith.divf %11, %12 : vector<256x8xf32>
    %14 = arith.mulf %8, %13 : vector<256x8xf32>
    %cst_8 = arith.constant 0.000000e+00 : f32
    %15 = vector.broadcast %cst_8 : f32 to vector<18x18x8xf32>
    %c0_9 = arith.constant 0 : index
    %c0_10 = arith.constant 0 : index
    %c0_11 = arith.constant 0 : index
    %16 = vector.load %arg7[%c0_9, %c0_10, %c0_11] : memref<18x18x8xf32, #tpu.memory_space<vmem>>, vector<18x18x8xf32>
    tpu.vector_store %arg7[%c0_9, %c0_10, %c0_11], %15 {strides = array<i32>} : memref<18x18x8xf32, #tpu.memory_space<vmem>>, vector<18x18x8xf32>,
    %17 = vector.shape_cast %14 : vector<256x8xf32> to vector<16x16x8xf32>
    %c1 = arith.constant 1 : index
    %c1_12 = arith.constant 1 : index
    %c0_13 = arith.constant 0 : index
    %18 = vector.load %arg7[%c1, %c1_12, %c0_13] : memref<18x18x8xf32, #tpu.memory_space<vmem>>, vector<16x16x8xf32>
    tpu.vector_store %arg7[%c1, %c1_12, %c0_13], %17 {strides = array<i32>} : memref<18x18x8xf32, #tpu.memory_space<vmem>>, vector<16x16x8xf32>,
    %cst_14 = arith.constant 0.000000e+00 : f32
    %19 = vector.broadcast %cst_14 : f32 to vector<256x8xf32>
    %c0_15 = arith.constant 0 : index
    %c0_16 = arith.constant 0 : index
    %20 = vector.load %arg5[%c0_15, %c0_16] : memref<1x8xf32, #tpu.memory_space<vmem>>, vector<1x8xf32>
    %21 = vector.broadcast %20 : vector<1x8xf32> to vector<256x8xf32>
    %22 = arith.addf %19, %21 : vector<256x8xf32>
    %c0_17 = arith.constant 0 : index
    %c0_18 = arith.constant 0 : index
    %c0_19 = arith.constant 0 : index
    %23 = vector.load %arg7[%c0_17, %c0_18, %c0_19] : memref<18x18x8xf32, #tpu.memory_space<vmem>>, vector<16x16x8xf32>
    %24 = vector.shape_cast %23 : vector<16x16x8xf32> to vector<256x8xf32>
    %25 = arith.truncf %24 : vector<256x8xf32> to vector<256x8xbf16>
    %c0_20 = arith.constant 0 : index
    %c0_21 = arith.constant 0 : index
    %c0_22 = arith.constant 0 : index
    %26 = vector.load %arg4[%c0_20, %c0_21, %c0_22] : memref<9x8x8xbf16, #tpu.memory_space<vmem>>, vector<1x8x8xbf16>
    %27 = vector.shape_cast %26 : vector<1x8x8xbf16> to vector<8x8xbf16>
    %cst_23 = arith.constant dense<0.000000e+00> : vector<256x8xf32>
    %28 = tpu.matmul %25, %27, %cst_23 {dimension_numbers = #tpu.dot_dimension_numbers<[1], [0], [0], [1], [0, 0, 1, 1], [], []>} : vector<256x8xbf16>, vector<8x8xbf16>, vector<256x8xf32> -> vector<256x8xf32>
    %29 = arith.addf %22, %28 : vector<256x8xf32>
    %c0_24 = arith.constant 0 : index
    %c1_25 = arith.constant 1 : index
    %c0_26 = arith.constant 0 : index
    %30 = vector.load %arg7[%c0_24, %c1_25, %c0_26] : memref<18x18x8xf32, #tpu.memory_space<vmem>>, vector<16x16x8xf32>
    %31 = vector.shape_cast %30 : vector<16x16x8xf32> to vector<256x8xf32>
    %32 = arith.truncf %31 : vector<256x8xf32> to vector<256x8xbf16>
    %c1_27 = arith.constant 1 : index
    %c0_28 = arith.constant 0 : index
    %c0_29 = arith.constant 0 : index
    %33 = vector.load %arg4[%c1_27, %c0_28, %c0_29] : memref<9x8x8xbf16, #tpu.memory_space<vmem>>, vector<1x8x8xbf16>
    %34 = vector.shape_cast %33 : vector<1x8x8xbf16> to vector<8x8xbf16>
    %cst_30 = arith.constant dense<0.000000e+00> : vector<256x8xf32>
    %35 = tpu.matmul %32, %34, %cst_30 {dimension_numbers = #tpu.dot_dimension_numbers<[1], [0], [0], [1], [0, 0, 1, 1], [], []>} : vector<256x8xbf16>, vector<8x8xbf16>, vector<256x8xf32> -> vector<256x8xf32>
    %36 = arith.addf %29, %35 : vector<256x8xf32>
    %c0_31 = arith.constant 0 : index
    %c2 = arith.constant 2 : index
    %c0_32 = arith.constant 0 : index
    %37 = vector.load %arg7[%c0_31, %c2, %c0_32] : memref<18x18x8xf32, #tpu.memory_space<vmem>>, vector<16x16x8xf32>
    %38 = vector.shape_cast %37 : vector<16x16x8xf32> to vector<256x8xf32>
    %39 = arith.truncf %38 : vector<256x8xf32> to vector<256x8xbf16>
    %c2_33 = arith.constant 2 : index
    %c0_34 = arith.constant 0 : index
    %c0_35 = arith.constant 0 : index
    %40 = vector.load %arg4[%c2_33, %c0_34, %c0_35] : memref<9x8x8xbf16, #tpu.memory_space<vmem>>, vector<1x8x8xbf16>
    %41 = vector.shape_cast %40 : vector<1x8x8xbf16> to vector<8x8xbf16>
    %cst_36 = arith.constant dense<0.000000e+00> : vector<256x8xf32>
    %42 = tpu.matmul %39, %41, %cst_36 {dimension_numbers = #tpu.dot_dimension_numbers<[1], [0], [0], [1], [0, 0, 1, 1], [], []>} : vector<256x8xbf16>, vector<8x8xbf16>, vector<256x8xf32> -> vector<256x8xf32>
    %43 = arith.addf %36, %42 : vector<256x8xf32>
    %c1_37 = arith.constant 1 : index
    %c0_38 = arith.constant 0 : index
    %c0_39 = arith.constant 0 : index
    %44 = vector.load %arg7[%c1_37, %c0_38, %c0_39] : memref<18x18x8xf32, #tpu.memory_space<vmem>>, vector<16x16x8xf32>
    %45 = vector.shape_cast %44 : vector<16x16x8xf32> to vector<256x8xf32>
    %46 = arith.truncf %45 : vector<256x8xf32> to vector<256x8xbf16>
    %c3 = arith.constant 3 : index
    %c0_40 = arith.constant 0 : index
    %c0_41 = arith.constant 0 : index
    %47 = vector.load %arg4[%c3, %c0_40, %c0_41] : memref<9x8x8xbf16, #tpu.memory_space<vmem>>, vector<1x8x8xbf16>
    %48 = vector.shape_cast %47 : vector<1x8x8xbf16> to vector<8x8xbf16>
    %cst_42 = arith.constant dense<0.000000e+00> : vector<256x8xf32>
    %49 = tpu.matmul %46, %48, %cst_42 {dimension_numbers = #tpu.dot_dimension_numbers<[1], [0], [0], [1], [0, 0, 1, 1], [], []>} : vector<256x8xbf16>, vector<8x8xbf16>, vector<256x8xf32> -> vector<256x8xf32>
    %50 = arith.addf %43, %49 : vector<256x8xf32>
    %c1_43 = arith.constant 1 : index
    %c1_44 = arith.constant 1 : index
    %c0_45 = arith.constant 0 : index
    %51 = vector.load %arg7[%c1_43, %c1_44, %c0_45] : memref<18x18x8xf32, #tpu.memory_space<vmem>>, vector<16x16x8xf32>
    %52 = vector.shape_cast %51 : vector<16x16x8xf32> to vector<256x8xf32>
    %53 = arith.truncf %52 : vector<256x8xf32> to vector<256x8xbf16>
    %c4 = arith.constant 4 : index
    %c0_46 = arith.constant 0 : index
    %c0_47 = arith.constant 0 : index
    %54 = vector.load %arg4[%c4, %c0_46, %c0_47] : memref<9x8x8xbf16, #tpu.memory_space<vmem>>, vector<1x8x8xbf16>
    %55 = vector.shape_cast %54 : vector<1x8x8xbf16> to vector<8x8xbf16>
    %cst_48 = arith.constant dense<0.000000e+00> : vector<256x8xf32>
    %56 = tpu.matmul %53, %55, %cst_48 {dimension_numbers = #tpu.dot_dimension_numbers<[1], [0], [0], [1], [0, 0, 1, 1], [], []>} : vector<256x8xbf16>, vector<8x8xbf16>, vector<256x8xf32> -> vector<256x8xf32>
    %57 = arith.addf %50, %56 : vector<256x8xf32>
    %c1_49 = arith.constant 1 : index
    %c2_50 = arith.constant 2 : index
    %c0_51 = arith.constant 0 : index
    %58 = vector.load %arg7[%c1_49, %c2_50, %c0_51] : memref<18x18x8xf32, #tpu.memory_space<vmem>>, vector<16x16x8xf32>
    %59 = vector.shape_cast %58 : vector<16x16x8xf32> to vector<256x8xf32>
    %60 = arith.truncf %59 : vector<256x8xf32> to vector<256x8xbf16>
    %c5 = arith.constant 5 : index
    %c0_52 = arith.constant 0 : index
    %c0_53 = arith.constant 0 : index
    %61 = vector.load %arg4[%c5, %c0_52, %c0_53] : memref<9x8x8xbf16, #tpu.memory_space<vmem>>, vector<1x8x8xbf16>
    %62 = vector.shape_cast %61 : vector<1x8x8xbf16> to vector<8x8xbf16>
    %cst_54 = arith.constant dense<0.000000e+00> : vector<256x8xf32>
    %63 = tpu.matmul %60, %62, %cst_54 {dimension_numbers = #tpu.dot_dimension_numbers<[1], [0], [0], [1], [0, 0, 1, 1], [], []>} : vector<256x8xbf16>, vector<8x8xbf16>, vector<256x8xf32> -> vector<256x8xf32>
    %64 = arith.addf %57, %63 : vector<256x8xf32>
    %c2_55 = arith.constant 2 : index
    %c0_56 = arith.constant 0 : index
    %c0_57 = arith.constant 0 : index
    %65 = vector.load %arg7[%c2_55, %c0_56, %c0_57] : memref<18x18x8xf32, #tpu.memory_space<vmem>>, vector<16x16x8xf32>
    %66 = vector.shape_cast %65 : vector<16x16x8xf32> to vector<256x8xf32>
    %67 = arith.truncf %66 : vector<256x8xf32> to vector<256x8xbf16>
    %c6 = arith.constant 6 : index
    %c0_58 = arith.constant 0 : index
    %c0_59 = arith.constant 0 : index
    %68 = vector.load %arg4[%c6, %c0_58, %c0_59] : memref<9x8x8xbf16, #tpu.memory_space<vmem>>, vector<1x8x8xbf16>
    %69 = vector.shape_cast %68 : vector<1x8x8xbf16> to vector<8x8xbf16>
    %cst_60 = arith.constant dense<0.000000e+00> : vector<256x8xf32>
    %70 = tpu.matmul %67, %69, %cst_60 {dimension_numbers = #tpu.dot_dimension_numbers<[1], [0], [0], [1], [0, 0, 1, 1], [], []>} : vector<256x8xbf16>, vector<8x8xbf16>, vector<256x8xf32> -> vector<256x8xf32>
    %71 = arith.addf %64, %70 : vector<256x8xf32>
    %c2_61 = arith.constant 2 : index
    %c1_62 = arith.constant 1 : index
    %c0_63 = arith.constant 0 : index
    %72 = vector.load %arg7[%c2_61, %c1_62, %c0_63] : memref<18x18x8xf32, #tpu.memory_space<vmem>>, vector<16x16x8xf32>
    %73 = vector.shape_cast %72 : vector<16x16x8xf32> to vector<256x8xf32>
    %74 = arith.truncf %73 : vector<256x8xf32> to vector<256x8xbf16>
    %c7 = arith.constant 7 : index
    %c0_64 = arith.constant 0 : index
    %c0_65 = arith.constant 0 : index
    %75 = vector.load %arg4[%c7, %c0_64, %c0_65] : memref<9x8x8xbf16, #tpu.memory_space<vmem>>, vector<1x8x8xbf16>
    %76 = vector.shape_cast %75 : vector<1x8x8xbf16> to vector<8x8xbf16>
    %cst_66 = arith.constant dense<0.000000e+00> : vector<256x8xf32>
    %77 = tpu.matmul %74, %76, %cst_66 {dimension_numbers = #tpu.dot_dimension_numbers<[1], [0], [0], [1], [0, 0, 1, 1], [], []>} : vector<256x8xbf16>, vector<8x8xbf16>, vector<256x8xf32> -> vector<256x8xf32>
    %78 = arith.addf %71, %77 : vector<256x8xf32>
    %c2_67 = arith.constant 2 : index
    %c2_68 = arith.constant 2 : index
    %c0_69 = arith.constant 0 : index
    %79 = vector.load %arg7[%c2_67, %c2_68, %c0_69] : memref<18x18x8xf32, #tpu.memory_space<vmem>>, vector<16x16x8xf32>
    %80 = vector.shape_cast %79 : vector<16x16x8xf32> to vector<256x8xf32>
    %81 = arith.truncf %80 : vector<256x8xf32> to vector<256x8xbf16>
    %c8 = arith.constant 8 : index
    %c0_70 = arith.constant 0 : index
    %c0_71 = arith.constant 0 : index
    %82 = vector.load %arg4[%c8, %c0_70, %c0_71] : memref<9x8x8xbf16, #tpu.memory_space<vmem>>, vector<1x8x8xbf16>
    %83 = vector.shape_cast %82 : vector<1x8x8xbf16> to vector<8x8xbf16>
    %cst_72 = arith.constant dense<0.000000e+00> : vector<256x8xf32>
    %84 = tpu.matmul %81, %83, %cst_72 {dimension_numbers = #tpu.dot_dimension_numbers<[1], [0], [0], [1], [0, 0, 1, 1], [], []>} : vector<256x8xbf16>, vector<8x8xbf16>, vector<256x8xf32> -> vector<256x8xf32>
    %85 = arith.addf %78, %84 : vector<256x8xf32>
    %86 = arith.negf %85 : vector<256x8xf32>
    %87 = math.exp %86 : vector<256x8xf32>
    %cst_73 = arith.constant 1.000000e+00 : f32
    %88 = vector.broadcast %cst_73 : f32 to vector<256x8xf32>
    %89 = arith.addf %88, %87 : vector<256x8xf32>
    %90 = arith.divf %88, %89 : vector<256x8xf32>
    %91 = arith.mulf %85, %90 : vector<256x8xf32>
    %92 = vector.shape_cast %91 : vector<256x8xf32> to vector<16x16x8xf32>
    %c0_74 = arith.constant 0 : index
    %c0_75 = arith.constant 0 : index
    %c0_76 = arith.constant 0 : index
    %c0_77 = arith.constant 0 : index
    %93 = vector.load %arg6[%c0_74, %c0_75, %c0_76, %c0_77] : memref<1x16x16x8xf32, #tpu.memory_space<vmem>>, vector<1x16x16x8xf32>
    %94 = vector.shape_cast %93 : vector<1x16x16x8xf32> to vector<16x16x8xf32>
    %95 = vector.shape_cast %92 : vector<16x16x8xf32> to vector<1x16x16x8xf32>
    tpu.vector_store %arg6[%c0_74, %c0_75, %c0_76, %c0_77], %95 {strides = array<i32>} : memref<1x16x16x8xf32, #tpu.memory_space<vmem>>, vector<1x16x16x8xf32>,
    return
  }
  func.func @transform_0(%arg0: i32) -> (i32, i32, i32, i32) {
    %c0_i32 = arith.constant 0 : i32
    %c0_i32_0 = arith.constant 0 : i32
    %c0_i32_1 = arith.constant 0 : i32
    %c0_i32_2 = arith.constant 0 : i32
    return %arg0, %c0_i32, %c0_i32_0, %c0_i32_1 : i32, i32, i32, i32
  }
  func.func @transform_1(%arg0: i32) -> (i32, i32) {
    %c0_i32 = arith.constant 0 : i32
    %c0_i32_0 = arith.constant 0 : i32
    %c0_i32_1 = arith.constant 0 : i32
    return %c0_i32, %c0_i32_0 : i32, i32
  }
  func.func @transform_2(%arg0: i32) -> (i32, i32) {
    %c0_i32 = arith.constant 0 : i32
    %c0_i32_0 = arith.constant 0 : i32
    %c0_i32_1 = arith.constant 0 : i32
    return %c0_i32, %c0_i32_0 : i32, i32
  }
  func.func @transform_3(%arg0: i32) -> (i32, i32, i32) {
    %c0_i32 = arith.constant 0 : i32
    %c0_i32_0 = arith.constant 0 : i32
    %c0_i32_1 = arith.constant 0 : i32
    %c0_i32_2 = arith.constant 0 : i32
    return %c0_i32, %c0_i32_0, %c0_i32_1 : i32, i32, i32
  }
  func.func @transform_4(%arg0: i32) -> (i32, i32) {
    %c0_i32 = arith.constant 0 : i32
    %c0_i32_0 = arith.constant 0 : i32
    %c0_i32_1 = arith.constant 0 : i32
    return %c0_i32, %c0_i32_0 : i32, i32
  }
  func.func @transform_5(%arg0: i32) -> (i32, i32, i32, i32) {
    %c0_i32 = arith.constant 0 : i32
    %c0_i32_0 = arith.constant 0 : i32
    %c0_i32_1 = arith.constant 0 : i32
    %c0_i32_2 = arith.constant 0 : i32
    return %arg0, %c0_i32, %c0_i32_0, %c0_i32_1 : i32, i32, i32, i32
  }
}

module attributes {stable_mosaic.version = 11 : i64} {
  func.func @_tail_kernel(%arg0: i32, %arg1: memref<1x16x16x8xf32, #tpu.memory_space<vmem>>, %arg2: memref<1x16x16x8xf32, #tpu.memory_space<vmem>>, %arg3: memref<1x16x16x4xf32, #tpu.memory_space<vmem>>, %arg4: memref<9x8xf32, #tpu.memory_space<vmem>>, %arg5: memref<1x8xf32, #tpu.memory_space<vmem>>, %arg6: memref<8x32xbf16, #tpu.memory_space<vmem>>, %arg7: memref<4x32xbf16, #tpu.memory_space<vmem>>, %arg8: memref<1x32xf32, #tpu.memory_space<vmem>>, %arg9: memref<1x16x16x32xf32, #tpu.memory_space<vmem>>, %arg10: memref<18x18x8xf32, #tpu.memory_space<vmem>>) attributes {dimension_semantics = [#tpu.dimension_semantics<parallel>], iteration_bounds = array<i64: 2>, scalar_prefetch = 0 : i64, scratch_operands = 1 : i64, tpu.core_type = #tpu.core_type<tc>, window_params = [{transform_indices = @transform_0, window_bounds = array<i64: 1, 16, 16, 8>}, {transform_indices = @transform_1, window_bounds = array<i64: 1, 16, 16, 8>}, {transform_indices = @transform_2, window_bounds = array<i64: 1, 16, 16, 4>}, {pipeline_mode = #tpu.pipeline_mode<synchronous>, transform_indices = @transform_3, window_bounds = array<i64: 9, 8>}, {pipeline_mode = #tpu.pipeline_mode<synchronous>, transform_indices = @transform_4, window_bounds = array<i64: 1, 8>}, {pipeline_mode = #tpu.pipeline_mode<synchronous>, transform_indices = @transform_5, window_bounds = array<i64: 8, 32>}, {pipeline_mode = #tpu.pipeline_mode<synchronous>, transform_indices = @transform_6, window_bounds = array<i64: 4, 32>}, {pipeline_mode = #tpu.pipeline_mode<synchronous>, transform_indices = @transform_7, window_bounds = array<i64: 1, 32>}, {transform_indices = @transform_8, window_bounds = array<i64: 1, 16, 16, 32>}]} {
    %cst = arith.constant 0.000000e+00 : f32
    %0 = vector.broadcast %cst : f32 to vector<18x18x8xf32>
    %c0 = arith.constant 0 : index
    %c0_0 = arith.constant 0 : index
    %c0_1 = arith.constant 0 : index
    %1 = vector.load %arg10[%c0, %c0_0, %c0_1] : memref<18x18x8xf32, #tpu.memory_space<vmem>>, vector<18x18x8xf32>
    tpu.vector_store %arg10[%c0, %c0_0, %c0_1], %0 {strides = array<i32>} : memref<18x18x8xf32, #tpu.memory_space<vmem>>, vector<18x18x8xf32>,
    %c0_2 = arith.constant 0 : index
    %c0_3 = arith.constant 0 : index
    %c0_4 = arith.constant 0 : index
    %c0_5 = arith.constant 0 : index
    %2 = vector.load %arg1[%c0_2, %c0_3, %c0_4, %c0_5] : memref<1x16x16x8xf32, #tpu.memory_space<vmem>>, vector<1x16x16x8xf32>
    %3 = vector.shape_cast %2 : vector<1x16x16x8xf32> to vector<16x16x8xf32>
    %c1 = arith.constant 1 : index
    %c1_6 = arith.constant 1 : index
    %c0_7 = arith.constant 0 : index
    %4 = vector.load %arg10[%c1, %c1_6, %c0_7] : memref<18x18x8xf32, #tpu.memory_space<vmem>>, vector<16x16x8xf32>
    tpu.vector_store %arg10[%c1, %c1_6, %c0_7], %3 {strides = array<i32>} : memref<18x18x8xf32, #tpu.memory_space<vmem>>, vector<16x16x8xf32>,
    %cst_8 = arith.constant 0.000000e+00 : f32
    %5 = vector.broadcast %cst_8 : f32 to vector<16x16x8xf32>
    %c0_9 = arith.constant 0 : index
    %c0_10 = arith.constant 0 : index
    %6 = vector.load %arg5[%c0_9, %c0_10] : memref<1x8xf32, #tpu.memory_space<vmem>>, vector<1x8xf32>
    %7 = vector.shape_cast %6 : vector<1x8xf32> to vector<8xf32>
    %8 = vector.shape_cast %7 : vector<8xf32> to vector<1x1x8xf32>
    %9 = vector.broadcast %8 : vector<1x1x8xf32> to vector<16x16x8xf32>
    %10 = arith.addf %5, %9 : vector<16x16x8xf32>
    %c0_11 = arith.constant 0 : index
    %c0_12 = arith.constant 0 : index
    %c0_13 = arith.constant 0 : index
    %11 = vector.load %arg10[%c0_11, %c0_12, %c0_13] : memref<18x18x8xf32, #tpu.memory_space<vmem>>, vector<16x16x8xf32>
    %c0_14 = arith.constant 0 : index
    %c0_15 = arith.constant 0 : index
    %12 = vector.load %arg4[%c0_14, %c0_15] : memref<9x8xf32, #tpu.memory_space<vmem>>, vector<1x8xf32>
    %13 = vector.shape_cast %12 : vector<1x8xf32> to vector<8xf32>
    %14 = vector.shape_cast %13 : vector<8xf32> to vector<1x1x8xf32>
    %15 = vector.broadcast %14 : vector<1x1x8xf32> to vector<16x16x8xf32>
    %16 = arith.mulf %11, %15 : vector<16x16x8xf32>
    %17 = arith.addf %10, %16 : vector<16x16x8xf32>
    %c0_16 = arith.constant 0 : index
    %c1_17 = arith.constant 1 : index
    %c0_18 = arith.constant 0 : index
    %18 = vector.load %arg10[%c0_16, %c1_17, %c0_18] : memref<18x18x8xf32, #tpu.memory_space<vmem>>, vector<16x16x8xf32>
    %c1_19 = arith.constant 1 : index
    %c0_20 = arith.constant 0 : index
    %19 = vector.load %arg4[%c1_19, %c0_20] : memref<9x8xf32, #tpu.memory_space<vmem>>, vector<1x8xf32>
    %20 = vector.shape_cast %19 : vector<1x8xf32> to vector<8xf32>
    %21 = vector.shape_cast %20 : vector<8xf32> to vector<1x1x8xf32>
    %22 = vector.broadcast %21 : vector<1x1x8xf32> to vector<16x16x8xf32>
    %23 = arith.mulf %18, %22 : vector<16x16x8xf32>
    %24 = arith.addf %17, %23 : vector<16x16x8xf32>
    %c0_21 = arith.constant 0 : index
    %c2 = arith.constant 2 : index
    %c0_22 = arith.constant 0 : index
    %25 = vector.load %arg10[%c0_21, %c2, %c0_22] : memref<18x18x8xf32, #tpu.memory_space<vmem>>, vector<16x16x8xf32>
    %c2_23 = arith.constant 2 : index
    %c0_24 = arith.constant 0 : index
    %26 = vector.load %arg4[%c2_23, %c0_24] : memref<9x8xf32, #tpu.memory_space<vmem>>, vector<1x8xf32>
    %27 = vector.shape_cast %26 : vector<1x8xf32> to vector<8xf32>
    %28 = vector.shape_cast %27 : vector<8xf32> to vector<1x1x8xf32>
    %29 = vector.broadcast %28 : vector<1x1x8xf32> to vector<16x16x8xf32>
    %30 = arith.mulf %25, %29 : vector<16x16x8xf32>
    %31 = arith.addf %24, %30 : vector<16x16x8xf32>
    %c1_25 = arith.constant 1 : index
    %c0_26 = arith.constant 0 : index
    %c0_27 = arith.constant 0 : index
    %32 = vector.load %arg10[%c1_25, %c0_26, %c0_27] : memref<18x18x8xf32, #tpu.memory_space<vmem>>, vector<16x16x8xf32>
    %c3 = arith.constant 3 : index
    %c0_28 = arith.constant 0 : index
    %33 = vector.load %arg4[%c3, %c0_28] : memref<9x8xf32, #tpu.memory_space<vmem>>, vector<1x8xf32>
    %34 = vector.shape_cast %33 : vector<1x8xf32> to vector<8xf32>
    %35 = vector.shape_cast %34 : vector<8xf32> to vector<1x1x8xf32>
    %36 = vector.broadcast %35 : vector<1x1x8xf32> to vector<16x16x8xf32>
    %37 = arith.mulf %32, %36 : vector<16x16x8xf32>
    %38 = arith.addf %31, %37 : vector<16x16x8xf32>
    %c1_29 = arith.constant 1 : index
    %c1_30 = arith.constant 1 : index
    %c0_31 = arith.constant 0 : index
    %39 = vector.load %arg10[%c1_29, %c1_30, %c0_31] : memref<18x18x8xf32, #tpu.memory_space<vmem>>, vector<16x16x8xf32>
    %c4 = arith.constant 4 : index
    %c0_32 = arith.constant 0 : index
    %40 = vector.load %arg4[%c4, %c0_32] : memref<9x8xf32, #tpu.memory_space<vmem>>, vector<1x8xf32>
    %41 = vector.shape_cast %40 : vector<1x8xf32> to vector<8xf32>
    %42 = vector.shape_cast %41 : vector<8xf32> to vector<1x1x8xf32>
    %43 = vector.broadcast %42 : vector<1x1x8xf32> to vector<16x16x8xf32>
    %44 = arith.mulf %39, %43 : vector<16x16x8xf32>
    %45 = arith.addf %38, %44 : vector<16x16x8xf32>
    %c1_33 = arith.constant 1 : index
    %c2_34 = arith.constant 2 : index
    %c0_35 = arith.constant 0 : index
    %46 = vector.load %arg10[%c1_33, %c2_34, %c0_35] : memref<18x18x8xf32, #tpu.memory_space<vmem>>, vector<16x16x8xf32>
    %c5 = arith.constant 5 : index
    %c0_36 = arith.constant 0 : index
    %47 = vector.load %arg4[%c5, %c0_36] : memref<9x8xf32, #tpu.memory_space<vmem>>, vector<1x8xf32>
    %48 = vector.shape_cast %47 : vector<1x8xf32> to vector<8xf32>
    %49 = vector.shape_cast %48 : vector<8xf32> to vector<1x1x8xf32>
    %50 = vector.broadcast %49 : vector<1x1x8xf32> to vector<16x16x8xf32>
    %51 = arith.mulf %46, %50 : vector<16x16x8xf32>
    %52 = arith.addf %45, %51 : vector<16x16x8xf32>
    %c2_37 = arith.constant 2 : index
    %c0_38 = arith.constant 0 : index
    %c0_39 = arith.constant 0 : index
    %53 = vector.load %arg10[%c2_37, %c0_38, %c0_39] : memref<18x18x8xf32, #tpu.memory_space<vmem>>, vector<16x16x8xf32>
    %c6 = arith.constant 6 : index
    %c0_40 = arith.constant 0 : index
    %54 = vector.load %arg4[%c6, %c0_40] : memref<9x8xf32, #tpu.memory_space<vmem>>, vector<1x8xf32>
    %55 = vector.shape_cast %54 : vector<1x8xf32> to vector<8xf32>
    %56 = vector.shape_cast %55 : vector<8xf32> to vector<1x1x8xf32>
    %57 = vector.broadcast %56 : vector<1x1x8xf32> to vector<16x16x8xf32>
    %58 = arith.mulf %53, %57 : vector<16x16x8xf32>
    %59 = arith.addf %52, %58 : vector<16x16x8xf32>
    %c2_41 = arith.constant 2 : index
    %c1_42 = arith.constant 1 : index
    %c0_43 = arith.constant 0 : index
    %60 = vector.load %arg10[%c2_41, %c1_42, %c0_43] : memref<18x18x8xf32, #tpu.memory_space<vmem>>, vector<16x16x8xf32>
    %c7 = arith.constant 7 : index
    %c0_44 = arith.constant 0 : index
    %61 = vector.load %arg4[%c7, %c0_44] : memref<9x8xf32, #tpu.memory_space<vmem>>, vector<1x8xf32>
    %62 = vector.shape_cast %61 : vector<1x8xf32> to vector<8xf32>
    %63 = vector.shape_cast %62 : vector<8xf32> to vector<1x1x8xf32>
    %64 = vector.broadcast %63 : vector<1x1x8xf32> to vector<16x16x8xf32>
    %65 = arith.mulf %60, %64 : vector<16x16x8xf32>
    %66 = arith.addf %59, %65 : vector<16x16x8xf32>
    %c2_45 = arith.constant 2 : index
    %c2_46 = arith.constant 2 : index
    %c0_47 = arith.constant 0 : index
    %67 = vector.load %arg10[%c2_45, %c2_46, %c0_47] : memref<18x18x8xf32, #tpu.memory_space<vmem>>, vector<16x16x8xf32>
    %c8 = arith.constant 8 : index
    %c0_48 = arith.constant 0 : index
    %68 = vector.load %arg4[%c8, %c0_48] : memref<9x8xf32, #tpu.memory_space<vmem>>, vector<1x8xf32>
    %69 = vector.shape_cast %68 : vector<1x8xf32> to vector<8xf32>
    %70 = vector.shape_cast %69 : vector<8xf32> to vector<1x1x8xf32>
    %71 = vector.broadcast %70 : vector<1x1x8xf32> to vector<16x16x8xf32>
    %72 = arith.mulf %67, %71 : vector<16x16x8xf32>
    %73 = arith.addf %66, %72 : vector<16x16x8xf32>
    %c0_49 = arith.constant 0 : index
    %c0_50 = arith.constant 0 : index
    %c0_51 = arith.constant 0 : index
    %c0_52 = arith.constant 0 : index
    %74 = vector.load %arg2[%c0_49, %c0_50, %c0_51, %c0_52] : memref<1x16x16x8xf32, #tpu.memory_space<vmem>>, vector<1x16x16x8xf32>
    %75 = vector.shape_cast %74 : vector<1x16x16x8xf32> to vector<16x16x8xf32>
    %76 = arith.addf %73, %75 : vector<16x16x8xf32>
    %77 = vector.shape_cast %76 : vector<16x16x8xf32> to vector<256x8xf32>
    %78 = arith.truncf %77 : vector<256x8xf32> to vector<256x8xbf16>
    %c0_53 = arith.constant 0 : index
    %c0_54 = arith.constant 0 : index
    %c0_55 = arith.constant 0 : index
    %c0_56 = arith.constant 0 : index
    %79 = vector.load %arg3[%c0_53, %c0_54, %c0_55, %c0_56] : memref<1x16x16x4xf32, #tpu.memory_space<vmem>>, vector<1x16x16x4xf32>
    %80 = vector.shape_cast %79 : vector<1x16x16x4xf32> to vector<16x16x4xf32>
    %81 = vector.shape_cast %80 : vector<16x16x4xf32> to vector<256x4xf32>
    %82 = arith.truncf %81 : vector<256x4xf32> to vector<256x4xbf16>
    %c0_57 = arith.constant 0 : index
    %c0_58 = arith.constant 0 : index
    %83 = vector.load %arg6[%c0_57, %c0_58] : memref<8x32xbf16, #tpu.memory_space<vmem>>, vector<8x32xbf16>
    %cst_59 = arith.constant dense<0.000000e+00> : vector<256x32xf32>
    %84 = tpu.matmul %78, %83, %cst_59 {dimension_numbers = #tpu.dot_dimension_numbers<[1], [0], [0], [1], [0, 0, 1, 1], [], []>} : vector<256x8xbf16>, vector<8x32xbf16>, vector<256x32xf32> -> vector<256x32xf32>
    %c0_60 = arith.constant 0 : index
    %c0_61 = arith.constant 0 : index
    %85 = vector.load %arg7[%c0_60, %c0_61] : memref<4x32xbf16, #tpu.memory_space<vmem>>, vector<4x32xbf16>
    %cst_62 = arith.constant dense<0.000000e+00> : vector<256x32xf32>
    %86 = tpu.matmul %82, %85, %cst_62 {dimension_numbers = #tpu.dot_dimension_numbers<[1], [0], [0], [1], [0, 0, 1, 1], [], []>} : vector<256x4xbf16>, vector<4x32xbf16>, vector<256x32xf32> -> vector<256x32xf32>
    %87 = arith.addf %84, %86 : vector<256x32xf32>
    %c0_63 = arith.constant 0 : index
    %c0_64 = arith.constant 0 : index
    %88 = vector.load %arg8[%c0_63, %c0_64] : memref<1x32xf32, #tpu.memory_space<vmem>>, vector<1x32xf32>
    %89 = vector.broadcast %88 : vector<1x32xf32> to vector<256x32xf32>
    %90 = arith.addf %87, %89 : vector<256x32xf32>
    %cst_65 = arith.constant 0.000000e+00 : f32
    %91 = vector.broadcast %cst_65 : f32 to vector<256x32xf32>
    %92 = arith.maximumf %90, %91 : vector<256x32xf32>
    %93 = vector.shape_cast %92 : vector<256x32xf32> to vector<16x16x32xf32>
    %c0_66 = arith.constant 0 : index
    %c0_67 = arith.constant 0 : index
    %c0_68 = arith.constant 0 : index
    %c0_69 = arith.constant 0 : index
    %94 = vector.load %arg9[%c0_66, %c0_67, %c0_68, %c0_69] : memref<1x16x16x32xf32, #tpu.memory_space<vmem>>, vector<1x16x16x32xf32>
    %95 = vector.shape_cast %94 : vector<1x16x16x32xf32> to vector<16x16x32xf32>
    %96 = vector.shape_cast %93 : vector<16x16x32xf32> to vector<1x16x16x32xf32>
    tpu.vector_store %arg9[%c0_66, %c0_67, %c0_68, %c0_69], %96 {strides = array<i32>} : memref<1x16x16x32xf32, #tpu.memory_space<vmem>>, vector<1x16x16x32xf32>,
    return
  }
  func.func @transform_0(%arg0: i32) -> (i32, i32, i32, i32) {
    %c0_i32 = arith.constant 0 : i32
    %c0_i32_0 = arith.constant 0 : i32
    %c0_i32_1 = arith.constant 0 : i32
    %c0_i32_2 = arith.constant 0 : i32
    return %arg0, %c0_i32, %c0_i32_0, %c0_i32_1 : i32, i32, i32, i32
  }
  func.func @transform_1(%arg0: i32) -> (i32, i32, i32, i32) {
    %c0_i32 = arith.constant 0 : i32
    %c0_i32_0 = arith.constant 0 : i32
    %c0_i32_1 = arith.constant 0 : i32
    %c0_i32_2 = arith.constant 0 : i32
    return %arg0, %c0_i32, %c0_i32_0, %c0_i32_1 : i32, i32, i32, i32
  }
  func.func @transform_2(%arg0: i32) -> (i32, i32, i32, i32) {
    %c0_i32 = arith.constant 0 : i32
    %c0_i32_0 = arith.constant 0 : i32
    %c0_i32_1 = arith.constant 0 : i32
    %c0_i32_2 = arith.constant 0 : i32
    return %arg0, %c0_i32, %c0_i32_0, %c0_i32_1 : i32, i32, i32, i32
  }
  func.func @transform_3(%arg0: i32) -> (i32, i32) {
    %c0_i32 = arith.constant 0 : i32
    %c0_i32_0 = arith.constant 0 : i32
    %c0_i32_1 = arith.constant 0 : i32
    return %c0_i32, %c0_i32_0 : i32, i32
  }
  func.func @transform_4(%arg0: i32) -> (i32, i32) {
    %c0_i32 = arith.constant 0 : i32
    %c0_i32_0 = arith.constant 0 : i32
    %c0_i32_1 = arith.constant 0 : i32
    return %c0_i32, %c0_i32_0 : i32, i32
  }
  func.func @transform_5(%arg0: i32) -> (i32, i32) {
    %c0_i32 = arith.constant 0 : i32
    %c0_i32_0 = arith.constant 0 : i32
    %c0_i32_1 = arith.constant 0 : i32
    return %c0_i32, %c0_i32_0 : i32, i32
  }
  func.func @transform_6(%arg0: i32) -> (i32, i32) {
    %c0_i32 = arith.constant 0 : i32
    %c0_i32_0 = arith.constant 0 : i32
    %c0_i32_1 = arith.constant 0 : i32
    return %c0_i32, %c0_i32_0 : i32, i32
  }
  func.func @transform_7(%arg0: i32) -> (i32, i32) {
    %c0_i32 = arith.constant 0 : i32
    %c0_i32_0 = arith.constant 0 : i32
    %c0_i32_1 = arith.constant 0 : i32
    return %c0_i32, %c0_i32_0 : i32, i32
  }
  func.func @transform_8(%arg0: i32) -> (i32, i32, i32, i32) {
    %c0_i32 = arith.constant 0 : i32
    %c0_i32_0 = arith.constant 0 : i32
    %c0_i32_1 = arith.constant 0 : i32
    %c0_i32_2 = arith.constant 0 : i32
    return %arg0, %c0_i32, %c0_i32_0, %c0_i32_1 : i32, i32, i32, i32
  }
}

module attributes {stable_mosaic.version = 11 : i64} {
  func.func @_wavelet_kernel(%arg0: i32, %arg1: memref<1x8x2x8x16xf32, #tpu.memory_space<vmem>>, %arg2: memref<16x32xbf16, #tpu.memory_space<vmem>>, %arg3: memref<16x32xbf16, #tpu.memory_space<vmem>>, %arg4: memref<9x32xf32, #tpu.memory_space<vmem>>, %arg5: memref<1x32xf32, #tpu.memory_space<vmem>>, %arg6: memref<32x16xbf16, #tpu.memory_space<vmem>>, %arg7: memref<1x16xf32, #tpu.memory_space<vmem>>, %arg8: memref<32x16xbf16, #tpu.memory_space<vmem>>, %arg9: memref<1x16xf32, #tpu.memory_space<vmem>>, %arg10: memref<1x8x2x8x16xf32, #tpu.memory_space<vmem>>, %arg11: memref<10x10x32xf32, #tpu.memory_space<vmem>>) attributes {dimension_semantics = [#tpu.dimension_semantics<parallel>], iteration_bounds = array<i64: 2>, scalar_prefetch = 0 : i64, scratch_operands = 1 : i64, tpu.core_type = #tpu.core_type<tc>, window_params = [{transform_indices = @transform_0, window_bounds = array<i64: 1, 8, 2, 8, 16>}, {pipeline_mode = #tpu.pipeline_mode<synchronous>, transform_indices = @transform_1, window_bounds = array<i64: 16, 32>}, {pipeline_mode = #tpu.pipeline_mode<synchronous>, transform_indices = @transform_2, window_bounds = array<i64: 16, 32>}, {pipeline_mode = #tpu.pipeline_mode<synchronous>, transform_indices = @transform_3, window_bounds = array<i64: 9, 32>}, {pipeline_mode = #tpu.pipeline_mode<synchronous>, transform_indices = @transform_4, window_bounds = array<i64: 1, 32>}, {pipeline_mode = #tpu.pipeline_mode<synchronous>, transform_indices = @transform_5, window_bounds = array<i64: 32, 16>}, {pipeline_mode = #tpu.pipeline_mode<synchronous>, transform_indices = @transform_6, window_bounds = array<i64: 1, 16>}, {pipeline_mode = #tpu.pipeline_mode<synchronous>, transform_indices = @transform_7, window_bounds = array<i64: 32, 16>}, {pipeline_mode = #tpu.pipeline_mode<synchronous>, transform_indices = @transform_8, window_bounds = array<i64: 1, 16>}, {transform_indices = @transform_9, window_bounds = array<i64: 1, 8, 2, 8, 16>}]} {
    %c0 = arith.constant 0 : index
    %c0_0 = arith.constant 0 : index
    %c0_1 = arith.constant 0 : index
    %c0_2 = arith.constant 0 : index
    %c0_3 = arith.constant 0 : index
    %0 = vector.load %arg1[%c0, %c0_0, %c0_1, %c0_2, %c0_3] : memref<1x8x2x8x16xf32, #tpu.memory_space<vmem>>, vector<1x8x1x8x16xf32>
    %1 = vector.shape_cast %0 : vector<1x8x1x8x16xf32> to vector<8x8x16xf32>
    %2 = vector.shape_cast %1 : vector<8x8x16xf32> to vector<64x16xf32>
    %3 = arith.truncf %2 : vector<64x16xf32> to vector<64x16xbf16>
    %c0_4 = arith.constant 0 : index
    %c0_5 = arith.constant 0 : index
    %c1 = arith.constant 1 : index
    %c0_6 = arith.constant 0 : index
    %c0_7 = arith.constant 0 : index
    %4 = vector.load %arg1[%c0_4, %c0_5, %c1, %c0_6, %c0_7] : memref<1x8x2x8x16xf32, #tpu.memory_space<vmem>>, vector<1x8x1x8x16xf32>
    %5 = vector.shape_cast %4 : vector<1x8x1x8x16xf32> to vector<8x8x16xf32>
    %6 = vector.shape_cast %5 : vector<8x8x16xf32> to vector<64x16xf32>
    %7 = arith.truncf %6 : vector<64x16xf32> to vector<64x16xbf16>
    %c0_8 = arith.constant 0 : index
    %c0_9 = arith.constant 0 : index
    %8 = vector.load %arg2[%c0_8, %c0_9] : memref<16x32xbf16, #tpu.memory_space<vmem>>, vector<16x32xbf16>
    %cst = arith.constant dense<0.000000e+00> : vector<64x32xf32>
    %9 = tpu.matmul %3, %8, %cst {dimension_numbers = #tpu.dot_dimension_numbers<[1], [0], [0], [1], [0, 0, 1, 1], [], []>} : vector<64x16xbf16>, vector<16x32xbf16>, vector<64x32xf32> -> vector<64x32xf32>
    %c0_10 = arith.constant 0 : index
    %c0_11 = arith.constant 0 : index
    %10 = vector.load %arg3[%c0_10, %c0_11] : memref<16x32xbf16, #tpu.memory_space<vmem>>, vector<16x32xbf16>
    %cst_12 = arith.constant dense<0.000000e+00> : vector<64x32xf32>
    %11 = tpu.matmul %7, %10, %cst_12 {dimension_numbers = #tpu.dot_dimension_numbers<[1], [0], [0], [1], [0, 0, 1, 1], [], []>} : vector<64x16xbf16>, vector<16x32xbf16>, vector<64x32xf32> -> vector<64x32xf32>
    %12 = arith.addf %9, %11 : vector<64x32xf32>
    %cst_13 = arith.constant 0.000000e+00 : f32
    %13 = vector.broadcast %cst_13 : f32 to vector<10x10x32xf32>
    %c0_14 = arith.constant 0 : index
    %c0_15 = arith.constant 0 : index
    %c0_16 = arith.constant 0 : index
    %14 = vector.load %arg11[%c0_14, %c0_15, %c0_16] : memref<10x10x32xf32, #tpu.memory_space<vmem>>, vector<10x10x32xf32>
    tpu.vector_store %arg11[%c0_14, %c0_15, %c0_16], %13 {strides = array<i32>} : memref<10x10x32xf32, #tpu.memory_space<vmem>>, vector<10x10x32xf32>,
    %15 = vector.shape_cast %12 : vector<64x32xf32> to vector<8x8x32xf32>
    %c1_17 = arith.constant 1 : index
    %c1_18 = arith.constant 1 : index
    %c0_19 = arith.constant 0 : index
    %16 = vector.load %arg11[%c1_17, %c1_18, %c0_19] : memref<10x10x32xf32, #tpu.memory_space<vmem>>, vector<8x8x32xf32>
    tpu.vector_store %arg11[%c1_17, %c1_18, %c0_19], %15 {strides = array<i32>} : memref<10x10x32xf32, #tpu.memory_space<vmem>>, vector<8x8x32xf32>,
    %cst_20 = arith.constant 0.000000e+00 : f32
    %17 = vector.broadcast %cst_20 : f32 to vector<8x8x32xf32>
    %c0_21 = arith.constant 0 : index
    %c0_22 = arith.constant 0 : index
    %18 = vector.load %arg5[%c0_21, %c0_22] : memref<1x32xf32, #tpu.memory_space<vmem>>, vector<1x32xf32>
    %19 = vector.shape_cast %18 : vector<1x32xf32> to vector<32xf32>
    %20 = vector.shape_cast %19 : vector<32xf32> to vector<1x1x32xf32>
    %21 = vector.broadcast %20 : vector<1x1x32xf32> to vector<8x8x32xf32>
    %22 = arith.addf %17, %21 : vector<8x8x32xf32>
    %c0_23 = arith.constant 0 : index
    %c0_24 = arith.constant 0 : index
    %c0_25 = arith.constant 0 : index
    %23 = vector.load %arg11[%c0_23, %c0_24, %c0_25] : memref<10x10x32xf32, #tpu.memory_space<vmem>>, vector<8x8x32xf32>
    %c0_26 = arith.constant 0 : index
    %c0_27 = arith.constant 0 : index
    %24 = vector.load %arg4[%c0_26, %c0_27] : memref<9x32xf32, #tpu.memory_space<vmem>>, vector<1x32xf32>
    %25 = vector.shape_cast %24 : vector<1x32xf32> to vector<32xf32>
    %26 = vector.shape_cast %25 : vector<32xf32> to vector<1x1x32xf32>
    %27 = vector.broadcast %26 : vector<1x1x32xf32> to vector<8x8x32xf32>
    %28 = arith.mulf %23, %27 : vector<8x8x32xf32>
    %29 = arith.addf %22, %28 : vector<8x8x32xf32>
    %c0_28 = arith.constant 0 : index
    %c1_29 = arith.constant 1 : index
    %c0_30 = arith.constant 0 : index
    %30 = vector.load %arg11[%c0_28, %c1_29, %c0_30] : memref<10x10x32xf32, #tpu.memory_space<vmem>>, vector<8x8x32xf32>
    %c1_31 = arith.constant 1 : index
    %c0_32 = arith.constant 0 : index
    %31 = vector.load %arg4[%c1_31, %c0_32] : memref<9x32xf32, #tpu.memory_space<vmem>>, vector<1x32xf32>
    %32 = vector.shape_cast %31 : vector<1x32xf32> to vector<32xf32>
    %33 = vector.shape_cast %32 : vector<32xf32> to vector<1x1x32xf32>
    %34 = vector.broadcast %33 : vector<1x1x32xf32> to vector<8x8x32xf32>
    %35 = arith.mulf %30, %34 : vector<8x8x32xf32>
    %36 = arith.addf %29, %35 : vector<8x8x32xf32>
    %c0_33 = arith.constant 0 : index
    %c2 = arith.constant 2 : index
    %c0_34 = arith.constant 0 : index
    %37 = vector.load %arg11[%c0_33, %c2, %c0_34] : memref<10x10x32xf32, #tpu.memory_space<vmem>>, vector<8x8x32xf32>
    %c2_35 = arith.constant 2 : index
    %c0_36 = arith.constant 0 : index
    %38 = vector.load %arg4[%c2_35, %c0_36] : memref<9x32xf32, #tpu.memory_space<vmem>>, vector<1x32xf32>
    %39 = vector.shape_cast %38 : vector<1x32xf32> to vector<32xf32>
    %40 = vector.shape_cast %39 : vector<32xf32> to vector<1x1x32xf32>
    %41 = vector.broadcast %40 : vector<1x1x32xf32> to vector<8x8x32xf32>
    %42 = arith.mulf %37, %41 : vector<8x8x32xf32>
    %43 = arith.addf %36, %42 : vector<8x8x32xf32>
    %c1_37 = arith.constant 1 : index
    %c0_38 = arith.constant 0 : index
    %c0_39 = arith.constant 0 : index
    %44 = vector.load %arg11[%c1_37, %c0_38, %c0_39] : memref<10x10x32xf32, #tpu.memory_space<vmem>>, vector<8x8x32xf32>
    %c3 = arith.constant 3 : index
    %c0_40 = arith.constant 0 : index
    %45 = vector.load %arg4[%c3, %c0_40] : memref<9x32xf32, #tpu.memory_space<vmem>>, vector<1x32xf32>
    %46 = vector.shape_cast %45 : vector<1x32xf32> to vector<32xf32>
    %47 = vector.shape_cast %46 : vector<32xf32> to vector<1x1x32xf32>
    %48 = vector.broadcast %47 : vector<1x1x32xf32> to vector<8x8x32xf32>
    %49 = arith.mulf %44, %48 : vector<8x8x32xf32>
    %50 = arith.addf %43, %49 : vector<8x8x32xf32>
    %c1_41 = arith.constant 1 : index
    %c1_42 = arith.constant 1 : index
    %c0_43 = arith.constant 0 : index
    %51 = vector.load %arg11[%c1_41, %c1_42, %c0_43] : memref<10x10x32xf32, #tpu.memory_space<vmem>>, vector<8x8x32xf32>
    %c4 = arith.constant 4 : index
    %c0_44 = arith.constant 0 : index
    %52 = vector.load %arg4[%c4, %c0_44] : memref<9x32xf32, #tpu.memory_space<vmem>>, vector<1x32xf32>
    %53 = vector.shape_cast %52 : vector<1x32xf32> to vector<32xf32>
    %54 = vector.shape_cast %53 : vector<32xf32> to vector<1x1x32xf32>
    %55 = vector.broadcast %54 : vector<1x1x32xf32> to vector<8x8x32xf32>
    %56 = arith.mulf %51, %55 : vector<8x8x32xf32>
    %57 = arith.addf %50, %56 : vector<8x8x32xf32>
    %c1_45 = arith.constant 1 : index
    %c2_46 = arith.constant 2 : index
    %c0_47 = arith.constant 0 : index
    %58 = vector.load %arg11[%c1_45, %c2_46, %c0_47] : memref<10x10x32xf32, #tpu.memory_space<vmem>>, vector<8x8x32xf32>
    %c5 = arith.constant 5 : index
    %c0_48 = arith.constant 0 : index
    %59 = vector.load %arg4[%c5, %c0_48] : memref<9x32xf32, #tpu.memory_space<vmem>>, vector<1x32xf32>
    %60 = vector.shape_cast %59 : vector<1x32xf32> to vector<32xf32>
    %61 = vector.shape_cast %60 : vector<32xf32> to vector<1x1x32xf32>
    %62 = vector.broadcast %61 : vector<1x1x32xf32> to vector<8x8x32xf32>
    %63 = arith.mulf %58, %62 : vector<8x8x32xf32>
    %64 = arith.addf %57, %63 : vector<8x8x32xf32>
    %c2_49 = arith.constant 2 : index
    %c0_50 = arith.constant 0 : index
    %c0_51 = arith.constant 0 : index
    %65 = vector.load %arg11[%c2_49, %c0_50, %c0_51] : memref<10x10x32xf32, #tpu.memory_space<vmem>>, vector<8x8x32xf32>
    %c6 = arith.constant 6 : index
    %c0_52 = arith.constant 0 : index
    %66 = vector.load %arg4[%c6, %c0_52] : memref<9x32xf32, #tpu.memory_space<vmem>>, vector<1x32xf32>
    %67 = vector.shape_cast %66 : vector<1x32xf32> to vector<32xf32>
    %68 = vector.shape_cast %67 : vector<32xf32> to vector<1x1x32xf32>
    %69 = vector.broadcast %68 : vector<1x1x32xf32> to vector<8x8x32xf32>
    %70 = arith.mulf %65, %69 : vector<8x8x32xf32>
    %71 = arith.addf %64, %70 : vector<8x8x32xf32>
    %c2_53 = arith.constant 2 : index
    %c1_54 = arith.constant 1 : index
    %c0_55 = arith.constant 0 : index
    %72 = vector.load %arg11[%c2_53, %c1_54, %c0_55] : memref<10x10x32xf32, #tpu.memory_space<vmem>>, vector<8x8x32xf32>
    %c7 = arith.constant 7 : index
    %c0_56 = arith.constant 0 : index
    %73 = vector.load %arg4[%c7, %c0_56] : memref<9x32xf32, #tpu.memory_space<vmem>>, vector<1x32xf32>
    %74 = vector.shape_cast %73 : vector<1x32xf32> to vector<32xf32>
    %75 = vector.shape_cast %74 : vector<32xf32> to vector<1x1x32xf32>
    %76 = vector.broadcast %75 : vector<1x1x32xf32> to vector<8x8x32xf32>
    %77 = arith.mulf %72, %76 : vector<8x8x32xf32>
    %78 = arith.addf %71, %77 : vector<8x8x32xf32>
    %c2_57 = arith.constant 2 : index
    %c2_58 = arith.constant 2 : index
    %c0_59 = arith.constant 0 : index
    %79 = vector.load %arg11[%c2_57, %c2_58, %c0_59] : memref<10x10x32xf32, #tpu.memory_space<vmem>>, vector<8x8x32xf32>
    %c8 = arith.constant 8 : index
    %c0_60 = arith.constant 0 : index
    %80 = vector.load %arg4[%c8, %c0_60] : memref<9x32xf32, #tpu.memory_space<vmem>>, vector<1x32xf32>
    %81 = vector.shape_cast %80 : vector<1x32xf32> to vector<32xf32>
    %82 = vector.shape_cast %81 : vector<32xf32> to vector<1x1x32xf32>
    %83 = vector.broadcast %82 : vector<1x1x32xf32> to vector<8x8x32xf32>
    %84 = arith.mulf %79, %83 : vector<8x8x32xf32>
    %85 = arith.addf %78, %84 : vector<8x8x32xf32>
    %86 = vector.shape_cast %85 : vector<8x8x32xf32> to vector<64x32xf32>
    %87 = arith.truncf %86 : vector<64x32xf32> to vector<64x32xbf16>
    %c0_61 = arith.constant 0 : index
    %c0_62 = arith.constant 0 : index
    %88 = vector.load %arg6[%c0_61, %c0_62] : memref<32x16xbf16, #tpu.memory_space<vmem>>, vector<32x16xbf16>
    %cst_63 = arith.constant dense<0.000000e+00> : vector<64x16xf32>
    %89 = tpu.matmul %87, %88, %cst_63 {dimension_numbers = #tpu.dot_dimension_numbers<[1], [0], [0], [1], [0, 0, 1, 1], [], []>} : vector<64x32xbf16>, vector<32x16xbf16>, vector<64x16xf32> -> vector<64x16xf32>
    %c0_64 = arith.constant 0 : index
    %c0_65 = arith.constant 0 : index
    %90 = vector.load %arg7[%c0_64, %c0_65] : memref<1x16xf32, #tpu.memory_space<vmem>>, vector<1x16xf32>
    %91 = vector.broadcast %90 : vector<1x16xf32> to vector<64x16xf32>
    %92 = arith.addf %89, %91 : vector<64x16xf32>
    %c0_66 = arith.constant 0 : index
    %c0_67 = arith.constant 0 : index
    %93 = vector.load %arg8[%c0_66, %c0_67] : memref<32x16xbf16, #tpu.memory_space<vmem>>, vector<32x16xbf16>
    %cst_68 = arith.constant dense<0.000000e+00> : vector<64x16xf32>
    %94 = tpu.matmul %87, %93, %cst_68 {dimension_numbers = #tpu.dot_dimension_numbers<[1], [0], [0], [1], [0, 0, 1, 1], [], []>} : vector<64x32xbf16>, vector<32x16xbf16>, vector<64x16xf32> -> vector<64x16xf32>
    %c0_69 = arith.constant 0 : index
    %c0_70 = arith.constant 0 : index
    %95 = vector.load %arg9[%c0_69, %c0_70] : memref<1x16xf32, #tpu.memory_space<vmem>>, vector<1x16xf32>
    %96 = vector.broadcast %95 : vector<1x16xf32> to vector<64x16xf32>
    %97 = arith.addf %94, %96 : vector<64x16xf32>
    %98 = vector.shape_cast %92 : vector<64x16xf32> to vector<8x8x16xf32>
    %c0_71 = arith.constant 0 : index
    %c0_72 = arith.constant 0 : index
    %c0_73 = arith.constant 0 : index
    %c0_74 = arith.constant 0 : index
    %c0_75 = arith.constant 0 : index
    %99 = vector.load %arg10[%c0_71, %c0_72, %c0_73, %c0_74, %c0_75] : memref<1x8x2x8x16xf32, #tpu.memory_space<vmem>>, vector<1x8x1x8x16xf32>
    %100 = vector.shape_cast %99 : vector<1x8x1x8x16xf32> to vector<8x8x16xf32>
    %101 = vector.shape_cast %98 : vector<8x8x16xf32> to vector<1x8x1x8x16xf32>
    tpu.vector_store %arg10[%c0_71, %c0_72, %c0_73, %c0_74, %c0_75], %101 {strides = array<i32>} : memref<1x8x2x8x16xf32, #tpu.memory_space<vmem>>, vector<1x8x1x8x16xf32>,
    %102 = vector.shape_cast %97 : vector<64x16xf32> to vector<8x8x16xf32>
    %c0_76 = arith.constant 0 : index
    %c0_77 = arith.constant 0 : index
    %c1_78 = arith.constant 1 : index
    %c0_79 = arith.constant 0 : index
    %c0_80 = arith.constant 0 : index
    %103 = vector.load %arg10[%c0_76, %c0_77, %c1_78, %c0_79, %c0_80] : memref<1x8x2x8x16xf32, #tpu.memory_space<vmem>>, vector<1x8x1x8x16xf32>
    %104 = vector.shape_cast %103 : vector<1x8x1x8x16xf32> to vector<8x8x16xf32>
    %105 = vector.shape_cast %102 : vector<8x8x16xf32> to vector<1x8x1x8x16xf32>
    tpu.vector_store %arg10[%c0_76, %c0_77, %c1_78, %c0_79, %c0_80], %105 {strides = array<i32>} : memref<1x8x2x8x16xf32, #tpu.memory_space<vmem>>, vector<1x8x1x8x16xf32>,
    return
  }
  func.func @transform_0(%arg0: i32) -> (i32, i32, i32, i32, i32) {
    %c0_i32 = arith.constant 0 : i32
    %c0_i32_0 = arith.constant 0 : i32
    %c0_i32_1 = arith.constant 0 : i32
    %c0_i32_2 = arith.constant 0 : i32
    %c0_i32_3 = arith.constant 0 : i32
    return %arg0, %c0_i32, %c0_i32_0, %c0_i32_1, %c0_i32_2 : i32, i32, i32, i32, i32
  }
  func.func @transform_1(%arg0: i32) -> (i32, i32) {
    %c0_i32 = arith.constant 0 : i32
    %c0_i32_0 = arith.constant 0 : i32
    %c0_i32_1 = arith.constant 0 : i32
    return %c0_i32, %c0_i32_0 : i32, i32
  }
  func.func @transform_2(%arg0: i32) -> (i32, i32) {
    %c0_i32 = arith.constant 0 : i32
    %c0_i32_0 = arith.constant 0 : i32
    %c0_i32_1 = arith.constant 0 : i32
    return %c0_i32, %c0_i32_0 : i32, i32
  }
  func.func @transform_3(%arg0: i32) -> (i32, i32) {
    %c0_i32 = arith.constant 0 : i32
    %c0_i32_0 = arith.constant 0 : i32
    %c0_i32_1 = arith.constant 0 : i32
    return %c0_i32, %c0_i32_0 : i32, i32
  }
  func.func @transform_4(%arg0: i32) -> (i32, i32) {
    %c0_i32 = arith.constant 0 : i32
    %c0_i32_0 = arith.constant 0 : i32
    %c0_i32_1 = arith.constant 0 : i32
    return %c0_i32, %c0_i32_0 : i32, i32
  }
  func.func @transform_5(%arg0: i32) -> (i32, i32) {
    %c0_i32 = arith.constant 0 : i32
    %c0_i32_0 = arith.constant 0 : i32
    %c0_i32_1 = arith.constant 0 : i32
    return %c0_i32, %c0_i32_0 : i32, i32
  }
  func.func @transform_6(%arg0: i32) -> (i32, i32) {
    %c0_i32 = arith.constant 0 : i32
    %c0_i32_0 = arith.constant 0 : i32
    %c0_i32_1 = arith.constant 0 : i32
    return %c0_i32, %c0_i32_0 : i32, i32
  }
  func.func @transform_7(%arg0: i32) -> (i32, i32) {
    %c0_i32 = arith.constant 0 : i32
    %c0_i32_0 = arith.constant 0 : i32
    %c0_i32_1 = arith.constant 0 : i32
    return %c0_i32, %c0_i32_0 : i32, i32
  }
  func.func @transform_8(%arg0: i32) -> (i32, i32) {
    %c0_i32 = arith.constant 0 : i32
    %c0_i32_0 = arith.constant 0 : i32
    %c0_i32_1 = arith.constant 0 : i32
    return %c0_i32, %c0_i32_0 : i32, i32
  }
  func.func @transform_9(%arg0: i32) -> (i32, i32, i32, i32, i32) {
    %c0_i32 = arith.constant 0 : i32
    %c0_i32_0 = arith.constant 0 : i32
    %c0_i32_1 = arith.constant 0 : i32
    %c0_i32_2 = arith.constant 0 : i32
    %c0_i32_3 = arith.constant 0 : i32
    return %arg0, %c0_i32, %c0_i32_0, %c0_i32_1, %c0_i32_2 : i32, i32, i32, i32, i32
  }
}

</mosaic_0001>

<llo_original>
// kernel: resnet_block_forward.4
$region0: #{resnet_block_forward.4}
  #allocation0 [shape = 'u32[]', space=smem, size = 0x4, offset = 0x4, fixed_abs, tag = 'smem constant byte address 0x4 - core index']
  #allocation1 [shape = 'u32[144,128]{1,0:T(1,128)}', space=vmem, size = 0x12000, scoped, tag = 'internal scratch']
  #allocation2 [shape = 'f32[10,10,32]{2,1,0:T(8,128)}', space=vmem, size = 0x14000, scoped, tag = 'scratch operand']
  %s0 = inlined_call_operand.vmem [shape: f32[2,8,2,8,16], index: 0, kind: input, shape index: {}]
  %s1 = inlined_call_operand.vmem [shape: bf16[16,32], index: 1, kind: input, shape index: {}]
  %s2 = inlined_call_operand.vmem [shape: bf16[16,32], index: 2, kind: input, shape index: {}]
  %s3 = inlined_call_operand.vmem [shape: f32[9,32], index: 3, kind: input, shape index: {}]
  %s4 = inlined_call_operand.vmem [shape: f32[1,32], index: 4, kind: input, shape index: {}]
  %s5 = inlined_call_operand.vmem [shape: bf16[32,16], index: 5, kind: input, shape index: {}]
  %s6 = inlined_call_operand.vmem [shape: f32[1,16], index: 6, kind: input, shape index: {}]
  %s7 = inlined_call_operand.vmem [shape: bf16[32,16], index: 7, kind: input, shape index: {}]
  %s8 = inlined_call_operand.vmem [shape: f32[1,16], index: 8, kind: input, shape index: {}]
  %s9 = inlined_call_operand.vmem [shape: f32[2,8,2,8,16], index: 9, kind: output, shape index: {}]
  %s10 = sld [smem:[#allocation0]]
  $region69: #{resnet_block_forward.4} parent=0
    _
  %s12 = ssub.s32 1, %s10
  %s13 = scalar_select 0, %s12, %s10
  loop: start=0, step=1, limit=4
  $region2: #{resnet_block_forward.4} parent=0 // loop_pre_header
    _
  $region3: #{resnet_block_forward.4} parent=0 // loop_header
    %s15 = sphi 0, %s19
    %p16 = scmp.ge.s32.totalorder %s15, 4
    %s25 = sphi 0, %s27
    %s28 = sphi 0, %s25
    %s29 = sphi 0, %s28
    %s45 = sphi 0, %s29
    %s49 = sphi 0, %s49
    %s51 = sphi 0, %s49
    %s52 = sphi 0, %s51
    %s66 = sphi 0, %s52
    %s70 = sphi 0, %s70
    %s72 = sphi 0, %s70
    %s73 = sphi 0, %s72
    %s87 = sphi 0, %s73
    %s91 = sphi 0, %s91
    %s93 = sphi 0, %s91
    %s94 = sphi 0, %s93
    %s108 = sphi 0, %s94
    %s112 = sphi 0, %s112
    %s114 = sphi 0, %s112
    %s115 = sphi 0, %s114
    %s129 = sphi 0, %s115
    %s133 = sphi 0, %s133
    %s135 = sphi 0, %s133
    %s136 = sphi 0, %s135
    %s150 = sphi 0, %s136
    %s154 = sphi 0, %s154
    %s156 = sphi 0, %s154
    %s157 = sphi 0, %s156
    %s171 = sphi 0, %s157
    %s175 = sphi 0, %s175
    %s177 = sphi 0, %s175
    %s178 = sphi 0, %s177
    %s192 = sphi 0, %s178
    %s196 = sphi 0, %s196
    %s198 = sphi 0, %s196
    %s199 = sphi 0, %s198
    %s213 = sphi 0, %s199
    %s219 = sphi 0, %s221
    %s222 = sphi 0, %s219
    %s223 = sphi 0, %s222
    %s239 = sphi 0, %s223
  $region4: #{resnet_block_forward.4} parent=0 // loop_header_branch
    %18 = sbr.rel (%p16) target = $region8
  $region5: #{resnet_block_forward.4} parent=0 // loop_body
    %s20 = ssub.s32 %s15, 1
    %s21 = ssub.s32 %s15, 2
    %s22 = sadd.s32 %s15, 1
    %s23 = ssub.s32 %s15, %s22
    %p24 = scmp.eq.s32.totalorder %s23, 0
    %s26 = sadd.s32 %s25, 1
    %s27 = scalar_select %p24, %s25, %s26
    %p30 = pneg %p24
    %p31 = scmp.eq.s32.totalorder %s15, 1
    %p32 = por %p30, %p31
    %p33 = scmp.ne.s32.totalorder %s25, %s28
    %p34 = scmp.eq.s32.totalorder %s15, 0
    %p35 = por %p33, %p34
    %p36 = scmp.ne.s32.totalorder %s25, %s28
    %p37 = scmp.eq.s32.totalorder %s20, 1
    %p38 = por %p36, %p37
    %p39 = scmp.ne.s32.totalorder %s28, %s29
    %p40 = scmp.eq.s32.totalorder %s20, 0
    %p41 = por %p39, %p40
    %p42 = scmp.ne.s32.totalorder %s28, %s29
    %p43 = scmp.eq.s32.totalorder %s21, 1
    %p44 = por %p42, %p43
    %p46 = scmp.ne.s32.totalorder %s29, %s45
    %p47 = scmp.eq.s32.totalorder %s21, 0
    %p48 = por %p46, %p47
    %s50 = sadd.s32 %s49, 1
    %p53 = scmp.eq.s32.totalorder %s15, 1
    %p54 = scmp.ne.s32.totalorder %s49, %s51
    %p55 = scmp.eq.s32.totalorder %s15, 0
    %p56 = por %p54, %p55
    %p57 = scmp.ne.s32.totalorder %s49, %s51
    %p58 = scmp.eq.s32.totalorder %s20, 1
    %p59 = por %p57, %p58
    %p60 = scmp.ne.s32.totalorder %s51, %s52
    %p61 = scmp.eq.s32.totalorder %s20, 0
    %p62 = por %p60, %p61
    %p63 = scmp.ne.s32.totalorder %s51, %s52
    %p64 = scmp.eq.s32.totalorder %s21, 1
    %p65 = por %p63, %p64
    %p67 = scmp.ne.s32.totalorder %s52, %s66
    %p68 = scmp.eq.s32.totalorder %s21, 0
    %p69 = por %p67, %p68
    %s71 = sadd.s32 %s70, 1
    %p74 = scmp.eq.s32.totalorder %s15, 1
    %p75 = scmp.ne.s32.totalorder %s70, %s72
    %p76 = scmp.eq.s32.totalorder %s15, 0
    %p77 = por %p75, %p76
    %p78 = scmp.ne.s32.totalorder %s70, %s72
    %p79 = scmp.eq.s32.totalorder %s20, 1
    %p80 = por %p78, %p79
    %p81 = scmp.ne.s32.totalorder %s72, %s73
    %p82 = scmp.eq.s32.totalorder %s20, 0
    %p83 = por %p81, %p82
    %p84 = scmp.ne.s32.totalorder %s72, %s73
    %p85 = scmp.eq.s32.totalorder %s21, 1
    %p86 = por %p84, %p85
    %p88 = scmp.ne.s32.totalorder %s73, %s87
    %p89 = scmp.eq.s32.totalorder %s21, 0
    %p90 = por %p88, %p89
    %s92 = sadd.s32 %s91, 1
    %p95 = scmp.eq.s32.totalorder %s15, 1
    %p96 = scmp.ne.s32.totalorder %s91, %s93
    %p97 = scmp.eq.s32.totalorder %s15, 0
    %p98 = por %p96, %p97
    %p99 = scmp.ne.s32.totalorder %s91, %s93
    %p100 = scmp.eq.s32.totalorder %s20, 1
    %p101 = por %p99, %p100
    %p102 = scmp.ne.s32.totalorder %s93, %s94
    %p103 = scmp.eq.s32.totalorder %s20, 0
    %p104 = por %p102, %p103
    %p105 = scmp.ne.s32.totalorder %s93, %s94
    %p106 = scmp.eq.s32.totalorder %s21, 1
    %p107 = por %p105, %p106
    %p109 = scmp.ne.s32.totalorder %s94, %s108
    %p110 = scmp.eq.s32.totalorder %s21, 0
    %p111 = por %p109, %p110
    %s113 = sadd.s32 %s112, 1
    %p116 = scmp.eq.s32.totalorder %s15, 1
    %p117 = scmp.ne.s32.totalorder %s112, %s114
    %p118 = scmp.eq.s32.totalorder %s15, 0
    %p119 = por %p117, %p118
    %p120 = scmp.ne.s32.totalorder %s112, %s114
    %p121 = scmp.eq.s32.totalorder %s20, 1
    %p122 = por %p120, %p121
    %p123 = scmp.ne.s32.totalorder %s114, %s115
    %p124 = scmp.eq.s32.totalorder %s20, 0
    %p125 = por %p123, %p124
    %p126 = scmp.ne.s32.totalorder %s114, %s115
    %p127 = scmp.eq.s32.totalorder %s21, 1
    %p128 = por %p126, %p127
    %p130 = scmp.ne.s32.totalorder %s115, %s129
    %p131 = scmp.eq.s32.totalorder %s21, 0
    %p132 = por %p130, %p131
    %s134 = sadd.s32 %s133, 1
    %p137 = scmp.eq.s32.totalorder %s15, 1
    %p138 = scmp.ne.s32.totalorder %s133, %s135
    %p139 = scmp.eq.s32.totalorder %s15, 0
    %p140 = por %p138, %p139
    %p141 = scmp.ne.s32.totalorder %s133, %s135
    %p142 = scmp.eq.s32.totalorder %s20, 1
    %p143 = por %p141, %p142
    %p144 = scmp.ne.s32.totalorder %s135, %s136
    %p145 = scmp.eq.s32.totalorder %s20, 0
    %p146 = por %p144, %p145
    %p147 = scmp.ne.s32.totalorder %s135, %s136
    %p148 = scmp.eq.s32.totalorder %s21, 1
    %p149 = por %p147, %p148
    %p151 = scmp.ne.s32.totalorder %s136, %s150
    %p152 = scmp.eq.s32.totalorder %s21, 0
    %p153 = por %p151, %p152
    %s155 = sadd.s32 %s154, 1
    %p158 = scmp.eq.s32.totalorder %s15, 1
    %p159 = scmp.ne.s32.totalorder %s154, %s156
    %p160 = scmp.eq.s32.totalorder %s15, 0
    %p161 = por %p159, %p160
    %p162 = scmp.ne.s32.totalorder %s154, %s156
    %p163 = scmp.eq.s32.totalorder %s20, 1
    %p164 = por %p162, %p163
    %p165 = scmp.ne.s32.totalorder %s156, %s157
    %p166 = scmp.eq.s32.totalorder %s20, 0
    %p167 = por %p165, %p166
    %p168 = scmp.ne.s32.totalorder %s156, %s157
    %p169 = scmp.eq.s32.totalorder %s21, 1
    %p170 = por %p168, %p169
    %p172 = scmp.ne.s32.totalorder %s157, %s171
    %p173 = scmp.eq.s32.totalorder %s21, 0
    %p174 = por %p172, %p173
    %s176 = sadd.s32 %s175, 1
    %p179 = scmp.eq.s32.totalorder %s15, 1
    %p180 = scmp.ne.s32.totalorder %s175, %s177
    %p181 = scmp.eq.s32.totalorder %s15, 0
    %p182 = por %p180, %p181
    %p183 = scmp.ne.s32.totalorder %s175, %s177
    %p184 = scmp.eq.s32.totalorder %s20, 1
    %p185 = por %p183, %p184
    %p186 = scmp.ne.s32.totalorder %s177, %s178
    %p187 = scmp.eq.s32.totalorder %s20, 0
    %p188 = por %p186, %p187
    %p189 = scmp.ne.s32.totalorder %s177, %s178
    %p190 = scmp.eq.s32.totalorder %s21, 1
    %p191 = por %p189, %p190
    %p193 = scmp.ne.s32.totalorder %s178, %s192
    %p194 = scmp.eq.s32.totalorder %s21, 0
    %p195 = por %p193, %p194
    %s197 = sadd.s32 %s196, 1
    %p200 = scmp.eq.s32.totalorder %s15, 1
    %p201 = scmp.ne.s32.totalorder %s196, %s198
    %p202 = scmp.eq.s32.totalorder %s15, 0
    %p203 = por %p201, %p202
    %p204 = scmp.ne.s32.totalorder %s196, %s198
    %p205 = scmp.eq.s32.totalorder %s20, 1
    %p206 = por %p204, %p205
    %p207 = scmp.ne.s32.totalorder %s198, %s199
    %p208 = scmp.eq.s32.totalorder %s20, 0
    %p209 = por %p207, %p208
    %p210 = scmp.ne.s32.totalorder %s198, %s199
    %p211 = scmp.eq.s32.totalorder %s21, 1
    %p212 = por %p210, %p211
    %p214 = scmp.ne.s32.totalorder %s199, %s213
    %p215 = scmp.eq.s32.totalorder %s21, 0
    %p216 = por %p214, %p215
    %s217 = ssub.s32 %s15, %s22
    %p218 = scmp.eq.s32.totalorder %s217, 0
    %s220 = sadd.s32 %s219, 1
    %s221 = scalar_select %p218, %s219, %s220
    %p224 = pneg %p218
    %p225 = scmp.eq.s32.totalorder %s15, 1
    %p226 = por %p224, %p225
    %p227 = scmp.ne.s32.totalorder %s219, %s222
    %p228 = scmp.eq.s32.totalorder %s15, 0
    %p229 = por %p227, %p228
    %p230 = scmp.ne.s32.totalorder %s219, %s222
    %p231 = scmp.eq.s32.totalorder %s20, 1
    %p232 = por %p230, %p231
    %p233 = scmp.ne.s32.totalorder %s222, %s223
    %p234 = scmp.eq.s32.totalorder %s20, 0
    %p235 = por %p233, %p234
    %p236 = scmp.ne.s32.totalorder %s222, %s223
    %p237 = scmp.eq.s32.totalorder %s21, 1
    %p238 = por %p236, %p237
    %p240 = scmp.ne.s32.totalorder %s223, %s239
    %p241 = scmp.eq.s32.totalorder %s21, 0
    %p242 = por %p240, %p241
    %p243 = scmp.le.s32.totalorder 1, %s15
    %p244 = scmp.lt.s32.totalorder %s15, 3
    %p245 = pnand %p243, %p244
    %p246 = pneg %p245
    // Predicated region
    $region9: #{resnet_block_forward.4} parent=5 // pred_check
      _
    $region10: #{resnet_block_forward.4} parent=5 // pred_check_branch
      %248 = sbr.rel (%p245) target = $region12
    $region11: #{resnet_block_forward.4} parent=5 // pred_region
      %s249 = ssub.s32 %s15, 1
      // Predicated region
      $region13: #{resnet_block_forward.4} parent=11 // pred_check
        %p250 = pneg %p62
      $region14: #{resnet_block_forward.4} parent=11 // pred_check_branch
        %252 = sbr.rel (%p250) target = $region16
      $region15: #{resnet_block_forward.4} parent=11 // pred_region
        _
      $region16: #{resnet_block_forward.4} parent=11 // pred_fallthru
        _
      // Predicated region
      $region17: #{resnet_block_forward.4} parent=11 // pred_check
        %p253 = pneg %p83
      $region18: #{resnet_block_forward.4} parent=11 // pred_check_branch
        %255 = sbr.rel (%p253) target = $region20
      $region19: #{resnet_block_forward.4} parent=11 // pred_region
        _
      $region20: #{resnet_block_forward.4} parent=11 // pred_fallthru
        _
      // Predicated region
      $region21: #{resnet_block_forward.4} parent=11 // pred_check
        %p256 = pneg %p104
      $region22: #{resnet_block_forward.4} parent=11 // pred_check_branch
        %258 = sbr.rel (%p256) target = $region24
      $region23: #{resnet_block_forward.4} parent=11 // pred_region
        _
      $region24: #{resnet_block_forward.4} parent=11 // pred_fallthru
        _
      // Predicated region
      $region25: #{resnet_block_forward.4} parent=11 // pred_check
        %p259 = pneg %p125
      $region26: #{resnet_block_forward.4} parent=11 // pred_check_branch
        %261 = sbr.rel (%p259) target = $region28
      $region27: #{resnet_block_forward.4} parent=11 // pred_region
        _
      $region28: #{resnet_block_forward.4} parent=11 // pred_fallthru
        _
      // Predicated region
      $region29: #{resnet_block_forward.4} parent=11 // pred_check
        %p262 = pneg %p146
      $region30: #{resnet_block_forward.4} parent=11 // pred_check_branch
        %264 = sbr.rel (%p262) target = $region32
      $region31: #{resnet_block_forward.4} parent=11 // pred_region
        _
      $region32: #{resnet_block_forward.4} parent=11 // pred_fallthru
        _
      // Predicated region
      $region33: #{resnet_block_forward.4} parent=11 // pred_check
        %p265 = pneg %p167
      $region34: #{resnet_block_forward.4} parent=11 // pred_check_branch
        %267 = sbr.rel (%p265) target = $region36
      $region35: #{resnet_block_forward.4} parent=11 // pred_region
        _
      $region36: #{resnet_block_forward.4} parent=11 // pred_fallthru
        _
      // Predicated region
      $region37: #{resnet_block_forward.4} parent=11 // pred_check
        %p268 = pneg %p188
      $region38: #{resnet_block_forward.4} parent=11 // pred_check_branch
        %270 = sbr.rel (%p268) target = $region40
      $region39: #{resnet_block_forward.4} parent=11 // pred_region
        _
      $region40: #{resnet_block_forward.4} parent=11 // pred_fallthru
        _
      // Predicated region
      $region41: #{resnet_block_forward.4} parent=11 // pred_check
        %p271 = pneg %p209
      $region42: #{resnet_block_forward.4} parent=11 // pred_check_branch
        %273 = sbr.rel (%p271) target = $region44
      $region43: #{resnet_block_forward.4} parent=11 // pred_region
        _
      $region44: #{resnet_block_forward.4} parent=11 // pred_fallthru
        _
    $region12: #{resnet_block_forward.4} parent=5 // pred_fallthru
      _
    %p274 = scmp.lt.s32.totalorder %s15, 2
    // Predicated region
    $region45: #{resnet_block_forward.4} parent=5 // pred_check
      %p275 = pneg %p274
    $region46: #{resnet_block_forward.4} parent=5 // pred_check_branch
      %277 = sbr.rel (%p275) target = $region48
    $region47: #{resnet_block_forward.4} parent=5 // pred_region
      // Predicated region
      $region49: #{resnet_block_forward.4} parent=47 // pred_check
        %p278 = pneg %p35
      $region50: #{resnet_block_forward.4} parent=47 // pred_check_branch
        %280 = sbr.rel (%p278) target = $region52
      $region51: #{resnet_block_forward.4} parent=47 // pred_region
        %p281 = scmp.lt.s32.totalorder %s15, 1
        %s282 = scalar_select %p281, %s15, 1
        %s283 = smul.addr %s282, 16
        %s284 = smul.addr %s283, 8
        %s285 = scalar_lea.vmem %s0, %s284
      $region52: #{resnet_block_forward.4} parent=47 // pred_fallthru
        _
    $region48: #{resnet_block_forward.4} parent=5 // pred_fallthru
      _
    %p286 = scmp.le.s32.totalorder 1, %s15
    %p287 = scmp.lt.s32.totalorder %s15, 3
    %p288 = pnand %p286, %p287
    %p289 = pneg %p288
    // Predicated region
    $region53: #{resnet_block_forward.4} parent=5 // pred_check
      _
    $region54: #{resnet_block_forward.4} parent=5 // pred_check_branch
      %291 = sbr.rel (%p288) target = $region56
    $region55: #{resnet_block_forward.4} parent=5 // pred_region
      %s292 = ssub.s32 %s15, 1
      %p293 = scmp.lt.s32.totalorder %s20, 1
      %s294 = scalar_select %p293, %s20, 1
      %s295 = smul.addr %s294, 16
      %s296 = smul.addr %s295, 8
      %s297 = scalar_lea.vmem %s0, %s296
      %p298 = pneg %p41
      %p299 = pneg %p38
      %p300 = pneg %p62
      %p301 = pneg %p59
      %p302 = pneg %p83
      %p303 = pneg %p80
      %p304 = pneg %p104
      %p305 = pneg %p101
      %p306 = pneg %p125
      %p307 = pneg %p122
      %p308 = pneg %p146
      %p309 = pneg %p143
      %p310 = pneg %p167
      %p311 = pneg %p164
      %p312 = pneg %p188
      %p313 = pneg %p185
      %p314 = pneg %p209
      %p315 = pneg %p206
      %p316 = pneg %p235
      %p317 = pneg %p232
      %p318 = scmp.lt.s32.totalorder %s20, 1
      %s319 = scalar_select %p318, %s20, 1
      %s320 = smul.addr %s319, 16
      %s321 = smul.addr %s320, 8
      %s322 = scalar_lea.vmem %s9, %s321
      %p323 = scmp.lt.s32.totalorder %s20, 1
      %s324 = scalar_select %p323, %s20, 1
      %s325 = smul.addr %s324, 16
      %s326 = smul.addr %s325, 8
      %s327 = scalar_lea.vmem %s0, %s326
      %p328 = scmp.lt.s32.totalorder %s20, 1
      %s329 = scalar_select %p328, %s20, 1
      %s330 = smul.addr %s329, 16
      %s331 = smul.addr %s330, 8
      %s332 = scalar_lea.vmem %s9, %s331
      %v334 = vld [vmem:[%s327] sm:$0xff]
      %v335 = vld [vmem:[%s327 + $0x10] sm:$0xff]
      %v336 = vld [vmem:[%s327 + $0x20] sm:$0xff]
      %v337 = vld [vmem:[%s327 + $0x30] sm:$0xff]
      %v338 = vld [vmem:[%s327 + $0x40] sm:$0xff]
      %v339 = vld [vmem:[%s327 + $0x50] sm:$0xff]
      %v340 = vld [vmem:[%s327 + $0x60] sm:$0xff]
      %v341 = vld [vmem:[%s327 + $0x70] sm:$0xff]
      %v342 = vpack.c.bf16 %v335, %v334
      %v343 = vpack.c.bf16 %v337, %v336
      %v344 = vpack.c.bf16 %v339, %v338
      %v345 = vpack.c.bf16 %v341, %v340
      %s346 = scalar_lea.vmem %s327, 8
      %v347 = vld [vmem:[%s346] sm:$0xff]
      %v348 = vld [vmem:[%s346 + $0x10] sm:$0xff]
      %v349 = vld [vmem:[%s346 + $0x20] sm:$0xff]
      %v350 = vld [vmem:[%s346 + $0x30] sm:$0xff]
      %v351 = vld [vmem:[%s346 + $0x40] sm:$0xff]
      %v352 = vld [vmem:[%s346 + $0x50] sm:$0xff]
      %v353 = vld [vmem:[%s346 + $0x60] sm:$0xff]
      %v354 = vld [vmem:[%s346 + $0x70] sm:$0xff]
      %v355 = vpack.c.bf16 %v348, %v347
      %v356 = vpack.c.bf16 %v350, %v349
      %v357 = vpack.c.bf16 %v352, %v351
      %v358 = vpack.c.bf16 %v354, %v353
      %v359 = vld [vmem:[%s1] sm:$0xf]
      %v360 = vld [vmem:[%s1 + $0x4] sm:$0xf]
      %v361 = vld [vmem:[%s2] sm:$0xf]
      %v362 = vld [vmem:[%s2 + $0x4] sm:$0xf]
      %v365 = vunpack.c.l.b16 %v361
      %v366 = vunpack.c.l.b16 %v362
      %v367 = vpack.c.b16 %v366, %v365
      %vm369 = vcmask 130048
      %v371 = vsel %vm369, %v355, 0
      %v374 = vsel %vm369, %v356, 0
      %v377 = vsel %vm369, %v357, 0
      %v380 = vsel %vm369, %v358, 0
      %382 = vmatprep.subr.bf16.mxu0 0
      %383 = vmatpush1.bf16.msra.mxu0 0
      %384 = vmatprep.subr.bf16.mxu0 0
      %385 = vmatpush1.bf16.msra.mxu0 0
      %386 = vmatprep.subr.bf16.mxu0 0
      %387 = vmatpush1.bf16.msra.mxu0 0
      %388 = vmatprep.subr.bf16.mxu0 0
      %389 = vmatpush1.bf16.msra.mxu0 0
      %390 = vmatprep.subr.bf16.mxu0 0
      %391 = vmatpush1.bf16.msra.mxu0 0
      %392 = vmatprep.subr.bf16.mxu0 0
      %393 = vmatpush1.bf16.msra.mxu0 0
      %394 = vmatprep.subr.bf16.mxu0 0
      %395 = vmatpush1.bf16.msra.mxu0 0
      %396 = vmatprep.subr.bf16.mxu0 0
      %397 = vmatpush1.bf16.msra.mxu0 %v367
      %398 = vmatprep.subr.bf16.mxu0 0
      %399 = vmatpush2.bf16.msra.mxu0 0
      %400 = vmatprep.subr.bf16.mxu0 0
      %401 = vmatpush2.bf16.msra.mxu0 0
      %402 = vmatprep.subr.bf16.mxu0 0
      %403 = vmatpush2.bf16.msra.mxu0 0
      %404 = vmatprep.subr.bf16.mxu0 0
      %405 = vmatpush2.bf16.msra.mxu0 0
      %406 = vmatprep.subr.bf16.mxu0 0
      %407 = vmatpush2.bf16.msra.mxu0 0
      %408 = vmatprep.subr.bf16.mxu0 0
      %409 = vmatpush2.bf16.msra.mxu0 0
      %410 = vmatprep.subr.bf16.mxu0 0
      %411 = vmatpush2.bf16.msra.mxu0 0
      %412 = vmatprep.subr.bf16.mxu0 0
      %413 = vmatpush2.bf16.msra.mxu0 0
      %414 = vmatprep.mubr.bf16.mxu0 0
      %415 = vmatmul.mubr.bf16.gmra.mxu0 %v371
      %v416 = vpop.f32.mrf.mxu0
      %v417 = vadd.f32 0.0, %v416
      %v418 = vpop.f32.mrf.mxu0
      %v419 = vpop.f32.mrf.mxu0
      %v420 = vadd.f32 0.0, %v419
      %v421 = vpop.f32.mrf.mxu0
      %422 = vmatprep.mubr.bf16.mxu0 0
      %423 = vmatmul.mubr.bf16.gmra.mxu0 %v374
      %v424 = vpop.f32.mrf.mxu0
      %v425 = vadd.f32 0.0, %v424
      %v426 = vpop.f32.mrf.mxu0
      %v427 = vpop.f32.mrf.mxu0
      %v428 = vadd.f32 0.0, %v427
      %v429 = vpop.f32.mrf.mxu0
      %430 = vmatprep.mubr.bf16.mxu0 0
      %431 = vmatmul.mubr.bf16.gmra.mxu0 %v377
      %v432 = vpop.f32.mrf.mxu0
      %v433 = vadd.f32 0.0, %v432
      %v434 = vpop.f32.mrf.mxu0
      %v435 = vpop.f32.mrf.mxu0
      %v436 = vadd.f32 0.0, %v435
      %v437 = vpop.f32.mrf.mxu0
      %438 = vmatprep.mubr.bf16.mxu0 0
      %439 = vmatmul.mubr.bf16.gmra.mxu0 %v380
      %v440 = vpop.f32.mrf.mxu0
      %v441 = vadd.f32 0.0, %v440
      %v442 = vpop.f32.mrf.mxu0
      %v443 = vpop.f32.mrf.mxu0
      %v444 = vadd.f32 0.0, %v443
      %v445 = vpop.f32.mrf.mxu0
      %446 = vdwg.mxu0
      %v449 = vunpack.c.l.b16 %v359
      %v450 = vunpack.c.l.b16 %v360
      %v451 = vpack.c.b16 %v450, %v449
      %v454 = vsel %vm369, %v342, 0
      %v457 = vsel %vm369, %v343, 0
      %v460 = vsel %vm369, %v344, 0
      %v463 = vsel %vm369, %v345, 0
      %465 = vmatprep.subr.bf16.mxu0 0
      %466 = vmatpush1.bf16.msra.mxu0 0
      %467 = vmatprep.subr.bf16.mxu0 0
      %468 = vmatpush1.bf16.msra.mxu0 0
      %469 = vmatprep.subr.bf16.mxu0 0
      %470 = vmatpush1.bf16.msra.mxu0 0
      %471 = vmatprep.subr.bf16.mxu0 0
      %472 = vmatpush1.bf16.msra.mxu0 0
      %473 = vmatprep.subr.bf16.mxu0 0
      %474 = vmatpush1.bf16.msra.mxu0 0
      %475 = vmatprep.subr.bf16.mxu0 0
      %476 = vmatpush1.bf16.msra.mxu0 0
      %477 = vmatprep.subr.bf16.mxu0 0
      %478 = vmatpush1.bf16.msra.mxu0 0
      %479 = vmatprep.subr.bf16.mxu0 0
      %480 = vmatpush1.bf16.msra.mxu0 %v451
      %481 = vmatprep.subr.bf16.mxu0 0
      %482 = vmatpush2.bf16.msra.mxu0 0
      %483 = vmatprep.subr.bf16.mxu0 0
      %484 = vmatpush2.bf16.msra.mxu0 0
      %485 = vmatprep.subr.bf16.mxu0 0
      %486 = vmatpush2.bf16.msra.mxu0 0
      %487 = vmatprep.subr.bf16.mxu0 0
      %488 = vmatpush2.bf16.msra.mxu0 0
      %489 = vmatprep.subr.bf16.mxu0 0
      %490 = vmatpush2.bf16.msra.mxu0 0
      %491 = vmatprep.subr.bf16.mxu0 0
      %492 = vmatpush2.bf16.msra.mxu0 0
      %493 = vmatprep.subr.bf16.mxu0 0
      %494 = vmatpush2.bf16.msra.mxu0 0
      %495 = vmatprep.subr.bf16.mxu0 0
      %496 = vmatpush2.bf16.msra.mxu0 0
      %497 = vmatprep.mubr.bf16.mxu0 0
      %498 = vmatmul.mubr.bf16.gmra.mxu0 %v454
      %v499 = vpop.f32.mrf.mxu0
      %v500 = vadd.f32 %v417, %v499
      %v501 = vpop.f32.mrf.mxu0
      %v502 = vpop.f32.mrf.mxu0
      %v503 = vadd.f32 %v420, %v502
      %v504 = vpop.f32.mrf.mxu0
      %505 = vmatprep.mubr.bf16.mxu0 0
      %506 = vmatmul.mubr.bf16.gmra.mxu0 %v457
      %v507 = vpop.f32.mrf.mxu0
      %v508 = vadd.f32 %v425, %v507
      %v509 = vpop.f32.mrf.mxu0
      %v510 = vpop.f32.mrf.mxu0
      %v511 = vadd.f32 %v428, %v510
      %v512 = vpop.f32.mrf.mxu0
      %513 = vmatprep.mubr.bf16.mxu0 0
      %514 = vmatmul.mubr.bf16.gmra.mxu0 %v460
      %v515 = vpop.f32.mrf.mxu0
      %v516 = vadd.f32 %v433, %v515
      %v517 = vpop.f32.mrf.mxu0
      %v518 = vpop.f32.mrf.mxu0
      %v519 = vadd.f32 %v436, %v518
      %v520 = vpop.f32.mrf.mxu0
      %521 = vmatprep.mubr.bf16.mxu0 0
      %522 = vmatmul.mubr.bf16.gmra.mxu0 %v463
      %v523 = vpop.f32.mrf.mxu0
      %v524 = vadd.f32 %v441, %v523
      %v525 = vpop.f32.mrf.mxu0
      %v526 = vpop.f32.mrf.mxu0
      %v527 = vadd.f32 %v444, %v526
      %v528 = vpop.f32.mrf.mxu0
      %529 = vdwg.mxu0
      %vm530 = vcmask 261120
      %531 = vst.msk [vmem:[#allocation2] sm:$0xff] %vm530, 0.0
      %vm532 = vcmask 254976
      %533 = vst.msk [vmem:[#allocation2 + $0x8] sm:$0x3] %vm532, 0.0
      %534 = vst.msk [vmem:[#allocation2 + $0x10] sm:$0xff] %vm530, 0.0
      %535 = vst.msk [vmem:[#allocation2 + $0x18] sm:$0x3] %vm532, 0.0
      %536 = vst.msk [vmem:[#allocation2 + $0x20] sm:$0xff] %vm530, 0.0
      %537 = vst.msk [vmem:[#allocation2 + $0x28] sm:$0x3] %vm532, 0.0
      %538 = vst.msk [vmem:[#allocation2 + $0x30] sm:$0xff] %vm530, 0.0
      %539 = vst.msk [vmem:[#allocation2 + $0x38] sm:$0x3] %vm532, 0.0
      %540 = vst.msk [vmem:[#allocation2 + $0x40] sm:$0xff] %vm530, 0.0
      %541 = vst.msk [vmem:[#allocation2 + $0x48] sm:$0x3] %vm532, 0.0
      %542 = vst.msk [vmem:[#allocation2 + $0x50] sm:$0xff] %vm530, 0.0
      %543 = vst.msk [vmem:[#allocation2 + $0x58] sm:$0x3] %vm532, 0.0
      %544 = vst.msk [vmem:[#allocation2 + $0x60] sm:$0xff] %vm530, 0.0
      %545 = vst.msk [vmem:[#allocation2 + $0x68] sm:$0x3] %vm532, 0.0
      %546 = vst.msk [vmem:[#allocation2 + $0x70] sm:$0xff] %vm530, 0.0
      %547 = vst.msk [vmem:[#allocation2 + $0x78] sm:$0x3] %vm532, 0.0
      %548 = vst.msk [vmem:[#allocation2 + $0x80] sm:$0xff] %vm530, 0.0
      %549 = vst.msk [vmem:[#allocation2 + $0x88] sm:$0x3] %vm532, 0.0
      %550 = vst.msk [vmem:[#allocation2 + $0x90] sm:$0xff] %vm530, 0.0
      %551 = vst.msk [vmem:[#allocation2 + $0x98] sm:$0x3] %vm532, 0.0
      %s552 = scalar_lea.vmem [#allocation2], 16
      %553 = vst.msk [vmem:[%s552 + $0x1] sm:$0xff] %vm530, %v500
      %554 = vst.msk [vmem:[%s552 + $0x11] sm:$0xff] %vm530, %v503
      %555 = vst.msk [vmem:[%s552 + $0x21] sm:$0xff] %vm530, %v508
      %556 = vst.msk [vmem:[%s552 + $0x31] sm:$0xff] %vm530, %v511
      %557 = vst.msk [vmem:[%s552 + $0x41] sm:$0xff] %vm530, %v516
      %558 = vst.msk [vmem:[%s552 + $0x51] sm:$0xff] %vm530, %v519
      %559 = vst.msk [vmem:[%s552 + $0x61] sm:$0xff] %vm530, %v524
      %560 = vst.msk [vmem:[%s552 + $0x71] sm:$0xff] %vm530, %v527
      %v561 = vld [vmem:[%s4] sm:$0x1]
      %v563 = vlaneseq
      %v564 = vshrl.u32 %v563, 7
      %v565 = vsub.s32 0, %v564
      %v566 = vrot.slane %v561, %v565
      %v568 = vadd.f32 %v566, 0.0
      %v569 = vld [vmem:[#allocation2] sm:$0xff]
      %v570 = vld [vmem:[#allocation2 + $0x10] sm:$0xff]
      %v571 = vld [vmem:[#allocation2 + $0x20] sm:$0xff]
      %v572 = vld [vmem:[#allocation2 + $0x30] sm:$0xff]
      %v573 = vld [vmem:[#allocation2 + $0x40] sm:$0xff]
      %v574 = vld [vmem:[#allocation2 + $0x50] sm:$0xff]
      %v575 = vld [vmem:[#allocation2 + $0x60] sm:$0xff]
      %v576 = vld [vmem:[#allocation2 + $0x70] sm:$0xff]
      %v577 = vld [vmem:[%s3] sm:$0x1]
      %v578 = vlaneseq
      %v579 = vshrl.u32 %v578, 7
      %v580 = vsub.s32 0, %v579
      %v581 = vrot.slane %v577, %v580
      %v582 = vmul.f32 %v569, %v581
      %v583 = vmul.f32 %v570, %v581
      %v584 = vmul.f32 %v571, %v581
      %v585 = vmul.f32 %v572, %v581
      %v586 = vmul.f32 %v573, %v581
      %v587 = vmul.f32 %v574, %v581
      %v588 = vmul.f32 %v575, %v581
      %v589 = vmul.f32 %v576, %v581
      %v590 = vadd.f32 %v568, %v582
      %v591 = vadd.f32 %v568, %v583
      %v592 = vadd.f32 %v568, %v584
      %v593 = vadd.f32 %v568, %v585
      %v594 = vadd.f32 %v568, %v586
      %v595 = vadd.f32 %v568, %v587
      %v596 = vadd.f32 %v568, %v588
      %v597 = vadd.f32 %v568, %v589
      %v598 = vld [vmem:[#allocation2 + $0x1] sm:$0xff]
      %v599 = vld [vmem:[#allocation2 + $0x11] sm:$0xff]
      %v600 = vld [vmem:[#allocation2 + $0x21] sm:$0xff]
      %v601 = vld [vmem:[#allocation2 + $0x31] sm:$0xff]
      %v602 = vld [vmem:[#allocation2 + $0x41] sm:$0xff]
      %v603 = vld [vmem:[#allocation2 + $0x51] sm:$0xff]
      %v604 = vld [vmem:[#allocation2 + $0x61] sm:$0xff]
      %v605 = vld [vmem:[#allocation2 + $0x71] sm:$0xff]
      %v606 = vld [vmem:[%s3 + $0x1] sm:$0x1]
      %v607 = vlaneseq
      %v608 = vshrl.u32 %v607, 7
      %v609 = vsub.s32 0, %v608
      %v610 = vrot.slane %v606, %v609
      %v611 = vmul.f32 %v598, %v610
      %v612 = vmul.f32 %v599, %v610
      %v613 = vmul.f32 %v600, %v610
      %v614 = vmul.f32 %v601, %v610
      %v615 = vmul.f32 %v602, %v610
      %v616 = vmul.f32 %v603, %v610
      %v617 = vmul.f32 %v604, %v610
      %v618 = vmul.f32 %v605, %v610
      %v619 = vadd.f32 %v590, %v611
      %v620 = vadd.f32 %v591, %v612
      %v621 = vadd.f32 %v592, %v613
      %v622 = vadd.f32 %v593, %v614
      %v623 = vadd.f32 %v594, %v615
      %v624 = vadd.f32 %v595, %v616
      %v625 = vadd.f32 %v596, %v617
      %v626 = vadd.f32 %v597, %v618
      %v627 = vld [vmem:[#allocation2 + $0x2] sm:$0xff]
      %v628 = vld [vmem:[#allocation2 + $0x12] sm:$0xff]
      %v629 = vld [vmem:[#allocation2 + $0x22] sm:$0xff]
      %v630 = vld [vmem:[#allocation2 + $0x32] sm:$0xff]
      %v631 = vld [vmem:[#allocation2 + $0x42] sm:$0xff]
      %v632 = vld [vmem:[#allocation2 + $0x52] sm:$0xff]
      %v633 = vld [vmem:[#allocation2 + $0x62] sm:$0xff]
      %v634 = vld [vmem:[#allocation2 + $0x72] sm:$0xff]
      %v635 = vld [vmem:[%s3 + $0x2] sm:$0x1]
      %v636 = vlaneseq
      %v637 = vshrl.u32 %v636, 7
      %v638 = vsub.s32 0, %v637
      %v639 = vrot.slane %v635, %v638
      %v640 = vmul.f32 %v627, %v639
      %v641 = vmul.f32 %v628, %v639
      %v642 = vmul.f32 %v629, %v639
      %v643 = vmul.f32 %v630, %v639
      %v644 = vmul.f32 %v631, %v639
      %v645 = vmul.f32 %v632, %v639
      %v646 = vmul.f32 %v633, %v639
      %v647 = vmul.f32 %v634, %v639
      %v648 = vadd.f32 %v619, %v640
      %v649 = vadd.f32 %v620, %v641
      %v650 = vadd.f32 %v621, %v642
      %v651 = vadd.f32 %v622, %v643
      %v652 = vadd.f32 %v623, %v644
      %v653 = vadd.f32 %v624, %v645
      %v654 = vadd.f32 %v625, %v646
      %v655 = vadd.f32 %v626, %v647
      %v656 = vld [vmem:[%s552] sm:$0xff]
      %v657 = vld [vmem:[%s552 + $0x10] sm:$0xff]
      %v658 = vld [vmem:[%s552 + $0x20] sm:$0xff]
      %v659 = vld [vmem:[%s552 + $0x30] sm:$0xff]
      %v660 = vld [vmem:[%s552 + $0x40] sm:$0xff]
      %v661 = vld [vmem:[%s552 + $0x50] sm:$0xff]
      %v662 = vld [vmem:[%s552 + $0x60] sm:$0xff]
      %v663 = vld [vmem:[%s552 + $0x70] sm:$0xff]
      %v664 = vld [vmem:[%s3 + $0x3] sm:$0x1]
      %v665 = vlaneseq
      %v666 = vshrl.u32 %v665, 7
      %v667 = vsub.s32 0, %v666
      %v668 = vrot.slane %v664, %v667
      %v669 = vmul.f32 %v656, %v668
      %v670 = vmul.f32 %v657, %v668
      %v671 = vmul.f32 %v658, %v668
      %v672 = vmul.f32 %v659, %v668
      %v673 = vmul.f32 %v660, %v668
      %v674 = vmul.f32 %v661, %v668
      %v675 = vmul.f32 %v662, %v668
      %v676 = vmul.f32 %v663, %v668
      %v677 = vadd.f32 %v648, %v669
      %v678 = vadd.f32 %v649, %v670
      %v679 = vadd.f32 %v650, %v671
      %v680 = vadd.f32 %v651, %v672
      %v681 = vadd.f32 %v652, %v673
      %v682 = vadd.f32 %v653, %v674
      %v683 = vadd.f32 %v654, %v675
      %v684 = vadd.f32 %v655, %v676
      %v685 = vld [vmem:[%s552 + $0x1] sm:$0xff]
      %v686 = vld [vmem:[%s552 + $0x11] sm:$0xff]
      %v687 = vld [vmem:[%s552 + $0x21] sm:$0xff]
      %v688 = vld [vmem:[%s552 + $0x31] sm:$0xff]
      %v689 = vld [vmem:[%s552 + $0x41] sm:$0xff]
      %v690 = vld [vmem:[%s552 + $0x51] sm:$0xff]
      %v691 = vld [vmem:[%s552 + $0x61] sm:$0xff]
      %v692 = vld [vmem:[%s552 + $0x71] sm:$0xff]
      %v693 = vld [vmem:[%s3 + $0x4] sm:$0x1]
      %v694 = vlaneseq
      %v695 = vshrl.u32 %v694, 7
      %v696 = vsub.s32 0, %v695
      %v697 = vrot.slane %v693, %v696
      %v698 = vmul.f32 %v685, %v697
      %v699 = vmul.f32 %v686, %v697
      %v700 = vmul.f32 %v687, %v697
      %v701 = vmul.f32 %v688, %v697
      %v702 = vmul.f32 %v689, %v697
      %v703 = vmul.f32 %v690, %v697
      %v704 = vmul.f32 %v691, %v697
      %v705 = vmul.f32 %v692, %v697
      %v706 = vadd.f32 %v677, %v698
      %v707 = vadd.f32 %v678, %v699
      %v708 = vadd.f32 %v679, %v700
      %v709 = vadd.f32 %v680, %v701
      %v710 = vadd.f32 %v681, %v702
      %v711 = vadd.f32 %v682, %v703
      %v712 = vadd.f32 %v683, %v704
      %v713 = vadd.f32 %v684, %v705
      %v714 = vld [vmem:[%s552 + $0x2] sm:$0xff]
      %v715 = vld [vmem:[%s552 + $0x12] sm:$0xff]
      %v716 = vld [vmem:[%s552 + $0x22] sm:$0xff]
      %v717 = vld [vmem:[%s552 + $0x32] sm:$0xff]
      %v718 = vld [vmem:[%s552 + $0x42] sm:$0xff]
      %v719 = vld [vmem:[%s552 + $0x52] sm:$0xff]
      %v720 = vld [vmem:[%s552 + $0x62] sm:$0xff]
      %v721 = vld [vmem:[%s552 + $0x72] sm:$0xff]
      %v722 = vld [vmem:[%s3 + $0x5] sm:$0x1]
      %v723 = vlaneseq
      %v724 = vshrl.u32 %v723, 7
      %v725 = vsub.s32 0, %v724
      %v726 = vrot.slane %v722, %v725
      %v727 = vmul.f32 %v714, %v726
      %v728 = vmul.f32 %v715, %v726
      %v729 = vmul.f32 %v716, %v726
      %v730 = vmul.f32 %v717, %v726
      %v731 = vmul.f32 %v718, %v726
      %v732 = vmul.f32 %v719, %v726
      %v733 = vmul.f32 %v720, %v726
      %v734 = vmul.f32 %v721, %v726
      %v735 = vadd.f32 %v706, %v727
      %v736 = vadd.f32 %v707, %v728
      %v737 = vadd.f32 %v708, %v729
      %v738 = vadd.f32 %v709, %v730
      %v739 = vadd.f32 %v710, %v731
      %v740 = vadd.f32 %v711, %v732
      %v741 = vadd.f32 %v712, %v733
      %v742 = vadd.f32 %v713, %v734
      %s743 = scalar_lea.vmem [#allocation2], 32
      %v744 = vld [vmem:[%s743] sm:$0xff]
      %v745 = vld [vmem:[%s743 + $0x10] sm:$0xff]
      %v746 = vld [vmem:[%s743 + $0x20] sm:$0xff]
      %v747 = vld [vmem:[%s743 + $0x30] sm:$0xff]
      %v748 = vld [vmem:[%s743 + $0x40] sm:$0xff]
      %v749 = vld [vmem:[%s743 + $0x50] sm:$0xff]
      %v750 = vld [vmem:[%s743 + $0x60] sm:$0xff]
      %v751 = vld [vmem:[%s743 + $0x70] sm:$0xff]
      %v752 = vld [vmem:[%s3 + $0x6] sm:$0x1]
      %v753 = vlaneseq
      %v754 = vshrl.u32 %v753, 7
      %v755 = vsub.s32 0, %v754
      %v756 = vrot.slane %v752, %v755
      %v757 = vmul.f32 %v744, %v756
      %v758 = vmul.f32 %v745, %v756
      %v759 = vmul.f32 %v746, %v756
      %v760 = vmul.f32 %v747, %v756
      %v761 = vmul.f32 %v748, %v756
      %v762 = vmul.f32 %v749, %v756
      %v763 = vmul.f32 %v750, %v756
      %v764 = vmul.f32 %v751, %v756
      %v765 = vadd.f32 %v735, %v757
      %v766 = vadd.f32 %v736, %v758
      %v767 = vadd.f32 %v737, %v759
      %v768 = vadd.f32 %v738, %v760
      %v769 = vadd.f32 %v739, %v761
      %v770 = vadd.f32 %v740, %v762
      %v771 = vadd.f32 %v741, %v763
      %v772 = vadd.f32 %v742, %v764
      %v773 = vld [vmem:[%s743 + $0x1] sm:$0xff]
      %v774 = vld [vmem:[%s743 + $0x11] sm:$0xff]
      %v775 = vld [vmem:[%s743 + $0x21] sm:$0xff]
      %v776 = vld [vmem:[%s743 + $0x31] sm:$0xff]
      %v777 = vld [vmem:[%s743 + $0x41] sm:$0xff]
      %v778 = vld [vmem:[%s743 + $0x51] sm:$0xff]
      %v779 = vld [vmem:[%s743 + $0x61] sm:$0xff]
      %v780 = vld [vmem:[%s743 + $0x71] sm:$0xff]
      %v781 = vld [vmem:[%s3 + $0x7] sm:$0x1]
      %v782 = vlaneseq
      %v783 = vshrl.u32 %v782, 7
      %v784 = vsub.s32 0, %v783
      %v785 = vrot.slane %v781, %v784
      %v786 = vmul.f32 %v773, %v785
      %v787 = vmul.f32 %v774, %v785
      %v788 = vmul.f32 %v775, %v785
      %v789 = vmul.f32 %v776, %v785
      %v790 = vmul.f32 %v777, %v785
      %v791 = vmul.f32 %v778, %v785
      %v792 = vmul.f32 %v779, %v785
      %v793 = vmul.f32 %v780, %v785
      %v794 = vadd.f32 %v765, %v786
      %v795 = vadd.f32 %v766, %v787
      %v796 = vadd.f32 %v767, %v788
      %v797 = vadd.f32 %v768, %v789
      %v798 = vadd.f32 %v769, %v790
      %v799 = vadd.f32 %v770, %v791
      %v800 = vadd.f32 %v771, %v792
      %v801 = vadd.f32 %v772, %v793
      %v802 = vld [vmem:[%s743 + $0x2] sm:$0xff]
      %v803 = vld [vmem:[%s743 + $0x12] sm:$0xff]
      %v804 = vld [vmem:[%s743 + $0x22] sm:$0xff]
      %v805 = vld [vmem:[%s743 + $0x32] sm:$0xff]
      %v806 = vld [vmem:[%s743 + $0x42] sm:$0xff]
      %v807 = vld [vmem:[%s743 + $0x52] sm:$0xff]
      %v808 = vld [vmem:[%s743 + $0x62] sm:$0xff]
      %v809 = vld [vmem:[%s743 + $0x72] sm:$0xff]
      %v810 = vld [vmem:[%s3 + $0x8] sm:$0x1]
      %v811 = vlaneseq
      %v812 = vshrl.u32 %v811, 7
      %v813 = vsub.s32 0, %v812
      %v814 = vrot.slane %v810, %v813
      %v815 = vmul.f32 %v802, %v814
      %v816 = vmul.f32 %v803, %v814
      %v817 = vmul.f32 %v804, %v814
      %v818 = vmul.f32 %v805, %v814
      %v819 = vmul.f32 %v806, %v814
      %v820 = vmul.f32 %v807, %v814
      %v821 = vmul.f32 %v808, %v814
      %v822 = vmul.f32 %v809, %v814
      %v823 = vadd.f32 %v794, %v815
      %v824 = vadd.f32 %v795, %v816
      %v825 = vadd.f32 %v796, %v817
      %v826 = vadd.f32 %v797, %v818
      %v827 = vadd.f32 %v798, %v819
      %v828 = vadd.f32 %v799, %v820
      %v829 = vadd.f32 %v800, %v821
      %v830 = vadd.f32 %v801, %v822
      %v831 = vpack.c.bf16 %v824, %v823
      %v832 = vpack.c.bf16 %v826, %v825
      %v833 = vpack.c.bf16 %v828, %v827
      %v834 = vpack.c.bf16 %v830, %v829
      %v835 = vld [vmem:[%s5] sm:$0xf]
      %v836 = vld [vmem:[%s5 + $0x4] sm:$0xf]
      %v837 = vld [vmem:[%s5 + $0x8] sm:$0xf]
      %v838 = vld [vmem:[%s5 + $0xc] sm:$0xf]
      %v839 = vld [vmem:[%s6] sm:$0x1]
      %v841 = vlaneseq
      %v842 = vshrl.u32 %v841, 7
      %v843 = vsub.s32 0, %v842
      %v844 = vrot.slane %v839, %v843
      %v850 = vunpack.c.l.b16 %v835
      %v851 = vunpack.c.l.b16 %v836
      %v852 = vunpack.c.l.b16 %v837
      %v853 = vunpack.c.l.b16 %v838
      %v854 = vpack.c.b16 %v851, %v850
      %v855 = vpack.c.b16 %v853, %v852
      %v859 = vsel %vm530, %v831, 0
      %v862 = vsel %vm530, %v832, 0
      %v865 = vsel %vm530, %v833, 0
      %v868 = vsel %vm530, %v834, 0
      %870 = vmatprep.subr.bf16.mxu0 0
      %871 = vmatpush1.bf16.msra.mxu0 0
      %872 = vmatprep.subr.bf16.mxu0 0
      %873 = vmatpush1.bf16.msra.mxu0 0
      %874 = vmatprep.subr.bf16.mxu0 0
      %875 = vmatpush1.bf16.msra.mxu0 0
      %876 = vmatprep.subr.bf16.mxu0 0
      %877 = vmatpush1.bf16.msra.mxu0 0
      %878 = vmatprep.subr.bf16.mxu0 0
      %879 = vmatpush1.bf16.msra.mxu0 0
      %880 = vmatprep.subr.bf16.mxu0 0
      %881 = vmatpush1.bf16.msra.mxu0 0
      %882 = vmatprep.subr.bf16.mxu0 0
      %883 = vmatpush1.bf16.msra.mxu0 %v855
      %884 = vmatprep.subr.bf16.mxu0 0
      %885 = vmatpush1.bf16.msra.mxu0 %v854
      %886 = vmatprep.subr.bf16.mxu0 0
      %887 = vmatpush2.bf16.msra.mxu0 0
      %888 = vmatprep.subr.bf16.mxu0 0
      %889 = vmatpush2.bf16.msra.mxu0 0
      %890 = vmatprep.subr.bf16.mxu0 0
      %891 = vmatpush2.bf16.msra.mxu0 0
      %892 = vmatprep.subr.bf16.mxu0 0
      %893 = vmatpush2.bf16.msra.mxu0 0
      %894 = vmatprep.subr.bf16.mxu0 0
      %895 = vmatpush2.bf16.msra.mxu0 0
      %896 = vmatprep.subr.bf16.mxu0 0
      %897 = vmatpush2.bf16.msra.mxu0 0
      %898 = vmatprep.subr.bf16.mxu0 0
      %899 = vmatpush2.bf16.msra.mxu0 0
      %900 = vmatprep.subr.bf16.mxu0 0
      %901 = vmatpush2.bf16.msra.mxu0 0
      %902 = vmatprep.mubr.bf16.mxu0 0
      %903 = vmatmul.mubr.bf16.gmra.mxu0 %v859
      %v904 = vpop.f32.mrf.mxu0
      %v905 = vadd.f32 %v844, %v904
      %v906 = vpop.f32.mrf.mxu0
      %v907 = vpop.f32.mrf.mxu0
      %v908 = vadd.f32 %v844, %v907
      %v909 = vpop.f32.mrf.mxu0
      %910 = vmatprep.mubr.bf16.mxu0 0
      %911 = vmatmul.mubr.bf16.gmra.mxu0 %v862
      %v912 = vpop.f32.mrf.mxu0
      %v913 = vadd.f32 %v844, %v912
      %v914 = vpop.f32.mrf.mxu0
      %v915 = vpop.f32.mrf.mxu0
      %v916 = vadd.f32 %v844, %v915
      %v917 = vpop.f32.mrf.mxu0
      %918 = vmatprep.mubr.bf16.mxu0 0
      %919 = vmatmul.mubr.bf16.gmra.mxu0 %v865
      %v920 = vpop.f32.mrf.mxu0
      %v921 = vadd.f32 %v844, %v920
      %v922 = vpop.f32.mrf.mxu0
      %v923 = vpop.f32.mrf.mxu0
      %v924 = vadd.f32 %v844, %v923
      %v925 = vpop.f32.mrf.mxu0
      %926 = vmatprep.mubr.bf16.mxu0 0
      %927 = vmatmul.mubr.bf16.gmra.mxu0 %v868
      %v928 = vpop.f32.mrf.mxu0
      %v929 = vadd.f32 %v844, %v928
      %v930 = vpop.f32.mrf.mxu0
      %v931 = vpop.f32.mrf.mxu0
      %v932 = vadd.f32 %v844, %v931
      %v933 = vpop.f32.mrf.mxu0
      %934 = vdwg.mxu0
      %v935 = vld [vmem:[%s7] sm:$0xf]
      %v936 = vld [vmem:[%s7 + $0x4] sm:$0xf]
      %v937 = vld [vmem:[%s7 + $0x8] sm:$0xf]
      %v938 = vld [vmem:[%s7 + $0xc] sm:$0xf]
      %v939 = vld [vmem:[%s8] sm:$0x1]
      %v941 = vlaneseq
      %v942 = vshrl.u32 %v941, 7
      %v943 = vsub.s32 0, %v942
      %v944 = vrot.slane %v939, %v943
      %v950 = vunpack.c.l.b16 %v935
      %v951 = vunpack.c.l.b16 %v936
      %v952 = vunpack.c.l.b16 %v937
      %v953 = vunpack.c.l.b16 %v938
      %v954 = vpack.c.b16 %v951, %v950
      %v955 = vpack.c.b16 %v953, %v952
      %958 = vmatprep.subr.bf16.mxu0 0
      %959 = vmatpush1.bf16.msra.mxu0 0
      %960 = vmatprep.subr.bf16.mxu0 0
      %961 = vmatpush1.bf16.msra.mxu0 0
      %962 = vmatprep.subr.bf16.mxu0 0
      %963 = vmatpush1.bf16.msra.mxu0 0
      %964 = vmatprep.subr.bf16.mxu0 0
      %965 = vmatpush1.bf16.msra.mxu0 0
      %966 = vmatprep.subr.bf16.mxu0 0
      %967 = vmatpush1.bf16.msra.mxu0 0
      %968 = vmatprep.subr.bf16.mxu0 0
      %969 = vmatpush1.bf16.msra.mxu0 0
      %970 = vmatprep.subr.bf16.mxu0 0
      %971 = vmatpush1.bf16.msra.mxu0 %v955
      %972 = vmatprep.subr.bf16.mxu0 0
      %973 = vmatpush1.bf16.msra.mxu0 %v954
      %974 = vmatprep.subr.bf16.mxu0 0
      %975 = vmatpush2.bf16.msra.mxu0 0
      %976 = vmatprep.subr.bf16.mxu0 0
      %977 = vmatpush2.bf16.msra.mxu0 0
      %978 = vmatprep.subr.bf16.mxu0 0
      %979 = vmatpush2.bf16.msra.mxu0 0
      %980 = vmatprep.subr.bf16.mxu0 0
      %981 = vmatpush2.bf16.msra.mxu0 0
      %982 = vmatprep.subr.bf16.mxu0 0
      %983 = vmatpush2.bf16.msra.mxu0 0
      %984 = vmatprep.subr.bf16.mxu0 0
      %985 = vmatpush2.bf16.msra.mxu0 0
      %986 = vmatprep.subr.bf16.mxu0 0
      %987 = vmatpush2.bf16.msra.mxu0 0
      %988 = vmatprep.subr.bf16.mxu0 0
      %989 = vmatpush2.bf16.msra.mxu0 0
      %990 = vmatprep.mubr.bf16.mxu0 0
      %991 = vmatmul.mubr.bf16.gmra.mxu0 %v859
      %v992 = vpop.f32.mrf.mxu0
      %v993 = vadd.f32 %v944, %v992
      %v994 = vpop.f32.mrf.mxu0
      %v995 = vpop.f32.mrf.mxu0
      %v996 = vadd.f32 %v944, %v995
      %v997 = vpop.f32.mrf.mxu0
      %998 = vmatprep.mubr.bf16.mxu0 0
      %999 = vmatmul.mubr.bf16.gmra.mxu0 %v862
      %v1000 = vpop.f32.mrf.mxu0
      %v1001 = vadd.f32 %v944, %v1000
      %v1002 = vpop.f32.mrf.mxu0
      %v1003 = vpop.f32.mrf.mxu0
      %v1004 = vadd.f32 %v944, %v1003
      %v1005 = vpop.f32.mrf.mxu0
      %1006 = vmatprep.mubr.bf16.mxu0 0
      %1007 = vmatmul.mubr.bf16.gmra.mxu0 %v865
      %v1008 = vpop.f32.mrf.mxu0
      %v1009 = vadd.f32 %v944, %v1008
      %v1010 = vpop.f32.mrf.mxu0
      %v1011 = vpop.f32.mrf.mxu0
      %v1012 = vadd.f32 %v944, %v1011
      %v1013 = vpop.f32.mrf.mxu0
      %1014 = vmatprep.mubr.bf16.mxu0 0
      %1015 = vmatmul.mubr.bf16.gmra.mxu0 %v868
      %v1016 = vpop.f32.mrf.mxu0
      %v1017 = vadd.f32 %v944, %v1016
      %v1018 = vpop.f32.mrf.mxu0
      %v1019 = vpop.f32.mrf.mxu0
      %v1020 = vadd.f32 %v944, %v1019
      %v1021 = vpop.f32.mrf.mxu0
      %1022 = vdwg.mxu0
      %1023 = vst.msk [vmem:[%s332] sm:$0xff] %vm369, %v905
      %1024 = vst.msk [vmem:[%s332 + $0x10] sm:$0xff] %vm369, %v908
      %1025 = vst.msk [vmem:[%s332 + $0x20] sm:$0xff] %vm369, %v913
      %1026 = vst.msk [vmem:[%s332 + $0x30] sm:$0xff] %vm369, %v916
      %1027 = vst.msk [vmem:[%s332 + $0x40] sm:$0xff] %vm369, %v921
      %1028 = vst.msk [vmem:[%s332 + $0x50] sm:$0xff] %vm369, %v924
      %1029 = vst.msk [vmem:[%s332 + $0x60] sm:$0xff] %vm369, %v929
      %1030 = vst.msk [vmem:[%s332 + $0x70] sm:$0xff] %vm369, %v932
      %s1031 = scalar_lea.vmem %s332, 8
      %1032 = vst.msk [vmem:[%s1031] sm:$0xff] %vm369, %v993
      %1033 = vst.msk [vmem:[%s1031 + $0x10] sm:$0xff] %vm369, %v996
      %1034 = vst.msk [vmem:[%s1031 + $0x20] sm:$0xff] %vm369, %v1001
      %1035 = vst.msk [vmem:[%s1031 + $0x30] sm:$0xff] %vm369, %v1004
      %1036 = vst.msk [vmem:[%s1031 + $0x40] sm:$0xff] %vm369, %v1009
      %1037 = vst.msk [vmem:[%s1031 + $0x50] sm:$0xff] %vm369, %v1012
      %1038 = vst.msk [vmem:[%s1031 + $0x60] sm:$0xff] %vm369, %v1017
      %1039 = vst.msk [vmem:[%s1031 + $0x70] sm:$0xff] %vm369, %v1020
      %p1040 = scmp.lt.s32.totalorder %s20, 1
      %s1041 = scalar_select %p1040, %s20, 1
      %s1042 = smul.addr %s1041, 16
      %s1043 = smul.addr %s1042, 8
      %s1044 = scalar_lea.vmem %s9, %s1043
      // Predicated region
      $region57: #{resnet_block_forward.4} parent=55 // pred_check
        %p1045 = pneg %p232
      $region58: #{resnet_block_forward.4} parent=55 // pred_check_branch
        %1047 = sbr.rel (%p1045) target = $region60
      $region59: #{resnet_block_forward.4} parent=55 // pred_region
        _
      $region60: #{resnet_block_forward.4} parent=55 // pred_fallthru
        _
    $region56: #{resnet_block_forward.4} parent=5 // pred_fallthru
      _
    %p1048 = scmp.le.s32.totalorder 2, %s15
    // Predicated region
    $region61: #{resnet_block_forward.4} parent=5 // pred_check
      %p1049 = pneg %p1048
    $region62: #{resnet_block_forward.4} parent=5 // pred_check_branch
      %1051 = sbr.rel (%p1049) target = $region64
    $region63: #{resnet_block_forward.4} parent=5 // pred_region
      %s1052 = ssub.s32 %s15, 2
      // Predicated region
      $region65: #{resnet_block_forward.4} parent=63 // pred_check
        %p1053 = pneg %p238
      $region66: #{resnet_block_forward.4} parent=63 // pred_check_branch
        %1055 = sbr.rel (%p1053) target = $region68
      $region67: #{resnet_block_forward.4} parent=63 // pred_region
        %p1056 = scmp.lt.s32.totalorder %s21, 1
        %s1057 = scalar_select %p1056, %s21, 1
        %s1058 = smul.addr %s1057, 16
        %s1059 = smul.addr %s1058, 8
        %s1060 = scalar_lea.vmem %s9, %s1059
      $region68: #{resnet_block_forward.4} parent=63 // pred_fallthru
        _
    $region64: #{resnet_block_forward.4} parent=5 // pred_fallthru
      _
  $region6: #{resnet_block_forward.4} parent=0 // loop_footer
    %s19 = sadd.s32 1, %s15
  $region7: #{resnet_block_forward.4} parent=0 // loop_footer_branch
    %14 = sbr.rel target = $region3
  $region8: #{resnet_block_forward.4} parent=0 // loop_exit
    _

// kernel: resnet_block_forward.5
$region0: #{resnet_block_forward.5}
  #allocation0 [shape = 'u32[]', space=smem, size = 0x4, offset = 0x4, fixed_abs, tag = 'smem constant byte address 0x4 - core index']
  #allocation1 [shape = 'u32[144,128]{1,0:T(1,128)}', space=vmem, size = 0x12000, scoped, tag = 'internal scratch']
  #allocation2 [shape = 'f32[18,18,8]{2,1,0:T(8,128)}', space=vmem, size = 0x36000, scoped, tag = 'scratch operand']
  %s0 = inlined_call_operand.vmem [shape: f32[2,16,16,8], index: 0, kind: input, shape index: {}]
  %s1 = inlined_call_operand.vmem [shape: f32[2,16,16,8], index: 1, kind: input, shape index: {}]
  %s2 = inlined_call_operand.vmem [shape: f32[2,16,16,4], index: 2, kind: input, shape index: {}]
  %s3 = inlined_call_operand.vmem [shape: f32[9,8], index: 3, kind: input, shape index: {}]
  %s4 = inlined_call_operand.vmem [shape: f32[1,8], index: 4, kind: input, shape index: {}]
  %s5 = inlined_call_operand.vmem [shape: bf16[8,32], index: 5, kind: input, shape index: {}]
  %s6 = inlined_call_operand.vmem [shape: bf16[4,32], index: 6, kind: input, shape index: {}]
  %s7 = inlined_call_operand.vmem [shape: f32[1,32], index: 7, kind: input, shape index: {}]
  %s8 = inlined_call_operand.hbm [shape: f32[2,16,16,32], index: 8, kind: output, shape index: {}]
  %s9 = sld [smem:[#allocation0]]
  $region65: #{resnet_block_forward.5} parent=0
    _
  %s11 = ssub.s32 1, %s9
  %s12 = scalar_select 0, %s11, %s9
  $region1: #{resnet_block_forward.5} parent=0
    #allocation3 [shape = 'u8[262144]{0}', space=vmem, size = 0x40000, scoped, tag = 'output window, operand 0']
    #allocation4 [shape = 's32[2]{0}', space=sflag, size = 0x8, scoped, tag = 'scoped memory for resnet_block_forward.5']
    %13 = vsyncpa [#allocation4], 0
    %s14 = scalar_lea.sflag [#allocation4], 1
    %15 = vsyncpa %s14, 0
    loop: start=0, step=1, limit=4
    $region2: #{resnet_block_forward.5} parent=1 // loop_pre_header
      _
    $region3: #{resnet_block_forward.5} parent=1 // loop_header
      %s17 = sphi 0, %s21
      %p18 = scmp.ge.s32.totalorder %s17, 4
      %s27 = sphi 0, %s29
      %s30 = sphi 0, %s27
      %s31 = sphi 0, %s30
      %s47 = sphi 0, %s31
      %s53 = sphi 0, %s55
      %s56 = sphi 0, %s53
      %s57 = sphi 0, %s56
      %s73 = sphi 0, %s57
      %s79 = sphi 0, %s81
      %s82 = sphi 0, %s79
      %s83 = sphi 0, %s82
      %s99 = sphi 0, %s83
      %s103 = sphi 0, %s103
      %s105 = sphi 0, %s103
      %s106 = sphi 0, %s105
      %s120 = sphi 0, %s106
      %s124 = sphi 0, %s124
      %s126 = sphi 0, %s124
      %s127 = sphi 0, %s126
      %s141 = sphi 0, %s127
      %s145 = sphi 0, %s145
      %s147 = sphi 0, %s145
      %s148 = sphi 0, %s147
      %s162 = sphi 0, %s148
      %s166 = sphi 0, %s166
      %s168 = sphi 0, %s166
      %s169 = sphi 0, %s168
      %s183 = sphi 0, %s169
      %s187 = sphi 0, %s187
      %s189 = sphi 0, %s187
      %s190 = sphi 0, %s189
      %s204 = sphi 0, %s190
      %s210 = sphi 0, %s212
      %s213 = sphi 0, %s210
      %s214 = sphi 0, %s213
      %s230 = sphi 0, %s214
    $region4: #{resnet_block_forward.5} parent=1 // loop_header_branch
      %20 = sbr.rel (%p18) target = $region8
    $region5: #{resnet_block_forward.5} parent=1 // loop_body
      %s22 = ssub.s32 %s17, 1
      %s23 = ssub.s32 %s17, 2
      %s24 = sadd.s32 %s17, 1
      %s25 = ssub.s32 %s17, %s24
      %p26 = scmp.eq.s32.totalorder %s25, 0
      %s28 = sadd.s32 %s27, 1
      %s29 = scalar_select %p26, %s27, %s28
      %p32 = pneg %p26
      %p33 = scmp.eq.s32.totalorder %s17, 1
      %p34 = por %p32, %p33
      %p35 = scmp.ne.s32.totalorder %s27, %s30
      %p36 = scmp.eq.s32.totalorder %s17, 0
      %p37 = por %p35, %p36
      %p38 = scmp.ne.s32.totalorder %s27, %s30
      %p39 = scmp.eq.s32.totalorder %s22, 1
      %p40 = por %p38, %p39
      %p41 = scmp.ne.s32.totalorder %s30, %s31
      %p42 = scmp.eq.s32.totalorder %s22, 0
      %p43 = por %p41, %p42
      %p44 = scmp.ne.s32.totalorder %s30, %s31
      %p45 = scmp.eq.s32.totalorder %s23, 1
      %p46 = por %p44, %p45
      %p48 = scmp.ne.s32.totalorder %s31, %s47
      %p49 = scmp.eq.s32.totalorder %s23, 0
      %p50 = por %p48, %p49
      %s51 = ssub.s32 %s17, %s24
      %p52 = scmp.eq.s32.totalorder %s51, 0
      %s54 = sadd.s32 %s53, 1
      %s55 = scalar_select %p52, %s53, %s54
      %p58 = pneg %p52
      %p59 = scmp.eq.s32.totalorder %s17, 1
      %p60 = por %p58, %p59
      %p61 = scmp.ne.s32.totalorder %s53, %s56
      %p62 = scmp.eq.s32.totalorder %s17, 0
      %p63 = por %p61, %p62
      %p64 = scmp.ne.s32.totalorder %s53, %s56
      %p65 = scmp.eq.s32.totalorder %s22, 1
      %p66 = por %p64, %p65
      %p67 = scmp.ne.s32.totalorder %s56, %s57
      %p68 = scmp.eq.s32.totalorder %s22, 0
      %p69 = por %p67, %p68
      %p70 = scmp.ne.s32.totalorder %s56, %s57
      %p71 = scmp.eq.s32.totalorder %s23, 1
      %p72 = por %p70, %p71
      %p74 = scmp.ne.s32.totalorder %s57, %s73
      %p75 = scmp.eq.s32.totalorder %s23, 0
      %p76 = por %p74, %p75
      %s77 = ssub.s32 %s17, %s24
      %p78 = scmp.eq.s32.totalorder %s77, 0
      %s80 = sadd.s32 %s79, 1
      %s81 = scalar_select %p78, %s79, %s80
      %p84 = pneg %p78
      %p85 = scmp.eq.s32.totalorder %s17, 1
      %p86 = por %p84, %p85
      %p87 = scmp.ne.s32.totalorder %s79, %s82
      %p88 = scmp.eq.s32.totalorder %s17, 0
      %p89 = por %p87, %p88
      %p90 = scmp.ne.s32.totalorder %s79, %s82
      %p91 = scmp.eq.s32.totalorder %s22, 1
      %p92 = por %p90, %p91
      %p93 = scmp.ne.s32.totalorder %s82, %s83
      %p94 = scmp.eq.s32.totalorder %s22, 0
      %p95 = por %p93, %p94
      %p96 = scmp.ne.s32.totalorder %s82, %s83
      %p97 = scmp.eq.s32.totalorder %s23, 1
      %p98 = por %p96, %p97
      %p100 = scmp.ne.s32.totalorder %s83, %s99
      %p101 = scmp.eq.s32.totalorder %s23, 0
      %p102 = por %p100, %p101
      %s104 = sadd.s32 %s103, 1
      %p107 = scmp.eq.s32.totalorder %s17, 1
      %p108 = scmp.ne.s32.totalorder %s103, %s105
      %p109 = scmp.eq.s32.totalorder %s17, 0
      %p110 = por %p108, %p109
      %p111 = scmp.ne.s32.totalorder %s103, %s105
      %p112 = scmp.eq.s32.totalorder %s22, 1
      %p113 = por %p111, %p112
      %p114 = scmp.ne.s32.totalorder %s105, %s106
      %p115 = scmp.eq.s32.totalorder %s22, 0
      %p116 = por %p114, %p115
      %p117 = scmp.ne.s32.totalorder %s105, %s106
      %p118 = scmp.eq.s32.totalorder %s23, 1
      %p119 = por %p117, %p118
      %p121 = scmp.ne.s32.totalorder %s106, %s120
      %p122 = scmp.eq.s32.totalorder %s23, 0
      %p123 = por %p121, %p122
      %s125 = sadd.s32 %s124, 1
      %p128 = scmp.eq.s32.totalorder %s17, 1
      %p129 = scmp.ne.s32.totalorder %s124, %s126
      %p130 = scmp.eq.s32.totalorder %s17, 0
      %p131 = por %p129, %p130
      %p132 = scmp.ne.s32.totalorder %s124, %s126
      %p133 = scmp.eq.s32.totalorder %s22, 1
      %p134 = por %p132, %p133
      %p135 = scmp.ne.s32.totalorder %s126, %s127
      %p136 = scmp.eq.s32.totalorder %s22, 0
      %p137 = por %p135, %p136
      %p138 = scmp.ne.s32.totalorder %s126, %s127
      %p139 = scmp.eq.s32.totalorder %s23, 1
      %p140 = por %p138, %p139
      %p142 = scmp.ne.s32.totalorder %s127, %s141
      %p143 = scmp.eq.s32.totalorder %s23, 0
      %p144 = por %p142, %p143
      %s146 = sadd.s32 %s145, 1
      %p149 = scmp.eq.s32.totalorder %s17, 1
      %p150 = scmp.ne.s32.totalorder %s145, %s147
      %p151 = scmp.eq.s32.totalorder %s17, 0
      %p152 = por %p150, %p151
      %p153 = scmp.ne.s32.totalorder %s145, %s147
      %p154 = scmp.eq.s32.totalorder %s22, 1
      %p155 = por %p153, %p154
      %p156 = scmp.ne.s32.totalorder %s147, %s148
      %p157 = scmp.eq.s32.totalorder %s22, 0
      %p158 = por %p156, %p157
      %p159 = scmp.ne.s32.totalorder %s147, %s148
      %p160 = scmp.eq.s32.totalorder %s23, 1
      %p161 = por %p159, %p160
      %p163 = scmp.ne.s32.totalorder %s148, %s162
      %p164 = scmp.eq.s32.totalorder %s23, 0
      %p165 = por %p163, %p164
      %s167 = sadd.s32 %s166, 1
      %p170 = scmp.eq.s32.totalorder %s17, 1
      %p171 = scmp.ne.s32.totalorder %s166, %s168
      %p172 = scmp.eq.s32.totalorder %s17, 0
      %p173 = por %p171, %p172
      %p174 = scmp.ne.s32.totalorder %s166, %s168
      %p175 = scmp.eq.s32.totalorder %s22, 1
      %p176 = por %p174, %p175
      %p177 = scmp.ne.s32.totalorder %s168, %s169
      %p178 = scmp.eq.s32.totalorder %s22, 0
      %p179 = por %p177, %p178
      %p180 = scmp.ne.s32.totalorder %s168, %s169
      %p181 = scmp.eq.s32.totalorder %s23, 1
      %p182 = por %p180, %p181
      %p184 = scmp.ne.s32.totalorder %s169, %s183
      %p185 = scmp.eq.s32.totalorder %s23, 0
      %p186 = por %p184, %p185
      %s188 = sadd.s32 %s187, 1
      %p191 = scmp.eq.s32.totalorder %s17, 1
      %p192 = scmp.ne.s32.totalorder %s187, %s189
      %p193 = scmp.eq.s32.totalorder %s17, 0
      %p194 = por %p192, %p193
      %p195 = scmp.ne.s32.totalorder %s187, %s189
      %p196 = scmp.eq.s32.totalorder %s22, 1
      %p197 = por %p195, %p196
      %p198 = scmp.ne.s32.totalorder %s189, %s190
      %p199 = scmp.eq.s32.totalorder %s22, 0
      %p200 = por %p198, %p199
      %p201 = scmp.ne.s32.totalorder %s189, %s190
      %p202 = scmp.eq.s32.totalorder %s23, 1
      %p203 = por %p201, %p202
      %p205 = scmp.ne.s32.totalorder %s190, %s204
      %p206 = scmp.eq.s32.totalorder %s23, 0
      %p207 = por %p205, %p206
      %s208 = ssub.s32 %s17, %s24
      %p209 = scmp.eq.s32.totalorder %s208, 0
      %s211 = sadd.s32 %s210, 1
      %s212 = scalar_select %p209, %s210, %s211
      %p215 = pneg %p209
      %p216 = scmp.eq.s32.totalorder %s17, 1
      %p217 = por %p215, %p216
      %p218 = scmp.ne.s32.totalorder %s210, %s213
      %p219 = scmp.eq.s32.totalorder %s17, 0
      %p220 = por %p218, %p219
      %p221 = scmp.ne.s32.totalorder %s210, %s213
      %p222 = scmp.eq.s32.totalorder %s22, 1
      %p223 = por %p221, %p222
      %p224 = scmp.ne.s32.totalorder %s213, %s214
      %p225 = scmp.eq.s32.totalorder %s22, 0
      %p226 = por %p224, %p225
      %p227 = scmp.ne.s32.totalorder %s213, %s214
      %p228 = scmp.eq.s32.totalorder %s23, 1
      %p229 = por %p227, %p228
      %p231 = scmp.ne.s32.totalorder %s214, %s230
      %p232 = scmp.eq.s32.totalorder %s23, 0
      %p233 = por %p231, %p232
      %p234 = scmp.le.s32.totalorder 1, %s17
      %p235 = scmp.lt.s32.totalorder %s17, 3
      %p236 = pnand %p234, %p235
      %p237 = pneg %p236
      // Predicated region
      $region9: #{resnet_block_forward.5} parent=5 // pred_check
        _
      $region10: #{resnet_block_forward.5} parent=5 // pred_check_branch
        %239 = sbr.rel (%p236) target = $region12
      $region11: #{resnet_block_forward.5} parent=5 // pred_region
        %s240 = ssub.s32 %s17, 1
        // Predicated region
        $region13: #{resnet_block_forward.5} parent=11 // pred_check
          %p241 = pneg %p116
        $region14: #{resnet_block_forward.5} parent=11 // pred_check_branch
          %243 = sbr.rel (%p241) target = $region16
        $region15: #{resnet_block_forward.5} parent=11 // pred_region
          _
        $region16: #{resnet_block_forward.5} parent=11 // pred_fallthru
          _
        // Predicated region
        $region17: #{resnet_block_forward.5} parent=11 // pred_check
          %p244 = pneg %p137
        $region18: #{resnet_block_forward.5} parent=11 // pred_check_branch
          %246 = sbr.rel (%p244) target = $region20
        $region19: #{resnet_block_forward.5} parent=11 // pred_region
          _
        $region20: #{resnet_block_forward.5} parent=11 // pred_fallthru
          _
        // Predicated region
        $region21: #{resnet_block_forward.5} parent=11 // pred_check
          %p247 = pneg %p158
        $region22: #{resnet_block_forward.5} parent=11 // pred_check_branch
          %249 = sbr.rel (%p247) target = $region24
        $region23: #{resnet_block_forward.5} parent=11 // pred_region
          _
        $region24: #{resnet_block_forward.5} parent=11 // pred_fallthru
          _
        // Predicated region
        $region25: #{resnet_block_forward.5} parent=11 // pred_check
          %p250 = pneg %p179
        $region26: #{resnet_block_forward.5} parent=11 // pred_check_branch
          %252 = sbr.rel (%p250) target = $region28
        $region27: #{resnet_block_forward.5} parent=11 // pred_region
          _
        $region28: #{resnet_block_forward.5} parent=11 // pred_fallthru
          _
        // Predicated region
        $region29: #{resnet_block_forward.5} parent=11 // pred_check
          %p253 = pneg %p200
        $region30: #{resnet_block_forward.5} parent=11 // pred_check_branch
          %255 = sbr.rel (%p253) target = $region32
        $region31: #{resnet_block_forward.5} parent=11 // pred_region
          _
        $region32: #{resnet_block_forward.5} parent=11 // pred_fallthru
          _
      $region12: #{resnet_block_forward.5} parent=5 // pred_fallthru
        _
      %p256 = scmp.lt.s32.totalorder %s17, 2
      // Predicated region
      $region33: #{resnet_block_forward.5} parent=5 // pred_check
        %p257 = pneg %p256
      $region34: #{resnet_block_forward.5} parent=5 // pred_check_branch
        %259 = sbr.rel (%p257) target = $region36
      $region35: #{resnet_block_forward.5} parent=5 // pred_region
        // Predicated region
        $region37: #{resnet_block_forward.5} parent=35 // pred_check
          %p260 = pneg %p37
        $region38: #{resnet_block_forward.5} parent=35 // pred_check_branch
          %262 = sbr.rel (%p260) target = $region40
        $region39: #{resnet_block_forward.5} parent=35 // pred_region
          %p263 = scmp.lt.s32.totalorder %s17, 1
          %s264 = scalar_select %p263, %s17, 1
          %s265 = smul.addr %s264, 32
          %s266 = smul.addr %s265, 8
          %s267 = scalar_lea.vmem %s0, %s266
        $region40: #{resnet_block_forward.5} parent=35 // pred_fallthru
          _
        // Predicated region
        $region41: #{resnet_block_forward.5} parent=35 // pred_check
          %p268 = pneg %p63
        $region42: #{resnet_block_forward.5} parent=35 // pred_check_branch
          %270 = sbr.rel (%p268) target = $region44
        $region43: #{resnet_block_forward.5} parent=35 // pred_region
          %p271 = scmp.lt.s32.totalorder %s17, 1
          %s272 = scalar_select %p271, %s17, 1
          %s273 = smul.addr %s272, 32
          %s274 = smul.addr %s273, 8
          %s275 = scalar_lea.vmem %s1, %s274
        $region44: #{resnet_block_forward.5} parent=35 // pred_fallthru
          _
        // Predicated region
        $region45: #{resnet_block_forward.5} parent=35 // pred_check
          %p276 = pneg %p89
        $region46: #{resnet_block_forward.5} parent=35 // pred_check_branch
          %278 = sbr.rel (%p276) target = $region48
        $region47: #{resnet_block_forward.5} parent=35 // pred_region
          %p279 = scmp.lt.s32.totalorder %s17, 1
          %s280 = scalar_select %p279, %s17, 1
          %s281 = smul.addr %s280, 32
          %s282 = smul.addr %s281, 8
          %s283 = scalar_lea.vmem %s2, %s282
        $region48: #{resnet_block_forward.5} parent=35 // pred_fallthru
          _
      $region36: #{resnet_block_forward.5} parent=5 // pred_fallthru
        _
      %p284 = scmp.le.s32.totalorder 1, %s17
      %p285 = scmp.lt.s32.totalorder %s17, 3
      %p286 = pnand %p284, %p285
      %p287 = pneg %p286
      // Predicated region
      $region49: #{resnet_block_forward.5} parent=5 // pred_check
        _
      $region50: #{resnet_block_forward.5} parent=5 // pred_check_branch
        %289 = sbr.rel (%p286) target = $region52
      $region51: #{resnet_block_forward.5} parent=5 // pred_region
        %s290 = ssub.s32 %s17, 1
        %p291 = scmp.lt.s32.totalorder %s22, 1
        %s292 = scalar_select %p291, %s22, 1
        %s293 = smul.addr %s292, 32
        %s294 = smul.addr %s293, 8
        %s295 = scalar_lea.vmem %s0, %s294
        %p296 = pneg %p43
        %p297 = pneg %p40
        %p298 = scmp.lt.s32.totalorder %s22, 1
        %s299 = scalar_select %p298, %s22, 1
        %s300 = smul.addr %s299, 32
        %s301 = smul.addr %s300, 8
        %s302 = scalar_lea.vmem %s1, %s301
        %p303 = pneg %p69
        %p304 = pneg %p66
        %p305 = scmp.lt.s32.totalorder %s22, 1
        %s306 = scalar_select %p305, %s22, 1
        %s307 = smul.addr %s306, 32
        %s308 = smul.addr %s307, 8
        %s309 = scalar_lea.vmem %s2, %s308
        %p310 = pneg %p95
        %p311 = pneg %p92
        %p312 = pneg %p116
        %p313 = pneg %p113
        %p314 = pneg %p137
        %p315 = pneg %p134
        %p316 = pneg %p158
        %p317 = pneg %p155
        %p318 = pneg %p179
        %p319 = pneg %p176
        %p320 = pneg %p200
        %p321 = pneg %p197
        %p322 = pneg %p226
        %p323 = pneg %p223
        %s324 = sand.u32 %s213, 1
        %s325 = scalar_lea.sflag [#allocation4], %s324
        %s326 = sand.u32 %s213, 1
        %s327 = smul.addr %s326, 256
        %s328 = scalar_lea.vmem [#allocation3], %s327
        %p329 = scmp.lt.s32.totalorder %s22, 1
        %s330 = scalar_select %p329, %s22, 1
        %s331 = smul.addr %s330, 32
        %s332 = smul.addr %s331, 8
        %s333 = scalar_lea.vmem %s0, %s332
        %p334 = scmp.lt.s32.totalorder %s22, 1
        %s335 = scalar_select %p334, %s22, 1
        %s336 = smul.addr %s335, 32
        %s337 = smul.addr %s336, 8
        %s338 = scalar_lea.vmem %s1, %s337
        %p339 = scmp.lt.s32.totalorder %s22, 1
        %s340 = scalar_select %p339, %s22, 1
        %s341 = smul.addr %s340, 32
        %s342 = smul.addr %s341, 8
        %s343 = scalar_lea.vmem %s2, %s342
        %vm345 = vcmask 64512
        %346 = vst.msk [vmem:[#allocation2] sm:$0xff] %vm345, 0.0
        %347 = vst.msk [vmem:[#allocation2 + $0x8] sm:$0xff] %vm345, 0.0
        %vm348 = vcmask 58368
        %349 = vst.msk [vmem:[#allocation2 + $0x10] sm:$0x3] %vm348, 0.0
        %350 = vst.msk [vmem:[#allocation2 + $0x18] sm:$0xff] %vm345, 0.0
        %351 = vst.msk [vmem:[#allocation2 + $0x20] sm:$0xff] %vm345, 0.0
        %352 = vst.msk [vmem:[#allocation2 + $0x28] sm:$0x3] %vm348, 0.0
        %353 = vst.msk [vmem:[#allocation2 + $0x30] sm:$0xff] %vm345, 0.0
        %354 = vst.msk [vmem:[#allocation2 + $0x38] sm:$0xff] %vm345, 0.0
        %355 = vst.msk [vmem:[#allocation2 + $0x40] sm:$0x3] %vm348, 0.0
        %356 = vst.msk [vmem:[#allocation2 + $0x48] sm:$0xff] %vm345, 0.0
        %357 = vst.msk [vmem:[#allocation2 + $0x50] sm:$0xff] %vm345, 0.0
        %358 = vst.msk [vmem:[#allocation2 + $0x58] sm:$0x3] %vm348, 0.0
        %359 = vst.msk [vmem:[#allocation2 + $0x60] sm:$0xff] %vm345, 0.0
        %360 = vst.msk [vmem:[#allocation2 + $0x68] sm:$0xff] %vm345, 0.0
        %361 = vst.msk [vmem:[#allocation2 + $0x70] sm:$0x3] %vm348, 0.0
        %362 = vst.msk [vmem:[#allocation2 + $0x78] sm:$0xff] %vm345, 0.0
        %363 = vst.msk [vmem:[#allocation2 + $0x80] sm:$0xff] %vm345, 0.0
        %364 = vst.msk [vmem:[#allocation2 + $0x88] sm:$0x3] %vm348, 0.0
        %365 = vst.msk [vmem:[#allocation2 + $0x90] sm:$0xff] %vm345, 0.0
        %366 = vst.msk [vmem:[#allocation2 + $0x98] sm:$0xff] %vm345, 0.0
        %367 = vst.msk [vmem:[#allocation2 + $0xa0] sm:$0x3] %vm348, 0.0
        %368 = vst.msk [vmem:[#allocation2 + $0xa8] sm:$0xff] %vm345, 0.0
        %369 = vst.msk [vmem:[#allocation2 + $0xb0] sm:$0xff] %vm345, 0.0
        %370 = vst.msk [vmem:[#allocation2 + $0xb8] sm:$0x3] %vm348, 0.0
        %371 = vst.msk [vmem:[#allocation2 + $0xc0] sm:$0xff] %vm345, 0.0
        %372 = vst.msk [vmem:[#allocation2 + $0xc8] sm:$0xff] %vm345, 0.0
        %373 = vst.msk [vmem:[#allocation2 + $0xd0] sm:$0x3] %vm348, 0.0
        %374 = vst.msk [vmem:[#allocation2 + $0xd8] sm:$0xff] %vm345, 0.0
        %375 = vst.msk [vmem:[#allocation2 + $0xe0] sm:$0xff] %vm345, 0.0
        %376 = vst.msk [vmem:[#allocation2 + $0xe8] sm:$0x3] %vm348, 0.0
        %377 = vst.msk [vmem:[#allocation2 + $0xf0] sm:$0xff] %vm345, 0.0
        %378 = vst.msk [vmem:[#allocation2 + $0xf8] sm:$0xff] %vm345, 0.0
        %379 = vst.msk [vmem:[#allocation2 + $0x100] sm:$0x3] %vm348, 0.0
        %380 = vst.msk [vmem:[#allocation2 + $0x108] sm:$0xff] %vm345, 0.0
        %381 = vst.msk [vmem:[#allocation2 + $0x110] sm:$0xff] %vm345, 0.0
        %382 = vst.msk [vmem:[#allocation2 + $0x118] sm:$0x3] %vm348, 0.0
        %383 = vst.msk [vmem:[#allocation2 + $0x120] sm:$0xff] %vm345, 0.0
        %384 = vst.msk [vmem:[#allocation2 + $0x128] sm:$0xff] %vm345, 0.0
        %385 = vst.msk [vmem:[#allocation2 + $0x130] sm:$0x3] %vm348, 0.0
        %386 = vst.msk [vmem:[#allocation2 + $0x138] sm:$0xff] %vm345, 0.0
        %387 = vst.msk [vmem:[#allocation2 + $0x140] sm:$0xff] %vm345, 0.0
        %388 = vst.msk [vmem:[#allocation2 + $0x148] sm:$0x3] %vm348, 0.0
        %389 = vst.msk [vmem:[#allocation2 + $0x150] sm:$0xff] %vm345, 0.0
        %390 = vst.msk [vmem:[#allocation2 + $0x158] sm:$0xff] %vm345, 0.0
        %391 = vst.msk [vmem:[#allocation2 + $0x160] sm:$0x3] %vm348, 0.0
        %392 = vst.msk [vmem:[#allocation2 + $0x168] sm:$0xff] %vm345, 0.0
        %393 = vst.msk [vmem:[#allocation2 + $0x170] sm:$0xff] %vm345, 0.0
        %394 = vst.msk [vmem:[#allocation2 + $0x178] sm:$0x3] %vm348, 0.0
        %395 = vst.msk [vmem:[#allocation2 + $0x180] sm:$0xff] %vm345, 0.0
        %396 = vst.msk [vmem:[#allocation2 + $0x188] sm:$0xff] %vm345, 0.0
        %397 = vst.msk [vmem:[#allocation2 + $0x190] sm:$0x3] %vm348, 0.0
        %398 = vst.msk [vmem:[#allocation2 + $0x198] sm:$0xff] %vm345, 0.0
        %399 = vst.msk [vmem:[#allocation2 + $0x1a0] sm:$0xff] %vm345, 0.0
        %400 = vst.msk [vmem:[#allocation2 + $0x1a8] sm:$0x3] %vm348, 0.0
        %v401 = vld [vmem:[%s333] sm:$0xff]
        %v402 = vld [vmem:[%s333 + $0x8] sm:$0xff]
        %v403 = vld [vmem:[%s333 + $0x10] sm:$0xff]
        %v404 = vld [vmem:[%s333 + $0x18] sm:$0xff]
        %v405 = vld [vmem:[%s333 + $0x20] sm:$0xff]
        %v406 = vld [vmem:[%s333 + $0x28] sm:$0xff]
        %v407 = vld [vmem:[%s333 + $0x30] sm:$0xff]
        %v408 = vld [vmem:[%s333 + $0x38] sm:$0xff]
        %v409 = vld [vmem:[%s333 + $0x40] sm:$0xff]
        %v410 = vld [vmem:[%s333 + $0x48] sm:$0xff]
        %v411 = vld [vmem:[%s333 + $0x50] sm:$0xff]
        %v412 = vld [vmem:[%s333 + $0x58] sm:$0xff]
        %v413 = vld [vmem:[%s333 + $0x60] sm:$0xff]
        %v414 = vld [vmem:[%s333 + $0x68] sm:$0xff]
        %v415 = vld [vmem:[%s333 + $0x70] sm:$0xff]
        %v416 = vld [vmem:[%s333 + $0x78] sm:$0xff]
        %v417 = vld [vmem:[%s333 + $0x80] sm:$0xff]
        %v418 = vld [vmem:[%s333 + $0x88] sm:$0xff]
        %v419 = vld [vmem:[%s333 + $0x90] sm:$0xff]
        %v420 = vld [vmem:[%s333 + $0x98] sm:$0xff]
        %v421 = vld [vmem:[%s333 + $0xa0] sm:$0xff]
        %v422 = vld [vmem:[%s333 + $0xa8] sm:$0xff]
        %v423 = vld [vmem:[%s333 + $0xb0] sm:$0xff]
        %v424 = vld [vmem:[%s333 + $0xb8] sm:$0xff]
        %v425 = vld [vmem:[%s333 + $0xc0] sm:$0xff]
        %v426 = vld [vmem:[%s333 + $0xc8] sm:$0xff]
        %v427 = vld [vmem:[%s333 + $0xd0] sm:$0xff]
        %v428 = vld [vmem:[%s333 + $0xd8] sm:$0xff]
        %v429 = vld [vmem:[%s333 + $0xe0] sm:$0xff]
        %v430 = vld [vmem:[%s333 + $0xe8] sm:$0xff]
        %v431 = vld [vmem:[%s333 + $0xf0] sm:$0xff]
        %v432 = vld [vmem:[%s333 + $0xf8] sm:$0xff]
        %s433 = scalar_lea.vmem [#allocation2], 24
        %434 = vst.msk [vmem:[%s433 + $0x1] sm:$0xff] %vm345, %v401
        %435 = vst.msk [vmem:[%s433 + $0x9] sm:$0xff] %vm345, %v402
        %436 = vst.msk [vmem:[%s433 + $0x19] sm:$0xff] %vm345, %v403
        %437 = vst.msk [vmem:[%s433 + $0x21] sm:$0xff] %vm345, %v404
        %438 = vst.msk [vmem:[%s433 + $0x31] sm:$0xff] %vm345, %v405
        %439 = vst.msk [vmem:[%s433 + $0x39] sm:$0xff] %vm345, %v406
        %440 = vst.msk [vmem:[%s433 + $0x49] sm:$0xff] %vm345, %v407
        %441 = vst.msk [vmem:[%s433 + $0x51] sm:$0xff] %vm345, %v408
        %442 = vst.msk [vmem:[%s433 + $0x61] sm:$0xff] %vm345, %v409
        %443 = vst.msk [vmem:[%s433 + $0x69] sm:$0xff] %vm345, %v410
        %444 = vst.msk [vmem:[%s433 + $0x79] sm:$0xff] %vm345, %v411
        %445 = vst.msk [vmem:[%s433 + $0x81] sm:$0xff] %vm345, %v412
        %446 = vst.msk [vmem:[%s433 + $0x91] sm:$0xff] %vm345, %v413
        %447 = vst.msk [vmem:[%s433 + $0x99] sm:$0xff] %vm345, %v414
        %448 = vst.msk [vmem:[%s433 + $0xa9] sm:$0xff] %vm345, %v415
        %449 = vst.msk [vmem:[%s433 + $0xb1] sm:$0xff] %vm345, %v416
        %450 = vst.msk [vmem:[%s433 + $0xc1] sm:$0xff] %vm345, %v417
        %451 = vst.msk [vmem:[%s433 + $0xc9] sm:$0xff] %vm345, %v418
        %452 = vst.msk [vmem:[%s433 + $0xd9] sm:$0xff] %vm345, %v419
        %453 = vst.msk [vmem:[%s433 + $0xe1] sm:$0xff] %vm345, %v420
        %454 = vst.msk [vmem:[%s433 + $0xf1] sm:$0xff] %vm345, %v421
        %455 = vst.msk [vmem:[%s433 + $0xf9] sm:$0xff] %vm345, %v422
        %456 = vst.msk [vmem:[%s433 + $0x109] sm:$0xff] %vm345, %v423
        %457 = vst.msk [vmem:[%s433 + $0x111] sm:$0xff] %vm345, %v424
        %458 = vst.msk [vmem:[%s433 + $0x121] sm:$0xff] %vm345, %v425
        %459 = vst.msk [vmem:[%s433 + $0x129] sm:$0xff] %vm345, %v426
        %460 = vst.msk [vmem:[%s433 + $0x139] sm:$0xff] %vm345, %v427
        %461 = vst.msk [vmem:[%s433 + $0x141] sm:$0xff] %vm345, %v428
        %462 = vst.msk [vmem:[%s433 + $0x151] sm:$0xff] %vm345, %v429
        %463 = vst.msk [vmem:[%s433 + $0x159] sm:$0xff] %vm345, %v430
        %464 = vst.msk [vmem:[%s433 + $0x169] sm:$0xff] %vm345, %v431
        %465 = vst.msk [vmem:[%s433 + $0x171] sm:$0xff] %vm345, %v432
        %v466 = vld [vmem:[%s4] sm:$0x1]
        %v468 = vlaneseq
        %v469 = vshrl.u32 %v468, 7
        %v470 = vsub.s32 0, %v469
        %v471 = vrot.slane %v466, %v470
        %v473 = vadd.f32 %v471, 0.0
        %v474 = vld [vmem:[#allocation2] sm:$0xff]
        %v475 = vld [vmem:[#allocation2 + $0x8] sm:$0xff]
        %v476 = vld [vmem:[#allocation2 + $0x18] sm:$0xff]
        %v477 = vld [vmem:[#allocation2 + $0x20] sm:$0xff]
        %v478 = vld [vmem:[#allocation2 + $0x30] sm:$0xff]
        %v479 = vld [vmem:[#allocation2 + $0x38] sm:$0xff]
        %v480 = vld [vmem:[#allocation2 + $0x48] sm:$0xff]
        %v481 = vld [vmem:[#allocation2 + $0x50] sm:$0xff]
        %v482 = vld [vmem:[#allocation2 + $0x60] sm:$0xff]
        %v483 = vld [vmem:[#allocation2 + $0x68] sm:$0xff]
        %v484 = vld [vmem:[#allocation2 + $0x78] sm:$0xff]
        %v485 = vld [vmem:[#allocation2 + $0x80] sm:$0xff]
        %v486 = vld [vmem:[#allocation2 + $0x90] sm:$0xff]
        %v487 = vld [vmem:[#allocation2 + $0x98] sm:$0xff]
        %v488 = vld [vmem:[#allocation2 + $0xa8] sm:$0xff]
        %v489 = vld [vmem:[#allocation2 + $0xb0] sm:$0xff]
        %v490 = vld [vmem:[#allocation2 + $0xc0] sm:$0xff]
        %v491 = vld [vmem:[#allocation2 + $0xc8] sm:$0xff]
        %v492 = vld [vmem:[#allocation2 + $0xd8] sm:$0xff]
        %v493 = vld [vmem:[#allocation2 + $0xe0] sm:$0xff]
        %v494 = vld [vmem:[#allocation2 + $0xf0] sm:$0xff]
        %v495 = vld [vmem:[#allocation2 + $0xf8] sm:$0xff]
        %v496 = vld [vmem:[#allocation2 + $0x108] sm:$0xff]
        %v497 = vld [vmem:[#allocation2 + $0x110] sm:$0xff]
        %v498 = vld [vmem:[#allocation2 + $0x120] sm:$0xff]
        %v499 = vld [vmem:[#allocation2 + $0x128] sm:$0xff]
        %v500 = vld [vmem:[#allocation2 + $0x138] sm:$0xff]
        %v501 = vld [vmem:[#allocation2 + $0x140] sm:$0xff]
        %v502 = vld [vmem:[#allocation2 + $0x150] sm:$0xff]
        %v503 = vld [vmem:[#allocation2 + $0x158] sm:$0xff]
        %v504 = vld [vmem:[#allocation2 + $0x168] sm:$0xff]
        %v505 = vld [vmem:[#allocation2 + $0x170] sm:$0xff]
        %v506 = vld [vmem:[%s3] sm:$0x1]
        %v507 = vlaneseq
        %v508 = vshrl.u32 %v507, 7
        %v509 = vsub.s32 0, %v508
        %v510 = vrot.slane %v506, %v509
        %v511 = vmul.f32 %v474, %v510
        %v512 = vmul.f32 %v475, %v510
        %v513 = vmul.f32 %v476, %v510
        %v514 = vmul.f32 %v477, %v510
        %v515 = vmul.f32 %v478, %v510
        %v516 = vmul.f32 %v479, %v510
        %v517 = vmul.f32 %v480, %v510
        %v518 = vmul.f32 %v481, %v510
        %v519 = vmul.f32 %v482, %v510
        %v520 = vmul.f32 %v483, %v510
        %v521 = vmul.f32 %v484, %v510
        %v522 = vmul.f32 %v485, %v510
        %v523 = vmul.f32 %v486, %v510
        %v524 = vmul.f32 %v487, %v510
        %v525 = vmul.f32 %v488, %v510
        %v526 = vmul.f32 %v489, %v510
        %v527 = vmul.f32 %v490, %v510
        %v528 = vmul.f32 %v491, %v510
        %v529 = vmul.f32 %v492, %v510
        %v530 = vmul.f32 %v493, %v510
        %v531 = vmul.f32 %v494, %v510
        %v532 = vmul.f32 %v495, %v510
        %v533 = vmul.f32 %v496, %v510
        %v534 = vmul.f32 %v497, %v510
        %v535 = vmul.f32 %v498, %v510
        %v536 = vmul.f32 %v499, %v510
        %v537 = vmul.f32 %v500, %v510
        %v538 = vmul.f32 %v501, %v510
        %v539 = vmul.f32 %v502, %v510
        %v540 = vmul.f32 %v503, %v510
        %v541 = vmul.f32 %v504, %v510
        %v542 = vmul.f32 %v505, %v510
        %v543 = vadd.f32 %v473, %v511
        %v544 = vadd.f32 %v473, %v512
        %v545 = vadd.f32 %v473, %v513
        %v546 = vadd.f32 %v473, %v514
        %v547 = vadd.f32 %v473, %v515
        %v548 = vadd.f32 %v473, %v516
        %v549 = vadd.f32 %v473, %v517
        %v550 = vadd.f32 %v473, %v518
        %v551 = vadd.f32 %v473, %v519
        %v552 = vadd.f32 %v473, %v520
        %v553 = vadd.f32 %v473, %v521
        %v554 = vadd.f32 %v473, %v522
        %v555 = vadd.f32 %v473, %v523
        %v556 = vadd.f32 %v473, %v524
        %v557 = vadd.f32 %v473, %v525
        %v558 = vadd.f32 %v473, %v526
        %v559 = vadd.f32 %v473, %v527
        %v560 = vadd.f32 %v473, %v528
        %v561 = vadd.f32 %v473, %v529
        %v562 = vadd.f32 %v473, %v530
        %v563 = vadd.f32 %v473, %v531
        %v564 = vadd.f32 %v473, %v532
        %v565 = vadd.f32 %v473, %v533
        %v566 = vadd.f32 %v473, %v534
        %v567 = vadd.f32 %v473, %v535
        %v568 = vadd.f32 %v473, %v536
        %v569 = vadd.f32 %v473, %v537
        %v570 = vadd.f32 %v473, %v538
        %v571 = vadd.f32 %v473, %v539
        %v572 = vadd.f32 %v473, %v540
        %v573 = vadd.f32 %v473, %v541
        %v574 = vadd.f32 %v473, %v542
        %v575 = vld [vmem:[#allocation2 + $0x1] sm:$0xff]
        %v576 = vld [vmem:[#allocation2 + $0x9] sm:$0xff]
        %v577 = vld [vmem:[#allocation2 + $0x19] sm:$0xff]
        %v578 = vld [vmem:[#allocation2 + $0x21] sm:$0xff]
        %v579 = vld [vmem:[#allocation2 + $0x31] sm:$0xff]
        %v580 = vld [vmem:[#allocation2 + $0x39] sm:$0xff]
        %v581 = vld [vmem:[#allocation2 + $0x49] sm:$0xff]
        %v582 = vld [vmem:[#allocation2 + $0x51] sm:$0xff]
        %v583 = vld [vmem:[#allocation2 + $0x61] sm:$0xff]
        %v584 = vld [vmem:[#allocation2 + $0x69] sm:$0xff]
        %v585 = vld [vmem:[#allocation2 + $0x79] sm:$0xff]
        %v586 = vld [vmem:[#allocation2 + $0x81] sm:$0xff]
        %v587 = vld [vmem:[#allocation2 + $0x91] sm:$0xff]
        %v588 = vld [vmem:[#allocation2 + $0x99] sm:$0xff]
        %v589 = vld [vmem:[#allocation2 + $0xa9] sm:$0xff]
        %v590 = vld [vmem:[#allocation2 + $0xb1] sm:$0xff]
        %v591 = vld [vmem:[#allocation2 + $0xc1] sm:$0xff]
        %v592 = vld [vmem:[#allocation2 + $0xc9] sm:$0xff]
        %v593 = vld [vmem:[#allocation2 + $0xd9] sm:$0xff]
        %v594 = vld [vmem:[#allocation2 + $0xe1] sm:$0xff]
        %v595 = vld [vmem:[#allocation2 + $0xf1] sm:$0xff]
        %v596 = vld [vmem:[#allocation2 + $0xf9] sm:$0xff]
        %v597 = vld [vmem:[#allocation2 + $0x109] sm:$0xff]
        %v598 = vld [vmem:[#allocation2 + $0x111] sm:$0xff]
        %v599 = vld [vmem:[#allocation2 + $0x121] sm:$0xff]
        %v600 = vld [vmem:[#allocation2 + $0x129] sm:$0xff]
        %v601 = vld [vmem:[#allocation2 + $0x139] sm:$0xff]
        %v602 = vld [vmem:[#allocation2 + $0x141] sm:$0xff]
        %v603 = vld [vmem:[#allocation2 + $0x151] sm:$0xff]
        %v604 = vld [vmem:[#allocation2 + $0x159] sm:$0xff]
        %v605 = vld [vmem:[#allocation2 + $0x169] sm:$0xff]
        %v606 = vld [vmem:[#allocation2 + $0x171] sm:$0xff]
        %v607 = vld [vmem:[%s3 + $0x1] sm:$0x1]
        %v608 = vlaneseq
        %v609 = vshrl.u32 %v608, 7
        %v610 = vsub.s32 0, %v609
        %v611 = vrot.slane %v607, %v610
        %v612 = vmul.f32 %v575, %v611
        %v613 = vmul.f32 %v576, %v611
        %v614 = vmul.f32 %v577, %v611
        %v615 = vmul.f32 %v578, %v611
        %v616 = vmul.f32 %v579, %v611
        %v617 = vmul.f32 %v580, %v611
        %v618 = vmul.f32 %v581, %v611
        %v619 = vmul.f32 %v582, %v611
        %v620 = vmul.f32 %v583, %v611
        %v621 = vmul.f32 %v584, %v611
        %v622 = vmul.f32 %v585, %v611
        %v623 = vmul.f32 %v586, %v611
        %v624 = vmul.f32 %v587, %v611
        %v625 = vmul.f32 %v588, %v611
        %v626 = vmul.f32 %v589, %v611
        %v627 = vmul.f32 %v590, %v611
        %v628 = vmul.f32 %v591, %v611
        %v629 = vmul.f32 %v592, %v611
        %v630 = vmul.f32 %v593, %v611
        %v631 = vmul.f32 %v594, %v611
        %v632 = vmul.f32 %v595, %v611
        %v633 = vmul.f32 %v596, %v611
        %v634 = vmul.f32 %v597, %v611
        %v635 = vmul.f32 %v598, %v611
        %v636 = vmul.f32 %v599, %v611
        %v637 = vmul.f32 %v600, %v611
        %v638 = vmul.f32 %v601, %v611
        %v639 = vmul.f32 %v602, %v611
        %v640 = vmul.f32 %v603, %v611
        %v641 = vmul.f32 %v604, %v611
        %v642 = vmul.f32 %v605, %v611
        %v643 = vmul.f32 %v606, %v611
        %v644 = vadd.f32 %v543, %v612
        %v645 = vadd.f32 %v544, %v613
        %v646 = vadd.f32 %v545, %v614
        %v647 = vadd.f32 %v546, %v615
        %v648 = vadd.f32 %v547, %v616
        %v649 = vadd.f32 %v548, %v617
        %v650 = vadd.f32 %v549, %v618
        %v651 = vadd.f32 %v550, %v619
        %v652 = vadd.f32 %v551, %v620
        %v653 = vadd.f32 %v552, %v621
        %v654 = vadd.f32 %v553, %v622
        %v655 = vadd.f32 %v554, %v623
        %v656 = vadd.f32 %v555, %v624
        %v657 = vadd.f32 %v556, %v625
        %v658 = vadd.f32 %v557, %v626
        %v659 = vadd.f32 %v558, %v627
        %v660 = vadd.f32 %v559, %v628
        %v661 = vadd.f32 %v560, %v629
        %v662 = vadd.f32 %v561, %v630
        %v663 = vadd.f32 %v562, %v631
        %v664 = vadd.f32 %v563, %v632
        %v665 = vadd.f32 %v564, %v633
        %v666 = vadd.f32 %v565, %v634
        %v667 = vadd.f32 %v566, %v635
        %v668 = vadd.f32 %v567, %v636
        %v669 = vadd.f32 %v568, %v637
        %v670 = vadd.f32 %v569, %v638
        %v671 = vadd.f32 %v570, %v639
        %v672 = vadd.f32 %v571, %v640
        %v673 = vadd.f32 %v572, %v641
        %v674 = vadd.f32 %v573, %v642
        %v675 = vadd.f32 %v574, %v643
        %v676 = vld [vmem:[#allocation2 + $0x2] sm:$0xff]
        %v677 = vld [vmem:[#allocation2 + $0xa] sm:$0xff]
        %v678 = vld [vmem:[#allocation2 + $0x1a] sm:$0xff]
        %v679 = vld [vmem:[#allocation2 + $0x22] sm:$0xff]
        %v680 = vld [vmem:[#allocation2 + $0x32] sm:$0xff]
        %v681 = vld [vmem:[#allocation2 + $0x3a] sm:$0xff]
        %v682 = vld [vmem:[#allocation2 + $0x4a] sm:$0xff]
        %v683 = vld [vmem:[#allocation2 + $0x52] sm:$0xff]
        %v684 = vld [vmem:[#allocation2 + $0x62] sm:$0xff]
        %v685 = vld [vmem:[#allocation2 + $0x6a] sm:$0xff]
        %v686 = vld [vmem:[#allocation2 + $0x7a] sm:$0xff]
        %v687 = vld [vmem:[#allocation2 + $0x82] sm:$0xff]
        %v688 = vld [vmem:[#allocation2 + $0x92] sm:$0xff]
        %v689 = vld [vmem:[#allocation2 + $0x9a] sm:$0xff]
        %v690 = vld [vmem:[#allocation2 + $0xaa] sm:$0xff]
        %v691 = vld [vmem:[#allocation2 + $0xb2] sm:$0xff]
        %v692 = vld [vmem:[#allocation2 + $0xc2] sm:$0xff]
        %v693 = vld [vmem:[#allocation2 + $0xca] sm:$0xff]
        %v694 = vld [vmem:[#allocation2 + $0xda] sm:$0xff]
        %v695 = vld [vmem:[#allocation2 + $0xe2] sm:$0xff]
        %v696 = vld [vmem:[#allocation2 + $0xf2] sm:$0xff]
        %v697 = vld [vmem:[#allocation2 + $0xfa] sm:$0xff]
        %v698 = vld [vmem:[#allocation2 + $0x10a] sm:$0xff]
        %v699 = vld [vmem:[#allocation2 + $0x112] sm:$0xff]
        %v700 = vld [vmem:[#allocation2 + $0x122] sm:$0xff]
        %v701 = vld [vmem:[#allocation2 + $0x12a] sm:$0xff]
        %v702 = vld [vmem:[#allocation2 + $0x13a] sm:$0xff]
        %v703 = vld [vmem:[#allocation2 + $0x142] sm:$0xff]
        %v704 = vld [vmem:[#allocation2 + $0x152] sm:$0xff]
        %v705 = vld [vmem:[#allocation2 + $0x15a] sm:$0xff]
        %v706 = vld [vmem:[#allocation2 + $0x16a] sm:$0xff]
        %v707 = vld [vmem:[#allocation2 + $0x172] sm:$0xff]
        %v708 = vld [vmem:[%s3 + $0x2] sm:$0x1]
        %v709 = vlaneseq
        %v710 = vshrl.u32 %v709, 7
        %v711 = vsub.s32 0, %v710
        %v712 = vrot.slane %v708, %v711
        %v713 = vmul.f32 %v676, %v712
        %v714 = vmul.f32 %v677, %v712
        %v715 = vmul.f32 %v678, %v712
        %v716 = vmul.f32 %v679, %v712
        %v717 = vmul.f32 %v680, %v712
        %v718 = vmul.f32 %v681, %v712
        %v719 = vmul.f32 %v682, %v712
        %v720 = vmul.f32 %v683, %v712
        %v721 = vmul.f32 %v684, %v712
        %v722 = vmul.f32 %v685, %v712
        %v723 = vmul.f32 %v686, %v712
        %v724 = vmul.f32 %v687, %v712
        %v725 = vmul.f32 %v688, %v712
        %v726 = vmul.f32 %v689, %v712
        %v727 = vmul.f32 %v690, %v712
        %v728 = vmul.f32 %v691, %v712
        %v729 = vmul.f32 %v692, %v712
        %v730 = vmul.f32 %v693, %v712
        %v731 = vmul.f32 %v694, %v712
        %v732 = vmul.f32 %v695, %v712
        %v733 = vmul.f32 %v696, %v712
        %v734 = vmul.f32 %v697, %v712
        %v735 = vmul.f32 %v698, %v712
        %v736 = vmul.f32 %v699, %v712
        %v737 = vmul.f32 %v700, %v712
        %v738 = vmul.f32 %v701, %v712
        %v739 = vmul.f32 %v702, %v712
        %v740 = vmul.f32 %v703, %v712
        %v741 = vmul.f32 %v704, %v712
        %v742 = vmul.f32 %v705, %v712
        %v743 = vmul.f32 %v706, %v712
        %v744 = vmul.f32 %v707, %v712
        %v745 = vadd.f32 %v644, %v713
        %v746 = vadd.f32 %v645, %v714
        %v747 = vadd.f32 %v646, %v715
        %v748 = vadd.f32 %v647, %v716
        %v749 = vadd.f32 %v648, %v717
        %v750 = vadd.f32 %v649, %v718
        %v751 = vadd.f32 %v650, %v719
        %v752 = vadd.f32 %v651, %v720
        %v753 = vadd.f32 %v652, %v721
        %v754 = vadd.f32 %v653, %v722
        %v755 = vadd.f32 %v654, %v723
        %v756 = vadd.f32 %v655, %v724
        %v757 = vadd.f32 %v656, %v725
        %v758 = vadd.f32 %v657, %v726
        %v759 = vadd.f32 %v658, %v727
        %v760 = vadd.f32 %v659, %v728
        %v761 = vadd.f32 %v660, %v729
        %v762 = vadd.f32 %v661, %v730
        %v763 = vadd.f32 %v662, %v731
        %v764 = vadd.f32 %v663, %v732
        %v765 = vadd.f32 %v664, %v733
        %v766 = vadd.f32 %v665, %v734
        %v767 = vadd.f32 %v666, %v735
        %v768 = vadd.f32 %v667, %v736
        %v769 = vadd.f32 %v668, %v737
        %v770 = vadd.f32 %v669, %v738
        %v771 = vadd.f32 %v670, %v739
        %v772 = vadd.f32 %v671, %v740
        %v773 = vadd.f32 %v672, %v741
        %v774 = vadd.f32 %v673, %v742
        %v775 = vadd.f32 %v674, %v743
        %v776 = vadd.f32 %v675, %v744
        %v777 = vld [vmem:[%s433] sm:$0xff]
        %v778 = vld [vmem:[%s433 + $0x8] sm:$0xff]
        %v779 = vld [vmem:[%s433 + $0x18] sm:$0xff]
        %v780 = vld [vmem:[%s433 + $0x20] sm:$0xff]
        %v781 = vld [vmem:[%s433 + $0x30] sm:$0xff]
        %v782 = vld [vmem:[%s433 + $0x38] sm:$0xff]
        %v783 = vld [vmem:[%s433 + $0x48] sm:$0xff]
        %v784 = vld [vmem:[%s433 + $0x50] sm:$0xff]
        %v785 = vld [vmem:[%s433 + $0x60] sm:$0xff]
        %v786 = vld [vmem:[%s433 + $0x68] sm:$0xff]
        %v787 = vld [vmem:[%s433 + $0x78] sm:$0xff]
        %v788 = vld [vmem:[%s433 + $0x80] sm:$0xff]
        %v789 = vld [vmem:[%s433 + $0x90] sm:$0xff]
        %v790 = vld [vmem:[%s433 + $0x98] sm:$0xff]
        %v791 = vld [vmem:[%s433 + $0xa8] sm:$0xff]
        %v792 = vld [vmem:[%s433 + $0xb0] sm:$0xff]
        %v793 = vld [vmem:[%s433 + $0xc0] sm:$0xff]
        %v794 = vld [vmem:[%s433 + $0xc8] sm:$0xff]
        %v795 = vld [vmem:[%s433 + $0xd8] sm:$0xff]
        %v796 = vld [vmem:[%s433 + $0xe0] sm:$0xff]
        %v797 = vld [vmem:[%s433 + $0xf0] sm:$0xff]
        %v798 = vld [vmem:[%s433 + $0xf8] sm:$0xff]
        %v799 = vld [vmem:[%s433 + $0x108] sm:$0xff]
        %v800 = vld [vmem:[%s433 + $0x110] sm:$0xff]
        %v801 = vld [vmem:[%s433 + $0x120] sm:$0xff]
        %v802 = vld [vmem:[%s433 + $0x128] sm:$0xff]
        %v803 = vld [vmem:[%s433 + $0x138] sm:$0xff]
        %v804 = vld [vmem:[%s433 + $0x140] sm:$0xff]
        %v805 = vld [vmem:[%s433 + $0x150] sm:$0xff]
        %v806 = vld [vmem:[%s433 + $0x158] sm:$0xff]
        %v807 = vld [vmem:[%s433 + $0x168] sm:$0xff]
        %v808 = vld [vmem:[%s433 + $0x170] sm:$0xff]
        %v809 = vld [vmem:[%s3 + $0x3] sm:$0x1]
        %v810 = vlaneseq
        %v811 = vshrl.u32 %v810, 7
        %v812 = vsub.s32 0, %v811
        %v813 = vrot.slane %v809, %v812
        %v814 = vmul.f32 %v777, %v813
        %v815 = vmul.f32 %v778, %v813
        %v816 = vmul.f32 %v779, %v813
        %v817 = vmul.f32 %v780, %v813
        %v818 = vmul.f32 %v781, %v813
        %v819 = vmul.f32 %v782, %v813
        %v820 = vmul.f32 %v783, %v813
        %v821 = vmul.f32 %v784, %v813
        %v822 = vmul.f32 %v785, %v813
        %v823 = vmul.f32 %v786, %v813
        %v824 = vmul.f32 %v787, %v813
        %v825 = vmul.f32 %v788, %v813
        %v826 = vmul.f32 %v789, %v813
        %v827 = vmul.f32 %v790, %v813
        %v828 = vmul.f32 %v791, %v813
        %v829 = vmul.f32 %v792, %v813
        %v830 = vmul.f32 %v793, %v813
        %v831 = vmul.f32 %v794, %v813
        %v832 = vmul.f32 %v795, %v813
        %v833 = vmul.f32 %v796, %v813
        %v834 = vmul.f32 %v797, %v813
        %v835 = vmul.f32 %v798, %v813
        %v836 = vmul.f32 %v799, %v813
        %v837 = vmul.f32 %v800, %v813
        %v838 = vmul.f32 %v801, %v813
        %v839 = vmul.f32 %v802, %v813
        %v840 = vmul.f32 %v803, %v813
        %v841 = vmul.f32 %v804, %v813
        %v842 = vmul.f32 %v805, %v813
        %v843 = vmul.f32 %v806, %v813
        %v844 = vmul.f32 %v807, %v813
        %v845 = vmul.f32 %v808, %v813
        %v846 = vadd.f32 %v745, %v814
        %v847 = vadd.f32 %v746, %v815
        %v848 = vadd.f32 %v747, %v816
        %v849 = vadd.f32 %v748, %v817
        %v850 = vadd.f32 %v749, %v818
        %v851 = vadd.f32 %v750, %v819
        %v852 = vadd.f32 %v751, %v820
        %v853 = vadd.f32 %v752, %v821
        %v854 = vadd.f32 %v753, %v822
        %v855 = vadd.f32 %v754, %v823
        %v856 = vadd.f32 %v755, %v824
        %v857 = vadd.f32 %v756, %v825
        %v858 = vadd.f32 %v757, %v826
        %v859 = vadd.f32 %v758, %v827
        %v860 = vadd.f32 %v759, %v828
        %v861 = vadd.f32 %v760, %v829
        %v862 = vadd.f32 %v761, %v830
        %v863 = vadd.f32 %v762, %v831
        %v864 = vadd.f32 %v763, %v832
        %v865 = vadd.f32 %v764, %v833
        %v866 = vadd.f32 %v765, %v834
        %v867 = vadd.f32 %v766, %v835
        %v868 = vadd.f32 %v767, %v836
        %v869 = vadd.f32 %v768, %v837
        %v870 = vadd.f32 %v769, %v838
        %v871 = vadd.f32 %v770, %v839
        %v872 = vadd.f32 %v771, %v840
        %v873 = vadd.f32 %v772, %v841
        %v874 = vadd.f32 %v773, %v842
        %v875 = vadd.f32 %v774, %v843
        %v876 = vadd.f32 %v775, %v844
        %v877 = vadd.f32 %v776, %v845
        %v878 = vld [vmem:[%s433 + $0x1] sm:$0xff]
        %v879 = vld [vmem:[%s433 + $0x9] sm:$0xff]
        %v880 = vld [vmem:[%s433 + $0x19] sm:$0xff]
        %v881 = vld [vmem:[%s433 + $0x21] sm:$0xff]
        %v882 = vld [vmem:[%s433 + $0x31] sm:$0xff]
        %v883 = vld [vmem:[%s433 + $0x39] sm:$0xff]
        %v884 = vld [vmem:[%s433 + $0x49] sm:$0xff]
        %v885 = vld [vmem:[%s433 + $0x51] sm:$0xff]
        %v886 = vld [vmem:[%s433 + $0x61] sm:$0xff]
        %v887 = vld [vmem:[%s433 + $0x69] sm:$0xff]
        %v888 = vld [vmem:[%s433 + $0x79] sm:$0xff]
        %v889 = vld [vmem:[%s433 + $0x81] sm:$0xff]
        %v890 = vld [vmem:[%s433 + $0x91] sm:$0xff]
        %v891 = vld [vmem:[%s433 + $0x99] sm:$0xff]
        %v892 = vld [vmem:[%s433 + $0xa9] sm:$0xff]
        %v893 = vld [vmem:[%s433 + $0xb1] sm:$0xff]
        %v894 = vld [vmem:[%s433 + $0xc1] sm:$0xff]
        %v895 = vld [vmem:[%s433 + $0xc9] sm:$0xff]
        %v896 = vld [vmem:[%s433 + $0xd9] sm:$0xff]
        %v897 = vld [vmem:[%s433 + $0xe1] sm:$0xff]
        %v898 = vld [vmem:[%s433 + $0xf1] sm:$0xff]
        %v899 = vld [vmem:[%s433 + $0xf9] sm:$0xff]
        %v900 = vld [vmem:[%s433 + $0x109] sm:$0xff]
        %v901 = vld [vmem:[%s433 + $0x111] sm:$0xff]
        %v902 = vld [vmem:[%s433 + $0x121] sm:$0xff]
        %v903 = vld [vmem:[%s433 + $0x129] sm:$0xff]
        %v904 = vld [vmem:[%s433 + $0x139] sm:$0xff]
        %v905 = vld [vmem:[%s433 + $0x141] sm:$0xff]
        %v906 = vld [vmem:[%s433 + $0x151] sm:$0xff]
        %v907 = vld [vmem:[%s433 + $0x159] sm:$0xff]
        %v908 = vld [vmem:[%s433 + $0x169] sm:$0xff]
        %v909 = vld [vmem:[%s433 + $0x171] sm:$0xff]
        %v910 = vld [vmem:[%s3 + $0x4] sm:$0x1]
        %v911 = vlaneseq
        %v912 = vshrl.u32 %v911, 7
        %v913 = vsub.s32 0, %v912
        %v914 = vrot.slane %v910, %v913
        %v915 = vmul.f32 %v878, %v914
        %v916 = vmul.f32 %v879, %v914
        %v917 = vmul.f32 %v880, %v914
        %v918 = vmul.f32 %v881, %v914
        %v919 = vmul.f32 %v882, %v914
        %v920 = vmul.f32 %v883, %v914
        %v921 = vmul.f32 %v884, %v914
        %v922 = vmul.f32 %v885, %v914
        %v923 = vmul.f32 %v886, %v914
        %v924 = vmul.f32 %v887, %v914
        %v925 = vmul.f32 %v888, %v914
        %v926 = vmul.f32 %v889, %v914
        %v927 = vmul.f32 %v890, %v914
        %v928 = vmul.f32 %v891, %v914
        %v929 = vmul.f32 %v892, %v914
        %v930 = vmul.f32 %v893, %v914
        %v931 = vmul.f32 %v894, %v914
        %v932 = vmul.f32 %v895, %v914
        %v933 = vmul.f32 %v896, %v914
        %v934 = vmul.f32 %v897, %v914
        %v935 = vmul.f32 %v898, %v914
        %v936 = vmul.f32 %v899, %v914
        %v937 = vmul.f32 %v900, %v914
        %v938 = vmul.f32 %v901, %v914
        %v939 = vmul.f32 %v902, %v914
        %v940 = vmul.f32 %v903, %v914
        %v941 = vmul.f32 %v904, %v914
        %v942 = vmul.f32 %v905, %v914
        %v943 = vmul.f32 %v906, %v914
        %v944 = vmul.f32 %v907, %v914
        %v945 = vmul.f32 %v908, %v914
        %v946 = vmul.f32 %v909, %v914
        %v947 = vadd.f32 %v846, %v915
        %v948 = vadd.f32 %v847, %v916
        %v949 = vadd.f32 %v848, %v917
        %v950 = vadd.f32 %v849, %v918
        %v951 = vadd.f32 %v850, %v919
        %v952 = vadd.f32 %v851, %v920
        %v953 = vadd.f32 %v852, %v921
        %v954 = vadd.f32 %v853, %v922
        %v955 = vadd.f32 %v854, %v923
        %v956 = vadd.f32 %v855, %v924
        %v957 = vadd.f32 %v856, %v925
        %v958 = vadd.f32 %v857, %v926
        %v959 = vadd.f32 %v858, %v927
        %v960 = vadd.f32 %v859, %v928
        %v961 = vadd.f32 %v860, %v929
        %v962 = vadd.f32 %v861, %v930
        %v963 = vadd.f32 %v862, %v931
        %v964 = vadd.f32 %v863, %v932
        %v965 = vadd.f32 %v864, %v933
        %v966 = vadd.f32 %v865, %v934
        %v967 = vadd.f32 %v866, %v935
        %v968 = vadd.f32 %v867, %v936
        %v969 = vadd.f32 %v868, %v937
        %v970 = vadd.f32 %v869, %v938
        %v971 = vadd.f32 %v870, %v939
        %v972 = vadd.f32 %v871, %v940
        %v973 = vadd.f32 %v872, %v941
        %v974 = vadd.f32 %v873, %v942
        %v975 = vadd.f32 %v874, %v943
        %v976 = vadd.f32 %v875, %v944
        %v977 = vadd.f32 %v876, %v945
        %v978 = vadd.f32 %v877, %v946
        %v979 = vld [vmem:[%s433 + $0x2] sm:$0xff]
        %v980 = vld [vmem:[%s433 + $0xa] sm:$0xff]
        %v981 = vld [vmem:[%s433 + $0x1a] sm:$0xff]
        %v982 = vld [vmem:[%s433 + $0x22] sm:$0xff]
        %v983 = vld [vmem:[%s433 + $0x32] sm:$0xff]
        %v984 = vld [vmem:[%s433 + $0x3a] sm:$0xff]
        %v985 = vld [vmem:[%s433 + $0x4a] sm:$0xff]
        %v986 = vld [vmem:[%s433 + $0x52] sm:$0xff]
        %v987 = vld [vmem:[%s433 + $0x62] sm:$0xff]
        %v988 = vld [vmem:[%s433 + $0x6a] sm:$0xff]
        %v989 = vld [vmem:[%s433 + $0x7a] sm:$0xff]
        %v990 = vld [vmem:[%s433 + $0x82] sm:$0xff]
        %v991 = vld [vmem:[%s433 + $0x92] sm:$0xff]
        %v992 = vld [vmem:[%s433 + $0x9a] sm:$0xff]
        %v993 = vld [vmem:[%s433 + $0xaa] sm:$0xff]
        %v994 = vld [vmem:[%s433 + $0xb2] sm:$0xff]
        %v995 = vld [vmem:[%s433 + $0xc2] sm:$0xff]
        %v996 = vld [vmem:[%s433 + $0xca] sm:$0xff]
        %v997 = vld [vmem:[%s433 + $0xda] sm:$0xff]
        %v998 = vld [vmem:[%s433 + $0xe2] sm:$0xff]
        %v999 = vld [vmem:[%s433 + $0xf2] sm:$0xff]
        %v1000 = vld [vmem:[%s433 + $0xfa] sm:$0xff]
        %v1001 = vld [vmem:[%s433 + $0x10a] sm:$0xff]
        %v1002 = vld [vmem:[%s433 + $0x112] sm:$0xff]
        %v1003 = vld [vmem:[%s433 + $0x122] sm:$0xff]
        %v1004 = vld [vmem:[%s433 + $0x12a] sm:$0xff]
        %v1005 = vld [vmem:[%s433 + $0x13a] sm:$0xff]
        %v1006 = vld [vmem:[%s433 + $0x142] sm:$0xff]
        %v1007 = vld [vmem:[%s433 + $0x152] sm:$0xff]
        %v1008 = vld [vmem:[%s433 + $0x15a] sm:$0xff]
        %v1009 = vld [vmem:[%s433 + $0x16a] sm:$0xff]
        %v1010 = vld [vmem:[%s433 + $0x172] sm:$0xff]
        %v1011 = vld [vmem:[%s3 + $0x5] sm:$0x1]
        %v1012 = vlaneseq
        %v1013 = vshrl.u32 %v1012, 7
        %v1014 = vsub.s32 0, %v1013
        %v1015 = vrot.slane %v1011, %v1014
        %v1016 = vmul.f32 %v979, %v1015
        %v1017 = vmul.f32 %v980, %v1015
        %v1018 = vmul.f32 %v981, %v1015
        %v1019 = vmul.f32 %v982, %v1015
        %v1020 = vmul.f32 %v983, %v1015
        %v1021 = vmul.f32 %v984, %v1015
        %v1022 = vmul.f32 %v985, %v1015
        %v1023 = vmul.f32 %v986, %v1015
        %v1024 = vmul.f32 %v987, %v1015
        %v1025 = vmul.f32 %v988, %v1015
        %v1026 = vmul.f32 %v989, %v1015
        %v1027 = vmul.f32 %v990, %v1015
        %v1028 = vmul.f32 %v991, %v1015
        %v1029 = vmul.f32 %v992, %v1015
        %v1030 = vmul.f32 %v993, %v1015
        %v1031 = vmul.f32 %v994, %v1015
        %v1032 = vmul.f32 %v995, %v1015
        %v1033 = vmul.f32 %v996, %v1015
        %v1034 = vmul.f32 %v997, %v1015
        %v1035 = vmul.f32 %v998, %v1015
        %v1036 = vmul.f32 %v999, %v1015
        %v1037 = vmul.f32 %v1000, %v1015
        %v1038 = vmul.f32 %v1001, %v1015
        %v1039 = vmul.f32 %v1002, %v1015
        %v1040 = vmul.f32 %v1003, %v1015
        %v1041 = vmul.f32 %v1004, %v1015
        %v1042 = vmul.f32 %v1005, %v1015
        %v1043 = vmul.f32 %v1006, %v1015
        %v1044 = vmul.f32 %v1007, %v1015
        %v1045 = vmul.f32 %v1008, %v1015
        %v1046 = vmul.f32 %v1009, %v1015
        %v1047 = vmul.f32 %v1010, %v1015
        %v1048 = vadd.f32 %v947, %v1016
        %v1049 = vadd.f32 %v948, %v1017
        %v1050 = vadd.f32 %v949, %v1018
        %v1051 = vadd.f32 %v950, %v1019
        %v1052 = vadd.f32 %v951, %v1020
        %v1053 = vadd.f32 %v952, %v1021
        %v1054 = vadd.f32 %v953, %v1022
        %v1055 = vadd.f32 %v954, %v1023
        %v1056 = vadd.f32 %v955, %v1024
        %v1057 = vadd.f32 %v956, %v1025
        %v1058 = vadd.f32 %v957, %v1026
        %v1059 = vadd.f32 %v958, %v1027
        %v1060 = vadd.f32 %v959, %v1028
        %v1061 = vadd.f32 %v960, %v1029
        %v1062 = vadd.f32 %v961, %v1030
        %v1063 = vadd.f32 %v962, %v1031
        %v1064 = vadd.f32 %v963, %v1032
        %v1065 = vadd.f32 %v964, %v1033
        %v1066 = vadd.f32 %v965, %v1034
        %v1067 = vadd.f32 %v966, %v1035
        %v1068 = vadd.f32 %v967, %v1036
        %v1069 = vadd.f32 %v968, %v1037
        %v1070 = vadd.f32 %v969, %v1038
        %v1071 = vadd.f32 %v970, %v1039
        %v1072 = vadd.f32 %v971, %v1040
        %v1073 = vadd.f32 %v972, %v1041
        %v1074 = vadd.f32 %v973, %v1042
        %v1075 = vadd.f32 %v974, %v1043
        %v1076 = vadd.f32 %v975, %v1044
        %v1077 = vadd.f32 %v976, %v1045
        %v1078 = vadd.f32 %v977, %v1046
        %v1079 = vadd.f32 %v978, %v1047
        %s1080 = scalar_lea.vmem [#allocation2], 48
        %v1081 = vld [vmem:[%s1080] sm:$0xff]
        %v1082 = vld [vmem:[%s1080 + $0x8] sm:$0xff]
        %v1083 = vld [vmem:[%s1080 + $0x18] sm:$0xff]
        %v1084 = vld [vmem:[%s1080 + $0x20] sm:$0xff]
        %v1085 = vld [vmem:[%s1080 + $0x30] sm:$0xff]
        %v1086 = vld [vmem:[%s1080 + $0x38] sm:$0xff]
        %v1087 = vld [vmem:[%s1080 + $0x48] sm:$0xff]
        %v1088 = vld [vmem:[%s1080 + $0x50] sm:$0xff]
        %v1089 = vld [vmem:[%s1080 + $0x60] sm:$0xff]
        %v1090 = vld [vmem:[%s1080 + $0x68] sm:$0xff]
        %v1091 = vld [vmem:[%s1080 + $0x78] sm:$0xff]
        %v1092 = vld [vmem:[%s1080 + $0x80] sm:$0xff]
        %v1093 = vld [vmem:[%s1080 + $0x90] sm:$0xff]
        %v1094 = vld [vmem:[%s1080 + $0x98] sm:$0xff]
        %v1095 = vld [vmem:[%s1080 + $0xa8] sm:$0xff]
        %v1096 = vld [vmem:[%s1080 + $0xb0] sm:$0xff]
        %v1097 = vld [vmem:[%s1080 + $0xc0] sm:$0xff]
        %v1098 = vld [vmem:[%s1080 + $0xc8] sm:$0xff]
        %v1099 = vld [vmem:[%s1080 + $0xd8] sm:$0xff]
        %v1100 = vld [vmem:[%s1080 + $0xe0] sm:$0xff]
        %v1101 = vld [vmem:[%s1080 + $0xf0] sm:$0xff]
        %v1102 = vld [vmem:[%s1080 + $0xf8] sm:$0xff]
        %v1103 = vld [vmem:[%s1080 + $0x108] sm:$0xff]
        %v1104 = vld [vmem:[%s1080 + $0x110] sm:$0xff]
        %v1105 = vld [vmem:[%s1080 + $0x120] sm:$0xff]
        %v1106 = vld [vmem:[%s1080 + $0x128] sm:$0xff]
        %v1107 = vld [vmem:[%s1080 + $0x138] sm:$0xff]
        %v1108 = vld [vmem:[%s1080 + $0x140] sm:$0xff]
        %v1109 = vld [vmem:[%s1080 + $0x150] sm:$0xff]
        %v1110 = vld [vmem:[%s1080 + $0x158] sm:$0xff]
        %v1111 = vld [vmem:[%s1080 + $0x168] sm:$0xff]
        %v1112 = vld [vmem:[%s1080 + $0x170] sm:$0xff]
        %v1113 = vld [vmem:[%s3 + $0x6] sm:$0x1]
        %v1114 = vlaneseq
        %v1115 = vshrl.u32 %v1114, 7
        %v1116 = vsub.s32 0, %v1115
        %v1117 = vrot.slane %v1113, %v1116
        %v1118 = vmul.f32 %v1081, %v1117
        %v1119 = vmul.f32 %v1082, %v1117
        %v1120 = vmul.f32 %v1083, %v1117
        %v1121 = vmul.f32 %v1084, %v1117
        %v1122 = vmul.f32 %v1085, %v1117
        %v1123 = vmul.f32 %v1086, %v1117
        %v1124 = vmul.f32 %v1087, %v1117
        %v1125 = vmul.f32 %v1088, %v1117
        %v1126 = vmul.f32 %v1089, %v1117
        %v1127 = vmul.f32 %v1090, %v1117
        %v1128 = vmul.f32 %v1091, %v1117
        %v1129 = vmul.f32 %v1092, %v1117
        %v1130 = vmul.f32 %v1093, %v1117
        %v1131 = vmul.f32 %v1094, %v1117
        %v1132 = vmul.f32 %v1095, %v1117
        %v1133 = vmul.f32 %v1096, %v1117
        %v1134 = vmul.f32 %v1097, %v1117
        %v1135 = vmul.f32 %v1098, %v1117
        %v1136 = vmul.f32 %v1099, %v1117
        %v1137 = vmul.f32 %v1100, %v1117
        %v1138 = vmul.f32 %v1101, %v1117
        %v1139 = vmul.f32 %v1102, %v1117
        %v1140 = vmul.f32 %v1103, %v1117
        %v1141 = vmul.f32 %v1104, %v1117
        %v1142 = vmul.f32 %v1105, %v1117
        %v1143 = vmul.f32 %v1106, %v1117
        %v1144 = vmul.f32 %v1107, %v1117
        %v1145 = vmul.f32 %v1108, %v1117
        %v1146 = vmul.f32 %v1109, %v1117
        %v1147 = vmul.f32 %v1110, %v1117
        %v1148 = vmul.f32 %v1111, %v1117
        %v1149 = vmul.f32 %v1112, %v1117
        %v1150 = vadd.f32 %v1048, %v1118
        %v1151 = vadd.f32 %v1049, %v1119
        %v1152 = vadd.f32 %v1050, %v1120
        %v1153 = vadd.f32 %v1051, %v1121
        %v1154 = vadd.f32 %v1052, %v1122
        %v1155 = vadd.f32 %v1053, %v1123
        %v1156 = vadd.f32 %v1054, %v1124
        %v1157 = vadd.f32 %v1055, %v1125
        %v1158 = vadd.f32 %v1056, %v1126
        %v1159 = vadd.f32 %v1057, %v1127
        %v1160 = vadd.f32 %v1058, %v1128
        %v1161 = vadd.f32 %v1059, %v1129
        %v1162 = vadd.f32 %v1060, %v1130
        %v1163 = vadd.f32 %v1061, %v1131
        %v1164 = vadd.f32 %v1062, %v1132
        %v1165 = vadd.f32 %v1063, %v1133
        %v1166 = vadd.f32 %v1064, %v1134
        %v1167 = vadd.f32 %v1065, %v1135
        %v1168 = vadd.f32 %v1066, %v1136
        %v1169 = vadd.f32 %v1067, %v1137
        %v1170 = vadd.f32 %v1068, %v1138
        %v1171 = vadd.f32 %v1069, %v1139
        %v1172 = vadd.f32 %v1070, %v1140
        %v1173 = vadd.f32 %v1071, %v1141
        %v1174 = vadd.f32 %v1072, %v1142
        %v1175 = vadd.f32 %v1073, %v1143
        %v1176 = vadd.f32 %v1074, %v1144
        %v1177 = vadd.f32 %v1075, %v1145
        %v1178 = vadd.f32 %v1076, %v1146
        %v1179 = vadd.f32 %v1077, %v1147
        %v1180 = vadd.f32 %v1078, %v1148
        %v1181 = vadd.f32 %v1079, %v1149
        %v1182 = vld [vmem:[%s1080 + $0x1] sm:$0xff]
        %v1183 = vld [vmem:[%s1080 + $0x9] sm:$0xff]
        %v1184 = vld [vmem:[%s1080 + $0x19] sm:$0xff]
        %v1185 = vld [vmem:[%s1080 + $0x21] sm:$0xff]
        %v1186 = vld [vmem:[%s1080 + $0x31] sm:$0xff]
        %v1187 = vld [vmem:[%s1080 + $0x39] sm:$0xff]
        %v1188 = vld [vmem:[%s1080 + $0x49] sm:$0xff]
        %v1189 = vld [vmem:[%s1080 + $0x51] sm:$0xff]
        %v1190 = vld [vmem:[%s1080 + $0x61] sm:$0xff]
        %v1191 = vld [vmem:[%s1080 + $0x69] sm:$0xff]
        %v1192 = vld [vmem:[%s1080 + $0x79] sm:$0xff]
        %v1193 = vld [vmem:[%s1080 + $0x81] sm:$0xff]
        %v1194 = vld [vmem:[%s1080 + $0x91] sm:$0xff]
        %v1195 = vld [vmem:[%s1080 + $0x99] sm:$0xff]
        %v1196 = vld [vmem:[%s1080 + $0xa9] sm:$0xff]
        %v1197 = vld [vmem:[%s1080 + $0xb1] sm:$0xff]
        %v1198 = vld [vmem:[%s1080 + $0xc1] sm:$0xff]
        %v1199 = vld [vmem:[%s1080 + $0xc9] sm:$0xff]
        %v1200 = vld [vmem:[%s1080 + $0xd9] sm:$0xff]
        %v1201 = vld [vmem:[%s1080 + $0xe1] sm:$0xff]
        %v1202 = vld [vmem:[%s1080 + $0xf1] sm:$0xff]
        %v1203 = vld [vmem:[%s1080 + $0xf9] sm:$0xff]
        %v1204 = vld [vmem:[%s1080 + $0x109] sm:$0xff]
        %v1205 = vld [vmem:[%s1080 + $0x111] sm:$0xff]
        %v1206 = vld [vmem:[%s1080 + $0x121] sm:$0xff]
        %v1207 = vld [vmem:[%s1080 + $0x129] sm:$0xff]
        %v1208 = vld [vmem:[%s1080 + $0x139] sm:$0xff]
        %v1209 = vld [vmem:[%s1080 + $0x141] sm:$0xff]
        %v1210 = vld [vmem:[%s1080 + $0x151] sm:$0xff]
        %v1211 = vld [vmem:[%s1080 + $0x159] sm:$0xff]
        %v1212 = vld [vmem:[%s1080 + $0x169] sm:$0xff]
        %v1213 = vld [vmem:[%s1080 + $0x171] sm:$0xff]
        %v1214 = vld [vmem:[%s3 + $0x7] sm:$0x1]
        %v1215 = vlaneseq
        %v1216 = vshrl.u32 %v1215, 7
        %v1217 = vsub.s32 0, %v1216
        %v1218 = vrot.slane %v1214, %v1217
        %v1219 = vmul.f32 %v1182, %v1218
        %v1220 = vmul.f32 %v1183, %v1218
        %v1221 = vmul.f32 %v1184, %v1218
        %v1222 = vmul.f32 %v1185, %v1218
        %v1223 = vmul.f32 %v1186, %v1218
        %v1224 = vmul.f32 %v1187, %v1218
        %v1225 = vmul.f32 %v1188, %v1218
        %v1226 = vmul.f32 %v1189, %v1218
        %v1227 = vmul.f32 %v1190, %v1218
        %v1228 = vmul.f32 %v1191, %v1218
        %v1229 = vmul.f32 %v1192, %v1218
        %v1230 = vmul.f32 %v1193, %v1218
        %v1231 = vmul.f32 %v1194, %v1218
        %v1232 = vmul.f32 %v1195, %v1218
        %v1233 = vmul.f32 %v1196, %v1218
        %v1234 = vmul.f32 %v1197, %v1218
        %v1235 = vmul.f32 %v1198, %v1218
        %v1236 = vmul.f32 %v1199, %v1218
        %v1237 = vmul.f32 %v1200, %v1218
        %v1238 = vmul.f32 %v1201, %v1218
        %v1239 = vmul.f32 %v1202, %v1218
        %v1240 = vmul.f32 %v1203, %v1218
        %v1241 = vmul.f32 %v1204, %v1218
        %v1242 = vmul.f32 %v1205, %v1218
        %v1243 = vmul.f32 %v1206, %v1218
        %v1244 = vmul.f32 %v1207, %v1218
        %v1245 = vmul.f32 %v1208, %v1218
        %v1246 = vmul.f32 %v1209, %v1218
        %v1247 = vmul.f32 %v1210, %v1218
        %v1248 = vmul.f32 %v1211, %v1218
        %v1249 = vmul.f32 %v1212, %v1218
        %v1250 = vmul.f32 %v1213, %v1218
        %v1251 = vadd.f32 %v1150, %v1219
        %v1252 = vadd.f32 %v1151, %v1220
        %v1253 = vadd.f32 %v1152, %v1221
        %v1254 = vadd.f32 %v1153, %v1222
        %v1255 = vadd.f32 %v1154, %v1223
        %v1256 = vadd.f32 %v1155, %v1224
        %v1257 = vadd.f32 %v1156, %v1225
        %v1258 = vadd.f32 %v1157, %v1226
        %v1259 = vadd.f32 %v1158, %v1227
        %v1260 = vadd.f32 %v1159, %v1228
        %v1261 = vadd.f32 %v1160, %v1229
        %v1262 = vadd.f32 %v1161, %v1230
        %v1263 = vadd.f32 %v1162, %v1231
        %v1264 = vadd.f32 %v1163, %v1232
        %v1265 = vadd.f32 %v1164, %v1233
        %v1266 = vadd.f32 %v1165, %v1234
        %v1267 = vadd.f32 %v1166, %v1235
        %v1268 = vadd.f32 %v1167, %v1236
        %v1269 = vadd.f32 %v1168, %v1237
        %v1270 = vadd.f32 %v1169, %v1238
        %v1271 = vadd.f32 %v1170, %v1239
        %v1272 = vadd.f32 %v1171, %v1240
        %v1273 = vadd.f32 %v1172, %v1241
        %v1274 = vadd.f32 %v1173, %v1242
        %v1275 = vadd.f32 %v1174, %v1243
        %v1276 = vadd.f32 %v1175, %v1244
        %v1277 = vadd.f32 %v1176, %v1245
        %v1278 = vadd.f32 %v1177, %v1246
        %v1279 = vadd.f32 %v1178, %v1247
        %v1280 = vadd.f32 %v1179, %v1248
        %v1281 = vadd.f32 %v1180, %v1249
        %v1282 = vadd.f32 %v1181, %v1250
        %v1283 = vld [vmem:[%s1080 + $0x2] sm:$0xff]
        %v1284 = vld [vmem:[%s1080 + $0xa] sm:$0xff]
        %v1285 = vld [vmem:[%s1080 + $0x1a] sm:$0xff]
        %v1286 = vld [vmem:[%s1080 + $0x22] sm:$0xff]
        %v1287 = vld [vmem:[%s1080 + $0x32] sm:$0xff]
        %v1288 = vld [vmem:[%s1080 + $0x3a] sm:$0xff]
        %v1289 = vld [vmem:[%s1080 + $0x4a] sm:$0xff]
        %v1290 = vld [vmem:[%s1080 + $0x52] sm:$0xff]
        %v1291 = vld [vmem:[%s1080 + $0x62] sm:$0xff]
        %v1292 = vld [vmem:[%s1080 + $0x6a] sm:$0xff]
        %v1293 = vld [vmem:[%s1080 + $0x7a] sm:$0xff]
        %v1294 = vld [vmem:[%s1080 + $0x82] sm:$0xff]
        %v1295 = vld [vmem:[%s1080 + $0x92] sm:$0xff]
        %v1296 = vld [vmem:[%s1080 + $0x9a] sm:$0xff]
        %v1297 = vld [vmem:[%s1080 + $0xaa] sm:$0xff]
        %v1298 = vld [vmem:[%s1080 + $0xb2] sm:$0xff]
        %v1299 = vld [vmem:[%s1080 + $0xc2] sm:$0xff]
        %v1300 = vld [vmem:[%s1080 + $0xca] sm:$0xff]
        %v1301 = vld [vmem:[%s1080 + $0xda] sm:$0xff]
        %v1302 = vld [vmem:[%s1080 + $0xe2] sm:$0xff]
        %v1303 = vld [vmem:[%s1080 + $0xf2] sm:$0xff]
        %v1304 = vld [vmem:[%s1080 + $0xfa] sm:$0xff]
        %v1305 = vld [vmem:[%s1080 + $0x10a] sm:$0xff]
        %v1306 = vld [vmem:[%s1080 + $0x112] sm:$0xff]
        %v1307 = vld [vmem:[%s1080 + $0x122] sm:$0xff]
        %v1308 = vld [vmem:[%s1080 + $0x12a] sm:$0xff]
        %v1309 = vld [vmem:[%s1080 + $0x13a] sm:$0xff]
        %v1310 = vld [vmem:[%s1080 + $0x142] sm:$0xff]
        %v1311 = vld [vmem:[%s1080 + $0x152] sm:$0xff]
        %v1312 = vld [vmem:[%s1080 + $0x15a] sm:$0xff]
        %v1313 = vld [vmem:[%s1080 + $0x16a] sm:$0xff]
        %v1314 = vld [vmem:[%s1080 + $0x172] sm:$0xff]
        %v1315 = vld [vmem:[%s3 + $0x8] sm:$0x1]
        %v1316 = vlaneseq
        %v1317 = vshrl.u32 %v1316, 7
        %v1318 = vsub.s32 0, %v1317
        %v1319 = vrot.slane %v1315, %v1318
        %v1320 = vmul.f32 %v1283, %v1319
        %v1321 = vmul.f32 %v1284, %v1319
        %v1322 = vmul.f32 %v1285, %v1319
        %v1323 = vmul.f32 %v1286, %v1319
        %v1324 = vmul.f32 %v1287, %v1319
        %v1325 = vmul.f32 %v1288, %v1319
        %v1326 = vmul.f32 %v1289, %v1319
        %v1327 = vmul.f32 %v1290, %v1319
        %v1328 = vmul.f32 %v1291, %v1319
        %v1329 = vmul.f32 %v1292, %v1319
        %v1330 = vmul.f32 %v1293, %v1319
        %v1331 = vmul.f32 %v1294, %v1319
        %v1332 = vmul.f32 %v1295, %v1319
        %v1333 = vmul.f32 %v1296, %v1319
        %v1334 = vmul.f32 %v1297, %v1319
        %v1335 = vmul.f32 %v1298, %v1319
        %v1336 = vmul.f32 %v1299, %v1319
        %v1337 = vmul.f32 %v1300, %v1319
        %v1338 = vmul.f32 %v1301, %v1319
        %v1339 = vmul.f32 %v1302, %v1319
        %v1340 = vmul.f32 %v1303, %v1319
        %v1341 = vmul.f32 %v1304, %v1319
        %v1342 = vmul.f32 %v1305, %v1319
        %v1343 = vmul.f32 %v1306, %v1319
        %v1344 = vmul.f32 %v1307, %v1319
        %v1345 = vmul.f32 %v1308, %v1319
        %v1346 = vmul.f32 %v1309, %v1319
        %v1347 = vmul.f32 %v1310, %v1319
        %v1348 = vmul.f32 %v1311, %v1319
        %v1349 = vmul.f32 %v1312, %v1319
        %v1350 = vmul.f32 %v1313, %v1319
        %v1351 = vmul.f32 %v1314, %v1319
        %v1352 = vadd.f32 %v1251, %v1320
        %v1353 = vadd.f32 %v1252, %v1321
        %v1354 = vadd.f32 %v1253, %v1322
        %v1355 = vadd.f32 %v1254, %v1323
        %v1356 = vadd.f32 %v1255, %v1324
        %v1357 = vadd.f32 %v1256, %v1325
        %v1358 = vadd.f32 %v1257, %v1326
        %v1359 = vadd.f32 %v1258, %v1327
        %v1360 = vadd.f32 %v1259, %v1328
        %v1361 = vadd.f32 %v1260, %v1329
        %v1362 = vadd.f32 %v1261, %v1330
        %v1363 = vadd.f32 %v1262, %v1331
        %v1364 = vadd.f32 %v1263, %v1332
        %v1365 = vadd.f32 %v1264, %v1333
        %v1366 = vadd.f32 %v1265, %v1334
        %v1367 = vadd.f32 %v1266, %v1335
        %v1368 = vadd.f32 %v1267, %v1336
        %v1369 = vadd.f32 %v1268, %v1337
        %v1370 = vadd.f32 %v1269, %v1338
        %v1371 = vadd.f32 %v1270, %v1339
        %v1372 = vadd.f32 %v1271, %v1340
        %v1373 = vadd.f32 %v1272, %v1341
        %v1374 = vadd.f32 %v1273, %v1342
        %v1375 = vadd.f32 %v1274, %v1343
        %v1376 = vadd.f32 %v1275, %v1344
        %v1377 = vadd.f32 %v1276, %v1345
        %v1378 = vadd.f32 %v1277, %v1346
        %v1379 = vadd.f32 %v1278, %v1347
        %v1380 = vadd.f32 %v1279, %v1348
        %v1381 = vadd.f32 %v1280, %v1349
        %v1382 = vadd.f32 %v1281, %v1350
        %v1383 = vadd.f32 %v1282, %v1351
        %v1384 = vld [vmem:[%s338] sm:$0xff]
        %v1385 = vld [vmem:[%s338 + $0x8] sm:$0xff]
        %v1386 = vld [vmem:[%s338 + $0x10] sm:$0xff]
        %v1387 = vld [vmem:[%s338 + $0x18] sm:$0xff]
        %v1388 = vld [vmem:[%s338 + $0x20] sm:$0xff]
        %v1389 = vld [vmem:[%s338 + $0x28] sm:$0xff]
        %v1390 = vld [vmem:[%s338 + $0x30] sm:$0xff]
        %v1391 = vld [vmem:[%s338 + $0x38] sm:$0xff]
        %v1392 = vld [vmem:[%s338 + $0x40] sm:$0xff]
        %v1393 = vld [vmem:[%s338 + $0x48] sm:$0xff]
        %v1394 = vld [vmem:[%s338 + $0x50] sm:$0xff]
        %v1395 = vld [vmem:[%s338 + $0x58] sm:$0xff]
        %v1396 = vld [vmem:[%s338 + $0x60] sm:$0xff]
        %v1397 = vld [vmem:[%s338 + $0x68] sm:$0xff]
        %v1398 = vld [vmem:[%s338 + $0x70] sm:$0xff]
        %v1399 = vld [vmem:[%s338 + $0x78] sm:$0xff]
        %v1400 = vld [vmem:[%s338 + $0x80] sm:$0xff]
        %v1401 = vld [vmem:[%s338 + $0x88] sm:$0xff]
        %v1402 = vld [vmem:[%s338 + $0x90] sm:$0xff]
        %v1403 = vld [vmem:[%s338 + $0x98] sm:$0xff]
        %v1404 = vld [vmem:[%s338 + $0xa0] sm:$0xff]
        %v1405 = vld [vmem:[%s338 + $0xa8] sm:$0xff]
        %v1406 = vld [vmem:[%s338 + $0xb0] sm:$0xff]
        %v1407 = vld [vmem:[%s338 + $0xb8] sm:$0xff]
        %v1408 = vld [vmem:[%s338 + $0xc0] sm:$0xff]
        %v1409 = vld [vmem:[%s338 + $0xc8] sm:$0xff]
        %v1410 = vld [vmem:[%s338 + $0xd0] sm:$0xff]
        %v1411 = vld [vmem:[%s338 + $0xd8] sm:$0xff]
        %v1412 = vld [vmem:[%s338 + $0xe0] sm:$0xff]
        %v1413 = vld [vmem:[%s338 + $0xe8] sm:$0xff]
        %v1414 = vld [vmem:[%s338 + $0xf0] sm:$0xff]
        %v1415 = vld [vmem:[%s338 + $0xf8] sm:$0xff]
        %v1416 = vadd.f32 %v1352, %v1384
        %v1417 = vadd.f32 %v1353, %v1385
        %v1418 = vadd.f32 %v1354, %v1386
        %v1419 = vadd.f32 %v1355, %v1387
        %v1420 = vadd.f32 %v1356, %v1388
        %v1421 = vadd.f32 %v1357, %v1389
        %v1422 = vadd.f32 %v1358, %v1390
        %v1423 = vadd.f32 %v1359, %v1391
        %v1424 = vadd.f32 %v1360, %v1392
        %v1425 = vadd.f32 %v1361, %v1393
        %v1426 = vadd.f32 %v1362, %v1394
        %v1427 = vadd.f32 %v1363, %v1395
        %v1428 = vadd.f32 %v1364, %v1396
        %v1429 = vadd.f32 %v1365, %v1397
        %v1430 = vadd.f32 %v1366, %v1398
        %v1431 = vadd.f32 %v1367, %v1399
        %v1432 = vadd.f32 %v1368, %v1400
        %v1433 = vadd.f32 %v1369, %v1401
        %v1434 = vadd.f32 %v1370, %v1402
        %v1435 = vadd.f32 %v1371, %v1403
        %v1436 = vadd.f32 %v1372, %v1404
        %v1437 = vadd.f32 %v1373, %v1405
        %v1438 = vadd.f32 %v1374, %v1406
        %v1439 = vadd.f32 %v1375, %v1407
        %v1440 = vadd.f32 %v1376, %v1408
        %v1441 = vadd.f32 %v1377, %v1409
        %v1442 = vadd.f32 %v1378, %v1410
        %v1443 = vadd.f32 %v1379, %v1411
        %v1444 = vadd.f32 %v1380, %v1412
        %v1445 = vadd.f32 %v1381, %v1413
        %v1446 = vadd.f32 %v1382, %v1414
        %v1447 = vadd.f32 %v1383, %v1415
        %v1448 = vpack.c.bf16 %v1417, %v1416
        %v1449 = vpack.c.bf16 %v1419, %v1418
        %v1450 = vpack.c.bf16 %v1421, %v1420
        %v1451 = vpack.c.bf16 %v1423, %v1422
        %v1452 = vpack.c.bf16 %v1425, %v1424
        %v1453 = vpack.c.bf16 %v1427, %v1426
        %v1454 = vpack.c.bf16 %v1429, %v1428
        %v1455 = vpack.c.bf16 %v1431, %v1430
        %v1456 = vpack.c.bf16 %v1433, %v1432
        %v1457 = vpack.c.bf16 %v1435, %v1434
        %v1458 = vpack.c.bf16 %v1437, %v1436
        %v1459 = vpack.c.bf16 %v1439, %v1438
        %v1460 = vpack.c.bf16 %v1441, %v1440
        %v1461 = vpack.c.bf16 %v1443, %v1442
        %v1462 = vpack.c.bf16 %v1445, %v1444
        %v1463 = vpack.c.bf16 %v1447, %v1446
        %v1464 = vld [vmem:[%s343] sm:$0xff]
        %v1465 = vld [vmem:[%s343 + $0x8] sm:$0xff]
        %v1466 = vld [vmem:[%s343 + $0x10] sm:$0xff]
        %v1467 = vld [vmem:[%s343 + $0x18] sm:$0xff]
        %v1468 = vld [vmem:[%s343 + $0x20] sm:$0xff]
        %v1469 = vld [vmem:[%s343 + $0x28] sm:$0xff]
        %v1470 = vld [vmem:[%s343 + $0x30] sm:$0xff]
        %v1471 = vld [vmem:[%s343 + $0x38] sm:$0xff]
        %v1472 = vld [vmem:[%s343 + $0x40] sm:$0xff]
        %v1473 = vld [vmem:[%s343 + $0x48] sm:$0xff]
        %v1474 = vld [vmem:[%s343 + $0x50] sm:$0xff]
        %v1475 = vld [vmem:[%s343 + $0x58] sm:$0xff]
        %v1476 = vld [vmem:[%s343 + $0x60] sm:$0xff]
        %v1477 = vld [vmem:[%s343 + $0x68] sm:$0xff]
        %v1478 = vld [vmem:[%s343 + $0x70] sm:$0xff]
        %v1479 = vld [vmem:[%s343 + $0x78] sm:$0xff]
        %v1480 = vld [vmem:[%s343 + $0x80] sm:$0xff]
        %v1481 = vld [vmem:[%s343 + $0x88] sm:$0xff]
        %v1482 = vld [vmem:[%s343 + $0x90] sm:$0xff]
        %v1483 = vld [vmem:[%s343 + $0x98] sm:$0xff]
        %v1484 = vld [vmem:[%s343 + $0xa0] sm:$0xff]
        %v1485 = vld [vmem:[%s343 + $0xa8] sm:$0xff]
        %v1486 = vld [vmem:[%s343 + $0xb0] sm:$0xff]
        %v1487 = vld [vmem:[%s343 + $0xb8] sm:$0xff]
        %v1488 = vld [vmem:[%s343 + $0xc0] sm:$0xff]
        %v1489 = vld [vmem:[%s343 + $0xc8] sm:$0xff]
        %v1490 = vld [vmem:[%s343 + $0xd0] sm:$0xff]
        %v1491 = vld [vmem:[%s343 + $0xd8] sm:$0xff]
        %v1492 = vld [vmem:[%s343 + $0xe0] sm:$0xff]
        %v1493 = vld [vmem:[%s343 + $0xe8] sm:$0xff]
        %v1494 = vld [vmem:[%s343 + $0xf0] sm:$0xff]
        %v1495 = vld [vmem:[%s343 + $0xf8] sm:$0xff]
        %v1496 = vpack.c.bf16 %v1465, %v1464
        %v1497 = vpack.c.bf16 %v1467, %v1466
        %v1498 = vpack.c.bf16 %v1469, %v1468
        %v1499 = vpack.c.bf16 %v1471, %v1470
        %v1500 = vpack.c.bf16 %v1473, %v1472
        %v1501 = vpack.c.bf16 %v1475, %v1474
        %v1502 = vpack.c.bf16 %v1477, %v1476
        %v1503 = vpack.c.bf16 %v1479, %v1478
        %v1504 = vpack.c.bf16 %v1481, %v1480
        %v1505 = vpack.c.bf16 %v1483, %v1482
        %v1506 = vpack.c.bf16 %v1485, %v1484
        %v1507 = vpack.c.bf16 %v1487, %v1486
        %v1508 = vpack.c.bf16 %v1489, %v1488
        %v1509 = vpack.c.bf16 %v1491, %v1490
        %v1510 = vpack.c.bf16 %v1493, %v1492
        %v1511 = vpack.c.bf16 %v1495, %v1494
        %v1512 = vld [vmem:[%s5] sm:$0xf]
        %v1513 = vld [vmem:[%s6] sm:$0x3]
        %vm1514 = vcmask 31744
        %v1516 = vsel %vm1514, %v1496, 0
        %v1519 = vsel %vm1514, %v1497, 0
        %v1522 = vsel %vm1514, %v1498, 0
        %v1525 = vsel %vm1514, %v1499, 0
        %v1528 = vsel %vm1514, %v1500, 0
        %v1531 = vsel %vm1514, %v1501, 0
        %v1534 = vsel %vm1514, %v1502, 0
        %v1537 = vsel %vm1514, %v1503, 0
        %v1540 = vsel %vm1514, %v1504, 0
        %v1543 = vsel %vm1514, %v1505, 0
        %v1546 = vsel %vm1514, %v1506, 0
        %v1549 = vsel %vm1514, %v1507, 0
        %v1552 = vsel %vm1514, %v1508, 0
        %v1555 = vsel %vm1514, %v1509, 0
        %v1558 = vsel %vm1514, %v1510, 0
        %v1561 = vsel %vm1514, %v1511, 0
        %vm1563 = vcmask 1041408
        %v1565 = vsel %vm1563, %v1513, 0
        %1567 = vmatprep.subr.bf16.mxu0 0
        %1568 = vmatpush1.bf16.msra.mxu0 0
        %1569 = vmatprep.subr.bf16.mxu0 0
        %1570 = vmatpush1.bf16.msra.mxu0 0
        %1571 = vmatprep.subr.bf16.mxu0 0
        %1572 = vmatpush1.bf16.msra.mxu0 0
        %1573 = vmatprep.subr.bf16.mxu0 0
        %1574 = vmatpush1.bf16.msra.mxu0 0
        %1575 = vmatprep.subr.bf16.mxu0 0
        %1576 = vmatpush1.bf16.msra.mxu0 0
        %1577 = vmatprep.subr.bf16.mxu0 0
        %1578 = vmatpush1.bf16.msra.mxu0 0
        %1579 = vmatprep.subr.bf16.mxu0 0
        %1580 = vmatpush1.bf16.msra.mxu0 0
        %1581 = vmatprep.subr.bf16.mxu0 0
        %1582 = vmatpush1.bf16.msra.mxu0 %v1565
        %1583 = vmatprep.subr.bf16.mxu0 0
        %1584 = vmatpush2.bf16.msra.mxu0 0
        %1585 = vmatprep.subr.bf16.mxu0 0
        %1586 = vmatpush2.bf16.msra.mxu0 0
        %1587 = vmatprep.subr.bf16.mxu0 0
        %1588 = vmatpush2.bf16.msra.mxu0 0
        %1589 = vmatprep.subr.bf16.mxu0 0
        %1590 = vmatpush2.bf16.msra.mxu0 0
        %1591 = vmatprep.subr.bf16.mxu0 0
        %1592 = vmatpush2.bf16.msra.mxu0 0
        %1593 = vmatprep.subr.bf16.mxu0 0
        %1594 = vmatpush2.bf16.msra.mxu0 0
        %1595 = vmatprep.subr.bf16.mxu0 0
        %1596 = vmatpush2.bf16.msra.mxu0 0
        %1597 = vmatprep.subr.bf16.mxu0 0
        %1598 = vmatpush2.bf16.msra.mxu0 0
        %1599 = vmatprep.mubr.bf16.mxu0 0
        %1600 = vmatmul.mubr.bf16.gmra.mxu0 %v1516
        %v1601 = vpop.f32.mrf.mxu0
        %v1602 = vadd.f32 0.0, %v1601
        %v1603 = vpop.f32.mrf.mxu0
        %v1604 = vpop.f32.mrf.mxu0
        %v1605 = vadd.f32 0.0, %v1604
        %v1606 = vpop.f32.mrf.mxu0
        %1607 = vmatprep.mubr.bf16.mxu0 0
        %1608 = vmatmul.mubr.bf16.gmra.mxu0 %v1519
        %v1609 = vpop.f32.mrf.mxu0
        %v1610 = vadd.f32 0.0, %v1609
        %v1611 = vpop.f32.mrf.mxu0
        %v1612 = vpop.f32.mrf.mxu0
        %v1613 = vadd.f32 0.0, %v1612
        %v1614 = vpop.f32.mrf.mxu0
        %1615 = vmatprep.mubr.bf16.mxu0 0
        %1616 = vmatmul.mubr.bf16.gmra.mxu0 %v1522
        %v1617 = vpop.f32.mrf.mxu0
        %v1618 = vadd.f32 0.0, %v1617
        %v1619 = vpop.f32.mrf.mxu0
        %v1620 = vpop.f32.mrf.mxu0
        %v1621 = vadd.f32 0.0, %v1620
        %v1622 = vpop.f32.mrf.mxu0
        %1623 = vmatprep.mubr.bf16.mxu0 0
        %1624 = vmatmul.mubr.bf16.gmra.mxu0 %v1525
        %v1625 = vpop.f32.mrf.mxu0
        %v1626 = vadd.f32 0.0, %v1625
        %v1627 = vpop.f32.mrf.mxu0
        %v1628 = vpop.f32.mrf.mxu0
        %v1629 = vadd.f32 0.0, %v1628
        %v1630 = vpop.f32.mrf.mxu0
        %1631 = vmatprep.mubr.bf16.mxu0 0
        %1632 = vmatmul.mubr.bf16.gmra.mxu0 %v1528
        %v1633 = vpop.f32.mrf.mxu0
        %v1634 = vadd.f32 0.0, %v1633
        %v1635 = vpop.f32.mrf.mxu0
        %v1636 = vpop.f32.mrf.mxu0
        %v1637 = vadd.f32 0.0, %v1636
        %v1638 = vpop.f32.mrf.mxu0
        %1639 = vmatprep.mubr.bf16.mxu0 0
        %1640 = vmatmul.mubr.bf16.gmra.mxu0 %v1531
        %v1641 = vpop.f32.mrf.mxu0
        %v1642 = vadd.f32 0.0, %v1641
        %v1643 = vpop.f32.mrf.mxu0
        %v1644 = vpop.f32.mrf.mxu0
        %v1645 = vadd.f32 0.0, %v1644
        %v1646 = vpop.f32.mrf.mxu0
        %1647 = vmatprep.mubr.bf16.mxu0 0
        %1648 = vmatmul.mubr.bf16.gmra.mxu0 %v1534
        %v1649 = vpop.f32.mrf.mxu0
        %v1650 = vadd.f32 0.0, %v1649
        %v1651 = vpop.f32.mrf.mxu0
        %v1652 = vpop.f32.mrf.mxu0
        %v1653 = vadd.f32 0.0, %v1652
        %v1654 = vpop.f32.mrf.mxu0
        %1655 = vmatprep.mubr.bf16.mxu0 0
        %1656 = vmatmul.mubr.bf16.gmra.mxu0 %v1537
        %v1657 = vpop.f32.mrf.mxu0
        %v1658 = vadd.f32 0.0, %v1657
        %v1659 = vpop.f32.mrf.mxu0
        %v1660 = vpop.f32.mrf.mxu0
        %v1661 = vadd.f32 0.0, %v1660
        %v1662 = vpop.f32.mrf.mxu0
        %1663 = vmatprep.mubr.bf16.mxu0 0
        %1664 = vmatmul.mubr.bf16.gmra.mxu0 %v1540
        %v1665 = vpop.f32.mrf.mxu0
        %v1666 = vadd.f32 0.0, %v1665
        %v1667 = vpop.f32.mrf.mxu0
        %v1668 = vpop.f32.mrf.mxu0
        %v1669 = vadd.f32 0.0, %v1668
        %v1670 = vpop.f32.mrf.mxu0
        %1671 = vmatprep.mubr.bf16.mxu0 0
        %1672 = vmatmul.mubr.bf16.gmra.mxu0 %v1543
        %v1673 = vpop.f32.mrf.mxu0
        %v1674 = vadd.f32 0.0, %v1673
        %v1675 = vpop.f32.mrf.mxu0
        %v1676 = vpop.f32.mrf.mxu0
        %v1677 = vadd.f32 0.0, %v1676
        %v1678 = vpop.f32.mrf.mxu0
        %1679 = vmatprep.mubr.bf16.mxu0 0
        %1680 = vmatmul.mubr.bf16.gmra.mxu0 %v1546
        %v1681 = vpop.f32.mrf.mxu0
        %v1682 = vadd.f32 0.0, %v1681
        %v1683 = vpop.f32.mrf.mxu0
        %v1684 = vpop.f32.mrf.mxu0
        %v1685 = vadd.f32 0.0, %v1684
        %v1686 = vpop.f32.mrf.mxu0
        %1687 = vmatprep.mubr.bf16.mxu0 0
        %1688 = vmatmul.mubr.bf16.gmra.mxu0 %v1549
        %v1689 = vpop.f32.mrf.mxu0
        %v1690 = vadd.f32 0.0, %v1689
        %v1691 = vpop.f32.mrf.mxu0
        %v1692 = vpop.f32.mrf.mxu0
        %v1693 = vadd.f32 0.0, %v1692
        %v1694 = vpop.f32.mrf.mxu0
        %1695 = vmatprep.mubr.bf16.mxu0 0
        %1696 = vmatmul.mubr.bf16.gmra.mxu0 %v1552
        %v1697 = vpop.f32.mrf.mxu0
        %v1698 = vadd.f32 0.0, %v1697
        %v1699 = vpop.f32.mrf.mxu0
        %v1700 = vpop.f32.mrf.mxu0
        %v1701 = vadd.f32 0.0, %v1700
        %v1702 = vpop.f32.mrf.mxu0
        %1703 = vmatprep.mubr.bf16.mxu0 0
        %1704 = vmatmul.mubr.bf16.gmra.mxu0 %v1555
        %v1705 = vpop.f32.mrf.mxu0
        %v1706 = vadd.f32 0.0, %v1705
        %v1707 = vpop.f32.mrf.mxu0
        %v1708 = vpop.f32.mrf.mxu0
        %v1709 = vadd.f32 0.0, %v1708
        %v1710 = vpop.f32.mrf.mxu0
        %1711 = vmatprep.mubr.bf16.mxu0 0
        %1712 = vmatmul.mubr.bf16.gmra.mxu0 %v1558
        %v1713 = vpop.f32.mrf.mxu0
        %v1714 = vadd.f32 0.0, %v1713
        %v1715 = vpop.f32.mrf.mxu0
        %v1716 = vpop.f32.mrf.mxu0
        %v1717 = vadd.f32 0.0, %v1716
        %v1718 = vpop.f32.mrf.mxu0
        %1719 = vmatprep.mubr.bf16.mxu0 0
        %1720 = vmatmul.mubr.bf16.gmra.mxu0 %v1561
        %v1721 = vpop.f32.mrf.mxu0
        %v1722 = vadd.f32 0.0, %v1721
        %v1723 = vpop.f32.mrf.mxu0
        %v1724 = vpop.f32.mrf.mxu0
        %v1725 = vadd.f32 0.0, %v1724
        %v1726 = vpop.f32.mrf.mxu0
        %1727 = vdwg.mxu0
        %v1729 = vsel %vm345, %v1448, 0
        %v1732 = vsel %vm345, %v1449, 0
        %v1735 = vsel %vm345, %v1450, 0
        %v1738 = vsel %vm345, %v1451, 0
        %v1741 = vsel %vm345, %v1452, 0
        %v1744 = vsel %vm345, %v1453, 0
        %v1747 = vsel %vm345, %v1454, 0
        %v1750 = vsel %vm345, %v1455, 0
        %v1753 = vsel %vm345, %v1456, 0
        %v1756 = vsel %vm345, %v1457, 0
        %v1759 = vsel %vm345, %v1458, 0
        %v1762 = vsel %vm345, %v1459, 0
        %v1765 = vsel %vm345, %v1460, 0
        %v1768 = vsel %vm345, %v1461, 0
        %v1771 = vsel %vm345, %v1462, 0
        %v1774 = vsel %vm345, %v1463, 0
        %vm1776 = vcmask 1043456
        %v1778 = vsel %vm1776, %v1512, 0
        %1780 = vmatprep.subr.bf16.mxu0 0
        %1781 = vmatpush1.bf16.msra.mxu0 0
        %1782 = vmatprep.subr.bf16.mxu0 0
        %1783 = vmatpush1.bf16.msra.mxu0 0
        %1784 = vmatprep.subr.bf16.mxu0 0
        %1785 = vmatpush1.bf16.msra.mxu0 0
        %1786 = vmatprep.subr.bf16.mxu0 0
        %1787 = vmatpush1.bf16.msra.mxu0 0
        %1788 = vmatprep.subr.bf16.mxu0 0
        %1789 = vmatpush1.bf16.msra.mxu0 0
        %1790 = vmatprep.subr.bf16.mxu0 0
        %1791 = vmatpush1.bf16.msra.mxu0 0
        %1792 = vmatprep.subr.bf16.mxu0 0
        %1793 = vmatpush1.bf16.msra.mxu0 0
        %1794 = vmatprep.subr.bf16.mxu0 0
        %1795 = vmatpush1.bf16.msra.mxu0 %v1778
        %1796 = vmatprep.subr.bf16.mxu0 0
        %1797 = vmatpush2.bf16.msra.mxu0 0
        %1798 = vmatprep.subr.bf16.mxu0 0
        %1799 = vmatpush2.bf16.msra.mxu0 0
        %1800 = vmatprep.subr.bf16.mxu0 0
        %1801 = vmatpush2.bf16.msra.mxu0 0
        %1802 = vmatprep.subr.bf16.mxu0 0
        %1803 = vmatpush2.bf16.msra.mxu0 0
        %1804 = vmatprep.subr.bf16.mxu0 0
        %1805 = vmatpush2.bf16.msra.mxu0 0
        %1806 = vmatprep.subr.bf16.mxu0 0
        %1807 = vmatpush2.bf16.msra.mxu0 0
        %1808 = vmatprep.subr.bf16.mxu0 0
        %1809 = vmatpush2.bf16.msra.mxu0 0
        %1810 = vmatprep.subr.bf16.mxu0 0
        %1811 = vmatpush2.bf16.msra.mxu0 0
        %1812 = vmatprep.mubr.bf16.mxu0 0
        %1813 = vmatmul.mubr.bf16.gmra.mxu0 %v1729
        %v1814 = vpop.f32.mrf.mxu0
        %v1815 = vadd.f32 %v1602, %v1814
        %v1816 = vpop.f32.mrf.mxu0
        %v1817 = vpop.f32.mrf.mxu0
        %v1818 = vadd.f32 %v1605, %v1817
        %v1819 = vpop.f32.mrf.mxu0
        %1820 = vmatprep.mubr.bf16.mxu0 0
        %1821 = vmatmul.mubr.bf16.gmra.mxu0 %v1732
        %v1822 = vpop.f32.mrf.mxu0
        %v1823 = vadd.f32 %v1610, %v1822
        %v1824 = vpop.f32.mrf.mxu0
        %v1825 = vpop.f32.mrf.mxu0
        %v1826 = vadd.f32 %v1613, %v1825
        %v1827 = vpop.f32.mrf.mxu0
        %1828 = vmatprep.mubr.bf16.mxu0 0
        %1829 = vmatmul.mubr.bf16.gmra.mxu0 %v1735
        %v1830 = vpop.f32.mrf.mxu0
        %v1831 = vadd.f32 %v1618, %v1830
        %v1832 = vpop.f32.mrf.mxu0
        %v1833 = vpop.f32.mrf.mxu0
        %v1834 = vadd.f32 %v1621, %v1833
        %v1835 = vpop.f32.mrf.mxu0
        %1836 = vmatprep.mubr.bf16.mxu0 0
        %1837 = vmatmul.mubr.bf16.gmra.mxu0 %v1738
        %v1838 = vpop.f32.mrf.mxu0
        %v1839 = vadd.f32 %v1626, %v1838
        %v1840 = vpop.f32.mrf.mxu0
        %v1841 = vpop.f32.mrf.mxu0
        %v1842 = vadd.f32 %v1629, %v1841
        %v1843 = vpop.f32.mrf.mxu0
        %1844 = vmatprep.mubr.bf16.mxu0 0
        %1845 = vmatmul.mubr.bf16.gmra.mxu0 %v1741
        %v1846 = vpop.f32.mrf.mxu0
        %v1847 = vadd.f32 %v1634, %v1846
        %v1848 = vpop.f32.mrf.mxu0
        %v1849 = vpop.f32.mrf.mxu0
        %v1850 = vadd.f32 %v1637, %v1849
        %v1851 = vpop.f32.mrf.mxu0
        %1852 = vmatprep.mubr.bf16.mxu0 0
        %1853 = vmatmul.mubr.bf16.gmra.mxu0 %v1744
        %v1854 = vpop.f32.mrf.mxu0
        %v1855 = vadd.f32 %v1642, %v1854
        %v1856 = vpop.f32.mrf.mxu0
        %v1857 = vpop.f32.mrf.mxu0
        %v1858 = vadd.f32 %v1645, %v1857
        %v1859 = vpop.f32.mrf.mxu0
        %1860 = vmatprep.mubr.bf16.mxu0 0
        %1861 = vmatmul.mubr.bf16.gmra.mxu0 %v1747
        %v1862 = vpop.f32.mrf.mxu0
        %v1863 = vadd.f32 %v1650, %v1862
        %v1864 = vpop.f32.mrf.mxu0
        %v1865 = vpop.f32.mrf.mxu0
        %v1866 = vadd.f32 %v1653, %v1865
        %v1867 = vpop.f32.mrf.mxu0
        %1868 = vmatprep.mubr.bf16.mxu0 0
        %1869 = vmatmul.mubr.bf16.gmra.mxu0 %v1750
        %v1870 = vpop.f32.mrf.mxu0
        %v1871 = vadd.f32 %v1658, %v1870
        %v1872 = vpop.f32.mrf.mxu0
        %v1873 = vpop.f32.mrf.mxu0
        %v1874 = vadd.f32 %v1661, %v1873
        %v1875 = vpop.f32.mrf.mxu0
        %1876 = vmatprep.mubr.bf16.mxu0 0
        %1877 = vmatmul.mubr.bf16.gmra.mxu0 %v1753
        %v1878 = vpop.f32.mrf.mxu0
        %v1879 = vadd.f32 %v1666, %v1878
        %v1880 = vpop.f32.mrf.mxu0
        %v1881 = vpop.f32.mrf.mxu0
        %v1882 = vadd.f32 %v1669, %v1881
        %v1883 = vpop.f32.mrf.mxu0
        %1884 = vmatprep.mubr.bf16.mxu0 0
        %1885 = vmatmul.mubr.bf16.gmra.mxu0 %v1756
        %v1886 = vpop.f32.mrf.mxu0
        %v1887 = vadd.f32 %v1674, %v1886
        %v1888 = vpop.f32.mrf.mxu0
        %v1889 = vpop.f32.mrf.mxu0
        %v1890 = vadd.f32 %v1677, %v1889
        %v1891 = vpop.f32.mrf.mxu0
        %1892 = vmatprep.mubr.bf16.mxu0 0
        %1893 = vmatmul.mubr.bf16.gmra.mxu0 %v1759
        %v1894 = vpop.f32.mrf.mxu0
        %v1895 = vadd.f32 %v1682, %v1894
        %v1896 = vpop.f32.mrf.mxu0
        %v1897 = vpop.f32.mrf.mxu0
        %v1898 = vadd.f32 %v1685, %v1897
        %v1899 = vpop.f32.mrf.mxu0
        %1900 = vmatprep.mubr.bf16.mxu0 0
        %1901 = vmatmul.mubr.bf16.gmra.mxu0 %v1762
        %v1902 = vpop.f32.mrf.mxu0
        %v1903 = vadd.f32 %v1690, %v1902
        %v1904 = vpop.f32.mrf.mxu0
        %v1905 = vpop.f32.mrf.mxu0
        %v1906 = vadd.f32 %v1693, %v1905
        %v1907 = vpop.f32.mrf.mxu0
        %1908 = vmatprep.mubr.bf16.mxu0 0
        %1909 = vmatmul.mubr.bf16.gmra.mxu0 %v1765
        %v1910 = vpop.f32.mrf.mxu0
        %v1911 = vadd.f32 %v1698, %v1910
        %v1912 = vpop.f32.mrf.mxu0
        %v1913 = vpop.f32.mrf.mxu0
        %v1914 = vadd.f32 %v1701, %v1913
        %v1915 = vpop.f32.mrf.mxu0
        %1916 = vmatprep.mubr.bf16.mxu0 0
        %1917 = vmatmul.mubr.bf16.gmra.mxu0 %v1768
        %v1918 = vpop.f32.mrf.mxu0
        %v1919 = vadd.f32 %v1706, %v1918
        %v1920 = vpop.f32.mrf.mxu0
        %v1921 = vpop.f32.mrf.mxu0
        %v1922 = vadd.f32 %v1709, %v1921
        %v1923 = vpop.f32.mrf.mxu0
        %1924 = vmatprep.mubr.bf16.mxu0 0
        %1925 = vmatmul.mubr.bf16.gmra.mxu0 %v1771
        %v1926 = vpop.f32.mrf.mxu0
        %v1927 = vadd.f32 %v1714, %v1926
        %v1928 = vpop.f32.mrf.mxu0
        %v1929 = vpop.f32.mrf.mxu0
        %v1930 = vadd.f32 %v1717, %v1929
        %v1931 = vpop.f32.mrf.mxu0
        %1932 = vmatprep.mubr.bf16.mxu0 0
        %1933 = vmatmul.mubr.bf16.gmra.mxu0 %v1774
        %v1934 = vpop.f32.mrf.mxu0
        %v1935 = vadd.f32 %v1722, %v1934
        %v1936 = vpop.f32.mrf.mxu0
        %v1937 = vpop.f32.mrf.mxu0
        %v1938 = vadd.f32 %v1725, %v1937
        %v1939 = vpop.f32.mrf.mxu0
        %1940 = vdwg.mxu0
        %v1941 = vld [vmem:[%s7] sm:$0x1]
        %v1943 = vlaneseq
        %v1944 = vshrl.u32 %v1943, 7
        %v1945 = vsub.s32 0, %v1944
        %v1946 = vrot.slane %v1941, %v1945
        %v1948 = vadd.f32 %v1815, %v1946
        %v1949 = vadd.f32 %v1818, %v1946
        %v1950 = vadd.f32 %v1823, %v1946
        %v1951 = vadd.f32 %v1826, %v1946
        %v1952 = vadd.f32 %v1831, %v1946
        %v1953 = vadd.f32 %v1834, %v1946
        %v1954 = vadd.f32 %v1839, %v1946
        %v1955 = vadd.f32 %v1842, %v1946
        %v1956 = vadd.f32 %v1847, %v1946
        %v1957 = vadd.f32 %v1850, %v1946
        %v1958 = vadd.f32 %v1855, %v1946
        %v1959 = vadd.f32 %v1858, %v1946
        %v1960 = vadd.f32 %v1863, %v1946
        %v1961 = vadd.f32 %v1866, %v1946
        %v1962 = vadd.f32 %v1871, %v1946
        %v1963 = vadd.f32 %v1874, %v1946
        %v1964 = vadd.f32 %v1879, %v1946
        %v1965 = vadd.f32 %v1882, %v1946
        %v1966 = vadd.f32 %v1887, %v1946
        %v1967 = vadd.f32 %v1890, %v1946
        %v1968 = vadd.f32 %v1895, %v1946
        %v1969 = vadd.f32 %v1898, %v1946
        %v1970 = vadd.f32 %v1903, %v1946
        %v1971 = vadd.f32 %v1906, %v1946
        %v1972 = vadd.f32 %v1911, %v1946
        %v1973 = vadd.f32 %v1914, %v1946
        %v1974 = vadd.f32 %v1919, %v1946
        %v1975 = vadd.f32 %v1922, %v1946
        %v1976 = vadd.f32 %v1927, %v1946
        %v1977 = vadd.f32 %v1930, %v1946
        %v1978 = vadd.f32 %v1935, %v1946
        %v1979 = vadd.f32 %v1938, %v1946
        %v1980 = vmax.f32 %v1948, 0.0
        %v1981 = vmax.f32 %v1949, 0.0
        %v1982 = vmax.f32 %v1950, 0.0
        %v1983 = vmax.f32 %v1951, 0.0
        %v1984 = vmax.f32 %v1952, 0.0
        %v1985 = vmax.f32 %v1953, 0.0
        %v1986 = vmax.f32 %v1954, 0.0
        %v1987 = vmax.f32 %v1955, 0.0
        %v1988 = vmax.f32 %v1956, 0.0
        %v1989 = vmax.f32 %v1957, 0.0
        %v1990 = vmax.f32 %v1958, 0.0
        %v1991 = vmax.f32 %v1959, 0.0
        %v1992 = vmax.f32 %v1960, 0.0
        %v1993 = vmax.f32 %v1961, 0.0
        %v1994 = vmax.f32 %v1962, 0.0
        %v1995 = vmax.f32 %v1963, 0.0
        %v1996 = vmax.f32 %v1964, 0.0
        %v1997 = vmax.f32 %v1965, 0.0
        %v1998 = vmax.f32 %v1966, 0.0
        %v1999 = vmax.f32 %v1967, 0.0
        %v2000 = vmax.f32 %v1968, 0.0
        %v2001 = vmax.f32 %v1969, 0.0
        %v2002 = vmax.f32 %v1970, 0.0
        %v2003 = vmax.f32 %v1971, 0.0
        %v2004 = vmax.f32 %v1972, 0.0
        %v2005 = vmax.f32 %v1973, 0.0
        %v2006 = vmax.f32 %v1974, 0.0
        %v2007 = vmax.f32 %v1975, 0.0
        %v2008 = vmax.f32 %v1976, 0.0
        %v2009 = vmax.f32 %v1977, 0.0
        %v2010 = vmax.f32 %v1978, 0.0
        %v2011 = vmax.f32 %v1979, 0.0
        %vm2012 = vcmask 261120
        %2013 = vst.msk [vmem:[%s328] sm:$0xff] %vm2012, %v1980
        %2014 = vst.msk [vmem:[%s328 + $0x8] sm:$0xff] %vm2012, %v1981
        %2015 = vst.msk [vmem:[%s328 + $0x10] sm:$0xff] %vm2012, %v1982
        %2016 = vst.msk [vmem:[%s328 + $0x18] sm:$0xff] %vm2012, %v1983
        %2017 = vst.msk [vmem:[%s328 + $0x20] sm:$0xff] %vm2012, %v1984
        %2018 = vst.msk [vmem:[%s328 + $0x28] sm:$0xff] %vm2012, %v1985
        %2019 = vst.msk [vmem:[%s328 + $0x30] sm:$0xff] %vm2012, %v1986
        %2020 = vst.msk [vmem:[%s328 + $0x38] sm:$0xff] %vm2012, %v1987
        %2021 = vst.msk [vmem:[%s328 + $0x40] sm:$0xff] %vm2012, %v1988
        %2022 = vst.msk [vmem:[%s328 + $0x48] sm:$0xff] %vm2012, %v1989
        %2023 = vst.msk [vmem:[%s328 + $0x50] sm:$0xff] %vm2012, %v1990
        %2024 = vst.msk [vmem:[%s328 + $0x58] sm:$0xff] %vm2012, %v1991
        %2025 = vst.msk [vmem:[%s328 + $0x60] sm:$0xff] %vm2012, %v1992
        %2026 = vst.msk [vmem:[%s328 + $0x68] sm:$0xff] %vm2012, %v1993
        %2027 = vst.msk [vmem:[%s328 + $0x70] sm:$0xff] %vm2012, %v1994
        %2028 = vst.msk [vmem:[%s328 + $0x78] sm:$0xff] %vm2012, %v1995
        %2029 = vst.msk [vmem:[%s328 + $0x80] sm:$0xff] %vm2012, %v1996
        %2030 = vst.msk [vmem:[%s328 + $0x88] sm:$0xff] %vm2012, %v1997
        %2031 = vst.msk [vmem:[%s328 + $0x90] sm:$0xff] %vm2012, %v1998
        %2032 = vst.msk [vmem:[%s328 + $0x98] sm:$0xff] %vm2012, %v1999
        %2033 = vst.msk [vmem:[%s328 + $0xa0] sm:$0xff] %vm2012, %v2000
        %2034 = vst.msk [vmem:[%s328 + $0xa8] sm:$0xff] %vm2012, %v2001
        %2035 = vst.msk [vmem:[%s328 + $0xb0] sm:$0xff] %vm2012, %v2002
        %2036 = vst.msk [vmem:[%s328 + $0xb8] sm:$0xff] %vm2012, %v2003
        %2037 = vst.msk [vmem:[%s328 + $0xc0] sm:$0xff] %vm2012, %v2004
        %2038 = vst.msk [vmem:[%s328 + $0xc8] sm:$0xff] %vm2012, %v2005
        %2039 = vst.msk [vmem:[%s328 + $0xd0] sm:$0xff] %vm2012, %v2006
        %2040 = vst.msk [vmem:[%s328 + $0xd8] sm:$0xff] %vm2012, %v2007
        %2041 = vst.msk [vmem:[%s328 + $0xe0] sm:$0xff] %vm2012, %v2008
        %2042 = vst.msk [vmem:[%s328 + $0xe8] sm:$0xff] %vm2012, %v2009
        %2043 = vst.msk [vmem:[%s328 + $0xf0] sm:$0xff] %vm2012, %v2010
        %2044 = vst.msk [vmem:[%s328 + $0xf8] sm:$0xff] %vm2012, %v2011
        %s2045 = sand.u32 %s213, 1
        %s2046 = scalar_lea.sflag [#allocation4], %s2045
        %s2047 = sand.u32 %s213, 1
        %s2048 = smul.addr %s2047, 256
        %s2049 = scalar_lea.vmem [#allocation3], %s2048
        // Predicated region
        $region53: #{resnet_block_forward.5} parent=51 // pred_check
          %p2050 = pneg %p223
        $region54: #{resnet_block_forward.5} parent=51 // pred_check_branch
          %2052 = sbr.rel (%p2050) target = $region56
        $region55: #{resnet_block_forward.5} parent=51 // pred_region
          %s2054 = ssub.s32 4096, 4096
          %2055 = vsyncadd %s2046, %s2054
          %s2056 = smul.addr %s22, 32
          %s2057 = smul.addr %s2056, 128
          %s2058 = scalar_lea.hbm %s8, %s2057
          %s2059 = sshll.u32 %s2049, 4
          %s2060 = int_to_ptr.vmem [resolvable:$true] %s2059
          %2065 = dma.vmem_to_hbm [thread:$0]  %s2060, 4096, %s2058, %s2046, 128, 128, 8
        $region56: #{resnet_block_forward.5} parent=51 // pred_fallthru
          _
      $region52: #{resnet_block_forward.5} parent=5 // pred_fallthru
        _
      %p2066 = scmp.le.s32.totalorder 2, %s17
      // Predicated region
      $region57: #{resnet_block_forward.5} parent=5 // pred_check
        %p2067 = pneg %p2066
      $region58: #{resnet_block_forward.5} parent=5 // pred_check_branch
        %2069 = sbr.rel (%p2067) target = $region60
      $region59: #{resnet_block_forward.5} parent=5 // pred_region
        %s2070 = ssub.s32 %s17, 2
        // Predicated region
        $region61: #{resnet_block_forward.5} parent=59 // pred_check
          %p2071 = pneg %p229
        $region62: #{resnet_block_forward.5} parent=59 // pred_check_branch
          %2073 = sbr.rel (%p2071) target = $region64
        $region63: #{resnet_block_forward.5} parent=59 // pred_region
          %s2074 = sand.u32 %s214, 1
          %s2075 = scalar_lea.sflag [#allocation4], %s2074
          %s2076 = sand.u32 %s214, 1
          %s2077 = smul.addr %s2076, 256
          %s2078 = scalar_lea.vmem [#allocation3], %s2077
          %2079 = dma.done %s2075, 4096
        $region64: #{resnet_block_forward.5} parent=59 // pred_fallthru
          _
      $region60: #{resnet_block_forward.5} parent=5 // pred_fallthru
        _
    $region6: #{resnet_block_forward.5} parent=1 // loop_footer
      %s21 = sadd.s32 1, %s17
    $region7: #{resnet_block_forward.5} parent=1 // loop_footer_branch
      %16 = sbr.rel target = $region3
    $region8: #{resnet_block_forward.5} parent=1 // loop_exit
      _
    %2080 = vsyncpa [#allocation4], 1
    %s2081 = scalar_lea.sflag [#allocation4], 1
    %2082 = vsyncpa %s2081, 1

// kernel: resnet_block_forward.3
$region0: #{resnet_block_forward.3}
  #allocation0 [shape = 'u32[]', space=smem, size = 0x4, offset = 0x4, fixed_abs, tag = 'smem constant byte address 0x4 - core index']
  #allocation1 [shape = 'u32[144,128]{1,0:T(1,128)}', space=vmem, size = 0x12000, scoped, tag = 'internal scratch']
  #allocation2 [shape = 'f32[18,18,8]{2,1,0:T(8,128)}', space=vmem, size = 0x36000, scoped, tag = 'scratch operand']
  %s0 = inlined_call_operand.vmem [shape: f32[2,16,16,4], index: 0, kind: input, shape index: {}]
  %s1 = inlined_call_operand.vmem [shape: bf16[4,8], index: 1, kind: input, shape index: {}]
  %s2 = inlined_call_operand.vmem [shape: f32[1,8], index: 2, kind: input, shape index: {}]
  %s3 = inlined_call_operand.vmem [shape: bf16[9,8,8], index: 3, kind: input, shape index: {}]
  %s4 = inlined_call_operand.vmem [shape: f32[1,8], index: 4, kind: input, shape index: {}]
  %s5 = inlined_call_operand.vmem [shape: f32[2,16,16,8], index: 5, kind: output, shape index: {}]
  %s6 = sld [smem:[#allocation0]]
  $region53: #{resnet_block_forward.3} parent=0
    _
  %s8 = ssub.s32 1, %s6
  %s9 = scalar_select 0, %s8, %s6
  loop: start=0, step=1, limit=4
  $region2: #{resnet_block_forward.3} parent=0 // loop_pre_header
    _
  $region3: #{resnet_block_forward.3} parent=0 // loop_header
    %s11 = sphi 0, %s15
    %p12 = scmp.ge.s32.totalorder %s11, 4
    %s21 = sphi 0, %s23
    %s24 = sphi 0, %s21
    %s25 = sphi 0, %s24
    %s41 = sphi 0, %s25
    %s45 = sphi 0, %s45
    %s47 = sphi 0, %s45
    %s48 = sphi 0, %s47
    %s62 = sphi 0, %s48
    %s66 = sphi 0, %s66
    %s68 = sphi 0, %s66
    %s69 = sphi 0, %s68
    %s83 = sphi 0, %s69
    %s87 = sphi 0, %s87
    %s89 = sphi 0, %s87
    %s90 = sphi 0, %s89
    %s104 = sphi 0, %s90
    %s108 = sphi 0, %s108
    %s110 = sphi 0, %s108
    %s111 = sphi 0, %s110
    %s125 = sphi 0, %s111
    %s131 = sphi 0, %s133
    %s134 = sphi 0, %s131
    %s135 = sphi 0, %s134
    %s151 = sphi 0, %s135
  $region4: #{resnet_block_forward.3} parent=0 // loop_header_branch
    %14 = sbr.rel (%p12) target = $region8
  $region5: #{resnet_block_forward.3} parent=0 // loop_body
    %s16 = ssub.s32 %s11, 1
    %s17 = ssub.s32 %s11, 2
    %s18 = sadd.s32 %s11, 1
    %s19 = ssub.s32 %s11, %s18
    %p20 = scmp.eq.s32.totalorder %s19, 0
    %s22 = sadd.s32 %s21, 1
    %s23 = scalar_select %p20, %s21, %s22
    %p26 = pneg %p20
    %p27 = scmp.eq.s32.totalorder %s11, 1
    %p28 = por %p26, %p27
    %p29 = scmp.ne.s32.totalorder %s21, %s24
    %p30 = scmp.eq.s32.totalorder %s11, 0
    %p31 = por %p29, %p30
    %p32 = scmp.ne.s32.totalorder %s21, %s24
    %p33 = scmp.eq.s32.totalorder %s16, 1
    %p34 = por %p32, %p33
    %p35 = scmp.ne.s32.totalorder %s24, %s25
    %p36 = scmp.eq.s32.totalorder %s16, 0
    %p37 = por %p35, %p36
    %p38 = scmp.ne.s32.totalorder %s24, %s25
    %p39 = scmp.eq.s32.totalorder %s17, 1
    %p40 = por %p38, %p39
    %p42 = scmp.ne.s32.totalorder %s25, %s41
    %p43 = scmp.eq.s32.totalorder %s17, 0
    %p44 = por %p42, %p43
    %s46 = sadd.s32 %s45, 1
    %p49 = scmp.eq.s32.totalorder %s11, 1
    %p50 = scmp.ne.s32.totalorder %s45, %s47
    %p51 = scmp.eq.s32.totalorder %s11, 0
    %p52 = por %p50, %p51
    %p53 = scmp.ne.s32.totalorder %s45, %s47
    %p54 = scmp.eq.s32.totalorder %s16, 1
    %p55 = por %p53, %p54
    %p56 = scmp.ne.s32.totalorder %s47, %s48
    %p57 = scmp.eq.s32.totalorder %s16, 0
    %p58 = por %p56, %p57
    %p59 = scmp.ne.s32.totalorder %s47, %s48
    %p60 = scmp.eq.s32.totalorder %s17, 1
    %p61 = por %p59, %p60
    %p63 = scmp.ne.s32.totalorder %s48, %s62
    %p64 = scmp.eq.s32.totalorder %s17, 0
    %p65 = por %p63, %p64
    %s67 = sadd.s32 %s66, 1
    %p70 = scmp.eq.s32.totalorder %s11, 1
    %p71 = scmp.ne.s32.totalorder %s66, %s68
    %p72 = scmp.eq.s32.totalorder %s11, 0
    %p73 = por %p71, %p72
    %p74 = scmp.ne.s32.totalorder %s66, %s68
    %p75 = scmp.eq.s32.totalorder %s16, 1
    %p76 = por %p74, %p75
    %p77 = scmp.ne.s32.totalorder %s68, %s69
    %p78 = scmp.eq.s32.totalorder %s16, 0
    %p79 = por %p77, %p78
    %p80 = scmp.ne.s32.totalorder %s68, %s69
    %p81 = scmp.eq.s32.totalorder %s17, 1
    %p82 = por %p80, %p81
    %p84 = scmp.ne.s32.totalorder %s69, %s83
    %p85 = scmp.eq.s32.totalorder %s17, 0
    %p86 = por %p84, %p85
    %s88 = sadd.s32 %s87, 1
    %p91 = scmp.eq.s32.totalorder %s11, 1
    %p92 = scmp.ne.s32.totalorder %s87, %s89
    %p93 = scmp.eq.s32.totalorder %s11, 0
    %p94 = por %p92, %p93
    %p95 = scmp.ne.s32.totalorder %s87, %s89
    %p96 = scmp.eq.s32.totalorder %s16, 1
    %p97 = por %p95, %p96
    %p98 = scmp.ne.s32.totalorder %s89, %s90
    %p99 = scmp.eq.s32.totalorder %s16, 0
    %p100 = por %p98, %p99
    %p101 = scmp.ne.s32.totalorder %s89, %s90
    %p102 = scmp.eq.s32.totalorder %s17, 1
    %p103 = por %p101, %p102
    %p105 = scmp.ne.s32.totalorder %s90, %s104
    %p106 = scmp.eq.s32.totalorder %s17, 0
    %p107 = por %p105, %p106
    %s109 = sadd.s32 %s108, 1
    %p112 = scmp.eq.s32.totalorder %s11, 1
    %p113 = scmp.ne.s32.totalorder %s108, %s110
    %p114 = scmp.eq.s32.totalorder %s11, 0
    %p115 = por %p113, %p114
    %p116 = scmp.ne.s32.totalorder %s108, %s110
    %p117 = scmp.eq.s32.totalorder %s16, 1
    %p118 = por %p116, %p117
    %p119 = scmp.ne.s32.totalorder %s110, %s111
    %p120 = scmp.eq.s32.totalorder %s16, 0
    %p121 = por %p119, %p120
    %p122 = scmp.ne.s32.totalorder %s110, %s111
    %p123 = scmp.eq.s32.totalorder %s17, 1
    %p124 = por %p122, %p123
    %p126 = scmp.ne.s32.totalorder %s111, %s125
    %p127 = scmp.eq.s32.totalorder %s17, 0
    %p128 = por %p126, %p127
    %s129 = ssub.s32 %s11, %s18
    %p130 = scmp.eq.s32.totalorder %s129, 0
    %s132 = sadd.s32 %s131, 1
    %s133 = scalar_select %p130, %s131, %s132
    %p136 = pneg %p130
    %p137 = scmp.eq.s32.totalorder %s11, 1
    %p138 = por %p136, %p137
    %p139 = scmp.ne.s32.totalorder %s131, %s134
    %p140 = scmp.eq.s32.totalorder %s11, 0
    %p141 = por %p139, %p140
    %p142 = scmp.ne.s32.totalorder %s131, %s134
    %p143 = scmp.eq.s32.totalorder %s16, 1
    %p144 = por %p142, %p143
    %p145 = scmp.ne.s32.totalorder %s134, %s135
    %p146 = scmp.eq.s32.totalorder %s16, 0
    %p147 = por %p145, %p146
    %p148 = scmp.ne.s32.totalorder %s134, %s135
    %p149 = scmp.eq.s32.totalorder %s17, 1
    %p150 = por %p148, %p149
    %p152 = scmp.ne.s32.totalorder %s135, %s151
    %p153 = scmp.eq.s32.totalorder %s17, 0
    %p154 = por %p152, %p153
    %p155 = scmp.le.s32.totalorder 1, %s11
    %p156 = scmp.lt.s32.totalorder %s11, 3
    %p157 = pnand %p155, %p156
    %p158 = pneg %p157
    // Predicated region
    $region9: #{resnet_block_forward.3} parent=5 // pred_check
      _
    $region10: #{resnet_block_forward.3} parent=5 // pred_check_branch
      %160 = sbr.rel (%p157) target = $region12
    $region11: #{resnet_block_forward.3} parent=5 // pred_region
      %s161 = ssub.s32 %s11, 1
      // Predicated region
      $region13: #{resnet_block_forward.3} parent=11 // pred_check
        %p162 = pneg %p58
      $region14: #{resnet_block_forward.3} parent=11 // pred_check_branch
        %164 = sbr.rel (%p162) target = $region16
      $region15: #{resnet_block_forward.3} parent=11 // pred_region
        _
      $region16: #{resnet_block_forward.3} parent=11 // pred_fallthru
        _
      // Predicated region
      $region17: #{resnet_block_forward.3} parent=11 // pred_check
        %p165 = pneg %p79
      $region18: #{resnet_block_forward.3} parent=11 // pred_check_branch
        %167 = sbr.rel (%p165) target = $region20
      $region19: #{resnet_block_forward.3} parent=11 // pred_region
        _
      $region20: #{resnet_block_forward.3} parent=11 // pred_fallthru
        _
      // Predicated region
      $region21: #{resnet_block_forward.3} parent=11 // pred_check
        %p168 = pneg %p100
      $region22: #{resnet_block_forward.3} parent=11 // pred_check_branch
        %170 = sbr.rel (%p168) target = $region24
      $region23: #{resnet_block_forward.3} parent=11 // pred_region
        _
      $region24: #{resnet_block_forward.3} parent=11 // pred_fallthru
        _
      // Predicated region
      $region25: #{resnet_block_forward.3} parent=11 // pred_check
        %p171 = pneg %p121
      $region26: #{resnet_block_forward.3} parent=11 // pred_check_branch
        %173 = sbr.rel (%p171) target = $region28
      $region27: #{resnet_block_forward.3} parent=11 // pred_region
        _
      $region28: #{resnet_block_forward.3} parent=11 // pred_fallthru
        _
    $region12: #{resnet_block_forward.3} parent=5 // pred_fallthru
      _
    %p174 = scmp.lt.s32.totalorder %s11, 2
    // Predicated region
    $region29: #{resnet_block_forward.3} parent=5 // pred_check
      %p175 = pneg %p174
    $region30: #{resnet_block_forward.3} parent=5 // pred_check_branch
      %177 = sbr.rel (%p175) target = $region32
    $region31: #{resnet_block_forward.3} parent=5 // pred_region
      // Predicated region
      $region33: #{resnet_block_forward.3} parent=31 // pred_check
        %p178 = pneg %p31
      $region34: #{resnet_block_forward.3} parent=31 // pred_check_branch
        %180 = sbr.rel (%p178) target = $region36
      $region35: #{resnet_block_forward.3} parent=31 // pred_region
        %p181 = scmp.lt.s32.totalorder %s11, 1
        %s182 = scalar_select %p181, %s11, 1
        %s183 = smul.addr %s182, 32
        %s184 = smul.addr %s183, 8
        %s185 = scalar_lea.vmem %s0, %s184
      $region36: #{resnet_block_forward.3} parent=31 // pred_fallthru
        _
    $region32: #{resnet_block_forward.3} parent=5 // pred_fallthru
      _
    %p186 = scmp.le.s32.totalorder 1, %s11
    %p187 = scmp.lt.s32.totalorder %s11, 3
    %p188 = pnand %p186, %p187
    %p189 = pneg %p188
    // Predicated region
    $region37: #{resnet_block_forward.3} parent=5 // pred_check
      _
    $region38: #{resnet_block_forward.3} parent=5 // pred_check_branch
      %191 = sbr.rel (%p188) target = $region40
    $region39: #{resnet_block_forward.3} parent=5 // pred_region
      %s192 = ssub.s32 %s11, 1
      %p193 = scmp.lt.s32.totalorder %s16, 1
      %s194 = scalar_select %p193, %s16, 1
      %s195 = smul.addr %s194, 32
      %s196 = smul.addr %s195, 8
      %s197 = scalar_lea.vmem %s0, %s196
      %p198 = pneg %p37
      %p199 = pneg %p34
      %p200 = pneg %p58
      %p201 = pneg %p55
      %p202 = pneg %p79
      %p203 = pneg %p76
      %p204 = pneg %p100
      %p205 = pneg %p97
      %p206 = pneg %p121
      %p207 = pneg %p118
      %p208 = pneg %p147
      %p209 = pneg %p144
      %p210 = scmp.lt.s32.totalorder %s16, 1
      %s211 = scalar_select %p210, %s16, 1
      %s212 = smul.addr %s211, 32
      %s213 = smul.addr %s212, 8
      %s214 = scalar_lea.vmem %s5, %s213
      %p215 = scmp.lt.s32.totalorder %s16, 1
      %s216 = scalar_select %p215, %s16, 1
      %s217 = smul.addr %s216, 32
      %s218 = smul.addr %s217, 8
      %s219 = scalar_lea.vmem %s0, %s218
      %p220 = scmp.lt.s32.totalorder %s16, 1
      %s221 = scalar_select %p220, %s16, 1
      %s222 = smul.addr %s221, 32
      %s223 = smul.addr %s222, 8
      %s224 = scalar_lea.vmem %s5, %s223
      %v226 = vld [vmem:[%s219] sm:$0xff]
      %v227 = vld [vmem:[%s219 + $0x8] sm:$0xff]
      %v228 = vld [vmem:[%s219 + $0x10] sm:$0xff]
      %v229 = vld [vmem:[%s219 + $0x18] sm:$0xff]
      %v230 = vld [vmem:[%s219 + $0x20] sm:$0xff]
      %v231 = vld [vmem:[%s219 + $0x28] sm:$0xff]
      %v232 = vld [vmem:[%s219 + $0x30] sm:$0xff]
      %v233 = vld [vmem:[%s219 + $0x38] sm:$0xff]
      %v234 = vld [vmem:[%s219 + $0x40] sm:$0xff]
      %v235 = vld [vmem:[%s219 + $0x48] sm:$0xff]
      %v236 = vld [vmem:[%s219 + $0x50] sm:$0xff]
      %v237 = vld [vmem:[%s219 + $0x58] sm:$0xff]
      %v238 = vld [vmem:[%s219 + $0x60] sm:$0xff]
      %v239 = vld [vmem:[%s219 + $0x68] sm:$0xff]
      %v240 = vld [vmem:[%s219 + $0x70] sm:$0xff]
      %v241 = vld [vmem:[%s219 + $0x78] sm:$0xff]
      %v242 = vld [vmem:[%s219 + $0x80] sm:$0xff]
      %v243 = vld [vmem:[%s219 + $0x88] sm:$0xff]
      %v244 = vld [vmem:[%s219 + $0x90] sm:$0xff]
      %v245 = vld [vmem:[%s219 + $0x98] sm:$0xff]
      %v246 = vld [vmem:[%s219 + $0xa0] sm:$0xff]
      %v247 = vld [vmem:[%s219 + $0xa8] sm:$0xff]
      %v248 = vld [vmem:[%s219 + $0xb0] sm:$0xff]
      %v249 = vld [vmem:[%s219 + $0xb8] sm:$0xff]
      %v250 = vld [vmem:[%s219 + $0xc0] sm:$0xff]
      %v251 = vld [vmem:[%s219 + $0xc8] sm:$0xff]
      %v252 = vld [vmem:[%s219 + $0xd0] sm:$0xff]
      %v253 = vld [vmem:[%s219 + $0xd8] sm:$0xff]
      %v254 = vld [vmem:[%s219 + $0xe0] sm:$0xff]
      %v255 = vld [vmem:[%s219 + $0xe8] sm:$0xff]
      %v256 = vld [vmem:[%s219 + $0xf0] sm:$0xff]
      %v257 = vld [vmem:[%s219 + $0xf8] sm:$0xff]
      %v258 = vpack.c.bf16 %v227, %v226
      %v259 = vpack.c.bf16 %v229, %v228
      %v260 = vpack.c.bf16 %v231, %v230
      %v261 = vpack.c.bf16 %v233, %v232
      %v262 = vpack.c.bf16 %v235, %v234
      %v263 = vpack.c.bf16 %v237, %v236
      %v264 = vpack.c.bf16 %v239, %v238
      %v265 = vpack.c.bf16 %v241, %v240
      %v266 = vpack.c.bf16 %v243, %v242
      %v267 = vpack.c.bf16 %v245, %v244
      %v268 = vpack.c.bf16 %v247, %v246
      %v269 = vpack.c.bf16 %v249, %v248
      %v270 = vpack.c.bf16 %v251, %v250
      %v271 = vpack.c.bf16 %v253, %v252
      %v272 = vpack.c.bf16 %v255, %v254
      %v273 = vpack.c.bf16 %v257, %v256
      %v274 = vld [vmem:[%s1] sm:$0x3]
      %v275 = vld [vmem:[%s2] sm:$0x1]
      %v277 = vlaneseq
      %v278 = vshrl.u32 %v277, 7
      %v279 = vsub.s32 0, %v278
      %v280 = vrot.slane %v275, %v279
      %vm282 = vcmask 31744
      %v284 = vsel %vm282, %v258, 0
      %v287 = vsel %vm282, %v259, 0
      %v290 = vsel %vm282, %v260, 0
      %v293 = vsel %vm282, %v261, 0
      %v296 = vsel %vm282, %v262, 0
      %v299 = vsel %vm282, %v263, 0
      %v302 = vsel %vm282, %v264, 0
      %v305 = vsel %vm282, %v265, 0
      %v308 = vsel %vm282, %v266, 0
      %v311 = vsel %vm282, %v267, 0
      %v314 = vsel %vm282, %v268, 0
      %v317 = vsel %vm282, %v269, 0
      %v320 = vsel %vm282, %v270, 0
      %v323 = vsel %vm282, %v271, 0
      %v326 = vsel %vm282, %v272, 0
      %v329 = vsel %vm282, %v273, 0
      %vm331 = vcmask 1041408
      %v333 = vsel %vm331, %v274, 0
      %335 = vmatprep.subr.bf16.mxu0 0
      %336 = vmatpush1.bf16.msra.mxu0 0
      %337 = vmatprep.subr.bf16.mxu0 0
      %338 = vmatpush1.bf16.msra.mxu0 0
      %339 = vmatprep.subr.bf16.mxu0 0
      %340 = vmatpush1.bf16.msra.mxu0 0
      %341 = vmatprep.subr.bf16.mxu0 0
      %342 = vmatpush1.bf16.msra.mxu0 0
      %343 = vmatprep.subr.bf16.mxu0 0
      %344 = vmatpush1.bf16.msra.mxu0 0
      %345 = vmatprep.subr.bf16.mxu0 0
      %346 = vmatpush1.bf16.msra.mxu0 0
      %347 = vmatprep.subr.bf16.mxu0 0
      %348 = vmatpush1.bf16.msra.mxu0 0
      %349 = vmatprep.subr.bf16.mxu0 0
      %350 = vmatpush1.bf16.msra.mxu0 %v333
      %351 = vmatprep.subr.bf16.mxu0 0
      %352 = vmatpush2.bf16.msra.mxu0 0
      %353 = vmatprep.subr.bf16.mxu0 0
      %354 = vmatpush2.bf16.msra.mxu0 0
      %355 = vmatprep.subr.bf16.mxu0 0
      %356 = vmatpush2.bf16.msra.mxu0 0
      %357 = vmatprep.subr.bf16.mxu0 0
      %358 = vmatpush2.bf16.msra.mxu0 0
      %359 = vmatprep.subr.bf16.mxu0 0
      %360 = vmatpush2.bf16.msra.mxu0 0
      %361 = vmatprep.subr.bf16.mxu0 0
      %362 = vmatpush2.bf16.msra.mxu0 0
      %363 = vmatprep.subr.bf16.mxu0 0
      %364 = vmatpush2.bf16.msra.mxu0 0
      %365 = vmatprep.subr.bf16.mxu0 0
      %366 = vmatpush2.bf16.msra.mxu0 0
      %367 = vmatprep.mubr.bf16.mxu0 0
      %368 = vmatmul.mubr.bf16.gmra.mxu0 %v284
      %v369 = vpop.f32.mrf.mxu0
      %v370 = vadd.f32 %v280, %v369
      %v371 = vpop.f32.mrf.mxu0
      %v372 = vpop.f32.mrf.mxu0
      %v373 = vadd.f32 %v280, %v372
      %v374 = vpop.f32.mrf.mxu0
      %375 = vmatprep.mubr.bf16.mxu0 0
      %376 = vmatmul.mubr.bf16.gmra.mxu0 %v287
      %v377 = vpop.f32.mrf.mxu0
      %v378 = vadd.f32 %v280, %v377
      %v379 = vpop.f32.mrf.mxu0
      %v380 = vpop.f32.mrf.mxu0
      %v381 = vadd.f32 %v280, %v380
      %v382 = vpop.f32.mrf.mxu0
      %383 = vmatprep.mubr.bf16.mxu0 0
      %384 = vmatmul.mubr.bf16.gmra.mxu0 %v290
      %v385 = vpop.f32.mrf.mxu0
      %v386 = vadd.f32 %v280, %v385
      %v387 = vpop.f32.mrf.mxu0
      %v388 = vpop.f32.mrf.mxu0
      %v389 = vadd.f32 %v280, %v388
      %v390 = vpop.f32.mrf.mxu0
      %391 = vmatprep.mubr.bf16.mxu0 0
      %392 = vmatmul.mubr.bf16.gmra.mxu0 %v293
      %v393 = vpop.f32.mrf.mxu0
      %v394 = vadd.f32 %v280, %v393
      %v395 = vpop.f32.mrf.mxu0
      %v396 = vpop.f32.mrf.mxu0
      %v397 = vadd.f32 %v280, %v396
      %v398 = vpop.f32.mrf.mxu0
      %399 = vmatprep.mubr.bf16.mxu0 0
      %400 = vmatmul.mubr.bf16.gmra.mxu0 %v296
      %v401 = vpop.f32.mrf.mxu0
      %v402 = vadd.f32 %v280, %v401
      %v403 = vpop.f32.mrf.mxu0
      %v404 = vpop.f32.mrf.mxu0
      %v405 = vadd.f32 %v280, %v404
      %v406 = vpop.f32.mrf.mxu0
      %407 = vmatprep.mubr.bf16.mxu0 0
      %408 = vmatmul.mubr.bf16.gmra.mxu0 %v299
      %v409 = vpop.f32.mrf.mxu0
      %v410 = vadd.f32 %v280, %v409
      %v411 = vpop.f32.mrf.mxu0
      %v412 = vpop.f32.mrf.mxu0
      %v413 = vadd.f32 %v280, %v412
      %v414 = vpop.f32.mrf.mxu0
      %415 = vmatprep.mubr.bf16.mxu0 0
      %416 = vmatmul.mubr.bf16.gmra.mxu0 %v302
      %v417 = vpop.f32.mrf.mxu0
      %v418 = vadd.f32 %v280, %v417
      %v419 = vpop.f32.mrf.mxu0
      %v420 = vpop.f32.mrf.mxu0
      %v421 = vadd.f32 %v280, %v420
      %v422 = vpop.f32.mrf.mxu0
      %423 = vmatprep.mubr.bf16.mxu0 0
      %424 = vmatmul.mubr.bf16.gmra.mxu0 %v305
      %v425 = vpop.f32.mrf.mxu0
      %v426 = vadd.f32 %v280, %v425
      %v427 = vpop.f32.mrf.mxu0
      %v428 = vpop.f32.mrf.mxu0
      %v429 = vadd.f32 %v280, %v428
      %v430 = vpop.f32.mrf.mxu0
      %431 = vmatprep.mubr.bf16.mxu0 0
      %432 = vmatmul.mubr.bf16.gmra.mxu0 %v308
      %v433 = vpop.f32.mrf.mxu0
      %v434 = vadd.f32 %v280, %v433
      %v435 = vpop.f32.mrf.mxu0
      %v436 = vpop.f32.mrf.mxu0
      %v437 = vadd.f32 %v280, %v436
      %v438 = vpop.f32.mrf.mxu0
      %439 = vmatprep.mubr.bf16.mxu0 0
      %440 = vmatmul.mubr.bf16.gmra.mxu0 %v311
      %v441 = vpop.f32.mrf.mxu0
      %v442 = vadd.f32 %v280, %v441
      %v443 = vpop.f32.mrf.mxu0
      %v444 = vpop.f32.mrf.mxu0
      %v445 = vadd.f32 %v280, %v444
      %v446 = vpop.f32.mrf.mxu0
      %447 = vmatprep.mubr.bf16.mxu0 0
      %448 = vmatmul.mubr.bf16.gmra.mxu0 %v314
      %v449 = vpop.f32.mrf.mxu0
      %v450 = vadd.f32 %v280, %v449
      %v451 = vpop.f32.mrf.mxu0
      %v452 = vpop.f32.mrf.mxu0
      %v453 = vadd.f32 %v280, %v452
      %v454 = vpop.f32.mrf.mxu0
      %455 = vmatprep.mubr.bf16.mxu0 0
      %456 = vmatmul.mubr.bf16.gmra.mxu0 %v317
      %v457 = vpop.f32.mrf.mxu0
      %v458 = vadd.f32 %v280, %v457
      %v459 = vpop.f32.mrf.mxu0
      %v460 = vpop.f32.mrf.mxu0
      %v461 = vadd.f32 %v280, %v460
      %v462 = vpop.f32.mrf.mxu0
      %463 = vmatprep.mubr.bf16.mxu0 0
      %464 = vmatmul.mubr.bf16.gmra.mxu0 %v320
      %v465 = vpop.f32.mrf.mxu0
      %v466 = vadd.f32 %v280, %v465
      %v467 = vpop.f32.mrf.mxu0
      %v468 = vpop.f32.mrf.mxu0
      %v469 = vadd.f32 %v280, %v468
      %v470 = vpop.f32.mrf.mxu0
      %471 = vmatprep.mubr.bf16.mxu0 0
      %472 = vmatmul.mubr.bf16.gmra.mxu0 %v323
      %v473 = vpop.f32.mrf.mxu0
      %v474 = vadd.f32 %v280, %v473
      %v475 = vpop.f32.mrf.mxu0
      %v476 = vpop.f32.mrf.mxu0
      %v477 = vadd.f32 %v280, %v476
      %v478 = vpop.f32.mrf.mxu0
      %479 = vmatprep.mubr.bf16.mxu0 0
      %480 = vmatmul.mubr.bf16.gmra.mxu0 %v326
      %v481 = vpop.f32.mrf.mxu0
      %v482 = vadd.f32 %v280, %v481
      %v483 = vpop.f32.mrf.mxu0
      %v484 = vpop.f32.mrf.mxu0
      %v485 = vadd.f32 %v280, %v484
      %v486 = vpop.f32.mrf.mxu0
      %487 = vmatprep.mubr.bf16.mxu0 0
      %488 = vmatmul.mubr.bf16.gmra.mxu0 %v329
      %v489 = vpop.f32.mrf.mxu0
      %v490 = vadd.f32 %v280, %v489
      %v491 = vpop.f32.mrf.mxu0
      %v492 = vpop.f32.mrf.mxu0
      %v493 = vadd.f32 %v280, %v492
      %v494 = vpop.f32.mrf.mxu0
      %495 = vdwg.mxu0
      %v496 = vxor.u32 %v370, 2147483648
      %v497 = vxor.u32 %v373, 2147483648
      %v498 = vxor.u32 %v378, 2147483648
      %v499 = vxor.u32 %v381, 2147483648
      %v500 = vxor.u32 %v386, 2147483648
      %v501 = vxor.u32 %v389, 2147483648
      %v502 = vxor.u32 %v394, 2147483648
      %v503 = vxor.u32 %v397, 2147483648
      %v504 = vxor.u32 %v402, 2147483648
      %v505 = vxor.u32 %v405, 2147483648
      %v506 = vxor.u32 %v410, 2147483648
      %v507 = vxor.u32 %v413, 2147483648
      %v508 = vxor.u32 %v418, 2147483648
      %v509 = vxor.u32 %v421, 2147483648
      %v510 = vxor.u32 %v426, 2147483648
      %v511 = vxor.u32 %v429, 2147483648
      %v512 = vxor.u32 %v434, 2147483648
      %v513 = vxor.u32 %v437, 2147483648
      %v514 = vxor.u32 %v442, 2147483648
      %v515 = vxor.u32 %v445, 2147483648
      %v516 = vxor.u32 %v450, 2147483648
      %v517 = vxor.u32 %v453, 2147483648
      %v518 = vxor.u32 %v458, 2147483648
      %v519 = vxor.u32 %v461, 2147483648
      %v520 = vxor.u32 %v466, 2147483648
      %v521 = vxor.u32 %v469, 2147483648
      %v522 = vxor.u32 %v474, 2147483648
      %v523 = vxor.u32 %v477, 2147483648
      %v524 = vxor.u32 %v482, 2147483648
      %v525 = vxor.u32 %v485, 2147483648
      %v526 = vxor.u32 %v490, 2147483648
      %v527 = vxor.u32 %v493, 2147483648
      %v528 = vmul.f32 %v496, 1.442695
      %v529 = vpow.pop %v528
      %v530 = vmul.f32 %v497, 1.442695
      %v531 = vpow.pop %v530
      %v532 = vmul.f32 %v498, 1.442695
      %v533 = vpow.pop %v532
      %v534 = vmul.f32 %v499, 1.442695
      %v535 = vpow.pop %v534
      %v536 = vmul.f32 %v500, 1.442695
      %v537 = vpow.pop %v536
      %v538 = vmul.f32 %v501, 1.442695
      %v539 = vpow.pop %v538
      %v540 = vmul.f32 %v502, 1.442695
      %v541 = vpow.pop %v540
      %v542 = vmul.f32 %v503, 1.442695
      %v543 = vpow.pop %v542
      %v544 = vmul.f32 %v504, 1.442695
      %v545 = vpow.pop %v544
      %v546 = vmul.f32 %v505, 1.442695
      %v547 = vpow.pop %v546
      %v548 = vmul.f32 %v506, 1.442695
      %v549 = vpow.pop %v548
      %v550 = vmul.f32 %v507, 1.442695
      %v551 = vpow.pop %v550
      %v552 = vmul.f32 %v508, 1.442695
      %v553 = vpow.pop %v552
      %v554 = vmul.f32 %v509, 1.442695
      %v555 = vpow.pop %v554
      %v556 = vmul.f32 %v510, 1.442695
      %v557 = vpow.pop %v556
      %v558 = vmul.f32 %v511, 1.442695
      %v559 = vpow.pop %v558
      %v560 = vmul.f32 %v512, 1.442695
      %v561 = vpow.pop %v560
      %v562 = vmul.f32 %v513, 1.442695
      %v563 = vpow.pop %v562
      %v564 = vmul.f32 %v514, 1.442695
      %v565 = vpow.pop %v564
      %v566 = vmul.f32 %v515, 1.442695
      %v567 = vpow.pop %v566
      %v568 = vmul.f32 %v516, 1.442695
      %v569 = vpow.pop %v568
      %v570 = vmul.f32 %v517, 1.442695
      %v571 = vpow.pop %v570
      %v572 = vmul.f32 %v518, 1.442695
      %v573 = vpow.pop %v572
      %v574 = vmul.f32 %v519, 1.442695
      %v575 = vpow.pop %v574
      %v576 = vmul.f32 %v520, 1.442695
      %v577 = vpow.pop %v576
      %v578 = vmul.f32 %v521, 1.442695
      %v579 = vpow.pop %v578
      %v580 = vmul.f32 %v522, 1.442695
      %v581 = vpow.pop %v580
      %v582 = vmul.f32 %v523, 1.442695
      %v583 = vpow.pop %v582
      %v584 = vmul.f32 %v524, 1.442695
      %v585 = vpow.pop %v584
      %v586 = vmul.f32 %v525, 1.442695
      %v587 = vpow.pop %v586
      %v588 = vmul.f32 %v526, 1.442695
      %v589 = vpow.pop %v588
      %v590 = vmul.f32 %v527, 1.442695
      %v591 = vpow.pop %v590
      %v592 = vadd.f32 %v529, 1.0
      %v593 = vadd.f32 %v531, 1.0
      %v594 = vadd.f32 %v533, 1.0
      %v595 = vadd.f32 %v535, 1.0
      %v596 = vadd.f32 %v537, 1.0
      %v597 = vadd.f32 %v539, 1.0
      %v598 = vadd.f32 %v541, 1.0
      %v599 = vadd.f32 %v543, 1.0
      %v600 = vadd.f32 %v545, 1.0
      %v601 = vadd.f32 %v547, 1.0
      %v602 = vadd.f32 %v549, 1.0
      %v603 = vadd.f32 %v551, 1.0
      %v604 = vadd.f32 %v553, 1.0
      %v605 = vadd.f32 %v555, 1.0
      %v606 = vadd.f32 %v557, 1.0
      %v607 = vadd.f32 %v559, 1.0
      %v608 = vadd.f32 %v561, 1.0
      %v609 = vadd.f32 %v563, 1.0
      %v610 = vadd.f32 %v565, 1.0
      %v611 = vadd.f32 %v567, 1.0
      %v612 = vadd.f32 %v569, 1.0
      %v613 = vadd.f32 %v571, 1.0
      %v614 = vadd.f32 %v573, 1.0
      %v615 = vadd.f32 %v575, 1.0
      %v616 = vadd.f32 %v577, 1.0
      %v617 = vadd.f32 %v579, 1.0
      %v618 = vadd.f32 %v581, 1.0
      %v619 = vadd.f32 %v583, 1.0
      %v620 = vadd.f32 %v585, 1.0
      %v621 = vadd.f32 %v587, 1.0
      %v622 = vadd.f32 %v589, 1.0
      %v623 = vadd.f32 %v591, 1.0
      %v624 = vrcp.pop %v592
      %v625 = vmul.f32 1.0, %v624
      %v626 = vrcp.pop %v593
      %v627 = vmul.f32 1.0, %v626
      %v628 = vrcp.pop %v594
      %v629 = vmul.f32 1.0, %v628
      %v630 = vrcp.pop %v595
      %v631 = vmul.f32 1.0, %v630
      %v632 = vrcp.pop %v596
      %v633 = vmul.f32 1.0, %v632
      %v634 = vrcp.pop %v597
      %v635 = vmul.f32 1.0, %v634
      %v636 = vrcp.pop %v598
      %v637 = vmul.f32 1.0, %v636
      %v638 = vrcp.pop %v599
      %v639 = vmul.f32 1.0, %v638
      %v640 = vrcp.pop %v600
      %v641 = vmul.f32 1.0, %v640
      %v642 = vrcp.pop %v601
      %v643 = vmul.f32 1.0, %v642
      %v644 = vrcp.pop %v602
      %v645 = vmul.f32 1.0, %v644
      %v646 = vrcp.pop %v603
      %v647 = vmul.f32 1.0, %v646
      %v648 = vrcp.pop %v604
      %v649 = vmul.f32 1.0, %v648
      %v650 = vrcp.pop %v605
      %v651 = vmul.f32 1.0, %v650
      %v652 = vrcp.pop %v606
      %v653 = vmul.f32 1.0, %v652
      %v654 = vrcp.pop %v607
      %v655 = vmul.f32 1.0, %v654
      %v656 = vrcp.pop %v608
      %v657 = vmul.f32 1.0, %v656
      %v658 = vrcp.pop %v609
      %v659 = vmul.f32 1.0, %v658
      %v660 = vrcp.pop %v610
      %v661 = vmul.f32 1.0, %v660
      %v662 = vrcp.pop %v611
      %v663 = vmul.f32 1.0, %v662
      %v664 = vrcp.pop %v612
      %v665 = vmul.f32 1.0, %v664
      %v666 = vrcp.pop %v613
      %v667 = vmul.f32 1.0, %v666
      %v668 = vrcp.pop %v614
      %v669 = vmul.f32 1.0, %v668
      %v670 = vrcp.pop %v615
      %v671 = vmul.f32 1.0, %v670
      %v672 = vrcp.pop %v616
      %v673 = vmul.f32 1.0, %v672
      %v674 = vrcp.pop %v617
      %v675 = vmul.f32 1.0, %v674
      %v676 = vrcp.pop %v618
      %v677 = vmul.f32 1.0, %v676
      %v678 = vrcp.pop %v619
      %v679 = vmul.f32 1.0, %v678
      %v680 = vrcp.pop %v620
      %v681 = vmul.f32 1.0, %v680
      %v682 = vrcp.pop %v621
      %v683 = vmul.f32 1.0, %v682
      %v684 = vrcp.pop %v622
      %v685 = vmul.f32 1.0, %v684
      %v686 = vrcp.pop %v623
      %v687 = vmul.f32 1.0, %v686
      %v688 = vmul.f32 %v370, %v625
      %v689 = vmul.f32 %v373, %v627
      %v690 = vmul.f32 %v378, %v629
      %v691 = vmul.f32 %v381, %v631
      %v692 = vmul.f32 %v386, %v633
      %v693 = vmul.f32 %v389, %v635
      %v694 = vmul.f32 %v394, %v637
      %v695 = vmul.f32 %v397, %v639
      %v696 = vmul.f32 %v402, %v641
      %v697 = vmul.f32 %v405, %v643
      %v698 = vmul.f32 %v410, %v645
      %v699 = vmul.f32 %v413, %v647
      %v700 = vmul.f32 %v418, %v649
      %v701 = vmul.f32 %v421, %v651
      %v702 = vmul.f32 %v426, %v653
      %v703 = vmul.f32 %v429, %v655
      %v704 = vmul.f32 %v434, %v657
      %v705 = vmul.f32 %v437, %v659
      %v706 = vmul.f32 %v442, %v661
      %v707 = vmul.f32 %v445, %v663
      %v708 = vmul.f32 %v450, %v665
      %v709 = vmul.f32 %v453, %v667
      %v710 = vmul.f32 %v458, %v669
      %v711 = vmul.f32 %v461, %v671
      %v712 = vmul.f32 %v466, %v673
      %v713 = vmul.f32 %v469, %v675
      %v714 = vmul.f32 %v474, %v677
      %v715 = vmul.f32 %v477, %v679
      %v716 = vmul.f32 %v482, %v681
      %v717 = vmul.f32 %v485, %v683
      %v718 = vmul.f32 %v490, %v685
      %v719 = vmul.f32 %v493, %v687
      %vm720 = vcmask 64512
      %721 = vst.msk [vmem:[#allocation2] sm:$0xff] %vm720, 0.0
      %722 = vst.msk [vmem:[#allocation2 + $0x8] sm:$0xff] %vm720, 0.0
      %vm723 = vcmask 58368
      %724 = vst.msk [vmem:[#allocation2 + $0x10] sm:$0x3] %vm723, 0.0
      %725 = vst.msk [vmem:[#allocation2 + $0x18] sm:$0xff] %vm720, 0.0
      %726 = vst.msk [vmem:[#allocation2 + $0x20] sm:$0xff] %vm720, 0.0
      %727 = vst.msk [vmem:[#allocation2 + $0x28] sm:$0x3] %vm723, 0.0
      %728 = vst.msk [vmem:[#allocation2 + $0x30] sm:$0xff] %vm720, 0.0
      %729 = vst.msk [vmem:[#allocation2 + $0x38] sm:$0xff] %vm720, 0.0
      %730 = vst.msk [vmem:[#allocation2 + $0x40] sm:$0x3] %vm723, 0.0
      %731 = vst.msk [vmem:[#allocation2 + $0x48] sm:$0xff] %vm720, 0.0
      %732 = vst.msk [vmem:[#allocation2 + $0x50] sm:$0xff] %vm720, 0.0
      %733 = vst.msk [vmem:[#allocation2 + $0x58] sm:$0x3] %vm723, 0.0
      %734 = vst.msk [vmem:[#allocation2 + $0x60] sm:$0xff] %vm720, 0.0
      %735 = vst.msk [vmem:[#allocation2 + $0x68] sm:$0xff] %vm720, 0.0
      %736 = vst.msk [vmem:[#allocation2 + $0x70] sm:$0x3] %vm723, 0.0
      %737 = vst.msk [vmem:[#allocation2 + $0x78] sm:$0xff] %vm720, 0.0
      %738 = vst.msk [vmem:[#allocation2 + $0x80] sm:$0xff] %vm720, 0.0
      %739 = vst.msk [vmem:[#allocation2 + $0x88] sm:$0x3] %vm723, 0.0
      %740 = vst.msk [vmem:[#allocation2 + $0x90] sm:$0xff] %vm720, 0.0
      %741 = vst.msk [vmem:[#allocation2 + $0x98] sm:$0xff] %vm720, 0.0
      %742 = vst.msk [vmem:[#allocation2 + $0xa0] sm:$0x3] %vm723, 0.0
      %743 = vst.msk [vmem:[#allocation2 + $0xa8] sm:$0xff] %vm720, 0.0
      %744 = vst.msk [vmem:[#allocation2 + $0xb0] sm:$0xff] %vm720, 0.0
      %745 = vst.msk [vmem:[#allocation2 + $0xb8] sm:$0x3] %vm723, 0.0
      %746 = vst.msk [vmem:[#allocation2 + $0xc0] sm:$0xff] %vm720, 0.0
      %747 = vst.msk [vmem:[#allocation2 + $0xc8] sm:$0xff] %vm720, 0.0
      %748 = vst.msk [vmem:[#allocation2 + $0xd0] sm:$0x3] %vm723, 0.0
      %749 = vst.msk [vmem:[#allocation2 + $0xd8] sm:$0xff] %vm720, 0.0
      %750 = vst.msk [vmem:[#allocation2 + $0xe0] sm:$0xff] %vm720, 0.0
      %751 = vst.msk [vmem:[#allocation2 + $0xe8] sm:$0x3] %vm723, 0.0
      %752 = vst.msk [vmem:[#allocation2 + $0xf0] sm:$0xff] %vm720, 0.0
      %753 = vst.msk [vmem:[#allocation2 + $0xf8] sm:$0xff] %vm720, 0.0
      %754 = vst.msk [vmem:[#allocation2 + $0x100] sm:$0x3] %vm723, 0.0
      %755 = vst.msk [vmem:[#allocation2 + $0x108] sm:$0xff] %vm720, 0.0
      %756 = vst.msk [vmem:[#allocation2 + $0x110] sm:$0xff] %vm720, 0.0
      %757 = vst.msk [vmem:[#allocation2 + $0x118] sm:$0x3] %vm723, 0.0
      %758 = vst.msk [vmem:[#allocation2 + $0x120] sm:$0xff] %vm720, 0.0
      %759 = vst.msk [vmem:[#allocation2 + $0x128] sm:$0xff] %vm720, 0.0
      %760 = vst.msk [vmem:[#allocation2 + $0x130] sm:$0x3] %vm723, 0.0
      %761 = vst.msk [vmem:[#allocation2 + $0x138] sm:$0xff] %vm720, 0.0
      %762 = vst.msk [vmem:[#allocation2 + $0x140] sm:$0xff] %vm720, 0.0
      %763 = vst.msk [vmem:[#allocation2 + $0x148] sm:$0x3] %vm723, 0.0
      %764 = vst.msk [vmem:[#allocation2 + $0x150] sm:$0xff] %vm720, 0.0
      %765 = vst.msk [vmem:[#allocation2 + $0x158] sm:$0xff] %vm720, 0.0
      %766 = vst.msk [vmem:[#allocation2 + $0x160] sm:$0x3] %vm723, 0.0
      %767 = vst.msk [vmem:[#allocation2 + $0x168] sm:$0xff] %vm720, 0.0
      %768 = vst.msk [vmem:[#allocation2 + $0x170] sm:$0xff] %vm720, 0.0
      %769 = vst.msk [vmem:[#allocation2 + $0x178] sm:$0x3] %vm723, 0.0
      %770 = vst.msk [vmem:[#allocation2 + $0x180] sm:$0xff] %vm720, 0.0
      %771 = vst.msk [vmem:[#allocation2 + $0x188] sm:$0xff] %vm720, 0.0
      %772 = vst.msk [vmem:[#allocation2 + $0x190] sm:$0x3] %vm723, 0.0
      %773 = vst.msk [vmem:[#allocation2 + $0x198] sm:$0xff] %vm720, 0.0
      %774 = vst.msk [vmem:[#allocation2 + $0x1a0] sm:$0xff] %vm720, 0.0
      %775 = vst.msk [vmem:[#allocation2 + $0x1a8] sm:$0x3] %vm723, 0.0
      %s776 = scalar_lea.vmem [#allocation2], 24
      %777 = vst.msk [vmem:[%s776 + $0x1] sm:$0xff] %vm720, %v688
      %778 = vst.msk [vmem:[%s776 + $0x9] sm:$0xff] %vm720, %v689
      %779 = vst.msk [vmem:[%s776 + $0x19] sm:$0xff] %vm720, %v690
      %780 = vst.msk [vmem:[%s776 + $0x21] sm:$0xff] %vm720, %v691
      %781 = vst.msk [vmem:[%s776 + $0x31] sm:$0xff] %vm720, %v692
      %782 = vst.msk [vmem:[%s776 + $0x39] sm:$0xff] %vm720, %v693
      %783 = vst.msk [vmem:[%s776 + $0x49] sm:$0xff] %vm720, %v694
      %784 = vst.msk [vmem:[%s776 + $0x51] sm:$0xff] %vm720, %v695
      %785 = vst.msk [vmem:[%s776 + $0x61] sm:$0xff] %vm720, %v696
      %786 = vst.msk [vmem:[%s776 + $0x69] sm:$0xff] %vm720, %v697
      %787 = vst.msk [vmem:[%s776 + $0x79] sm:$0xff] %vm720, %v698
      %788 = vst.msk [vmem:[%s776 + $0x81] sm:$0xff] %vm720, %v699
      %789 = vst.msk [vmem:[%s776 + $0x91] sm:$0xff] %vm720, %v700
      %790 = vst.msk [vmem:[%s776 + $0x99] sm:$0xff] %vm720, %v701
      %791 = vst.msk [vmem:[%s776 + $0xa9] sm:$0xff] %vm720, %v702
      %792 = vst.msk [vmem:[%s776 + $0xb1] sm:$0xff] %vm720, %v703
      %793 = vst.msk [vmem:[%s776 + $0xc1] sm:$0xff] %vm720, %v704
      %794 = vst.msk [vmem:[%s776 + $0xc9] sm:$0xff] %vm720, %v705
      %795 = vst.msk [vmem:[%s776 + $0xd9] sm:$0xff] %vm720, %v706
      %796 = vst.msk [vmem:[%s776 + $0xe1] sm:$0xff] %vm720, %v707
      %797 = vst.msk [vmem:[%s776 + $0xf1] sm:$0xff] %vm720, %v708
      %798 = vst.msk [vmem:[%s776 + $0xf9] sm:$0xff] %vm720, %v709
      %799 = vst.msk [vmem:[%s776 + $0x109] sm:$0xff] %vm720, %v710
      %800 = vst.msk [vmem:[%s776 + $0x111] sm:$0xff] %vm720, %v711
      %801 = vst.msk [vmem:[%s776 + $0x121] sm:$0xff] %vm720, %v712
      %802 = vst.msk [vmem:[%s776 + $0x129] sm:$0xff] %vm720, %v713
      %803 = vst.msk [vmem:[%s776 + $0x139] sm:$0xff] %vm720, %v714
      %804 = vst.msk [vmem:[%s776 + $0x141] sm:$0xff] %vm720, %v715
      %805 = vst.msk [vmem:[%s776 + $0x151] sm:$0xff] %vm720, %v716
      %806 = vst.msk [vmem:[%s776 + $0x159] sm:$0xff] %vm720, %v717
      %807 = vst.msk [vmem:[%s776 + $0x169] sm:$0xff] %vm720, %v718
      %808 = vst.msk [vmem:[%s776 + $0x171] sm:$0xff] %vm720, %v719
      %v809 = vld [vmem:[%s4] sm:$0x1]
      %v811 = vlaneseq
      %v812 = vshrl.u32 %v811, 7
      %v813 = vsub.s32 0, %v812
      %v814 = vrot.slane %v809, %v813
      %v816 = vadd.f32 %v814, 0.0
      %v817 = vld [vmem:[#allocation2] sm:$0xff]
      %v818 = vld [vmem:[#allocation2 + $0x8] sm:$0xff]
      %v819 = vld [vmem:[#allocation2 + $0x18] sm:$0xff]
      %v820 = vld [vmem:[#allocation2 + $0x20] sm:$0xff]
      %v821 = vld [vmem:[#allocation2 + $0x30] sm:$0xff]
      %v822 = vld [vmem:[#allocation2 + $0x38] sm:$0xff]
      %v823 = vld [vmem:[#allocation2 + $0x48] sm:$0xff]
      %v824 = vld [vmem:[#allocation2 + $0x50] sm:$0xff]
      %v825 = vld [vmem:[#allocation2 + $0x60] sm:$0xff]
      %v826 = vld [vmem:[#allocation2 + $0x68] sm:$0xff]
      %v827 = vld [vmem:[#allocation2 + $0x78] sm:$0xff]
      %v828 = vld [vmem:[#allocation2 + $0x80] sm:$0xff]
      %v829 = vld [vmem:[#allocation2 + $0x90] sm:$0xff]
      %v830 = vld [vmem:[#allocation2 + $0x98] sm:$0xff]
      %v831 = vld [vmem:[#allocation2 + $0xa8] sm:$0xff]
      %v832 = vld [vmem:[#allocation2 + $0xb0] sm:$0xff]
      %v833 = vld [vmem:[#allocation2 + $0xc0] sm:$0xff]
      %v834 = vld [vmem:[#allocation2 + $0xc8] sm:$0xff]
      %v835 = vld [vmem:[#allocation2 + $0xd8] sm:$0xff]
      %v836 = vld [vmem:[#allocation2 + $0xe0] sm:$0xff]
      %v837 = vld [vmem:[#allocation2 + $0xf0] sm:$0xff]
      %v838 = vld [vmem:[#allocation2 + $0xf8] sm:$0xff]
      %v839 = vld [vmem:[#allocation2 + $0x108] sm:$0xff]
      %v840 = vld [vmem:[#allocation2 + $0x110] sm:$0xff]
      %v841 = vld [vmem:[#allocation2 + $0x120] sm:$0xff]
      %v842 = vld [vmem:[#allocation2 + $0x128] sm:$0xff]
      %v843 = vld [vmem:[#allocation2 + $0x138] sm:$0xff]
      %v844 = vld [vmem:[#allocation2 + $0x140] sm:$0xff]
      %v845 = vld [vmem:[#allocation2 + $0x150] sm:$0xff]
      %v846 = vld [vmem:[#allocation2 + $0x158] sm:$0xff]
      %v847 = vld [vmem:[#allocation2 + $0x168] sm:$0xff]
      %v848 = vld [vmem:[#allocation2 + $0x170] sm:$0xff]
      %v849 = vpack.c.bf16 %v818, %v817
      %v850 = vpack.c.bf16 %v820, %v819
      %v851 = vpack.c.bf16 %v822, %v821
      %v852 = vpack.c.bf16 %v824, %v823
      %v853 = vpack.c.bf16 %v826, %v825
      %v854 = vpack.c.bf16 %v828, %v827
      %v855 = vpack.c.bf16 %v830, %v829
      %v856 = vpack.c.bf16 %v832, %v831
      %v857 = vpack.c.bf16 %v834, %v833
      %v858 = vpack.c.bf16 %v836, %v835
      %v859 = vpack.c.bf16 %v838, %v837
      %v860 = vpack.c.bf16 %v840, %v839
      %v861 = vpack.c.bf16 %v842, %v841
      %v862 = vpack.c.bf16 %v844, %v843
      %v863 = vpack.c.bf16 %v846, %v845
      %v864 = vpack.c.bf16 %v848, %v847
      %v865 = vld [vmem:[%s3] sm:$0xf]
      %v867 = vsel %vm720, %v849, 0
      %v870 = vsel %vm720, %v850, 0
      %v873 = vsel %vm720, %v851, 0
      %v876 = vsel %vm720, %v852, 0
      %v879 = vsel %vm720, %v853, 0
      %v882 = vsel %vm720, %v854, 0
      %v885 = vsel %vm720, %v855, 0
      %v888 = vsel %vm720, %v856, 0
      %v891 = vsel %vm720, %v857, 0
      %v894 = vsel %vm720, %v858, 0
      %v897 = vsel %vm720, %v859, 0
      %v900 = vsel %vm720, %v860, 0
      %v903 = vsel %vm720, %v861, 0
      %v906 = vsel %vm720, %v862, 0
      %v909 = vsel %vm720, %v863, 0
      %v912 = vsel %vm720, %v864, 0
      %vm914 = vcmask 1043456
      %v916 = vsel %vm914, %v865, 0
      %918 = vmatprep.subr.bf16.mxu0 0
      %919 = vmatpush1.bf16.msra.mxu0 0
      %920 = vmatprep.subr.bf16.mxu0 0
      %921 = vmatpush1.bf16.msra.mxu0 0
      %922 = vmatprep.subr.bf16.mxu0 0
      %923 = vmatpush1.bf16.msra.mxu0 0
      %924 = vmatprep.subr.bf16.mxu0 0
      %925 = vmatpush1.bf16.msra.mxu0 0
      %926 = vmatprep.subr.bf16.mxu0 0
      %927 = vmatpush1.bf16.msra.mxu0 0
      %928 = vmatprep.subr.bf16.mxu0 0
      %929 = vmatpush1.bf16.msra.mxu0 0
      %930 = vmatprep.subr.bf16.mxu0 0
      %931 = vmatpush1.bf16.msra.mxu0 0
      %932 = vmatprep.subr.bf16.mxu0 0
      %933 = vmatpush1.bf16.msra.mxu0 %v916
      %934 = vmatprep.subr.bf16.mxu0 0
      %935 = vmatpush2.bf16.msra.mxu0 0
      %936 = vmatprep.subr.bf16.mxu0 0
      %937 = vmatpush2.bf16.msra.mxu0 0
      %938 = vmatprep.subr.bf16.mxu0 0
      %939 = vmatpush2.bf16.msra.mxu0 0
      %940 = vmatprep.subr.bf16.mxu0 0
      %941 = vmatpush2.bf16.msra.mxu0 0
      %942 = vmatprep.subr.bf16.mxu0 0
      %943 = vmatpush2.bf16.msra.mxu0 0
      %944 = vmatprep.subr.bf16.mxu0 0
      %945 = vmatpush2.bf16.msra.mxu0 0
      %946 = vmatprep.subr.bf16.mxu0 0
      %947 = vmatpush2.bf16.msra.mxu0 0
      %948 = vmatprep.subr.bf16.mxu0 0
      %949 = vmatpush2.bf16.msra.mxu0 0
      %950 = vmatprep.mubr.bf16.mxu0 0
      %951 = vmatmul.mubr.bf16.gmra.mxu0 %v867
      %v952 = vpop.f32.mrf.mxu0
      %v953 = vadd.f32 0.0, %v952
      %v954 = vpop.f32.mrf.mxu0
      %v955 = vpop.f32.mrf.mxu0
      %v956 = vadd.f32 0.0, %v955
      %v957 = vpop.f32.mrf.mxu0
      %958 = vmatprep.mubr.bf16.mxu0 0
      %959 = vmatmul.mubr.bf16.gmra.mxu0 %v870
      %v960 = vpop.f32.mrf.mxu0
      %v961 = vadd.f32 0.0, %v960
      %v962 = vpop.f32.mrf.mxu0
      %v963 = vpop.f32.mrf.mxu0
      %v964 = vadd.f32 0.0, %v963
      %v965 = vpop.f32.mrf.mxu0
      %966 = vmatprep.mubr.bf16.mxu0 0
      %967 = vmatmul.mubr.bf16.gmra.mxu0 %v873
      %v968 = vpop.f32.mrf.mxu0
      %v969 = vadd.f32 0.0, %v968
      %v970 = vpop.f32.mrf.mxu0
      %v971 = vpop.f32.mrf.mxu0
      %v972 = vadd.f32 0.0, %v971
      %v973 = vpop.f32.mrf.mxu0
      %974 = vmatprep.mubr.bf16.mxu0 0
      %975 = vmatmul.mubr.bf16.gmra.mxu0 %v876
      %v976 = vpop.f32.mrf.mxu0
      %v977 = vadd.f32 0.0, %v976
      %v978 = vpop.f32.mrf.mxu0
      %v979 = vpop.f32.mrf.mxu0
      %v980 = vadd.f32 0.0, %v979
      %v981 = vpop.f32.mrf.mxu0
      %982 = vmatprep.mubr.bf16.mxu0 0
      %983 = vmatmul.mubr.bf16.gmra.mxu0 %v879
      %v984 = vpop.f32.mrf.mxu0
      %v985 = vadd.f32 0.0, %v984
      %v986 = vpop.f32.mrf.mxu0
      %v987 = vpop.f32.mrf.mxu0
      %v988 = vadd.f32 0.0, %v987
      %v989 = vpop.f32.mrf.mxu0
      %990 = vmatprep.mubr.bf16.mxu0 0
      %991 = vmatmul.mubr.bf16.gmra.mxu0 %v882
      %v992 = vpop.f32.mrf.mxu0
      %v993 = vadd.f32 0.0, %v992
      %v994 = vpop.f32.mrf.mxu0
      %v995 = vpop.f32.mrf.mxu0
      %v996 = vadd.f32 0.0, %v995
      %v997 = vpop.f32.mrf.mxu0
      %998 = vmatprep.mubr.bf16.mxu0 0
      %999 = vmatmul.mubr.bf16.gmra.mxu0 %v885
      %v1000 = vpop.f32.mrf.mxu0
      %v1001 = vadd.f32 0.0, %v1000
      %v1002 = vpop.f32.mrf.mxu0
      %v1003 = vpop.f32.mrf.mxu0
      %v1004 = vadd.f32 0.0, %v1003
      %v1005 = vpop.f32.mrf.mxu0
      %1006 = vmatprep.mubr.bf16.mxu0 0
      %1007 = vmatmul.mubr.bf16.gmra.mxu0 %v888
      %v1008 = vpop.f32.mrf.mxu0
      %v1009 = vadd.f32 0.0, %v1008
      %v1010 = vpop.f32.mrf.mxu0
      %v1011 = vpop.f32.mrf.mxu0
      %v1012 = vadd.f32 0.0, %v1011
      %v1013 = vpop.f32.mrf.mxu0
      %1014 = vmatprep.mubr.bf16.mxu0 0
      %1015 = vmatmul.mubr.bf16.gmra.mxu0 %v891
      %v1016 = vpop.f32.mrf.mxu0
      %v1017 = vadd.f32 0.0, %v1016
      %v1018 = vpop.f32.mrf.mxu0
      %v1019 = vpop.f32.mrf.mxu0
      %v1020 = vadd.f32 0.0, %v1019
      %v1021 = vpop.f32.mrf.mxu0
      %1022 = vmatprep.mubr.bf16.mxu0 0
      %1023 = vmatmul.mubr.bf16.gmra.mxu0 %v894
      %v1024 = vpop.f32.mrf.mxu0
      %v1025 = vadd.f32 0.0, %v1024
      %v1026 = vpop.f32.mrf.mxu0
      %v1027 = vpop.f32.mrf.mxu0
      %v1028 = vadd.f32 0.0, %v1027
      %v1029 = vpop.f32.mrf.mxu0
      %1030 = vmatprep.mubr.bf16.mxu0 0
      %1031 = vmatmul.mubr.bf16.gmra.mxu0 %v897
      %v1032 = vpop.f32.mrf.mxu0
      %v1033 = vadd.f32 0.0, %v1032
      %v1034 = vpop.f32.mrf.mxu0
      %v1035 = vpop.f32.mrf.mxu0
      %v1036 = vadd.f32 0.0, %v1035
      %v1037 = vpop.f32.mrf.mxu0
      %1038 = vmatprep.mubr.bf16.mxu0 0
      %1039 = vmatmul.mubr.bf16.gmra.mxu0 %v900
      %v1040 = vpop.f32.mrf.mxu0
      %v1041 = vadd.f32 0.0, %v1040
      %v1042 = vpop.f32.mrf.mxu0
      %v1043 = vpop.f32.mrf.mxu0
      %v1044 = vadd.f32 0.0, %v1043
      %v1045 = vpop.f32.mrf.mxu0
      %1046 = vmatprep.mubr.bf16.mxu0 0
      %1047 = vmatmul.mubr.bf16.gmra.mxu0 %v903
      %v1048 = vpop.f32.mrf.mxu0
      %v1049 = vadd.f32 0.0, %v1048
      %v1050 = vpop.f32.mrf.mxu0
      %v1051 = vpop.f32.mrf.mxu0
      %v1052 = vadd.f32 0.0, %v1051
      %v1053 = vpop.f32.mrf.mxu0
      %1054 = vmatprep.mubr.bf16.mxu0 0
      %1055 = vmatmul.mubr.bf16.gmra.mxu0 %v906
      %v1056 = vpop.f32.mrf.mxu0
      %v1057 = vadd.f32 0.0, %v1056
      %v1058 = vpop.f32.mrf.mxu0
      %v1059 = vpop.f32.mrf.mxu0
      %v1060 = vadd.f32 0.0, %v1059
      %v1061 = vpop.f32.mrf.mxu0
      %1062 = vmatprep.mubr.bf16.mxu0 0
      %1063 = vmatmul.mubr.bf16.gmra.mxu0 %v909
      %v1064 = vpop.f32.mrf.mxu0
      %v1065 = vadd.f32 0.0, %v1064
      %v1066 = vpop.f32.mrf.mxu0
      %v1067 = vpop.f32.mrf.mxu0
      %v1068 = vadd.f32 0.0, %v1067
      %v1069 = vpop.f32.mrf.mxu0
      %1070 = vmatprep.mubr.bf16.mxu0 0
      %1071 = vmatmul.mubr.bf16.gmra.mxu0 %v912
      %v1072 = vpop.f32.mrf.mxu0
      %v1073 = vadd.f32 0.0, %v1072
      %v1074 = vpop.f32.mrf.mxu0
      %v1075 = vpop.f32.mrf.mxu0
      %v1076 = vadd.f32 0.0, %v1075
      %v1077 = vpop.f32.mrf.mxu0
      %1078 = vdwg.mxu0
      %v1079 = vadd.f32 %v816, %v953
      %v1080 = vadd.f32 %v816, %v956
      %v1081 = vadd.f32 %v816, %v961
      %v1082 = vadd.f32 %v816, %v964
      %v1083 = vadd.f32 %v816, %v969
      %v1084 = vadd.f32 %v816, %v972
      %v1085 = vadd.f32 %v816, %v977
      %v1086 = vadd.f32 %v816, %v980
      %v1087 = vadd.f32 %v816, %v985
      %v1088 = vadd.f32 %v816, %v988
      %v1089 = vadd.f32 %v816, %v993
      %v1090 = vadd.f32 %v816, %v996
      %v1091 = vadd.f32 %v816, %v1001
      %v1092 = vadd.f32 %v816, %v1004
      %v1093 = vadd.f32 %v816, %v1009
      %v1094 = vadd.f32 %v816, %v1012
      %v1095 = vadd.f32 %v816, %v1017
      %v1096 = vadd.f32 %v816, %v1020
      %v1097 = vadd.f32 %v816, %v1025
      %v1098 = vadd.f32 %v816, %v1028
      %v1099 = vadd.f32 %v816, %v1033
      %v1100 = vadd.f32 %v816, %v1036
      %v1101 = vadd.f32 %v816, %v1041
      %v1102 = vadd.f32 %v816, %v1044
      %v1103 = vadd.f32 %v816, %v1049
      %v1104 = vadd.f32 %v816, %v1052
      %v1105 = vadd.f32 %v816, %v1057
      %v1106 = vadd.f32 %v816, %v1060
      %v1107 = vadd.f32 %v816, %v1065
      %v1108 = vadd.f32 %v816, %v1068
      %v1109 = vadd.f32 %v816, %v1073
      %v1110 = vadd.f32 %v816, %v1076
      %v1111 = vld [vmem:[#allocation2 + $0x1] sm:$0xff]
      %v1112 = vld [vmem:[#allocation2 + $0x9] sm:$0xff]
      %v1113 = vld [vmem:[#allocation2 + $0x19] sm:$0xff]
      %v1114 = vld [vmem:[#allocation2 + $0x21] sm:$0xff]
      %v1115 = vld [vmem:[#allocation2 + $0x31] sm:$0xff]
      %v1116 = vld [vmem:[#allocation2 + $0x39] sm:$0xff]
      %v1117 = vld [vmem:[#allocation2 + $0x49] sm:$0xff]
      %v1118 = vld [vmem:[#allocation2 + $0x51] sm:$0xff]
      %v1119 = vld [vmem:[#allocation2 + $0x61] sm:$0xff]
      %v1120 = vld [vmem:[#allocation2 + $0x69] sm:$0xff]
      %v1121 = vld [vmem:[#allocation2 + $0x79] sm:$0xff]
      %v1122 = vld [vmem:[#allocation2 + $0x81] sm:$0xff]
      %v1123 = vld [vmem:[#allocation2 + $0x91] sm:$0xff]
      %v1124 = vld [vmem:[#allocation2 + $0x99] sm:$0xff]
      %v1125 = vld [vmem:[#allocation2 + $0xa9] sm:$0xff]
      %v1126 = vld [vmem:[#allocation2 + $0xb1] sm:$0xff]
      %v1127 = vld [vmem:[#allocation2 + $0xc1] sm:$0xff]
      %v1128 = vld [vmem:[#allocation2 + $0xc9] sm:$0xff]
      %v1129 = vld [vmem:[#allocation2 + $0xd9] sm:$0xff]
      %v1130 = vld [vmem:[#allocation2 + $0xe1] sm:$0xff]
      %v1131 = vld [vmem:[#allocation2 + $0xf1] sm:$0xff]
      %v1132 = vld [vmem:[#allocation2 + $0xf9] sm:$0xff]
      %v1133 = vld [vmem:[#allocation2 + $0x109] sm:$0xff]
      %v1134 = vld [vmem:[#allocation2 + $0x111] sm:$0xff]
      %v1135 = vld [vmem:[#allocation2 + $0x121] sm:$0xff]
      %v1136 = vld [vmem:[#allocation2 + $0x129] sm:$0xff]
      %v1137 = vld [vmem:[#allocation2 + $0x139] sm:$0xff]
      %v1138 = vld [vmem:[#allocation2 + $0x141] sm:$0xff]
      %v1139 = vld [vmem:[#allocation2 + $0x151] sm:$0xff]
      %v1140 = vld [vmem:[#allocation2 + $0x159] sm:$0xff]
      %v1141 = vld [vmem:[#allocation2 + $0x169] sm:$0xff]
      %v1142 = vld [vmem:[#allocation2 + $0x171] sm:$0xff]
      %v1143 = vpack.c.bf16 %v1112, %v1111
      %v1144 = vpack.c.bf16 %v1114, %v1113
      %v1145 = vpack.c.bf16 %v1116, %v1115
      %v1146 = vpack.c.bf16 %v1118, %v1117
      %v1147 = vpack.c.bf16 %v1120, %v1119
      %v1148 = vpack.c.bf16 %v1122, %v1121
      %v1149 = vpack.c.bf16 %v1124, %v1123
      %v1150 = vpack.c.bf16 %v1126, %v1125
      %v1151 = vpack.c.bf16 %v1128, %v1127
      %v1152 = vpack.c.bf16 %v1130, %v1129
      %v1153 = vpack.c.bf16 %v1132, %v1131
      %v1154 = vpack.c.bf16 %v1134, %v1133
      %v1155 = vpack.c.bf16 %v1136, %v1135
      %v1156 = vpack.c.bf16 %v1138, %v1137
      %v1157 = vpack.c.bf16 %v1140, %v1139
      %v1158 = vpack.c.bf16 %v1142, %v1141
      %s1159 = scalar_lea.vmem %s3, 4
      %v1160 = vld [vmem:[%s1159] sm:$0xf]
      %v1162 = vsel %vm720, %v1143, 0
      %v1165 = vsel %vm720, %v1144, 0
      %v1168 = vsel %vm720, %v1145, 0
      %v1171 = vsel %vm720, %v1146, 0
      %v1174 = vsel %vm720, %v1147, 0
      %v1177 = vsel %vm720, %v1148, 0
      %v1180 = vsel %vm720, %v1149, 0
      %v1183 = vsel %vm720, %v1150, 0
      %v1186 = vsel %vm720, %v1151, 0
      %v1189 = vsel %vm720, %v1152, 0
      %v1192 = vsel %vm720, %v1153, 0
      %v1195 = vsel %vm720, %v1154, 0
      %v1198 = vsel %vm720, %v1155, 0
      %v1201 = vsel %vm720, %v1156, 0
      %v1204 = vsel %vm720, %v1157, 0
      %v1207 = vsel %vm720, %v1158, 0
      %v1210 = vsel %vm914, %v1160, 0
      %1212 = vmatprep.subr.bf16.mxu0 0
      %1213 = vmatpush1.bf16.msra.mxu0 0
      %1214 = vmatprep.subr.bf16.mxu0 0
      %1215 = vmatpush1.bf16.msra.mxu0 0
      %1216 = vmatprep.subr.bf16.mxu0 0
      %1217 = vmatpush1.bf16.msra.mxu0 0
      %1218 = vmatprep.subr.bf16.mxu0 0
      %1219 = vmatpush1.bf16.msra.mxu0 0
      %1220 = vmatprep.subr.bf16.mxu0 0
      %1221 = vmatpush1.bf16.msra.mxu0 0
      %1222 = vmatprep.subr.bf16.mxu0 0
      %1223 = vmatpush1.bf16.msra.mxu0 0
      %1224 = vmatprep.subr.bf16.mxu0 0
      %1225 = vmatpush1.bf16.msra.mxu0 0
      %1226 = vmatprep.subr.bf16.mxu0 0
      %1227 = vmatpush1.bf16.msra.mxu0 %v1210
      %1228 = vmatprep.subr.bf16.mxu0 0
      %1229 = vmatpush2.bf16.msra.mxu0 0
      %1230 = vmatprep.subr.bf16.mxu0 0
      %1231 = vmatpush2.bf16.msra.mxu0 0
      %1232 = vmatprep.subr.bf16.mxu0 0
      %1233 = vmatpush2.bf16.msra.mxu0 0
      %1234 = vmatprep.subr.bf16.mxu0 0
      %1235 = vmatpush2.bf16.msra.mxu0 0
      %1236 = vmatprep.subr.bf16.mxu0 0
      %1237 = vmatpush2.bf16.msra.mxu0 0
      %1238 = vmatprep.subr.bf16.mxu0 0
      %1239 = vmatpush2.bf16.msra.mxu0 0
      %1240 = vmatprep.subr.bf16.mxu0 0
      %1241 = vmatpush2.bf16.msra.mxu0 0
      %1242 = vmatprep.subr.bf16.mxu0 0
      %1243 = vmatpush2.bf16.msra.mxu0 0
      %1244 = vmatprep.mubr.bf16.mxu0 0
      %1245 = vmatmul.mubr.bf16.gmra.mxu0 %v1162
      %v1246 = vpop.f32.mrf.mxu0
      %v1247 = vadd.f32 0.0, %v1246
      %v1248 = vpop.f32.mrf.mxu0
      %v1249 = vpop.f32.mrf.mxu0
      %v1250 = vadd.f32 0.0, %v1249
      %v1251 = vpop.f32.mrf.mxu0
      %1252 = vmatprep.mubr.bf16.mxu0 0
      %1253 = vmatmul.mubr.bf16.gmra.mxu0 %v1165
      %v1254 = vpop.f32.mrf.mxu0
      %v1255 = vadd.f32 0.0, %v1254
      %v1256 = vpop.f32.mrf.mxu0
      %v1257 = vpop.f32.mrf.mxu0
      %v1258 = vadd.f32 0.0, %v1257
      %v1259 = vpop.f32.mrf.mxu0
      %1260 = vmatprep.mubr.bf16.mxu0 0
      %1261 = vmatmul.mubr.bf16.gmra.mxu0 %v1168
      %v1262 = vpop.f32.mrf.mxu0
      %v1263 = vadd.f32 0.0, %v1262
      %v1264 = vpop.f32.mrf.mxu0
      %v1265 = vpop.f32.mrf.mxu0
      %v1266 = vadd.f32 0.0, %v1265
      %v1267 = vpop.f32.mrf.mxu0
      %1268 = vmatprep.mubr.bf16.mxu0 0
      %1269 = vmatmul.mubr.bf16.gmra.mxu0 %v1171
      %v1270 = vpop.f32.mrf.mxu0
      %v1271 = vadd.f32 0.0, %v1270
      %v1272 = vpop.f32.mrf.mxu0
      %v1273 = vpop.f32.mrf.mxu0
      %v1274 = vadd.f32 0.0, %v1273
      %v1275 = vpop.f32.mrf.mxu0
      %1276 = vmatprep.mubr.bf16.mxu0 0
      %1277 = vmatmul.mubr.bf16.gmra.mxu0 %v1174
      %v1278 = vpop.f32.mrf.mxu0
      %v1279 = vadd.f32 0.0, %v1278
      %v1280 = vpop.f32.mrf.mxu0
      %v1281 = vpop.f32.mrf.mxu0
      %v1282 = vadd.f32 0.0, %v1281
      %v1283 = vpop.f32.mrf.mxu0
      %1284 = vmatprep.mubr.bf16.mxu0 0
      %1285 = vmatmul.mubr.bf16.gmra.mxu0 %v1177
      %v1286 = vpop.f32.mrf.mxu0
      %v1287 = vadd.f32 0.0, %v1286
      %v1288 = vpop.f32.mrf.mxu0
      %v1289 = vpop.f32.mrf.mxu0
      %v1290 = vadd.f32 0.0, %v1289
      %v1291 = vpop.f32.mrf.mxu0
      %1292 = vmatprep.mubr.bf16.mxu0 0
      %1293 = vmatmul.mubr.bf16.gmra.mxu0 %v1180
      %v1294 = vpop.f32.mrf.mxu0
      %v1295 = vadd.f32 0.0, %v1294
      %v1296 = vpop.f32.mrf.mxu0
      %v1297 = vpop.f32.mrf.mxu0
      %v1298 = vadd.f32 0.0, %v1297
      %v1299 = vpop.f32.mrf.mxu0
      %1300 = vmatprep.mubr.bf16.mxu0 0
      %1301 = vmatmul.mubr.bf16.gmra.mxu0 %v1183
      %v1302 = vpop.f32.mrf.mxu0
      %v1303 = vadd.f32 0.0, %v1302
      %v1304 = vpop.f32.mrf.mxu0
      %v1305 = vpop.f32.mrf.mxu0
      %v1306 = vadd.f32 0.0, %v1305
      %v1307 = vpop.f32.mrf.mxu0
      %1308 = vmatprep.mubr.bf16.mxu0 0
      %1309 = vmatmul.mubr.bf16.gmra.mxu0 %v1186
      %v1310 = vpop.f32.mrf.mxu0
      %v1311 = vadd.f32 0.0, %v1310
      %v1312 = vpop.f32.mrf.mxu0
      %v1313 = vpop.f32.mrf.mxu0
      %v1314 = vadd.f32 0.0, %v1313
      %v1315 = vpop.f32.mrf.mxu0
      %1316 = vmatprep.mubr.bf16.mxu0 0
      %1317 = vmatmul.mubr.bf16.gmra.mxu0 %v1189
      %v1318 = vpop.f32.mrf.mxu0
      %v1319 = vadd.f32 0.0, %v1318
      %v1320 = vpop.f32.mrf.mxu0
      %v1321 = vpop.f32.mrf.mxu0
      %v1322 = vadd.f32 0.0, %v1321
      %v1323 = vpop.f32.mrf.mxu0
      %1324 = vmatprep.mubr.bf16.mxu0 0
      %1325 = vmatmul.mubr.bf16.gmra.mxu0 %v1192
      %v1326 = vpop.f32.mrf.mxu0
      %v1327 = vadd.f32 0.0, %v1326
      %v1328 = vpop.f32.mrf.mxu0
      %v1329 = vpop.f32.mrf.mxu0
      %v1330 = vadd.f32 0.0, %v1329
      %v1331 = vpop.f32.mrf.mxu0
      %1332 = vmatprep.mubr.bf16.mxu0 0
      %1333 = vmatmul.mubr.bf16.gmra.mxu0 %v1195
      %v1334 = vpop.f32.mrf.mxu0
      %v1335 = vadd.f32 0.0, %v1334
      %v1336 = vpop.f32.mrf.mxu0
      %v1337 = vpop.f32.mrf.mxu0
      %v1338 = vadd.f32 0.0, %v1337
      %v1339 = vpop.f32.mrf.mxu0
      %1340 = vmatprep.mubr.bf16.mxu0 0
      %1341 = vmatmul.mubr.bf16.gmra.mxu0 %v1198
      %v1342 = vpop.f32.mrf.mxu0
      %v1343 = vadd.f32 0.0, %v1342
      %v1344 = vpop.f32.mrf.mxu0
      %v1345 = vpop.f32.mrf.mxu0
      %v1346 = vadd.f32 0.0, %v1345
      %v1347 = vpop.f32.mrf.mxu0
      %1348 = vmatprep.mubr.bf16.mxu0 0
      %1349 = vmatmul.mubr.bf16.gmra.mxu0 %v1201
      %v1350 = vpop.f32.mrf.mxu0
      %v1351 = vadd.f32 0.0, %v1350
      %v1352 = vpop.f32.mrf.mxu0
      %v1353 = vpop.f32.mrf.mxu0
      %v1354 = vadd.f32 0.0, %v1353
      %v1355 = vpop.f32.mrf.mxu0
      %1356 = vmatprep.mubr.bf16.mxu0 0
      %1357 = vmatmul.mubr.bf16.gmra.mxu0 %v1204
      %v1358 = vpop.f32.mrf.mxu0
      %v1359 = vadd.f32 0.0, %v1358
      %v1360 = vpop.f32.mrf.mxu0
      %v1361 = vpop.f32.mrf.mxu0
      %v1362 = vadd.f32 0.0, %v1361
      %v1363 = vpop.f32.mrf.mxu0
      %1364 = vmatprep.mubr.bf16.mxu0 0
      %1365 = vmatmul.mubr.bf16.gmra.mxu0 %v1207
      %v1366 = vpop.f32.mrf.mxu0
      %v1367 = vadd.f32 0.0, %v1366
      %v1368 = vpop.f32.mrf.mxu0
      %v1369 = vpop.f32.mrf.mxu0
      %v1370 = vadd.f32 0.0, %v1369
      %v1371 = vpop.f32.mrf.mxu0
      %1372 = vdwg.mxu0
      %v1373 = vadd.f32 %v1079, %v1247
      %v1374 = vadd.f32 %v1080, %v1250
      %v1375 = vadd.f32 %v1081, %v1255
      %v1376 = vadd.f32 %v1082, %v1258
      %v1377 = vadd.f32 %v1083, %v1263
      %v1378 = vadd.f32 %v1084, %v1266
      %v1379 = vadd.f32 %v1085, %v1271
      %v1380 = vadd.f32 %v1086, %v1274
      %v1381 = vadd.f32 %v1087, %v1279
      %v1382 = vadd.f32 %v1088, %v1282
      %v1383 = vadd.f32 %v1089, %v1287
      %v1384 = vadd.f32 %v1090, %v1290
      %v1385 = vadd.f32 %v1091, %v1295
      %v1386 = vadd.f32 %v1092, %v1298
      %v1387 = vadd.f32 %v1093, %v1303
      %v1388 = vadd.f32 %v1094, %v1306
      %v1389 = vadd.f32 %v1095, %v1311
      %v1390 = vadd.f32 %v1096, %v1314
      %v1391 = vadd.f32 %v1097, %v1319
      %v1392 = vadd.f32 %v1098, %v1322
      %v1393 = vadd.f32 %v1099, %v1327
      %v1394 = vadd.f32 %v1100, %v1330
      %v1395 = vadd.f32 %v1101, %v1335
      %v1396 = vadd.f32 %v1102, %v1338
      %v1397 = vadd.f32 %v1103, %v1343
      %v1398 = vadd.f32 %v1104, %v1346
      %v1399 = vadd.f32 %v1105, %v1351
      %v1400 = vadd.f32 %v1106, %v1354
      %v1401 = vadd.f32 %v1107, %v1359
      %v1402 = vadd.f32 %v1108, %v1362
      %v1403 = vadd.f32 %v1109, %v1367
      %v1404 = vadd.f32 %v1110, %v1370
      %v1405 = vld [vmem:[#allocation2 + $0x2] sm:$0xff]
      %v1406 = vld [vmem:[#allocation2 + $0xa] sm:$0xff]
      %v1407 = vld [vmem:[#allocation2 + $0x1a] sm:$0xff]
      %v1408 = vld [vmem:[#allocation2 + $0x22] sm:$0xff]
      %v1409 = vld [vmem:[#allocation2 + $0x32] sm:$0xff]
      %v1410 = vld [vmem:[#allocation2 + $0x3a] sm:$0xff]
      %v1411 = vld [vmem:[#allocation2 + $0x4a] sm:$0xff]
      %v1412 = vld [vmem:[#allocation2 + $0x52] sm:$0xff]
      %v1413 = vld [vmem:[#allocation2 + $0x62] sm:$0xff]
      %v1414 = vld [vmem:[#allocation2 + $0x6a] sm:$0xff]
      %v1415 = vld [vmem:[#allocation2 + $0x7a] sm:$0xff]
      %v1416 = vld [vmem:[#allocation2 + $0x82] sm:$0xff]
      %v1417 = vld [vmem:[#allocation2 + $0x92] sm:$0xff]
      %v1418 = vld [vmem:[#allocation2 + $0x9a] sm:$0xff]
      %v1419 = vld [vmem:[#allocation2 + $0xaa] sm:$0xff]
      %v1420 = vld [vmem:[#allocation2 + $0xb2] sm:$0xff]
      %v1421 = vld [vmem:[#allocation2 + $0xc2] sm:$0xff]
      %v1422 = vld [vmem:[#allocation2 + $0xca] sm:$0xff]
      %v1423 = vld [vmem:[#allocation2 + $0xda] sm:$0xff]
      %v1424 = vld [vmem:[#allocation2 + $0xe2] sm:$0xff]
      %v1425 = vld [vmem:[#allocation2 + $0xf2] sm:$0xff]
      %v1426 = vld [vmem:[#allocation2 + $0xfa] sm:$0xff]
      %v1427 = vld [vmem:[#allocation2 + $0x10a] sm:$0xff]
      %v1428 = vld [vmem:[#allocation2 + $0x112] sm:$0xff]
      %v1429 = vld [vmem:[#allocation2 + $0x122] sm:$0xff]
      %v1430 = vld [vmem:[#allocation2 + $0x12a] sm:$0xff]
      %v1431 = vld [vmem:[#allocation2 + $0x13a] sm:$0xff]
      %v1432 = vld [vmem:[#allocation2 + $0x142] sm:$0xff]
      %v1433 = vld [vmem:[#allocation2 + $0x152] sm:$0xff]
      %v1434 = vld [vmem:[#allocation2 + $0x15a] sm:$0xff]
      %v1435 = vld [vmem:[#allocation2 + $0x16a] sm:$0xff]
      %v1436 = vld [vmem:[#allocation2 + $0x172] sm:$0xff]
      %v1437 = vpack.c.bf16 %v1406, %v1405
      %v1438 = vpack.c.bf16 %v1408, %v1407
      %v1439 = vpack.c.bf16 %v1410, %v1409
      %v1440 = vpack.c.bf16 %v1412, %v1411
      %v1441 = vpack.c.bf16 %v1414, %v1413
      %v1442 = vpack.c.bf16 %v1416, %v1415
      %v1443 = vpack.c.bf16 %v1418, %v1417
      %v1444 = vpack.c.bf16 %v1420, %v1419
      %v1445 = vpack.c.bf16 %v1422, %v1421
      %v1446 = vpack.c.bf16 %v1424, %v1423
      %v1447 = vpack.c.bf16 %v1426, %v1425
      %v1448 = vpack.c.bf16 %v1428, %v1427
      %v1449 = vpack.c.bf16 %v1430, %v1429
      %v1450 = vpack.c.bf16 %v1432, %v1431
      %v1451 = vpack.c.bf16 %v1434, %v1433
      %v1452 = vpack.c.bf16 %v1436, %v1435
      %s1453 = scalar_lea.vmem %s3, 8
      %v1454 = vld [vmem:[%s1453] sm:$0xf]
      %v1456 = vsel %vm720, %v1437, 0
      %v1459 = vsel %vm720, %v1438, 0
      %v1462 = vsel %vm720, %v1439, 0
      %v1465 = vsel %vm720, %v1440, 0
      %v1468 = vsel %vm720, %v1441, 0
      %v1471 = vsel %vm720, %v1442, 0
      %v1474 = vsel %vm720, %v1443, 0
      %v1477 = vsel %vm720, %v1444, 0
      %v1480 = vsel %vm720, %v1445, 0
      %v1483 = vsel %vm720, %v1446, 0
      %v1486 = vsel %vm720, %v1447, 0
      %v1489 = vsel %vm720, %v1448, 0
      %v1492 = vsel %vm720, %v1449, 0
      %v1495 = vsel %vm720, %v1450, 0
      %v1498 = vsel %vm720, %v1451, 0
      %v1501 = vsel %vm720, %v1452, 0
      %v1504 = vsel %vm914, %v1454, 0
      %1506 = vmatprep.subr.bf16.mxu0 0
      %1507 = vmatpush1.bf16.msra.mxu0 0
      %1508 = vmatprep.subr.bf16.mxu0 0
      %1509 = vmatpush1.bf16.msra.mxu0 0
      %1510 = vmatprep.subr.bf16.mxu0 0
      %1511 = vmatpush1.bf16.msra.mxu0 0
      %1512 = vmatprep.subr.bf16.mxu0 0
      %1513 = vmatpush1.bf16.msra.mxu0 0
      %1514 = vmatprep.subr.bf16.mxu0 0
      %1515 = vmatpush1.bf16.msra.mxu0 0
      %1516 = vmatprep.subr.bf16.mxu0 0
      %1517 = vmatpush1.bf16.msra.mxu0 0
      %1518 = vmatprep.subr.bf16.mxu0 0
      %1519 = vmatpush1.bf16.msra.mxu0 0
      %1520 = vmatprep.subr.bf16.mxu0 0
      %1521 = vmatpush1.bf16.msra.mxu0 %v1504
      %1522 = vmatprep.subr.bf16.mxu0 0
      %1523 = vmatpush2.bf16.msra.mxu0 0
      %1524 = vmatprep.subr.bf16.mxu0 0
      %1525 = vmatpush2.bf16.msra.mxu0 0
      %1526 = vmatprep.subr.bf16.mxu0 0
      %1527 = vmatpush2.bf16.msra.mxu0 0
      %1528 = vmatprep.subr.bf16.mxu0 0
      %1529 = vmatpush2.bf16.msra.mxu0 0
      %1530 = vmatprep.subr.bf16.mxu0 0
      %1531 = vmatpush2.bf16.msra.mxu0 0
      %1532 = vmatprep.subr.bf16.mxu0 0
      %1533 = vmatpush2.bf16.msra.mxu0 0
      %1534 = vmatprep.subr.bf16.mxu0 0
      %1535 = vmatpush2.bf16.msra.mxu0 0
      %1536 = vmatprep.subr.bf16.mxu0 0
      %1537 = vmatpush2.bf16.msra.mxu0 0
      %1538 = vmatprep.mubr.bf16.mxu0 0
      %1539 = vmatmul.mubr.bf16.gmra.mxu0 %v1456
      %v1540 = vpop.f32.mrf.mxu0
      %v1541 = vadd.f32 0.0, %v1540
      %v1542 = vpop.f32.mrf.mxu0
      %v1543 = vpop.f32.mrf.mxu0
      %v1544 = vadd.f32 0.0, %v1543
      %v1545 = vpop.f32.mrf.mxu0
      %1546 = vmatprep.mubr.bf16.mxu0 0
      %1547 = vmatmul.mubr.bf16.gmra.mxu0 %v1459
      %v1548 = vpop.f32.mrf.mxu0
      %v1549 = vadd.f32 0.0, %v1548
      %v1550 = vpop.f32.mrf.mxu0
      %v1551 = vpop.f32.mrf.mxu0
      %v1552 = vadd.f32 0.0, %v1551
      %v1553 = vpop.f32.mrf.mxu0
      %1554 = vmatprep.mubr.bf16.mxu0 0
      %1555 = vmatmul.mubr.bf16.gmra.mxu0 %v1462
      %v1556 = vpop.f32.mrf.mxu0
      %v1557 = vadd.f32 0.0, %v1556
      %v1558 = vpop.f32.mrf.mxu0
      %v1559 = vpop.f32.mrf.mxu0
      %v1560 = vadd.f32 0.0, %v1559
      %v1561 = vpop.f32.mrf.mxu0
      %1562 = vmatprep.mubr.bf16.mxu0 0
      %1563 = vmatmul.mubr.bf16.gmra.mxu0 %v1465
      %v1564 = vpop.f32.mrf.mxu0
      %v1565 = vadd.f32 0.0, %v1564
      %v1566 = vpop.f32.mrf.mxu0
      %v1567 = vpop.f32.mrf.mxu0
      %v1568 = vadd.f32 0.0, %v1567
      %v1569 = vpop.f32.mrf.mxu0
      %1570 = vmatprep.mubr.bf16.mxu0 0
      %1571 = vmatmul.mubr.bf16.gmra.mxu0 %v1468
      %v1572 = vpop.f32.mrf.mxu0
      %v1573 = vadd.f32 0.0, %v1572
      %v1574 = vpop.f32.mrf.mxu0
      %v1575 = vpop.f32.mrf.mxu0
      %v1576 = vadd.f32 0.0, %v1575
      %v1577 = vpop.f32.mrf.mxu0
      %1578 = vmatprep.mubr.bf16.mxu0 0
      %1579 = vmatmul.mubr.bf16.gmra.mxu0 %v1471
      %v1580 = vpop.f32.mrf.mxu0
      %v1581 = vadd.f32 0.0, %v1580
      %v1582 = vpop.f32.mrf.mxu0
      %v1583 = vpop.f32.mrf.mxu0
      %v1584 = vadd.f32 0.0, %v1583
      %v1585 = vpop.f32.mrf.mxu0
      %1586 = vmatprep.mubr.bf16.mxu0 0
      %1587 = vmatmul.mubr.bf16.gmra.mxu0 %v1474
      %v1588 = vpop.f32.mrf.mxu0
      %v1589 = vadd.f32 0.0, %v1588
      %v1590 = vpop.f32.mrf.mxu0
      %v1591 = vpop.f32.mrf.mxu0
      %v1592 = vadd.f32 0.0, %v1591
      %v1593 = vpop.f32.mrf.mxu0
      %1594 = vmatprep.mubr.bf16.mxu0 0
      %1595 = vmatmul.mubr.bf16.gmra.mxu0 %v1477
      %v1596 = vpop.f32.mrf.mxu0
      %v1597 = vadd.f32 0.0, %v1596
      %v1598 = vpop.f32.mrf.mxu0
      %v1599 = vpop.f32.mrf.mxu0
      %v1600 = vadd.f32 0.0, %v1599
      %v1601 = vpop.f32.mrf.mxu0
      %1602 = vmatprep.mubr.bf16.mxu0 0
      %1603 = vmatmul.mubr.bf16.gmra.mxu0 %v1480
      %v1604 = vpop.f32.mrf.mxu0
      %v1605 = vadd.f32 0.0, %v1604
      %v1606 = vpop.f32.mrf.mxu0
      %v1607 = vpop.f32.mrf.mxu0
      %v1608 = vadd.f32 0.0, %v1607
      %v1609 = vpop.f32.mrf.mxu0
      %1610 = vmatprep.mubr.bf16.mxu0 0
      %1611 = vmatmul.mubr.bf16.gmra.mxu0 %v1483
      %v1612 = vpop.f32.mrf.mxu0
      %v1613 = vadd.f32 0.0, %v1612
      %v1614 = vpop.f32.mrf.mxu0
      %v1615 = vpop.f32.mrf.mxu0
      %v1616 = vadd.f32 0.0, %v1615
      %v1617 = vpop.f32.mrf.mxu0
      %1618 = vmatprep.mubr.bf16.mxu0 0
      %1619 = vmatmul.mubr.bf16.gmra.mxu0 %v1486
      %v1620 = vpop.f32.mrf.mxu0
      %v1621 = vadd.f32 0.0, %v1620
      %v1622 = vpop.f32.mrf.mxu0
      %v1623 = vpop.f32.mrf.mxu0
      %v1624 = vadd.f32 0.0, %v1623
      %v1625 = vpop.f32.mrf.mxu0
      %1626 = vmatprep.mubr.bf16.mxu0 0
      %1627 = vmatmul.mubr.bf16.gmra.mxu0 %v1489
      %v1628 = vpop.f32.mrf.mxu0
      %v1629 = vadd.f32 0.0, %v1628
      %v1630 = vpop.f32.mrf.mxu0
      %v1631 = vpop.f32.mrf.mxu0
      %v1632 = vadd.f32 0.0, %v1631
      %v1633 = vpop.f32.mrf.mxu0
      %1634 = vmatprep.mubr.bf16.mxu0 0
      %1635 = vmatmul.mubr.bf16.gmra.mxu0 %v1492
      %v1636 = vpop.f32.mrf.mxu0
      %v1637 = vadd.f32 0.0, %v1636
      %v1638 = vpop.f32.mrf.mxu0
      %v1639 = vpop.f32.mrf.mxu0
      %v1640 = vadd.f32 0.0, %v1639
      %v1641 = vpop.f32.mrf.mxu0
      %1642 = vmatprep.mubr.bf16.mxu0 0
      %1643 = vmatmul.mubr.bf16.gmra.mxu0 %v1495
      %v1644 = vpop.f32.mrf.mxu0
      %v1645 = vadd.f32 0.0, %v1644
      %v1646 = vpop.f32.mrf.mxu0
      %v1647 = vpop.f32.mrf.mxu0
      %v1648 = vadd.f32 0.0, %v1647
      %v1649 = vpop.f32.mrf.mxu0
      %1650 = vmatprep.mubr.bf16.mxu0 0
      %1651 = vmatmul.mubr.bf16.gmra.mxu0 %v1498
      %v1652 = vpop.f32.mrf.mxu0
      %v1653 = vadd.f32 0.0, %v1652
      %v1654 = vpop.f32.mrf.mxu0
      %v1655 = vpop.f32.mrf.mxu0
      %v1656 = vadd.f32 0.0, %v1655
      %v1657 = vpop.f32.mrf.mxu0
      %1658 = vmatprep.mubr.bf16.mxu0 0
      %1659 = vmatmul.mubr.bf16.gmra.mxu0 %v1501
      %v1660 = vpop.f32.mrf.mxu0
      %v1661 = vadd.f32 0.0, %v1660
      %v1662 = vpop.f32.mrf.mxu0
      %v1663 = vpop.f32.mrf.mxu0
      %v1664 = vadd.f32 0.0, %v1663
      %v1665 = vpop.f32.mrf.mxu0
      %1666 = vdwg.mxu0
      %v1667 = vadd.f32 %v1373, %v1541
      %v1668 = vadd.f32 %v1374, %v1544
      %v1669 = vadd.f32 %v1375, %v1549
      %v1670 = vadd.f32 %v1376, %v1552
      %v1671 = vadd.f32 %v1377, %v1557
      %v1672 = vadd.f32 %v1378, %v1560
      %v1673 = vadd.f32 %v1379, %v1565
      %v1674 = vadd.f32 %v1380, %v1568
      %v1675 = vadd.f32 %v1381, %v1573
      %v1676 = vadd.f32 %v1382, %v1576
      %v1677 = vadd.f32 %v1383, %v1581
      %v1678 = vadd.f32 %v1384, %v1584
      %v1679 = vadd.f32 %v1385, %v1589
      %v1680 = vadd.f32 %v1386, %v1592
      %v1681 = vadd.f32 %v1387, %v1597
      %v1682 = vadd.f32 %v1388, %v1600
      %v1683 = vadd.f32 %v1389, %v1605
      %v1684 = vadd.f32 %v1390, %v1608
      %v1685 = vadd.f32 %v1391, %v1613
      %v1686 = vadd.f32 %v1392, %v1616
      %v1687 = vadd.f32 %v1393, %v1621
      %v1688 = vadd.f32 %v1394, %v1624
      %v1689 = vadd.f32 %v1395, %v1629
      %v1690 = vadd.f32 %v1396, %v1632
      %v1691 = vadd.f32 %v1397, %v1637
      %v1692 = vadd.f32 %v1398, %v1640
      %v1693 = vadd.f32 %v1399, %v1645
      %v1694 = vadd.f32 %v1400, %v1648
      %v1695 = vadd.f32 %v1401, %v1653
      %v1696 = vadd.f32 %v1402, %v1656
      %v1697 = vadd.f32 %v1403, %v1661
      %v1698 = vadd.f32 %v1404, %v1664
      %v1699 = vld [vmem:[%s776] sm:$0xff]
      %v1700 = vld [vmem:[%s776 + $0x8] sm:$0xff]
      %v1701 = vld [vmem:[%s776 + $0x18] sm:$0xff]
      %v1702 = vld [vmem:[%s776 + $0x20] sm:$0xff]
      %v1703 = vld [vmem:[%s776 + $0x30] sm:$0xff]
      %v1704 = vld [vmem:[%s776 + $0x38] sm:$0xff]
      %v1705 = vld [vmem:[%s776 + $0x48] sm:$0xff]
      %v1706 = vld [vmem:[%s776 + $0x50] sm:$0xff]
      %v1707 = vld [vmem:[%s776 + $0x60] sm:$0xff]
      %v1708 = vld [vmem:[%s776 + $0x68] sm:$0xff]
      %v1709 = vld [vmem:[%s776 + $0x78] sm:$0xff]
      %v1710 = vld [vmem:[%s776 + $0x80] sm:$0xff]
      %v1711 = vld [vmem:[%s776 + $0x90] sm:$0xff]
      %v1712 = vld [vmem:[%s776 + $0x98] sm:$0xff]
      %v1713 = vld [vmem:[%s776 + $0xa8] sm:$0xff]
      %v1714 = vld [vmem:[%s776 + $0xb0] sm:$0xff]
      %v1715 = vld [vmem:[%s776 + $0xc0] sm:$0xff]
      %v1716 = vld [vmem:[%s776 + $0xc8] sm:$0xff]
      %v1717 = vld [vmem:[%s776 + $0xd8] sm:$0xff]
      %v1718 = vld [vmem:[%s776 + $0xe0] sm:$0xff]
      %v1719 = vld [vmem:[%s776 + $0xf0] sm:$0xff]
      %v1720 = vld [vmem:[%s776 + $0xf8] sm:$0xff]
      %v1721 = vld [vmem:[%s776 + $0x108] sm:$0xff]
      %v1722 = vld [vmem:[%s776 + $0x110] sm:$0xff]
      %v1723 = vld [vmem:[%s776 + $0x120] sm:$0xff]
      %v1724 = vld [vmem:[%s776 + $0x128] sm:$0xff]
      %v1725 = vld [vmem:[%s776 + $0x138] sm:$0xff]
      %v1726 = vld [vmem:[%s776 + $0x140] sm:$0xff]
      %v1727 = vld [vmem:[%s776 + $0x150] sm:$0xff]
      %v1728 = vld [vmem:[%s776 + $0x158] sm:$0xff]
      %v1729 = vld [vmem:[%s776 + $0x168] sm:$0xff]
      %v1730 = vld [vmem:[%s776 + $0x170] sm:$0xff]
      %v1731 = vpack.c.bf16 %v1700, %v1699
      %v1732 = vpack.c.bf16 %v1702, %v1701
      %v1733 = vpack.c.bf16 %v1704, %v1703
      %v1734 = vpack.c.bf16 %v1706, %v1705
      %v1735 = vpack.c.bf16 %v1708, %v1707
      %v1736 = vpack.c.bf16 %v1710, %v1709
      %v1737 = vpack.c.bf16 %v1712, %v1711
      %v1738 = vpack.c.bf16 %v1714, %v1713
      %v1739 = vpack.c.bf16 %v1716, %v1715
      %v1740 = vpack.c.bf16 %v1718, %v1717
      %v1741 = vpack.c.bf16 %v1720, %v1719
      %v1742 = vpack.c.bf16 %v1722, %v1721
      %v1743 = vpack.c.bf16 %v1724, %v1723
      %v1744 = vpack.c.bf16 %v1726, %v1725
      %v1745 = vpack.c.bf16 %v1728, %v1727
      %v1746 = vpack.c.bf16 %v1730, %v1729
      %s1747 = scalar_lea.vmem %s3, 12
      %v1748 = vld [vmem:[%s1747] sm:$0xf]
      %v1750 = vsel %vm720, %v1731, 0
      %v1753 = vsel %vm720, %v1732, 0
      %v1756 = vsel %vm720, %v1733, 0
      %v1759 = vsel %vm720, %v1734, 0
      %v1762 = vsel %vm720, %v1735, 0
      %v1765 = vsel %vm720, %v1736, 0
      %v1768 = vsel %vm720, %v1737, 0
      %v1771 = vsel %vm720, %v1738, 0
      %v1774 = vsel %vm720, %v1739, 0
      %v1777 = vsel %vm720, %v1740, 0
      %v1780 = vsel %vm720, %v1741, 0
      %v1783 = vsel %vm720, %v1742, 0
      %v1786 = vsel %vm720, %v1743, 0
      %v1789 = vsel %vm720, %v1744, 0
      %v1792 = vsel %vm720, %v1745, 0
      %v1795 = vsel %vm720, %v1746, 0
      %v1798 = vsel %vm914, %v1748, 0
      %1800 = vmatprep.subr.bf16.mxu0 0
      %1801 = vmatpush1.bf16.msra.mxu0 0
      %1802 = vmatprep.subr.bf16.mxu0 0
      %1803 = vmatpush1.bf16.msra.mxu0 0
      %1804 = vmatprep.subr.bf16.mxu0 0
      %1805 = vmatpush1.bf16.msra.mxu0 0
      %1806 = vmatprep.subr.bf16.mxu0 0
      %1807 = vmatpush1.bf16.msra.mxu0 0
      %1808 = vmatprep.subr.bf16.mxu0 0
      %1809 = vmatpush1.bf16.msra.mxu0 0
      %1810 = vmatprep.subr.bf16.mxu0 0
      %1811 = vmatpush1.bf16.msra.mxu0 0
      %1812 = vmatprep.subr.bf16.mxu0 0
      %1813 = vmatpush1.bf16.msra.mxu0 0
      %1814 = vmatprep.subr.bf16.mxu0 0
      %1815 = vmatpush1.bf16.msra.mxu0 %v1798
      %1816 = vmatprep.subr.bf16.mxu0 0
      %1817 = vmatpush2.bf16.msra.mxu0 0
      %1818 = vmatprep.subr.bf16.mxu0 0
      %1819 = vmatpush2.bf16.msra.mxu0 0
      %1820 = vmatprep.subr.bf16.mxu0 0
      %1821 = vmatpush2.bf16.msra.mxu0 0
      %1822 = vmatprep.subr.bf16.mxu0 0
      %1823 = vmatpush2.bf16.msra.mxu0 0
      %1824 = vmatprep.subr.bf16.mxu0 0
      %1825 = vmatpush2.bf16.msra.mxu0 0
      %1826 = vmatprep.subr.bf16.mxu0 0
      %1827 = vmatpush2.bf16.msra.mxu0 0
      %1828 = vmatprep.subr.bf16.mxu0 0
      %1829 = vmatpush2.bf16.msra.mxu0 0
      %1830 = vmatprep.subr.bf16.mxu0 0
      %1831 = vmatpush2.bf16.msra.mxu0 0
      %1832 = vmatprep.mubr.bf16.mxu0 0
      %1833 = vmatmul.mubr.bf16.gmra.mxu0 %v1750
      %v1834 = vpop.f32.mrf.mxu0
      %v1835 = vadd.f32 0.0, %v1834
      %v1836 = vpop.f32.mrf.mxu0
      %v1837 = vpop.f32.mrf.mxu0
      %v1838 = vadd.f32 0.0, %v1837
      %v1839 = vpop.f32.mrf.mxu0
      %1840 = vmatprep.mubr.bf16.mxu0 0
      %1841 = vmatmul.mubr.bf16.gmra.mxu0 %v1753
      %v1842 = vpop.f32.mrf.mxu0
      %v1843 = vadd.f32 0.0, %v1842
      %v1844 = vpop.f32.mrf.mxu0
      %v1845 = vpop.f32.mrf.mxu0
      %v1846 = vadd.f32 0.0, %v1845
      %v1847 = vpop.f32.mrf.mxu0
      %1848 = vmatprep.mubr.bf16.mxu0 0
      %1849 = vmatmul.mubr.bf16.gmra.mxu0 %v1756
      %v1850 = vpop.f32.mrf.mxu0
      %v1851 = vadd.f32 0.0, %v1850
      %v1852 = vpop.f32.mrf.mxu0
      %v1853 = vpop.f32.mrf.mxu0
      %v1854 = vadd.f32 0.0, %v1853
      %v1855 = vpop.f32.mrf.mxu0
      %1856 = vmatprep.mubr.bf16.mxu0 0
      %1857 = vmatmul.mubr.bf16.gmra.mxu0 %v1759
      %v1858 = vpop.f32.mrf.mxu0
      %v1859 = vadd.f32 0.0, %v1858
      %v1860 = vpop.f32.mrf.mxu0
      %v1861 = vpop.f32.mrf.mxu0
      %v1862 = vadd.f32 0.0, %v1861
      %v1863 = vpop.f32.mrf.mxu0
      %1864 = vmatprep.mubr.bf16.mxu0 0
      %1865 = vmatmul.mubr.bf16.gmra.mxu0 %v1762
      %v1866 = vpop.f32.mrf.mxu0
      %v1867 = vadd.f32 0.0, %v1866
      %v1868 = vpop.f32.mrf.mxu0
      %v1869 = vpop.f32.mrf.mxu0
      %v1870 = vadd.f32 0.0, %v1869
      %v1871 = vpop.f32.mrf.mxu0
      %1872 = vmatprep.mubr.bf16.mxu0 0
      %1873 = vmatmul.mubr.bf16.gmra.mxu0 %v1765
      %v1874 = vpop.f32.mrf.mxu0
      %v1875 = vadd.f32 0.0, %v1874
      %v1876 = vpop.f32.mrf.mxu0
      %v1877 = vpop.f32.mrf.mxu0
      %v1878 = vadd.f32 0.0, %v1877
      %v1879 = vpop.f32.mrf.mxu0
      %1880 = vmatprep.mubr.bf16.mxu0 0
      %1881 = vmatmul.mubr.bf16.gmra.mxu0 %v1768
      %v1882 = vpop.f32.mrf.mxu0
      %v1883 = vadd.f32 0.0, %v1882
      %v1884 = vpop.f32.mrf.mxu0
      %v1885 = vpop.f32.mrf.mxu0
      %v1886 = vadd.f32 0.0, %v1885
      %v1887 = vpop.f32.mrf.mxu0
      %1888 = vmatprep.mubr.bf16.mxu0 0
      %1889 = vmatmul.mubr.bf16.gmra.mxu0 %v1771
      %v1890 = vpop.f32.mrf.mxu0
      %v1891 = vadd.f32 0.0, %v1890
      %v1892 = vpop.f32.mrf.mxu0
      %v1893 = vpop.f32.mrf.mxu0
      %v1894 = vadd.f32 0.0, %v1893
      %v1895 = vpop.f32.mrf.mxu0
      %1896 = vmatprep.mubr.bf16.mxu0 0
      %1897 = vmatmul.mubr.bf16.gmra.mxu0 %v1774
      %v1898 = vpop.f32.mrf.mxu0
      %v1899 = vadd.f32 0.0, %v1898
      %v1900 = vpop.f32.mrf.mxu0
      %v1901 = vpop.f32.mrf.mxu0
      %v1902 = vadd.f32 0.0, %v1901
      %v1903 = vpop.f32.mrf.mxu0
      %1904 = vmatprep.mubr.bf16.mxu0 0
      %1905 = vmatmul.mubr.bf16.gmra.mxu0 %v1777
      %v1906 = vpop.f32.mrf.mxu0
      %v1907 = vadd.f32 0.0, %v1906
      %v1908 = vpop.f32.mrf.mxu0
      %v1909 = vpop.f32.mrf.mxu0
      %v1910 = vadd.f32 0.0, %v1909
      %v1911 = vpop.f32.mrf.mxu0
      %1912 = vmatprep.mubr.bf16.mxu0 0
      %1913 = vmatmul.mubr.bf16.gmra.mxu0 %v1780
      %v1914 = vpop.f32.mrf.mxu0
      %v1915 = vadd.f32 0.0, %v1914
      %v1916 = vpop.f32.mrf.mxu0
      %v1917 = vpop.f32.mrf.mxu0
      %v1918 = vadd.f32 0.0, %v1917
      %v1919 = vpop.f32.mrf.mxu0
      %1920 = vmatprep.mubr.bf16.mxu0 0
      %1921 = vmatmul.mubr.bf16.gmra.mxu0 %v1783
      %v1922 = vpop.f32.mrf.mxu0
      %v1923 = vadd.f32 0.0, %v1922
      %v1924 = vpop.f32.mrf.mxu0
      %v1925 = vpop.f32.mrf.mxu0
      %v1926 = vadd.f32 0.0, %v1925
      %v1927 = vpop.f32.mrf.mxu0
      %1928 = vmatprep.mubr.bf16.mxu0 0
      %1929 = vmatmul.mubr.bf16.gmra.mxu0 %v1786
      %v1930 = vpop.f32.mrf.mxu0
      %v1931 = vadd.f32 0.0, %v1930
      %v1932 = vpop.f32.mrf.mxu0
      %v1933 = vpop.f32.mrf.mxu0
      %v1934 = vadd.f32 0.0, %v1933
      %v1935 = vpop.f32.mrf.mxu0
      %1936 = vmatprep.mubr.bf16.mxu0 0
      %1937 = vmatmul.mubr.bf16.gmra.mxu0 %v1789
      %v1938 = vpop.f32.mrf.mxu0
      %v1939 = vadd.f32 0.0, %v1938
      %v1940 = vpop.f32.mrf.mxu0
      %v1941 = vpop.f32.mrf.mxu0
      %v1942 = vadd.f32 0.0, %v1941
      %v1943 = vpop.f32.mrf.mxu0
      %1944 = vmatprep.mubr.bf16.mxu0 0
      %1945 = vmatmul.mubr.bf16.gmra.mxu0 %v1792
      %v1946 = vpop.f32.mrf.mxu0
      %v1947 = vadd.f32 0.0, %v1946
      %v1948 = vpop.f32.mrf.mxu0
      %v1949 = vpop.f32.mrf.mxu0
      %v1950 = vadd.f32 0.0, %v1949
      %v1951 = vpop.f32.mrf.mxu0
      %1952 = vmatprep.mubr.bf16.mxu0 0
      %1953 = vmatmul.mubr.bf16.gmra.mxu0 %v1795
      %v1954 = vpop.f32.mrf.mxu0
      %v1955 = vadd.f32 0.0, %v1954
      %v1956 = vpop.f32.mrf.mxu0
      %v1957 = vpop.f32.mrf.mxu0
      %v1958 = vadd.f32 0.0, %v1957
      %v1959 = vpop.f32.mrf.mxu0
      %1960 = vdwg.mxu0
      %v1961 = vadd.f32 %v1667, %v1835
      %v1962 = vadd.f32 %v1668, %v1838
      %v1963 = vadd.f32 %v1669, %v1843
      %v1964 = vadd.f32 %v1670, %v1846
      %v1965 = vadd.f32 %v1671, %v1851
      %v1966 = vadd.f32 %v1672, %v1854
      %v1967 = vadd.f32 %v1673, %v1859
      %v1968 = vadd.f32 %v1674, %v1862
      %v1969 = vadd.f32 %v1675, %v1867
      %v1970 = vadd.f32 %v1676, %v1870
      %v1971 = vadd.f32 %v1677, %v1875
      %v1972 = vadd.f32 %v1678, %v1878
      %v1973 = vadd.f32 %v1679, %v1883
      %v1974 = vadd.f32 %v1680, %v1886
      %v1975 = vadd.f32 %v1681, %v1891
      %v1976 = vadd.f32 %v1682, %v1894
      %v1977 = vadd.f32 %v1683, %v1899
      %v1978 = vadd.f32 %v1684, %v1902
      %v1979 = vadd.f32 %v1685, %v1907
      %v1980 = vadd.f32 %v1686, %v1910
      %v1981 = vadd.f32 %v1687, %v1915
      %v1982 = vadd.f32 %v1688, %v1918
      %v1983 = vadd.f32 %v1689, %v1923
      %v1984 = vadd.f32 %v1690, %v1926
      %v1985 = vadd.f32 %v1691, %v1931
      %v1986 = vadd.f32 %v1692, %v1934
      %v1987 = vadd.f32 %v1693, %v1939
      %v1988 = vadd.f32 %v1694, %v1942
      %v1989 = vadd.f32 %v1695, %v1947
      %v1990 = vadd.f32 %v1696, %v1950
      %v1991 = vadd.f32 %v1697, %v1955
      %v1992 = vadd.f32 %v1698, %v1958
      %v1993 = vld [vmem:[%s776 + $0x1] sm:$0xff]
      %v1994 = vld [vmem:[%s776 + $0x9] sm:$0xff]
      %v1995 = vld [vmem:[%s776 + $0x19] sm:$0xff]
      %v1996 = vld [vmem:[%s776 + $0x21] sm:$0xff]
      %v1997 = vld [vmem:[%s776 + $0x31] sm:$0xff]
      %v1998 = vld [vmem:[%s776 + $0x39] sm:$0xff]
      %v1999 = vld [vmem:[%s776 + $0x49] sm:$0xff]
      %v2000 = vld [vmem:[%s776 + $0x51] sm:$0xff]
      %v2001 = vld [vmem:[%s776 + $0x61] sm:$0xff]
      %v2002 = vld [vmem:[%s776 + $0x69] sm:$0xff]
      %v2003 = vld [vmem:[%s776 + $0x79] sm:$0xff]
      %v2004 = vld [vmem:[%s776 + $0x81] sm:$0xff]
      %v2005 = vld [vmem:[%s776 + $0x91] sm:$0xff]
      %v2006 = vld [vmem:[%s776 + $0x99] sm:$0xff]
      %v2007 = vld [vmem:[%s776 + $0xa9] sm:$0xff]
      %v2008 = vld [vmem:[%s776 + $0xb1] sm:$0xff]
      %v2009 = vld [vmem:[%s776 + $0xc1] sm:$0xff]
      %v2010 = vld [vmem:[%s776 + $0xc9] sm:$0xff]
      %v2011 = vld [vmem:[%s776 + $0xd9] sm:$0xff]
      %v2012 = vld [vmem:[%s776 + $0xe1] sm:$0xff]
      %v2013 = vld [vmem:[%s776 + $0xf1] sm:$0xff]
      %v2014 = vld [vmem:[%s776 + $0xf9] sm:$0xff]
      %v2015 = vld [vmem:[%s776 + $0x109] sm:$0xff]
      %v2016 = vld [vmem:[%s776 + $0x111] sm:$0xff]
      %v2017 = vld [vmem:[%s776 + $0x121] sm:$0xff]
      %v2018 = vld [vmem:[%s776 + $0x129] sm:$0xff]
      %v2019 = vld [vmem:[%s776 + $0x139] sm:$0xff]
      %v2020 = vld [vmem:[%s776 + $0x141] sm:$0xff]
      %v2021 = vld [vmem:[%s776 + $0x151] sm:$0xff]
      %v2022 = vld [vmem:[%s776 + $0x159] sm:$0xff]
      %v2023 = vld [vmem:[%s776 + $0x169] sm:$0xff]
      %v2024 = vld [vmem:[%s776 + $0x171] sm:$0xff]
      %v2025 = vpack.c.bf16 %v1994, %v1993
      %v2026 = vpack.c.bf16 %v1996, %v1995
      %v2027 = vpack.c.bf16 %v1998, %v1997
      %v2028 = vpack.c.bf16 %v2000, %v1999
      %v2029 = vpack.c.bf16 %v2002, %v2001
      %v2030 = vpack.c.bf16 %v2004, %v2003
      %v2031 = vpack.c.bf16 %v2006, %v2005
      %v2032 = vpack.c.bf16 %v2008, %v2007
      %v2033 = vpack.c.bf16 %v2010, %v2009
      %v2034 = vpack.c.bf16 %v2012, %v2011
      %v2035 = vpack.c.bf16 %v2014, %v2013
      %v2036 = vpack.c.bf16 %v2016, %v2015
      %v2037 = vpack.c.bf16 %v2018, %v2017
      %v2038 = vpack.c.bf16 %v2020, %v2019
      %v2039 = vpack.c.bf16 %v2022, %v2021
      %v2040 = vpack.c.bf16 %v2024, %v2023
      %s2041 = scalar_lea.vmem %s3, 16
      %v2042 = vld [vmem:[%s2041] sm:$0xf]
      %v2044 = vsel %vm720, %v2025, 0
      %v2047 = vsel %vm720, %v2026, 0
      %v2050 = vsel %vm720, %v2027, 0
      %v2053 = vsel %vm720, %v2028, 0
      %v2056 = vsel %vm720, %v2029, 0
      %v2059 = vsel %vm720, %v2030, 0
      %v2062 = vsel %vm720, %v2031, 0
      %v2065 = vsel %vm720, %v2032, 0
      %v2068 = vsel %vm720, %v2033, 0
      %v2071 = vsel %vm720, %v2034, 0
      %v2074 = vsel %vm720, %v2035, 0
      %v2077 = vsel %vm720, %v2036, 0
      %v2080 = vsel %vm720, %v2037, 0
      %v2083 = vsel %vm720, %v2038, 0
      %v2086 = vsel %vm720, %v2039, 0
      %v2089 = vsel %vm720, %v2040, 0
      %v2092 = vsel %vm914, %v2042, 0
      %2094 = vmatprep.subr.bf16.mxu0 0
      %2095 = vmatpush1.bf16.msra.mxu0 0
      %2096 = vmatprep.subr.bf16.mxu0 0
      %2097 = vmatpush1.bf16.msra.mxu0 0
      %2098 = vmatprep.subr.bf16.mxu0 0
      %2099 = vmatpush1.bf16.msra.mxu0 0
      %2100 = vmatprep.subr.bf16.mxu0 0
      %2101 = vmatpush1.bf16.msra.mxu0 0
      %2102 = vmatprep.subr.bf16.mxu0 0
      %2103 = vmatpush1.bf16.msra.mxu0 0
      %2104 = vmatprep.subr.bf16.mxu0 0
      %2105 = vmatpush1.bf16.msra.mxu0 0
      %2106 = vmatprep.subr.bf16.mxu0 0
      %2107 = vmatpush1.bf16.msra.mxu0 0
      %2108 = vmatprep.subr.bf16.mxu0 0
      %2109 = vmatpush1.bf16.msra.mxu0 %v2092
      %2110 = vmatprep.subr.bf16.mxu0 0
      %2111 = vmatpush2.bf16.msra.mxu0 0
      %2112 = vmatprep.subr.bf16.mxu0 0
      %2113 = vmatpush2.bf16.msra.mxu0 0
      %2114 = vmatprep.subr.bf16.mxu0 0
      %2115 = vmatpush2.bf16.msra.mxu0 0
      %2116 = vmatprep.subr.bf16.mxu0 0
      %2117 = vmatpush2.bf16.msra.mxu0 0
      %2118 = vmatprep.subr.bf16.mxu0 0
      %2119 = vmatpush2.bf16.msra.mxu0 0
      %2120 = vmatprep.subr.bf16.mxu0 0
      %2121 = vmatpush2.bf16.msra.mxu0 0
      %2122 = vmatprep.subr.bf16.mxu0 0
      %2123 = vmatpush2.bf16.msra.mxu0 0
      %2124 = vmatprep.subr.bf16.mxu0 0
      %2125 = vmatpush2.bf16.msra.mxu0 0
      %2126 = vmatprep.mubr.bf16.mxu0 0
      %2127 = vmatmul.mubr.bf16.gmra.mxu0 %v2044
      %v2128 = vpop.f32.mrf.mxu0
      %v2129 = vadd.f32 0.0, %v2128
      %v2130 = vpop.f32.mrf.mxu0
      %v2131 = vpop.f32.mrf.mxu0
      %v2132 = vadd.f32 0.0, %v2131
      %v2133 = vpop.f32.mrf.mxu0
      %2134 = vmatprep.mubr.bf16.mxu0 0
      %2135 = vmatmul.mubr.bf16.gmra.mxu0 %v2047
      %v2136 = vpop.f32.mrf.mxu0
      %v2137 = vadd.f32 0.0, %v2136
      %v2138 = vpop.f32.mrf.mxu0
      %v2139 = vpop.f32.mrf.mxu0
      %v2140 = vadd.f32 0.0, %v2139
      %v2141 = vpop.f32.mrf.mxu0
      %2142 = vmatprep.mubr.bf16.mxu0 0
      %2143 = vmatmul.mubr.bf16.gmra.mxu0 %v2050
      %v2144 = vpop.f32.mrf.mxu0
      %v2145 = vadd.f32 0.0, %v2144
      %v2146 = vpop.f32.mrf.mxu0
      %v2147 = vpop.f32.mrf.mxu0
      %v2148 = vadd.f32 0.0, %v2147
      %v2149 = vpop.f32.mrf.mxu0
      %2150 = vmatprep.mubr.bf16.mxu0 0
      %2151 = vmatmul.mubr.bf16.gmra.mxu0 %v2053
      %v2152 = vpop.f32.mrf.mxu0
      %v2153 = vadd.f32 0.0, %v2152
      %v2154 = vpop.f32.mrf.mxu0
      %v2155 = vpop.f32.mrf.mxu0
      %v2156 = vadd.f32 0.0, %v2155
      %v2157 = vpop.f32.mrf.mxu0
      %2158 = vmatprep.mubr.bf16.mxu0 0
      %2159 = vmatmul.mubr.bf16.gmra.mxu0 %v2056
      %v2160 = vpop.f32.mrf.mxu0
      %v2161 = vadd.f32 0.0, %v2160
      %v2162 = vpop.f32.mrf.mxu0
      %v2163 = vpop.f32.mrf.mxu0
      %v2164 = vadd.f32 0.0, %v2163
      %v2165 = vpop.f32.mrf.mxu0
      %2166 = vmatprep.mubr.bf16.mxu0 0
      %2167 = vmatmul.mubr.bf16.gmra.mxu0 %v2059
      %v2168 = vpop.f32.mrf.mxu0
      %v2169 = vadd.f32 0.0, %v2168
      %v2170 = vpop.f32.mrf.mxu0
      %v2171 = vpop.f32.mrf.mxu0
      %v2172 = vadd.f32 0.0, %v2171
      %v2173 = vpop.f32.mrf.mxu0
      %2174 = vmatprep.mubr.bf16.mxu0 0
      %2175 = vmatmul.mubr.bf16.gmra.mxu0 %v2062
      %v2176 = vpop.f32.mrf.mxu0
      %v2177 = vadd.f32 0.0, %v2176
      %v2178 = vpop.f32.mrf.mxu0
      %v2179 = vpop.f32.mrf.mxu0
      %v2180 = vadd.f32 0.0, %v2179
      %v2181 = vpop.f32.mrf.mxu0
      %2182 = vmatprep.mubr.bf16.mxu0 0
      %2183 = vmatmul.mubr.bf16.gmra.mxu0 %v2065
      %v2184 = vpop.f32.mrf.mxu0
      %v2185 = vadd.f32 0.0, %v2184
      %v2186 = vpop.f32.mrf.mxu0
      %v2187 = vpop.f32.mrf.mxu0
      %v2188 = vadd.f32 0.0, %v2187
      %v2189 = vpop.f32.mrf.mxu0
      %2190 = vmatprep.mubr.bf16.mxu0 0
      %2191 = vmatmul.mubr.bf16.gmra.mxu0 %v2068
      %v2192 = vpop.f32.mrf.mxu0
      %v2193 = vadd.f32 0.0, %v2192
      %v2194 = vpop.f32.mrf.mxu0
      %v2195 = vpop.f32.mrf.mxu0
      %v2196 = vadd.f32 0.0, %v2195
      %v2197 = vpop.f32.mrf.mxu0
      %2198 = vmatprep.mubr.bf16.mxu0 0
      %2199 = vmatmul.mubr.bf16.gmra.mxu0 %v2071
      %v2200 = vpop.f32.mrf.mxu0
      %v2201 = vadd.f32 0.0, %v2200
      %v2202 = vpop.f32.mrf.mxu0
      %v2203 = vpop.f32.mrf.mxu0
      %v2204 = vadd.f32 0.0, %v2203
      %v2205 = vpop.f32.mrf.mxu0
      %2206 = vmatprep.mubr.bf16.mxu0 0
      %2207 = vmatmul.mubr.bf16.gmra.mxu0 %v2074
      %v2208 = vpop.f32.mrf.mxu0
      %v2209 = vadd.f32 0.0, %v2208
      %v2210 = vpop.f32.mrf.mxu0
      %v2211 = vpop.f32.mrf.mxu0
      %v2212 = vadd.f32 0.0, %v2211
      %v2213 = vpop.f32.mrf.mxu0
      %2214 = vmatprep.mubr.bf16.mxu0 0
      %2215 = vmatmul.mubr.bf16.gmra.mxu0 %v2077
      %v2216 = vpop.f32.mrf.mxu0
      %v2217 = vadd.f32 0.0, %v2216
      %v2218 = vpop.f32.mrf.mxu0
      %v2219 = vpop.f32.mrf.mxu0
      %v2220 = vadd.f32 0.0, %v2219
      %v2221 = vpop.f32.mrf.mxu0
      %2222 = vmatprep.mubr.bf16.mxu0 0
      %2223 = vmatmul.mubr.bf16.gmra.mxu0 %v2080
      %v2224 = vpop.f32.mrf.mxu0
      %v2225 = vadd.f32 0.0, %v2224
      %v2226 = vpop.f32.mrf.mxu0
      %v2227 = vpop.f32.mrf.mxu0
      %v2228 = vadd.f32 0.0, %v2227
      %v2229 = vpop.f32.mrf.mxu0
      %2230 = vmatprep.mubr.bf16.mxu0 0
      %2231 = vmatmul.mubr.bf16.gmra.mxu0 %v2083
      %v2232 = vpop.f32.mrf.mxu0
      %v2233 = vadd.f32 0.0, %v2232
      %v2234 = vpop.f32.mrf.mxu0
      %v2235 = vpop.f32.mrf.mxu0
      %v2236 = vadd.f32 0.0, %v2235
      %v2237 = vpop.f32.mrf.mxu0
      %2238 = vmatprep.mubr.bf16.mxu0 0
      %2239 = vmatmul.mubr.bf16.gmra.mxu0 %v2086
      %v2240 = vpop.f32.mrf.mxu0
      %v2241 = vadd.f32 0.0, %v2240
      %v2242 = vpop.f32.mrf.mxu0
      %v2243 = vpop.f32.mrf.mxu0
      %v2244 = vadd.f32 0.0, %v2243
      %v2245 = vpop.f32.mrf.mxu0
      %2246 = vmatprep.mubr.bf16.mxu0 0
      %2247 = vmatmul.mubr.bf16.gmra.mxu0 %v2089
      %v2248 = vpop.f32.mrf.mxu0
      %v2249 = vadd.f32 0.0, %v2248
      %v2250 = vpop.f32.mrf.mxu0
      %v2251 = vpop.f32.mrf.mxu0
      %v2252 = vadd.f32 0.0, %v2251
      %v2253 = vpop.f32.mrf.mxu0
      %2254 = vdwg.mxu0
      %v2255 = vadd.f32 %v1961, %v2129
      %v2256 = vadd.f32 %v1962, %v2132
      %v2257 = vadd.f32 %v1963, %v2137
      %v2258 = vadd.f32 %v1964, %v2140
      %v2259 = vadd.f32 %v1965, %v2145
      %v2260 = vadd.f32 %v1966, %v2148
      %v2261 = vadd.f32 %v1967, %v2153
      %v2262 = vadd.f32 %v1968, %v2156
      %v2263 = vadd.f32 %v1969, %v2161
      %v2264 = vadd.f32 %v1970, %v2164
      %v2265 = vadd.f32 %v1971, %v2169
      %v2266 = vadd.f32 %v1972, %v2172
      %v2267 = vadd.f32 %v1973, %v2177
      %v2268 = vadd.f32 %v1974, %v2180
      %v2269 = vadd.f32 %v1975, %v2185
      %v2270 = vadd.f32 %v1976, %v2188
      %v2271 = vadd.f32 %v1977, %v2193
      %v2272 = vadd.f32 %v1978, %v2196
      %v2273 = vadd.f32 %v1979, %v2201
      %v2274 = vadd.f32 %v1980, %v2204
      %v2275 = vadd.f32 %v1981, %v2209
      %v2276 = vadd.f32 %v1982, %v2212
      %v2277 = vadd.f32 %v1983, %v2217
      %v2278 = vadd.f32 %v1984, %v2220
      %v2279 = vadd.f32 %v1985, %v2225
      %v2280 = vadd.f32 %v1986, %v2228
      %v2281 = vadd.f32 %v1987, %v2233
      %v2282 = vadd.f32 %v1988, %v2236
      %v2283 = vadd.f32 %v1989, %v2241
      %v2284 = vadd.f32 %v1990, %v2244
      %v2285 = vadd.f32 %v1991, %v2249
      %v2286 = vadd.f32 %v1992, %v2252
      %v2287 = vld [vmem:[%s776 + $0x2] sm:$0xff]
      %v2288 = vld [vmem:[%s776 + $0xa] sm:$0xff]
      %v2289 = vld [vmem:[%s776 + $0x1a] sm:$0xff]
      %v2290 = vld [vmem:[%s776 + $0x22] sm:$0xff]
      %v2291 = vld [vmem:[%s776 + $0x32] sm:$0xff]
      %v2292 = vld [vmem:[%s776 + $0x3a] sm:$0xff]
      %v2293 = vld [vmem:[%s776 + $0x4a] sm:$0xff]
      %v2294 = vld [vmem:[%s776 + $0x52] sm:$0xff]
      %v2295 = vld [vmem:[%s776 + $0x62] sm:$0xff]
      %v2296 = vld [vmem:[%s776 + $0x6a] sm:$0xff]
      %v2297 = vld [vmem:[%s776 + $0x7a] sm:$0xff]
      %v2298 = vld [vmem:[%s776 + $0x82] sm:$0xff]
      %v2299 = vld [vmem:[%s776 + $0x92] sm:$0xff]
      %v2300 = vld [vmem:[%s776 + $0x9a] sm:$0xff]
      %v2301 = vld [vmem:[%s776 + $0xaa] sm:$0xff]
      %v2302 = vld [vmem:[%s776 + $0xb2] sm:$0xff]
      %v2303 = vld [vmem:[%s776 + $0xc2] sm:$0xff]
      %v2304 = vld [vmem:[%s776 + $0xca] sm:$0xff]
      %v2305 = vld [vmem:[%s776 + $0xda] sm:$0xff]
      %v2306 = vld [vmem:[%s776 + $0xe2] sm:$0xff]
      %v2307 = vld [vmem:[%s776 + $0xf2] sm:$0xff]
      %v2308 = vld [vmem:[%s776 + $0xfa] sm:$0xff]
      %v2309 = vld [vmem:[%s776 + $0x10a] sm:$0xff]
      %v2310 = vld [vmem:[%s776 + $0x112] sm:$0xff]
      %v2311 = vld [vmem:[%s776 + $0x122] sm:$0xff]
      %v2312 = vld [vmem:[%s776 + $0x12a] sm:$0xff]
      %v2313 = vld [vmem:[%s776 + $0x13a] sm:$0xff]
      %v2314 = vld [vmem:[%s776 + $0x142] sm:$0xff]
      %v2315 = vld [vmem:[%s776 + $0x152] sm:$0xff]
      %v2316 = vld [vmem:[%s776 + $0x15a] sm:$0xff]
      %v2317 = vld [vmem:[%s776 + $0x16a] sm:$0xff]
      %v2318 = vld [vmem:[%s776 + $0x172] sm:$0xff]
      %v2319 = vpack.c.bf16 %v2288, %v2287
      %v2320 = vpack.c.bf16 %v2290, %v2289
      %v2321 = vpack.c.bf16 %v2292, %v2291
      %v2322 = vpack.c.bf16 %v2294, %v2293
      %v2323 = vpack.c.bf16 %v2296, %v2295
      %v2324 = vpack.c.bf16 %v2298, %v2297
      %v2325 = vpack.c.bf16 %v2300, %v2299
      %v2326 = vpack.c.bf16 %v2302, %v2301
      %v2327 = vpack.c.bf16 %v2304, %v2303
      %v2328 = vpack.c.bf16 %v2306, %v2305
      %v2329 = vpack.c.bf16 %v2308, %v2307
      %v2330 = vpack.c.bf16 %v2310, %v2309
      %v2331 = vpack.c.bf16 %v2312, %v2311
      %v2332 = vpack.c.bf16 %v2314, %v2313
      %v2333 = vpack.c.bf16 %v2316, %v2315
      %v2334 = vpack.c.bf16 %v2318, %v2317
      %s2335 = scalar_lea.vmem %s3, 20
      %v2336 = vld [vmem:[%s2335] sm:$0xf]
      %v2338 = vsel %vm720, %v2319, 0
      %v2341 = vsel %vm720, %v2320, 0
      %v2344 = vsel %vm720, %v2321, 0
      %v2347 = vsel %vm720, %v2322, 0
      %v2350 = vsel %vm720, %v2323, 0
      %v2353 = vsel %vm720, %v2324, 0
      %v2356 = vsel %vm720, %v2325, 0
      %v2359 = vsel %vm720, %v2326, 0
      %v2362 = vsel %vm720, %v2327, 0
      %v2365 = vsel %vm720, %v2328, 0
      %v2368 = vsel %vm720, %v2329, 0
      %v2371 = vsel %vm720, %v2330, 0
      %v2374 = vsel %vm720, %v2331, 0
      %v2377 = vsel %vm720, %v2332, 0
      %v2380 = vsel %vm720, %v2333, 0
      %v2383 = vsel %vm720, %v2334, 0
      %v2386 = vsel %vm914, %v2336, 0
      %2388 = vmatprep.subr.bf16.mxu0 0
      %2389 = vmatpush1.bf16.msra.mxu0 0
      %2390 = vmatprep.subr.bf16.mxu0 0
      %2391 = vmatpush1.bf16.msra.mxu0 0
      %2392 = vmatprep.subr.bf16.mxu0 0
      %2393 = vmatpush1.bf16.msra.mxu0 0
      %2394 = vmatprep.subr.bf16.mxu0 0
      %2395 = vmatpush1.bf16.msra.mxu0 0
      %2396 = vmatprep.subr.bf16.mxu0 0
      %2397 = vmatpush1.bf16.msra.mxu0 0
      %2398 = vmatprep.subr.bf16.mxu0 0
      %2399 = vmatpush1.bf16.msra.mxu0 0
      %2400 = vmatprep.subr.bf16.mxu0 0
      %2401 = vmatpush1.bf16.msra.mxu0 0
      %2402 = vmatprep.subr.bf16.mxu0 0
      %2403 = vmatpush1.bf16.msra.mxu0 %v2386
      %2404 = vmatprep.subr.bf16.mxu0 0
      %2405 = vmatpush2.bf16.msra.mxu0 0
      %2406 = vmatprep.subr.bf16.mxu0 0
      %2407 = vmatpush2.bf16.msra.mxu0 0
      %2408 = vmatprep.subr.bf16.mxu0 0
      %2409 = vmatpush2.bf16.msra.mxu0 0
      %2410 = vmatprep.subr.bf16.mxu0 0
      %2411 = vmatpush2.bf16.msra.mxu0 0
      %2412 = vmatprep.subr.bf16.mxu0 0
      %2413 = vmatpush2.bf16.msra.mxu0 0
      %2414 = vmatprep.subr.bf16.mxu0 0
      %2415 = vmatpush2.bf16.msra.mxu0 0
      %2416 = vmatprep.subr.bf16.mxu0 0
      %2417 = vmatpush2.bf16.msra.mxu0 0
      %2418 = vmatprep.subr.bf16.mxu0 0
      %2419 = vmatpush2.bf16.msra.mxu0 0
      %2420 = vmatprep.mubr.bf16.mxu0 0
      %2421 = vmatmul.mubr.bf16.gmra.mxu0 %v2338
      %v2422 = vpop.f32.mrf.mxu0
      %v2423 = vadd.f32 0.0, %v2422
      %v2424 = vpop.f32.mrf.mxu0
      %v2425 = vpop.f32.mrf.mxu0
      %v2426 = vadd.f32 0.0, %v2425
      %v2427 = vpop.f32.mrf.mxu0
      %2428 = vmatprep.mubr.bf16.mxu0 0
      %2429 = vmatmul.mubr.bf16.gmra.mxu0 %v2341
      %v2430 = vpop.f32.mrf.mxu0
      %v2431 = vadd.f32 0.0, %v2430
      %v2432 = vpop.f32.mrf.mxu0
      %v2433 = vpop.f32.mrf.mxu0
      %v2434 = vadd.f32 0.0, %v2433
      %v2435 = vpop.f32.mrf.mxu0
      %2436 = vmatprep.mubr.bf16.mxu0 0
      %2437 = vmatmul.mubr.bf16.gmra.mxu0 %v2344
      %v2438 = vpop.f32.mrf.mxu0
      %v2439 = vadd.f32 0.0, %v2438
      %v2440 = vpop.f32.mrf.mxu0
      %v2441 = vpop.f32.mrf.mxu0
      %v2442 = vadd.f32 0.0, %v2441
      %v2443 = vpop.f32.mrf.mxu0
      %2444 = vmatprep.mubr.bf16.mxu0 0
      %2445 = vmatmul.mubr.bf16.gmra.mxu0 %v2347
      %v2446 = vpop.f32.mrf.mxu0
      %v2447 = vadd.f32 0.0, %v2446
      %v2448 = vpop.f32.mrf.mxu0
      %v2449 = vpop.f32.mrf.mxu0
      %v2450 = vadd.f32 0.0, %v2449
      %v2451 = vpop.f32.mrf.mxu0
      %2452 = vmatprep.mubr.bf16.mxu0 0
      %2453 = vmatmul.mubr.bf16.gmra.mxu0 %v2350
      %v2454 = vpop.f32.mrf.mxu0
      %v2455 = vadd.f32 0.0, %v2454
      %v2456 = vpop.f32.mrf.mxu0
      %v2457 = vpop.f32.mrf.mxu0
      %v2458 = vadd.f32 0.0, %v2457
      %v2459 = vpop.f32.mrf.mxu0
      %2460 = vmatprep.mubr.bf16.mxu0 0
      %2461 = vmatmul.mubr.bf16.gmra.mxu0 %v2353
      %v2462 = vpop.f32.mrf.mxu0
      %v2463 = vadd.f32 0.0, %v2462
      %v2464 = vpop.f32.mrf.mxu0
      %v2465 = vpop.f32.mrf.mxu0
      %v2466 = vadd.f32 0.0, %v2465
      %v2467 = vpop.f32.mrf.mxu0
      %2468 = vmatprep.mubr.bf16.mxu0 0
      %2469 = vmatmul.mubr.bf16.gmra.mxu0 %v2356
      %v2470 = vpop.f32.mrf.mxu0
      %v2471 = vadd.f32 0.0, %v2470
      %v2472 = vpop.f32.mrf.mxu0
      %v2473 = vpop.f32.mrf.mxu0
      %v2474 = vadd.f32 0.0, %v2473
      %v2475 = vpop.f32.mrf.mxu0
      %2476 = vmatprep.mubr.bf16.mxu0 0
      %2477 = vmatmul.mubr.bf16.gmra.mxu0 %v2359
      %v2478 = vpop.f32.mrf.mxu0
      %v2479 = vadd.f32 0.0, %v2478
      %v2480 = vpop.f32.mrf.mxu0
      %v2481 = vpop.f32.mrf.mxu0
      %v2482 = vadd.f32 0.0, %v2481
      %v2483 = vpop.f32.mrf.mxu0
      %2484 = vmatprep.mubr.bf16.mxu0 0
      %2485 = vmatmul.mubr.bf16.gmra.mxu0 %v2362
      %v2486 = vpop.f32.mrf.mxu0
      %v2487 = vadd.f32 0.0, %v2486
      %v2488 = vpop.f32.mrf.mxu0
      %v2489 = vpop.f32.mrf.mxu0
      %v2490 = vadd.f32 0.0, %v2489
      %v2491 = vpop.f32.mrf.mxu0
      %2492 = vmatprep.mubr.bf16.mxu0 0
      %2493 = vmatmul.mubr.bf16.gmra.mxu0 %v2365
      %v2494 = vpop.f32.mrf.mxu0
      %v2495 = vadd.f32 0.0, %v2494
      %v2496 = vpop.f32.mrf.mxu0
      %v2497 = vpop.f32.mrf.mxu0
      %v2498 = vadd.f32 0.0, %v2497
      %v2499 = vpop.f32.mrf.mxu0
      %2500 = vmatprep.mubr.bf16.mxu0 0
      %2501 = vmatmul.mubr.bf16.gmra.mxu0 %v2368
      %v2502 = vpop.f32.mrf.mxu0
      %v2503 = vadd.f32 0.0, %v2502
      %v2504 = vpop.f32.mrf.mxu0
      %v2505 = vpop.f32.mrf.mxu0
      %v2506 = vadd.f32 0.0, %v2505
      %v2507 = vpop.f32.mrf.mxu0
      %2508 = vmatprep.mubr.bf16.mxu0 0
      %2509 = vmatmul.mubr.bf16.gmra.mxu0 %v2371
      %v2510 = vpop.f32.mrf.mxu0
      %v2511 = vadd.f32 0.0, %v2510
      %v2512 = vpop.f32.mrf.mxu0
      %v2513 = vpop.f32.mrf.mxu0
      %v2514 = vadd.f32 0.0, %v2513
      %v2515 = vpop.f32.mrf.mxu0
      %2516 = vmatprep.mubr.bf16.mxu0 0
      %2517 = vmatmul.mubr.bf16.gmra.mxu0 %v2374
      %v2518 = vpop.f32.mrf.mxu0
      %v2519 = vadd.f32 0.0, %v2518
      %v2520 = vpop.f32.mrf.mxu0
      %v2521 = vpop.f32.mrf.mxu0
      %v2522 = vadd.f32 0.0, %v2521
      %v2523 = vpop.f32.mrf.mxu0
      %2524 = vmatprep.mubr.bf16.mxu0 0
      %2525 = vmatmul.mubr.bf16.gmra.mxu0 %v2377
      %v2526 = vpop.f32.mrf.mxu0
      %v2527 = vadd.f32 0.0, %v2526
      %v2528 = vpop.f32.mrf.mxu0
      %v2529 = vpop.f32.mrf.mxu0
      %v2530 = vadd.f32 0.0, %v2529
      %v2531 = vpop.f32.mrf.mxu0
      %2532 = vmatprep.mubr.bf16.mxu0 0
      %2533 = vmatmul.mubr.bf16.gmra.mxu0 %v2380
      %v2534 = vpop.f32.mrf.mxu0
      %v2535 = vadd.f32 0.0, %v2534
      %v2536 = vpop.f32.mrf.mxu0
      %v2537 = vpop.f32.mrf.mxu0
      %v2538 = vadd.f32 0.0, %v2537
      %v2539 = vpop.f32.mrf.mxu0
      %2540 = vmatprep.mubr.bf16.mxu0 0
      %2541 = vmatmul.mubr.bf16.gmra.mxu0 %v2383
      %v2542 = vpop.f32.mrf.mxu0
      %v2543 = vadd.f32 0.0, %v2542
      %v2544 = vpop.f32.mrf.mxu0
      %v2545 = vpop.f32.mrf.mxu0
      %v2546 = vadd.f32 0.0, %v2545
      %v2547 = vpop.f32.mrf.mxu0
      %2548 = vdwg.mxu0
      %v2549 = vadd.f32 %v2255, %v2423
      %v2550 = vadd.f32 %v2256, %v2426
      %v2551 = vadd.f32 %v2257, %v2431
      %v2552 = vadd.f32 %v2258, %v2434
      %v2553 = vadd.f32 %v2259, %v2439
      %v2554 = vadd.f32 %v2260, %v2442
      %v2555 = vadd.f32 %v2261, %v2447
      %v2556 = vadd.f32 %v2262, %v2450
      %v2557 = vadd.f32 %v2263, %v2455
      %v2558 = vadd.f32 %v2264, %v2458
      %v2559 = vadd.f32 %v2265, %v2463
      %v2560 = vadd.f32 %v2266, %v2466
      %v2561 = vadd.f32 %v2267, %v2471
      %v2562 = vadd.f32 %v2268, %v2474
      %v2563 = vadd.f32 %v2269, %v2479
      %v2564 = vadd.f32 %v2270, %v2482
      %v2565 = vadd.f32 %v2271, %v2487
      %v2566 = vadd.f32 %v2272, %v2490
      %v2567 = vadd.f32 %v2273, %v2495
      %v2568 = vadd.f32 %v2274, %v2498
      %v2569 = vadd.f32 %v2275, %v2503
      %v2570 = vadd.f32 %v2276, %v2506
      %v2571 = vadd.f32 %v2277, %v2511
      %v2572 = vadd.f32 %v2278, %v2514
      %v2573 = vadd.f32 %v2279, %v2519
      %v2574 = vadd.f32 %v2280, %v2522
      %v2575 = vadd.f32 %v2281, %v2527
      %v2576 = vadd.f32 %v2282, %v2530
      %v2577 = vadd.f32 %v2283, %v2535
      %v2578 = vadd.f32 %v2284, %v2538
      %v2579 = vadd.f32 %v2285, %v2543
      %v2580 = vadd.f32 %v2286, %v2546
      %s2581 = scalar_lea.vmem [#allocation2], 48
      %v2582 = vld [vmem:[%s2581] sm:$0xff]
      %v2583 = vld [vmem:[%s2581 + $0x8] sm:$0xff]
      %v2584 = vld [vmem:[%s2581 + $0x18] sm:$0xff]
      %v2585 = vld [vmem:[%s2581 + $0x20] sm:$0xff]
      %v2586 = vld [vmem:[%s2581 + $0x30] sm:$0xff]
      %v2587 = vld [vmem:[%s2581 + $0x38] sm:$0xff]
      %v2588 = vld [vmem:[%s2581 + $0x48] sm:$0xff]
      %v2589 = vld [vmem:[%s2581 + $0x50] sm:$0xff]
      %v2590 = vld [vmem:[%s2581 + $0x60] sm:$0xff]
      %v2591 = vld [vmem:[%s2581 + $0x68] sm:$0xff]
      %v2592 = vld [vmem:[%s2581 + $0x78] sm:$0xff]
      %v2593 = vld [vmem:[%s2581 + $0x80] sm:$0xff]
      %v2594 = vld [vmem:[%s2581 + $0x90] sm:$0xff]
      %v2595 = vld [vmem:[%s2581 + $0x98] sm:$0xff]
      %v2596 = vld [vmem:[%s2581 + $0xa8] sm:$0xff]
      %v2597 = vld [vmem:[%s2581 + $0xb0] sm:$0xff]
      %v2598 = vld [vmem:[%s2581 + $0xc0] sm:$0xff]
      %v2599 = vld [vmem:[%s2581 + $0xc8] sm:$0xff]
      %v2600 = vld [vmem:[%s2581 + $0xd8] sm:$0xff]
      %v2601 = vld [vmem:[%s2581 + $0xe0] sm:$0xff]
      %v2602 = vld [vmem:[%s2581 + $0xf0] sm:$0xff]
      %v2603 = vld [vmem:[%s2581 + $0xf8] sm:$0xff]
      %v2604 = vld [vmem:[%s2581 + $0x108] sm:$0xff]
      %v2605 = vld [vmem:[%s2581 + $0x110] sm:$0xff]
      %v2606 = vld [vmem:[%s2581 + $0x120] sm:$0xff]
      %v2607 = vld [vmem:[%s2581 + $0x128] sm:$0xff]
      %v2608 = vld [vmem:[%s2581 + $0x138] sm:$0xff]
      %v2609 = vld [vmem:[%s2581 + $0x140] sm:$0xff]
      %v2610 = vld [vmem:[%s2581 + $0x150] sm:$0xff]
      %v2611 = vld [vmem:[%s2581 + $0x158] sm:$0xff]
      %v2612 = vld [vmem:[%s2581 + $0x168] sm:$0xff]
      %v2613 = vld [vmem:[%s2581 + $0x170] sm:$0xff]
      %v2614 = vpack.c.bf16 %v2583, %v2582
      %v2615 = vpack.c.bf16 %v2585, %v2584
      %v2616 = vpack.c.bf16 %v2587, %v2586
      %v2617 = vpack.c.bf16 %v2589, %v2588
      %v2618 = vpack.c.bf16 %v2591, %v2590
      %v2619 = vpack.c.bf16 %v2593, %v2592
      %v2620 = vpack.c.bf16 %v2595, %v2594
      %v2621 = vpack.c.bf16 %v2597, %v2596
      %v2622 = vpack.c.bf16 %v2599, %v2598
      %v2623 = vpack.c.bf16 %v2601, %v2600
      %v2624 = vpack.c.bf16 %v2603, %v2602
      %v2625 = vpack.c.bf16 %v2605, %v2604
      %v2626 = vpack.c.bf16 %v2607, %v2606
      %v2627 = vpack.c.bf16 %v2609, %v2608
      %v2628 = vpack.c.bf16 %v2611, %v2610
      %v2629 = vpack.c.bf16 %v2613, %v2612
      %s2630 = scalar_lea.vmem %s3, 24
      %v2631 = vld [vmem:[%s2630] sm:$0xf]
      %v2633 = vsel %vm720, %v2614, 0
      %v2636 = vsel %vm720, %v2615, 0
      %v2639 = vsel %vm720, %v2616, 0
      %v2642 = vsel %vm720, %v2617, 0
      %v2645 = vsel %vm720, %v2618, 0
      %v2648 = vsel %vm720, %v2619, 0
      %v2651 = vsel %vm720, %v2620, 0
      %v2654 = vsel %vm720, %v2621, 0
      %v2657 = vsel %vm720, %v2622, 0
      %v2660 = vsel %vm720, %v2623, 0
      %v2663 = vsel %vm720, %v2624, 0
      %v2666 = vsel %vm720, %v2625, 0
      %v2669 = vsel %vm720, %v2626, 0
      %v2672 = vsel %vm720, %v2627, 0
      %v2675 = vsel %vm720, %v2628, 0
      %v2678 = vsel %vm720, %v2629, 0
      %v2681 = vsel %vm914, %v2631, 0
      %2683 = vmatprep.subr.bf16.mxu0 0
      %2684 = vmatpush1.bf16.msra.mxu0 0
      %2685 = vmatprep.subr.bf16.mxu0 0
      %2686 = vmatpush1.bf16.msra.mxu0 0
      %2687 = vmatprep.subr.bf16.mxu0 0
      %2688 = vmatpush1.bf16.msra.mxu0 0
      %2689 = vmatprep.subr.bf16.mxu0 0
      %2690 = vmatpush1.bf16.msra.mxu0 0
      %2691 = vmatprep.subr.bf16.mxu0 0
      %2692 = vmatpush1.bf16.msra.mxu0 0
      %2693 = vmatprep.subr.bf16.mxu0 0
      %2694 = vmatpush1.bf16.msra.mxu0 0
      %2695 = vmatprep.subr.bf16.mxu0 0
      %2696 = vmatpush1.bf16.msra.mxu0 0
      %2697 = vmatprep.subr.bf16.mxu0 0
      %2698 = vmatpush1.bf16.msra.mxu0 %v2681
      %2699 = vmatprep.subr.bf16.mxu0 0
      %2700 = vmatpush2.bf16.msra.mxu0 0
      %2701 = vmatprep.subr.bf16.mxu0 0
      %2702 = vmatpush2.bf16.msra.mxu0 0
      %2703 = vmatprep.subr.bf16.mxu0 0
      %2704 = vmatpush2.bf16.msra.mxu0 0
      %2705 = vmatprep.subr.bf16.mxu0 0
      %2706 = vmatpush2.bf16.msra.mxu0 0
      %2707 = vmatprep.subr.bf16.mxu0 0
      %2708 = vmatpush2.bf16.msra.mxu0 0
      %2709 = vmatprep.subr.bf16.mxu0 0
      %2710 = vmatpush2.bf16.msra.mxu0 0
      %2711 = vmatprep.subr.bf16.mxu0 0
      %2712 = vmatpush2.bf16.msra.mxu0 0
      %2713 = vmatprep.subr.bf16.mxu0 0
      %2714 = vmatpush2.bf16.msra.mxu0 0
      %2715 = vmatprep.mubr.bf16.mxu0 0
      %2716 = vmatmul.mubr.bf16.gmra.mxu0 %v2633
      %v2717 = vpop.f32.mrf.mxu0
      %v2718 = vadd.f32 0.0, %v2717
      %v2719 = vpop.f32.mrf.mxu0
      %v2720 = vpop.f32.mrf.mxu0
      %v2721 = vadd.f32 0.0, %v2720
      %v2722 = vpop.f32.mrf.mxu0
      %2723 = vmatprep.mubr.bf16.mxu0 0
      %2724 = vmatmul.mubr.bf16.gmra.mxu0 %v2636
      %v2725 = vpop.f32.mrf.mxu0
      %v2726 = vadd.f32 0.0, %v2725
      %v2727 = vpop.f32.mrf.mxu0
      %v2728 = vpop.f32.mrf.mxu0
      %v2729 = vadd.f32 0.0, %v2728
      %v2730 = vpop.f32.mrf.mxu0
      %2731 = vmatprep.mubr.bf16.mxu0 0
      %2732 = vmatmul.mubr.bf16.gmra.mxu0 %v2639
      %v2733 = vpop.f32.mrf.mxu0
      %v2734 = vadd.f32 0.0, %v2733
      %v2735 = vpop.f32.mrf.mxu0
      %v2736 = vpop.f32.mrf.mxu0
      %v2737 = vadd.f32 0.0, %v2736
      %v2738 = vpop.f32.mrf.mxu0
      %2739 = vmatprep.mubr.bf16.mxu0 0
      %2740 = vmatmul.mubr.bf16.gmra.mxu0 %v2642
      %v2741 = vpop.f32.mrf.mxu0
      %v2742 = vadd.f32 0.0, %v2741
      %v2743 = vpop.f32.mrf.mxu0
      %v2744 = vpop.f32.mrf.mxu0
      %v2745 = vadd.f32 0.0, %v2744
      %v2746 = vpop.f32.mrf.mxu0
      %2747 = vmatprep.mubr.bf16.mxu0 0
      %2748 = vmatmul.mubr.bf16.gmra.mxu0 %v2645
      %v2749 = vpop.f32.mrf.mxu0
      %v2750 = vadd.f32 0.0, %v2749
      %v2751 = vpop.f32.mrf.mxu0
      %v2752 = vpop.f32.mrf.mxu0
      %v2753 = vadd.f32 0.0, %v2752
      %v2754 = vpop.f32.mrf.mxu0
      %2755 = vmatprep.mubr.bf16.mxu0 0
      %2756 = vmatmul.mubr.bf16.gmra.mxu0 %v2648
      %v2757 = vpop.f32.mrf.mxu0
      %v2758 = vadd.f32 0.0, %v2757
      %v2759 = vpop.f32.mrf.mxu0
      %v2760 = vpop.f32.mrf.mxu0
      %v2761 = vadd.f32 0.0, %v2760
      %v2762 = vpop.f32.mrf.mxu0
      %2763 = vmatprep.mubr.bf16.mxu0 0
      %2764 = vmatmul.mubr.bf16.gmra.mxu0 %v2651
      %v2765 = vpop.f32.mrf.mxu0
      %v2766 = vadd.f32 0.0, %v2765
      %v2767 = vpop.f32.mrf.mxu0
      %v2768 = vpop.f32.mrf.mxu0
      %v2769 = vadd.f32 0.0, %v2768
      %v2770 = vpop.f32.mrf.mxu0
      %2771 = vmatprep.mubr.bf16.mxu0 0
      %2772 = vmatmul.mubr.bf16.gmra.mxu0 %v2654
      %v2773 = vpop.f32.mrf.mxu0
      %v2774 = vadd.f32 0.0, %v2773
      %v2775 = vpop.f32.mrf.mxu0
      %v2776 = vpop.f32.mrf.mxu0
      %v2777 = vadd.f32 0.0, %v2776
      %v2778 = vpop.f32.mrf.mxu0
      %2779 = vmatprep.mubr.bf16.mxu0 0
      %2780 = vmatmul.mubr.bf16.gmra.mxu0 %v2657
      %v2781 = vpop.f32.mrf.mxu0
      %v2782 = vadd.f32 0.0, %v2781
      %v2783 = vpop.f32.mrf.mxu0
      %v2784 = vpop.f32.mrf.mxu0
      %v2785 = vadd.f32 0.0, %v2784
      %v2786 = vpop.f32.mrf.mxu0
      %2787 = vmatprep.mubr.bf16.mxu0 0
      %2788 = vmatmul.mubr.bf16.gmra.mxu0 %v2660
      %v2789 = vpop.f32.mrf.mxu0
      %v2790 = vadd.f32 0.0, %v2789
      %v2791 = vpop.f32.mrf.mxu0
      %v2792 = vpop.f32.mrf.mxu0
      %v2793 = vadd.f32 0.0, %v2792
      %v2794 = vpop.f32.mrf.mxu0
      %2795 = vmatprep.mubr.bf16.mxu0 0
      %2796 = vmatmul.mubr.bf16.gmra.mxu0 %v2663
      %v2797 = vpop.f32.mrf.mxu0
      %v2798 = vadd.f32 0.0, %v2797
      %v2799 = vpop.f32.mrf.mxu0
      %v2800 = vpop.f32.mrf.mxu0
      %v2801 = vadd.f32 0.0, %v2800
      %v2802 = vpop.f32.mrf.mxu0
      %2803 = vmatprep.mubr.bf16.mxu0 0
      %2804 = vmatmul.mubr.bf16.gmra.mxu0 %v2666
      %v2805 = vpop.f32.mrf.mxu0
      %v2806 = vadd.f32 0.0, %v2805
      %v2807 = vpop.f32.mrf.mxu0
      %v2808 = vpop.f32.mrf.mxu0
      %v2809 = vadd.f32 0.0, %v2808
      %v2810 = vpop.f32.mrf.mxu0
      %2811 = vmatprep.mubr.bf16.mxu0 0
      %2812 = vmatmul.mubr.bf16.gmra.mxu0 %v2669
      %v2813 = vpop.f32.mrf.mxu0
      %v2814 = vadd.f32 0.0, %v2813
      %v2815 = vpop.f32.mrf.mxu0
      %v2816 = vpop.f32.mrf.mxu0
      %v2817 = vadd.f32 0.0, %v2816
      %v2818 = vpop.f32.mrf.mxu0
      %2819 = vmatprep.mubr.bf16.mxu0 0
      %2820 = vmatmul.mubr.bf16.gmra.mxu0 %v2672
      %v2821 = vpop.f32.mrf.mxu0
      %v2822 = vadd.f32 0.0, %v2821
      %v2823 = vpop.f32.mrf.mxu0
      %v2824 = vpop.f32.mrf.mxu0
      %v2825 = vadd.f32 0.0, %v2824
      %v2826 = vpop.f32.mrf.mxu0
      %2827 = vmatprep.mubr.bf16.mxu0 0
      %2828 = vmatmul.mubr.bf16.gmra.mxu0 %v2675
      %v2829 = vpop.f32.mrf.mxu0
      %v2830 = vadd.f32 0.0, %v2829
      %v2831 = vpop.f32.mrf.mxu0
      %v2832 = vpop.f32.mrf.mxu0
      %v2833 = vadd.f32 0.0, %v2832
      %v2834 = vpop.f32.mrf.mxu0
      %2835 = vmatprep.mubr.bf16.mxu0 0
      %2836 = vmatmul.mubr.bf16.gmra.mxu0 %v2678
      %v2837 = vpop.f32.mrf.mxu0
      %v2838 = vadd.f32 0.0, %v2837
      %v2839 = vpop.f32.mrf.mxu0
      %v2840 = vpop.f32.mrf.mxu0
      %v2841 = vadd.f32 0.0, %v2840
      %v2842 = vpop.f32.mrf.mxu0
      %2843 = vdwg.mxu0
      %v2844 = vadd.f32 %v2549, %v2718
      %v2845 = vadd.f32 %v2550, %v2721
      %v2846 = vadd.f32 %v2551, %v2726
      %v2847 = vadd.f32 %v2552, %v2729
      %v2848 = vadd.f32 %v2553, %v2734
      %v2849 = vadd.f32 %v2554, %v2737
      %v2850 = vadd.f32 %v2555, %v2742
      %v2851 = vadd.f32 %v2556, %v2745
      %v2852 = vadd.f32 %v2557, %v2750
      %v2853 = vadd.f32 %v2558, %v2753
      %v2854 = vadd.f32 %v2559, %v2758
      %v2855 = vadd.f32 %v2560, %v2761
      %v2856 = vadd.f32 %v2561, %v2766
      %v2857 = vadd.f32 %v2562, %v2769
      %v2858 = vadd.f32 %v2563, %v2774
      %v2859 = vadd.f32 %v2564, %v2777
      %v2860 = vadd.f32 %v2565, %v2782
      %v2861 = vadd.f32 %v2566, %v2785
      %v2862 = vadd.f32 %v2567, %v2790
      %v2863 = vadd.f32 %v2568, %v2793
      %v2864 = vadd.f32 %v2569, %v2798
      %v2865 = vadd.f32 %v2570, %v2801
      %v2866 = vadd.f32 %v2571, %v2806
      %v2867 = vadd.f32 %v2572, %v2809
      %v2868 = vadd.f32 %v2573, %v2814
      %v2869 = vadd.f32 %v2574, %v2817
      %v2870 = vadd.f32 %v2575, %v2822
      %v2871 = vadd.f32 %v2576, %v2825
      %v2872 = vadd.f32 %v2577, %v2830
      %v2873 = vadd.f32 %v2578, %v2833
      %v2874 = vadd.f32 %v2579, %v2838
      %v2875 = vadd.f32 %v2580, %v2841
      %v2876 = vld [vmem:[%s2581 + $0x1] sm:$0xff]
      %v2877 = vld [vmem:[%s2581 + $0x9] sm:$0xff]
      %v2878 = vld [vmem:[%s2581 + $0x19] sm:$0xff]
      %v2879 = vld [vmem:[%s2581 + $0x21] sm:$0xff]
      %v2880 = vld [vmem:[%s2581 + $0x31] sm:$0xff]
      %v2881 = vld [vmem:[%s2581 + $0x39] sm:$0xff]
      %v2882 = vld [vmem:[%s2581 + $0x49] sm:$0xff]
      %v2883 = vld [vmem:[%s2581 + $0x51] sm:$0xff]
      %v2884 = vld [vmem:[%s2581 + $0x61] sm:$0xff]
      %v2885 = vld [vmem:[%s2581 + $0x69] sm:$0xff]
      %v2886 = vld [vmem:[%s2581 + $0x79] sm:$0xff]
      %v2887 = vld [vmem:[%s2581 + $0x81] sm:$0xff]
      %v2888 = vld [vmem:[%s2581 + $0x91] sm:$0xff]
      %v2889 = vld [vmem:[%s2581 + $0x99] sm:$0xff]
      %v2890 = vld [vmem:[%s2581 + $0xa9] sm:$0xff]
      %v2891 = vld [vmem:[%s2581 + $0xb1] sm:$0xff]
      %v2892 = vld [vmem:[%s2581 + $0xc1] sm:$0xff]
      %v2893 = vld [vmem:[%s2581 + $0xc9] sm:$0xff]
      %v2894 = vld [vmem:[%s2581 + $0xd9] sm:$0xff]
      %v2895 = vld [vmem:[%s2581 + $0xe1] sm:$0xff]
      %v2896 = vld [vmem:[%s2581 + $0xf1] sm:$0xff]
      %v2897 = vld [vmem:[%s2581 + $0xf9] sm:$0xff]
      %v2898 = vld [vmem:[%s2581 + $0x109] sm:$0xff]
      %v2899 = vld [vmem:[%s2581 + $0x111] sm:$0xff]
      %v2900 = vld [vmem:[%s2581 + $0x121] sm:$0xff]
      %v2901 = vld [vmem:[%s2581 + $0x129] sm:$0xff]
      %v2902 = vld [vmem:[%s2581 + $0x139] sm:$0xff]
      %v2903 = vld [vmem:[%s2581 + $0x141] sm:$0xff]
      %v2904 = vld [vmem:[%s2581 + $0x151] sm:$0xff]
      %v2905 = vld [vmem:[%s2581 + $0x159] sm:$0xff]
      %v2906 = vld [vmem:[%s2581 + $0x169] sm:$0xff]
      %v2907 = vld [vmem:[%s2581 + $0x171] sm:$0xff]
      %v2908 = vpack.c.bf16 %v2877, %v2876
      %v2909 = vpack.c.bf16 %v2879, %v2878
      %v2910 = vpack.c.bf16 %v2881, %v2880
      %v2911 = vpack.c.bf16 %v2883, %v2882
      %v2912 = vpack.c.bf16 %v2885, %v2884
      %v2913 = vpack.c.bf16 %v2887, %v2886
      %v2914 = vpack.c.bf16 %v2889, %v2888
      %v2915 = vpack.c.bf16 %v2891, %v2890
      %v2916 = vpack.c.bf16 %v2893, %v2892
      %v2917 = vpack.c.bf16 %v2895, %v2894
      %v2918 = vpack.c.bf16 %v2897, %v2896
      %v2919 = vpack.c.bf16 %v2899, %v2898
      %v2920 = vpack.c.bf16 %v2901, %v2900
      %v2921 = vpack.c.bf16 %v2903, %v2902
      %v2922 = vpack.c.bf16 %v2905, %v2904
      %v2923 = vpack.c.bf16 %v2907, %v2906
      %s2924 = scalar_lea.vmem %s3, 28
      %v2925 = vld [vmem:[%s2924] sm:$0xf]
      %v2927 = vsel %vm720, %v2908, 0
      %v2930 = vsel %vm720, %v2909, 0
      %v2933 = vsel %vm720, %v2910, 0
      %v2936 = vsel %vm720, %v2911, 0
      %v2939 = vsel %vm720, %v2912, 0
      %v2942 = vsel %vm720, %v2913, 0
      %v2945 = vsel %vm720, %v2914, 0
      %v2948 = vsel %vm720, %v2915, 0
      %v2951 = vsel %vm720, %v2916, 0
      %v2954 = vsel %vm720, %v2917, 0
      %v2957 = vsel %vm720, %v2918, 0
      %v2960 = vsel %vm720, %v2919, 0
      %v2963 = vsel %vm720, %v2920, 0
      %v2966 = vsel %vm720, %v2921, 0
      %v2969 = vsel %vm720, %v2922, 0
      %v2972 = vsel %vm720, %v2923, 0
      %v2975 = vsel %vm914, %v2925, 0
      %2977 = vmatprep.subr.bf16.mxu0 0
      %2978 = vmatpush1.bf16.msra.mxu0 0
      %2979 = vmatprep.subr.bf16.mxu0 0
      %2980 = vmatpush1.bf16.msra.mxu0 0
      %2981 = vmatprep.subr.bf16.mxu0 0
      %2982 = vmatpush1.bf16.msra.mxu0 0
      %2983 = vmatprep.subr.bf16.mxu0 0
      %2984 = vmatpush1.bf16.msra.mxu0 0
      %2985 = vmatprep.subr.bf16.mxu0 0
      %2986 = vmatpush1.bf16.msra.mxu0 0
      %2987 = vmatprep.subr.bf16.mxu0 0
      %2988 = vmatpush1.bf16.msra.mxu0 0
      %2989 = vmatprep.subr.bf16.mxu0 0
      %2990 = vmatpush1.bf16.msra.mxu0 0
      %2991 = vmatprep.subr.bf16.mxu0 0
      %2992 = vmatpush1.bf16.msra.mxu0 %v2975
      %2993 = vmatprep.subr.bf16.mxu0 0
      %2994 = vmatpush2.bf16.msra.mxu0 0
      %2995 = vmatprep.subr.bf16.mxu0 0
      %2996 = vmatpush2.bf16.msra.mxu0 0
      %2997 = vmatprep.subr.bf16.mxu0 0
      %2998 = vmatpush2.bf16.msra.mxu0 0
      %2999 = vmatprep.subr.bf16.mxu0 0
      %3000 = vmatpush2.bf16.msra.mxu0 0
      %3001 = vmatprep.subr.bf16.mxu0 0
      %3002 = vmatpush2.bf16.msra.mxu0 0
      %3003 = vmatprep.subr.bf16.mxu0 0
      %3004 = vmatpush2.bf16.msra.mxu0 0
      %3005 = vmatprep.subr.bf16.mxu0 0
      %3006 = vmatpush2.bf16.msra.mxu0 0
      %3007 = vmatprep.subr.bf16.mxu0 0
      %3008 = vmatpush2.bf16.msra.mxu0 0
      %3009 = vmatprep.mubr.bf16.mxu0 0
      %3010 = vmatmul.mubr.bf16.gmra.mxu0 %v2927
      %v3011 = vpop.f32.mrf.mxu0
      %v3012 = vadd.f32 0.0, %v3011
      %v3013 = vpop.f32.mrf.mxu0
      %v3014 = vpop.f32.mrf.mxu0
      %v3015 = vadd.f32 0.0, %v3014
      %v3016 = vpop.f32.mrf.mxu0
      %3017 = vmatprep.mubr.bf16.mxu0 0
      %3018 = vmatmul.mubr.bf16.gmra.mxu0 %v2930
      %v3019 = vpop.f32.mrf.mxu0
      %v3020 = vadd.f32 0.0, %v3019
      %v3021 = vpop.f32.mrf.mxu0
      %v3022 = vpop.f32.mrf.mxu0
      %v3023 = vadd.f32 0.0, %v3022
      %v3024 = vpop.f32.mrf.mxu0
      %3025 = vmatprep.mubr.bf16.mxu0 0
      %3026 = vmatmul.mubr.bf16.gmra.mxu0 %v2933
      %v3027 = vpop.f32.mrf.mxu0
      %v3028 = vadd.f32 0.0, %v3027
      %v3029 = vpop.f32.mrf.mxu0
      %v3030 = vpop.f32.mrf.mxu0
      %v3031 = vadd.f32 0.0, %v3030
      %v3032 = vpop.f32.mrf.mxu0
      %3033 = vmatprep.mubr.bf16.mxu0 0
      %3034 = vmatmul.mubr.bf16.gmra.mxu0 %v2936
      %v3035 = vpop.f32.mrf.mxu0
      %v3036 = vadd.f32 0.0, %v3035
      %v3037 = vpop.f32.mrf.mxu0
      %v3038 = vpop.f32.mrf.mxu0
      %v3039 = vadd.f32 0.0, %v3038
      %v3040 = vpop.f32.mrf.mxu0
      %3041 = vmatprep.mubr.bf16.mxu0 0
      %3042 = vmatmul.mubr.bf16.gmra.mxu0 %v2939
      %v3043 = vpop.f32.mrf.mxu0
      %v3044 = vadd.f32 0.0, %v3043
      %v3045 = vpop.f32.mrf.mxu0
      %v3046 = vpop.f32.mrf.mxu0
      %v3047 = vadd.f32 0.0, %v3046
      %v3048 = vpop.f32.mrf.mxu0
      %3049 = vmatprep.mubr.bf16.mxu0 0
      %3050 = vmatmul.mubr.bf16.gmra.mxu0 %v2942
      %v3051 = vpop.f32.mrf.mxu0
      %v3052 = vadd.f32 0.0, %v3051
      %v3053 = vpop.f32.mrf.mxu0
      %v3054 = vpop.f32.mrf.mxu0
      %v3055 = vadd.f32 0.0, %v3054
      %v3056 = vpop.f32.mrf.mxu0
      %3057 = vmatprep.mubr.bf16.mxu0 0
      %3058 = vmatmul.mubr.bf16.gmra.mxu0 %v2945
      %v3059 = vpop.f32.mrf.mxu0
      %v3060 = vadd.f32 0.0, %v3059
      %v3061 = vpop.f32.mrf.mxu0
      %v3062 = vpop.f32.mrf.mxu0
      %v3063 = vadd.f32 0.0, %v3062
      %v3064 = vpop.f32.mrf.mxu0
      %3065 = vmatprep.mubr.bf16.mxu0 0
      %3066 = vmatmul.mubr.bf16.gmra.mxu0 %v2948
      %v3067 = vpop.f32.mrf.mxu0
      %v3068 = vadd.f32 0.0, %v3067
      %v3069 = vpop.f32.mrf.mxu0
      %v3070 = vpop.f32.mrf.mxu0
      %v3071 = vadd.f32 0.0, %v3070
      %v3072 = vpop.f32.mrf.mxu0
      %3073 = vmatprep.mubr.bf16.mxu0 0
      %3074 = vmatmul.mubr.bf16.gmra.mxu0 %v2951
      %v3075 = vpop.f32.mrf.mxu0
      %v3076 = vadd.f32 0.0, %v3075
      %v3077 = vpop.f32.mrf.mxu0
      %v3078 = vpop.f32.mrf.mxu0
      %v3079 = vadd.f32 0.0, %v3078
      %v3080 = vpop.f32.mrf.mxu0
      %3081 = vmatprep.mubr.bf16.mxu0 0
      %3082 = vmatmul.mubr.bf16.gmra.mxu0 %v2954
      %v3083 = vpop.f32.mrf.mxu0
      %v3084 = vadd.f32 0.0, %v3083
      %v3085 = vpop.f32.mrf.mxu0
      %v3086 = vpop.f32.mrf.mxu0
      %v3087 = vadd.f32 0.0, %v3086
      %v3088 = vpop.f32.mrf.mxu0
      %3089 = vmatprep.mubr.bf16.mxu0 0
      %3090 = vmatmul.mubr.bf16.gmra.mxu0 %v2957
      %v3091 = vpop.f32.mrf.mxu0
      %v3092 = vadd.f32 0.0, %v3091
      %v3093 = vpop.f32.mrf.mxu0
      %v3094 = vpop.f32.mrf.mxu0
      %v3095 = vadd.f32 0.0, %v3094
      %v3096 = vpop.f32.mrf.mxu0
      %3097 = vmatprep.mubr.bf16.mxu0 0
      %3098 = vmatmul.mubr.bf16.gmra.mxu0 %v2960
      %v3099 = vpop.f32.mrf.mxu0
      %v3100 = vadd.f32 0.0, %v3099
      %v3101 = vpop.f32.mrf.mxu0
      %v3102 = vpop.f32.mrf.mxu0
      %v3103 = vadd.f32 0.0, %v3102
      %v3104 = vpop.f32.mrf.mxu0
      %3105 = vmatprep.mubr.bf16.mxu0 0
      %3106 = vmatmul.mubr.bf16.gmra.mxu0 %v2963
      %v3107 = vpop.f32.mrf.mxu0
      %v3108 = vadd.f32 0.0, %v3107
      %v3109 = vpop.f32.mrf.mxu0
      %v3110 = vpop.f32.mrf.mxu0
      %v3111 = vadd.f32 0.0, %v3110
      %v3112 = vpop.f32.mrf.mxu0
      %3113 = vmatprep.mubr.bf16.mxu0 0
      %3114 = vmatmul.mubr.bf16.gmra.mxu0 %v2966
      %v3115 = vpop.f32.mrf.mxu0
      %v3116 = vadd.f32 0.0, %v3115
      %v3117 = vpop.f32.mrf.mxu0
      %v3118 = vpop.f32.mrf.mxu0
      %v3119 = vadd.f32 0.0, %v3118
      %v3120 = vpop.f32.mrf.mxu0
      %3121 = vmatprep.mubr.bf16.mxu0 0
      %3122 = vmatmul.mubr.bf16.gmra.mxu0 %v2969
      %v3123 = vpop.f32.mrf.mxu0
      %v3124 = vadd.f32 0.0, %v3123
      %v3125 = vpop.f32.mrf.mxu0
      %v3126 = vpop.f32.mrf.mxu0
      %v3127 = vadd.f32 0.0, %v3126
      %v3128 = vpop.f32.mrf.mxu0
      %3129 = vmatprep.mubr.bf16.mxu0 0
      %3130 = vmatmul.mubr.bf16.gmra.mxu0 %v2972
      %v3131 = vpop.f32.mrf.mxu0
      %v3132 = vadd.f32 0.0, %v3131
      %v3133 = vpop.f32.mrf.mxu0
      %v3134 = vpop.f32.mrf.mxu0
      %v3135 = vadd.f32 0.0, %v3134
      %v3136 = vpop.f32.mrf.mxu0
      %3137 = vdwg.mxu0
      %v3138 = vadd.f32 %v2844, %v3012
      %v3139 = vadd.f32 %v2845, %v3015
      %v3140 = vadd.f32 %v2846, %v3020
      %v3141 = vadd.f32 %v2847, %v3023
      %v3142 = vadd.f32 %v2848, %v3028
      %v3143 = vadd.f32 %v2849, %v3031
      %v3144 = vadd.f32 %v2850, %v3036
      %v3145 = vadd.f32 %v2851, %v3039
      %v3146 = vadd.f32 %v2852, %v3044
      %v3147 = vadd.f32 %v2853, %v3047
      %v3148 = vadd.f32 %v2854, %v3052
      %v3149 = vadd.f32 %v2855, %v3055
      %v3150 = vadd.f32 %v2856, %v3060
      %v3151 = vadd.f32 %v2857, %v3063
      %v3152 = vadd.f32 %v2858, %v3068
      %v3153 = vadd.f32 %v2859, %v3071
      %v3154 = vadd.f32 %v2860, %v3076
      %v3155 = vadd.f32 %v2861, %v3079
      %v3156 = vadd.f32 %v2862, %v3084
      %v3157 = vadd.f32 %v2863, %v3087
      %v3158 = vadd.f32 %v2864, %v3092
      %v3159 = vadd.f32 %v2865, %v3095
      %v3160 = vadd.f32 %v2866, %v3100
      %v3161 = vadd.f32 %v2867, %v3103
      %v3162 = vadd.f32 %v2868, %v3108
      %v3163 = vadd.f32 %v2869, %v3111
      %v3164 = vadd.f32 %v2870, %v3116
      %v3165 = vadd.f32 %v2871, %v3119
      %v3166 = vadd.f32 %v2872, %v3124
      %v3167 = vadd.f32 %v2873, %v3127
      %v3168 = vadd.f32 %v2874, %v3132
      %v3169 = vadd.f32 %v2875, %v3135
      %v3170 = vld [vmem:[%s2581 + $0x2] sm:$0xff]
      %v3171 = vld [vmem:[%s2581 + $0xa] sm:$0xff]
      %v3172 = vld [vmem:[%s2581 + $0x1a] sm:$0xff]
      %v3173 = vld [vmem:[%s2581 + $0x22] sm:$0xff]
      %v3174 = vld [vmem:[%s2581 + $0x32] sm:$0xff]
      %v3175 = vld [vmem:[%s2581 + $0x3a] sm:$0xff]
      %v3176 = vld [vmem:[%s2581 + $0x4a] sm:$0xff]
      %v3177 = vld [vmem:[%s2581 + $0x52] sm:$0xff]
      %v3178 = vld [vmem:[%s2581 + $0x62] sm:$0xff]
      %v3179 = vld [vmem:[%s2581 + $0x6a] sm:$0xff]
      %v3180 = vld [vmem:[%s2581 + $0x7a] sm:$0xff]
      %v3181 = vld [vmem:[%s2581 + $0x82] sm:$0xff]
      %v3182 = vld [vmem:[%s2581 + $0x92] sm:$0xff]
      %v3183 = vld [vmem:[%s2581 + $0x9a] sm:$0xff]
      %v3184 = vld [vmem:[%s2581 + $0xaa] sm:$0xff]
      %v3185 = vld [vmem:[%s2581 + $0xb2] sm:$0xff]
      %v3186 = vld [vmem:[%s2581 + $0xc2] sm:$0xff]
      %v3187 = vld [vmem:[%s2581 + $0xca] sm:$0xff]
      %v3188 = vld [vmem:[%s2581 + $0xda] sm:$0xff]
      %v3189 = vld [vmem:[%s2581 + $0xe2] sm:$0xff]
      %v3190 = vld [vmem:[%s2581 + $0xf2] sm:$0xff]
      %v3191 = vld [vmem:[%s2581 + $0xfa] sm:$0xff]
      %v3192 = vld [vmem:[%s2581 + $0x10a] sm:$0xff]
      %v3193 = vld [vmem:[%s2581 + $0x112] sm:$0xff]
      %v3194 = vld [vmem:[%s2581 + $0x122] sm:$0xff]
      %v3195 = vld [vmem:[%s2581 + $0x12a] sm:$0xff]
      %v3196 = vld [vmem:[%s2581 + $0x13a] sm:$0xff]
      %v3197 = vld [vmem:[%s2581 + $0x142] sm:$0xff]
      %v3198 = vld [vmem:[%s2581 + $0x152] sm:$0xff]
      %v3199 = vld [vmem:[%s2581 + $0x15a] sm:$0xff]
      %v3200 = vld [vmem:[%s2581 + $0x16a] sm:$0xff]
      %v3201 = vld [vmem:[%s2581 + $0x172] sm:$0xff]
      %v3202 = vpack.c.bf16 %v3171, %v3170
      %v3203 = vpack.c.bf16 %v3173, %v3172
      %v3204 = vpack.c.bf16 %v3175, %v3174
      %v3205 = vpack.c.bf16 %v3177, %v3176
      %v3206 = vpack.c.bf16 %v3179, %v3178
      %v3207 = vpack.c.bf16 %v3181, %v3180
      %v3208 = vpack.c.bf16 %v3183, %v3182
      %v3209 = vpack.c.bf16 %v3185, %v3184
      %v3210 = vpack.c.bf16 %v3187, %v3186
      %v3211 = vpack.c.bf16 %v3189, %v3188
      %v3212 = vpack.c.bf16 %v3191, %v3190
      %v3213 = vpack.c.bf16 %v3193, %v3192
      %v3214 = vpack.c.bf16 %v3195, %v3194
      %v3215 = vpack.c.bf16 %v3197, %v3196
      %v3216 = vpack.c.bf16 %v3199, %v3198
      %v3217 = vpack.c.bf16 %v3201, %v3200
      %s3218 = scalar_lea.vmem %s3, 32
      %v3219 = vld [vmem:[%s3218] sm:$0xf]
      %v3221 = vsel %vm720, %v3202, 0
      %v3224 = vsel %vm720, %v3203, 0
      %v3227 = vsel %vm720, %v3204, 0
      %v3230 = vsel %vm720, %v3205, 0
      %v3233 = vsel %vm720, %v3206, 0
      %v3236 = vsel %vm720, %v3207, 0
      %v3239 = vsel %vm720, %v3208, 0
      %v3242 = vsel %vm720, %v3209, 0
      %v3245 = vsel %vm720, %v3210, 0
      %v3248 = vsel %vm720, %v3211, 0
      %v3251 = vsel %vm720, %v3212, 0
      %v3254 = vsel %vm720, %v3213, 0
      %v3257 = vsel %vm720, %v3214, 0
      %v3260 = vsel %vm720, %v3215, 0
      %v3263 = vsel %vm720, %v3216, 0
      %v3266 = vsel %vm720, %v3217, 0
      %v3269 = vsel %vm914, %v3219, 0
      %3271 = vmatprep.subr.bf16.mxu0 0
      %3272 = vmatpush1.bf16.msra.mxu0 0
      %3273 = vmatprep.subr.bf16.mxu0 0
      %3274 = vmatpush1.bf16.msra.mxu0 0
      %3275 = vmatprep.subr.bf16.mxu0 0
      %3276 = vmatpush1.bf16.msra.mxu0 0
      %3277 = vmatprep.subr.bf16.mxu0 0
      %3278 = vmatpush1.bf16.msra.mxu0 0
      %3279 = vmatprep.subr.bf16.mxu0 0
      %3280 = vmatpush1.bf16.msra.mxu0 0
      %3281 = vmatprep.subr.bf16.mxu0 0
      %3282 = vmatpush1.bf16.msra.mxu0 0
      %3283 = vmatprep.subr.bf16.mxu0 0
      %3284 = vmatpush1.bf16.msra.mxu0 0
      %3285 = vmatprep.subr.bf16.mxu0 0
      %3286 = vmatpush1.bf16.msra.mxu0 %v3269
      %3287 = vmatprep.subr.bf16.mxu0 0
      %3288 = vmatpush2.bf16.msra.mxu0 0
      %3289 = vmatprep.subr.bf16.mxu0 0
      %3290 = vmatpush2.bf16.msra.mxu0 0
      %3291 = vmatprep.subr.bf16.mxu0 0
      %3292 = vmatpush2.bf16.msra.mxu0 0
      %3293 = vmatprep.subr.bf16.mxu0 0
      %3294 = vmatpush2.bf16.msra.mxu0 0
      %3295 = vmatprep.subr.bf16.mxu0 0
      %3296 = vmatpush2.bf16.msra.mxu0 0
      %3297 = vmatprep.subr.bf16.mxu0 0
      %3298 = vmatpush2.bf16.msra.mxu0 0
      %3299 = vmatprep.subr.bf16.mxu0 0
      %3300 = vmatpush2.bf16.msra.mxu0 0
      %3301 = vmatprep.subr.bf16.mxu0 0
      %3302 = vmatpush2.bf16.msra.mxu0 0
      %3303 = vmatprep.mubr.bf16.mxu0 0
      %3304 = vmatmul.mubr.bf16.gmra.mxu0 %v3221
      %v3305 = vpop.f32.mrf.mxu0
      %v3306 = vadd.f32 0.0, %v3305
      %v3307 = vpop.f32.mrf.mxu0
      %v3308 = vpop.f32.mrf.mxu0
      %v3309 = vadd.f32 0.0, %v3308
      %v3310 = vpop.f32.mrf.mxu0
      %3311 = vmatprep.mubr.bf16.mxu0 0
      %3312 = vmatmul.mubr.bf16.gmra.mxu0 %v3224
      %v3313 = vpop.f32.mrf.mxu0
      %v3314 = vadd.f32 0.0, %v3313
      %v3315 = vpop.f32.mrf.mxu0
      %v3316 = vpop.f32.mrf.mxu0
      %v3317 = vadd.f32 0.0, %v3316
      %v3318 = vpop.f32.mrf.mxu0
      %3319 = vmatprep.mubr.bf16.mxu0 0
      %3320 = vmatmul.mubr.bf16.gmra.mxu0 %v3227
      %v3321 = vpop.f32.mrf.mxu0
      %v3322 = vadd.f32 0.0, %v3321
      %v3323 = vpop.f32.mrf.mxu0
      %v3324 = vpop.f32.mrf.mxu0
      %v3325 = vadd.f32 0.0, %v3324
      %v3326 = vpop.f32.mrf.mxu0
      %3327 = vmatprep.mubr.bf16.mxu0 0
      %3328 = vmatmul.mubr.bf16.gmra.mxu0 %v3230
      %v3329 = vpop.f32.mrf.mxu0
      %v3330 = vadd.f32 0.0, %v3329
      %v3331 = vpop.f32.mrf.mxu0
      %v3332 = vpop.f32.mrf.mxu0
      %v3333 = vadd.f32 0.0, %v3332
      %v3334 = vpop.f32.mrf.mxu0
      %3335 = vmatprep.mubr.bf16.mxu0 0
      %3336 = vmatmul.mubr.bf16.gmra.mxu0 %v3233
      %v3337 = vpop.f32.mrf.mxu0
      %v3338 = vadd.f32 0.0, %v3337
      %v3339 = vpop.f32.mrf.mxu0
      %v3340 = vpop.f32.mrf.mxu0
      %v3341 = vadd.f32 0.0, %v3340
      %v3342 = vpop.f32.mrf.mxu0
      %3343 = vmatprep.mubr.bf16.mxu0 0
      %3344 = vmatmul.mubr.bf16.gmra.mxu0 %v3236
      %v3345 = vpop.f32.mrf.mxu0
      %v3346 = vadd.f32 0.0, %v3345
      %v3347 = vpop.f32.mrf.mxu0
      %v3348 = vpop.f32.mrf.mxu0
      %v3349 = vadd.f32 0.0, %v3348
      %v3350 = vpop.f32.mrf.mxu0
      %3351 = vmatprep.mubr.bf16.mxu0 0
      %3352 = vmatmul.mubr.bf16.gmra.mxu0 %v3239
      %v3353 = vpop.f32.mrf.mxu0
      %v3354 = vadd.f32 0.0, %v3353
      %v3355 = vpop.f32.mrf.mxu0
      %v3356 = vpop.f32.mrf.mxu0
      %v3357 = vadd.f32 0.0, %v3356
      %v3358 = vpop.f32.mrf.mxu0
      %3359 = vmatprep.mubr.bf16.mxu0 0
      %3360 = vmatmul.mubr.bf16.gmra.mxu0 %v3242
      %v3361 = vpop.f32.mrf.mxu0
      %v3362 = vadd.f32 0.0, %v3361
      %v3363 = vpop.f32.mrf.mxu0
      %v3364 = vpop.f32.mrf.mxu0
      %v3365 = vadd.f32 0.0, %v3364
      %v3366 = vpop.f32.mrf.mxu0
      %3367 = vmatprep.mubr.bf16.mxu0 0
      %3368 = vmatmul.mubr.bf16.gmra.mxu0 %v3245
      %v3369 = vpop.f32.mrf.mxu0
      %v3370 = vadd.f32 0.0, %v3369
      %v3371 = vpop.f32.mrf.mxu0
      %v3372 = vpop.f32.mrf.mxu0
      %v3373 = vadd.f32 0.0, %v3372
      %v3374 = vpop.f32.mrf.mxu0
      %3375 = vmatprep.mubr.bf16.mxu0 0
      %3376 = vmatmul.mubr.bf16.gmra.mxu0 %v3248
      %v3377 = vpop.f32.mrf.mxu0
      %v3378 = vadd.f32 0.0, %v3377
      %v3379 = vpop.f32.mrf.mxu0
      %v3380 = vpop.f32.mrf.mxu0
      %v3381 = vadd.f32 0.0, %v3380
      %v3382 = vpop.f32.mrf.mxu0
      %3383 = vmatprep.mubr.bf16.mxu0 0
      %3384 = vmatmul.mubr.bf16.gmra.mxu0 %v3251
      %v3385 = vpop.f32.mrf.mxu0
      %v3386 = vadd.f32 0.0, %v3385
      %v3387 = vpop.f32.mrf.mxu0
      %v3388 = vpop.f32.mrf.mxu0
      %v3389 = vadd.f32 0.0, %v3388
      %v3390 = vpop.f32.mrf.mxu0
      %3391 = vmatprep.mubr.bf16.mxu0 0
      %3392 = vmatmul.mubr.bf16.gmra.mxu0 %v3254
      %v3393 = vpop.f32.mrf.mxu0
      %v3394 = vadd.f32 0.0, %v3393
      %v3395 = vpop.f32.mrf.mxu0
      %v3396 = vpop.f32.mrf.mxu0
      %v3397 = vadd.f32 0.0, %v3396
      %v3398 = vpop.f32.mrf.mxu0
      %3399 = vmatprep.mubr.bf16.mxu0 0
      %3400 = vmatmul.mubr.bf16.gmra.mxu0 %v3257
      %v3401 = vpop.f32.mrf.mxu0
      %v3402 = vadd.f32 0.0, %v3401
      %v3403 = vpop.f32.mrf.mxu0
      %v3404 = vpop.f32.mrf.mxu0
      %v3405 = vadd.f32 0.0, %v3404
      %v3406 = vpop.f32.mrf.mxu0
      %3407 = vmatprep.mubr.bf16.mxu0 0
      %3408 = vmatmul.mubr.bf16.gmra.mxu0 %v3260
      %v3409 = vpop.f32.mrf.mxu0
      %v3410 = vadd.f32 0.0, %v3409
      %v3411 = vpop.f32.mrf.mxu0
      %v3412 = vpop.f32.mrf.mxu0
      %v3413 = vadd.f32 0.0, %v3412
      %v3414 = vpop.f32.mrf.mxu0
      %3415 = vmatprep.mubr.bf16.mxu0 0
      %3416 = vmatmul.mubr.bf16.gmra.mxu0 %v3263
      %v3417 = vpop.f32.mrf.mxu0
      %v3418 = vadd.f32 0.0, %v3417
      %v3419 = vpop.f32.mrf.mxu0
      %v3420 = vpop.f32.mrf.mxu0
      %v3421 = vadd.f32 0.0, %v3420
      %v3422 = vpop.f32.mrf.mxu0
      %3423 = vmatprep.mubr.bf16.mxu0 0
      %3424 = vmatmul.mubr.bf16.gmra.mxu0 %v3266
      %v3425 = vpop.f32.mrf.mxu0
      %v3426 = vadd.f32 0.0, %v3425
      %v3427 = vpop.f32.mrf.mxu0
      %v3428 = vpop.f32.mrf.mxu0
      %v3429 = vadd.f32 0.0, %v3428
      %v3430 = vpop.f32.mrf.mxu0
      %3431 = vdwg.mxu0
      %v3432 = vadd.f32 %v3138, %v3306
      %v3433 = vadd.f32 %v3139, %v3309
      %v3434 = vadd.f32 %v3140, %v3314
      %v3435 = vadd.f32 %v3141, %v3317
      %v3436 = vadd.f32 %v3142, %v3322
      %v3437 = vadd.f32 %v3143, %v3325
      %v3438 = vadd.f32 %v3144, %v3330
      %v3439 = vadd.f32 %v3145, %v3333
      %v3440 = vadd.f32 %v3146, %v3338
      %v3441 = vadd.f32 %v3147, %v3341
      %v3442 = vadd.f32 %v3148, %v3346
      %v3443 = vadd.f32 %v3149, %v3349
      %v3444 = vadd.f32 %v3150, %v3354
      %v3445 = vadd.f32 %v3151, %v3357
      %v3446 = vadd.f32 %v3152, %v3362
      %v3447 = vadd.f32 %v3153, %v3365
      %v3448 = vadd.f32 %v3154, %v3370
      %v3449 = vadd.f32 %v3155, %v3373
      %v3450 = vadd.f32 %v3156, %v3378
      %v3451 = vadd.f32 %v3157, %v3381
      %v3452 = vadd.f32 %v3158, %v3386
      %v3453 = vadd.f32 %v3159, %v3389
      %v3454 = vadd.f32 %v3160, %v3394
      %v3455 = vadd.f32 %v3161, %v3397
      %v3456 = vadd.f32 %v3162, %v3402
      %v3457 = vadd.f32 %v3163, %v3405
      %v3458 = vadd.f32 %v3164, %v3410
      %v3459 = vadd.f32 %v3165, %v3413
      %v3460 = vadd.f32 %v3166, %v3418
      %v3461 = vadd.f32 %v3167, %v3421
      %v3462 = vadd.f32 %v3168, %v3426
      %v3463 = vadd.f32 %v3169, %v3429
      %v3464 = vxor.u32 %v3432, 2147483648
      %v3465 = vxor.u32 %v3433, 2147483648
      %v3466 = vxor.u32 %v3434, 2147483648
      %v3467 = vxor.u32 %v3435, 2147483648
      %v3468 = vxor.u32 %v3436, 2147483648
      %v3469 = vxor.u32 %v3437, 2147483648
      %v3470 = vxor.u32 %v3438, 2147483648
      %v3471 = vxor.u32 %v3439, 2147483648
      %v3472 = vxor.u32 %v3440, 2147483648
      %v3473 = vxor.u32 %v3441, 2147483648
      %v3474 = vxor.u32 %v3442, 2147483648
      %v3475 = vxor.u32 %v3443, 2147483648
      %v3476 = vxor.u32 %v3444, 2147483648
      %v3477 = vxor.u32 %v3445, 2147483648
      %v3478 = vxor.u32 %v3446, 2147483648
      %v3479 = vxor.u32 %v3447, 2147483648
      %v3480 = vxor.u32 %v3448, 2147483648
      %v3481 = vxor.u32 %v3449, 2147483648
      %v3482 = vxor.u32 %v3450, 2147483648
      %v3483 = vxor.u32 %v3451, 2147483648
      %v3484 = vxor.u32 %v3452, 2147483648
      %v3485 = vxor.u32 %v3453, 2147483648
      %v3486 = vxor.u32 %v3454, 2147483648
      %v3487 = vxor.u32 %v3455, 2147483648
      %v3488 = vxor.u32 %v3456, 2147483648
      %v3489 = vxor.u32 %v3457, 2147483648
      %v3490 = vxor.u32 %v3458, 2147483648
      %v3491 = vxor.u32 %v3459, 2147483648
      %v3492 = vxor.u32 %v3460, 2147483648
      %v3493 = vxor.u32 %v3461, 2147483648
      %v3494 = vxor.u32 %v3462, 2147483648
      %v3495 = vxor.u32 %v3463, 2147483648
      %v3496 = vmul.f32 %v3464, 1.442695
      %v3497 = vpow.pop %v3496
      %v3498 = vmul.f32 %v3465, 1.442695
      %v3499 = vpow.pop %v3498
      %v3500 = vmul.f32 %v3466, 1.442695
      %v3501 = vpow.pop %v3500
      %v3502 = vmul.f32 %v3467, 1.442695
      %v3503 = vpow.pop %v3502
      %v3504 = vmul.f32 %v3468, 1.442695
      %v3505 = vpow.pop %v3504
      %v3506 = vmul.f32 %v3469, 1.442695
      %v3507 = vpow.pop %v3506
      %v3508 = vmul.f32 %v3470, 1.442695
      %v3509 = vpow.pop %v3508
      %v3510 = vmul.f32 %v3471, 1.442695
      %v3511 = vpow.pop %v3510
      %v3512 = vmul.f32 %v3472, 1.442695
      %v3513 = vpow.pop %v3512
      %v3514 = vmul.f32 %v3473, 1.442695
      %v3515 = vpow.pop %v3514
      %v3516 = vmul.f32 %v3474, 1.442695
      %v3517 = vpow.pop %v3516
      %v3518 = vmul.f32 %v3475, 1.442695
      %v3519 = vpow.pop %v3518
      %v3520 = vmul.f32 %v3476, 1.442695
      %v3521 = vpow.pop %v3520
      %v3522 = vmul.f32 %v3477, 1.442695
      %v3523 = vpow.pop %v3522
      %v3524 = vmul.f32 %v3478, 1.442695
      %v3525 = vpow.pop %v3524
      %v3526 = vmul.f32 %v3479, 1.442695
      %v3527 = vpow.pop %v3526
      %v3528 = vmul.f32 %v3480, 1.442695
      %v3529 = vpow.pop %v3528
      %v3530 = vmul.f32 %v3481, 1.442695
      %v3531 = vpow.pop %v3530
      %v3532 = vmul.f32 %v3482, 1.442695
      %v3533 = vpow.pop %v3532
      %v3534 = vmul.f32 %v3483, 1.442695
      %v3535 = vpow.pop %v3534
      %v3536 = vmul.f32 %v3484, 1.442695
      %v3537 = vpow.pop %v3536
      %v3538 = vmul.f32 %v3485, 1.442695
      %v3539 = vpow.pop %v3538
      %v3540 = vmul.f32 %v3486, 1.442695
      %v3541 = vpow.pop %v3540
      %v3542 = vmul.f32 %v3487, 1.442695
      %v3543 = vpow.pop %v3542
      %v3544 = vmul.f32 %v3488, 1.442695
      %v3545 = vpow.pop %v3544
      %v3546 = vmul.f32 %v3489, 1.442695
      %v3547 = vpow.pop %v3546
      %v3548 = vmul.f32 %v3490, 1.442695
      %v3549 = vpow.pop %v3548
      %v3550 = vmul.f32 %v3491, 1.442695
      %v3551 = vpow.pop %v3550
      %v3552 = vmul.f32 %v3492, 1.442695
      %v3553 = vpow.pop %v3552
      %v3554 = vmul.f32 %v3493, 1.442695
      %v3555 = vpow.pop %v3554
      %v3556 = vmul.f32 %v3494, 1.442695
      %v3557 = vpow.pop %v3556
      %v3558 = vmul.f32 %v3495, 1.442695
      %v3559 = vpow.pop %v3558
      %v3560 = vadd.f32 %v3497, 1.0
      %v3561 = vadd.f32 %v3499, 1.0
      %v3562 = vadd.f32 %v3501, 1.0
      %v3563 = vadd.f32 %v3503, 1.0
      %v3564 = vadd.f32 %v3505, 1.0
      %v3565 = vadd.f32 %v3507, 1.0
      %v3566 = vadd.f32 %v3509, 1.0
      %v3567 = vadd.f32 %v3511, 1.0
      %v3568 = vadd.f32 %v3513, 1.0
      %v3569 = vadd.f32 %v3515, 1.0
      %v3570 = vadd.f32 %v3517, 1.0
      %v3571 = vadd.f32 %v3519, 1.0
      %v3572 = vadd.f32 %v3521, 1.0
      %v3573 = vadd.f32 %v3523, 1.0
      %v3574 = vadd.f32 %v3525, 1.0
      %v3575 = vadd.f32 %v3527, 1.0
      %v3576 = vadd.f32 %v3529, 1.0
      %v3577 = vadd.f32 %v3531, 1.0
      %v3578 = vadd.f32 %v3533, 1.0
      %v3579 = vadd.f32 %v3535, 1.0
      %v3580 = vadd.f32 %v3537, 1.0
      %v3581 = vadd.f32 %v3539, 1.0
      %v3582 = vadd.f32 %v3541, 1.0
      %v3583 = vadd.f32 %v3543, 1.0
      %v3584 = vadd.f32 %v3545, 1.0
      %v3585 = vadd.f32 %v3547, 1.0
      %v3586 = vadd.f32 %v3549, 1.0
      %v3587 = vadd.f32 %v3551, 1.0
      %v3588 = vadd.f32 %v3553, 1.0
      %v3589 = vadd.f32 %v3555, 1.0
      %v3590 = vadd.f32 %v3557, 1.0
      %v3591 = vadd.f32 %v3559, 1.0
      %v3592 = vrcp.pop %v3560
      %v3593 = vmul.f32 1.0, %v3592
      %v3594 = vrcp.pop %v3561
      %v3595 = vmul.f32 1.0, %v3594
      %v3596 = vrcp.pop %v3562
      %v3597 = vmul.f32 1.0, %v3596
      %v3598 = vrcp.pop %v3563
      %v3599 = vmul.f32 1.0, %v3598
      %v3600 = vrcp.pop %v3564
      %v3601 = vmul.f32 1.0, %v3600
      %v3602 = vrcp.pop %v3565
      %v3603 = vmul.f32 1.0, %v3602
      %v3604 = vrcp.pop %v3566
      %v3605 = vmul.f32 1.0, %v3604
      %v3606 = vrcp.pop %v3567
      %v3607 = vmul.f32 1.0, %v3606
      %v3608 = vrcp.pop %v3568
      %v3609 = vmul.f32 1.0, %v3608
      %v3610 = vrcp.pop %v3569
      %v3611 = vmul.f32 1.0, %v3610
      %v3612 = vrcp.pop %v3570
      %v3613 = vmul.f32 1.0, %v3612
      %v3614 = vrcp.pop %v3571
      %v3615 = vmul.f32 1.0, %v3614
      %v3616 = vrcp.pop %v3572
      %v3617 = vmul.f32 1.0, %v3616
      %v3618 = vrcp.pop %v3573
      %v3619 = vmul.f32 1.0, %v3618
      %v3620 = vrcp.pop %v3574
      %v3621 = vmul.f32 1.0, %v3620
      %v3622 = vrcp.pop %v3575
      %v3623 = vmul.f32 1.0, %v3622
      %v3624 = vrcp.pop %v3576
      %v3625 = vmul.f32 1.0, %v3624
      %v3626 = vrcp.pop %v3577
      %v3627 = vmul.f32 1.0, %v3626
      %v3628 = vrcp.pop %v3578
      %v3629 = vmul.f32 1.0, %v3628
      %v3630 = vrcp.pop %v3579
      %v3631 = vmul.f32 1.0, %v3630
      %v3632 = vrcp.pop %v3580
      %v3633 = vmul.f32 1.0, %v3632
      %v3634 = vrcp.pop %v3581
      %v3635 = vmul.f32 1.0, %v3634
      %v3636 = vrcp.pop %v3582
      %v3637 = vmul.f32 1.0, %v3636
      %v3638 = vrcp.pop %v3583
      %v3639 = vmul.f32 1.0, %v3638
      %v3640 = vrcp.pop %v3584
      %v3641 = vmul.f32 1.0, %v3640
      %v3642 = vrcp.pop %v3585
      %v3643 = vmul.f32 1.0, %v3642
      %v3644 = vrcp.pop %v3586
      %v3645 = vmul.f32 1.0, %v3644
      %v3646 = vrcp.pop %v3587
      %v3647 = vmul.f32 1.0, %v3646
      %v3648 = vrcp.pop %v3588
      %v3649 = vmul.f32 1.0, %v3648
      %v3650 = vrcp.pop %v3589
      %v3651 = vmul.f32 1.0, %v3650
      %v3652 = vrcp.pop %v3590
      %v3653 = vmul.f32 1.0, %v3652
      %v3654 = vrcp.pop %v3591
      %v3655 = vmul.f32 1.0, %v3654
      %v3656 = vmul.f32 %v3432, %v3593
      %v3657 = vmul.f32 %v3433, %v3595
      %v3658 = vmul.f32 %v3434, %v3597
      %v3659 = vmul.f32 %v3435, %v3599
      %v3660 = vmul.f32 %v3436, %v3601
      %v3661 = vmul.f32 %v3437, %v3603
      %v3662 = vmul.f32 %v3438, %v3605
      %v3663 = vmul.f32 %v3439, %v3607
      %v3664 = vmul.f32 %v3440, %v3609
      %v3665 = vmul.f32 %v3441, %v3611
      %v3666 = vmul.f32 %v3442, %v3613
      %v3667 = vmul.f32 %v3443, %v3615
      %v3668 = vmul.f32 %v3444, %v3617
      %v3669 = vmul.f32 %v3445, %v3619
      %v3670 = vmul.f32 %v3446, %v3621
      %v3671 = vmul.f32 %v3447, %v3623
      %v3672 = vmul.f32 %v3448, %v3625
      %v3673 = vmul.f32 %v3449, %v3627
      %v3674 = vmul.f32 %v3450, %v3629
      %v3675 = vmul.f32 %v3451, %v3631
      %v3676 = vmul.f32 %v3452, %v3633
      %v3677 = vmul.f32 %v3453, %v3635
      %v3678 = vmul.f32 %v3454, %v3637
      %v3679 = vmul.f32 %v3455, %v3639
      %v3680 = vmul.f32 %v3456, %v3641
      %v3681 = vmul.f32 %v3457, %v3643
      %v3682 = vmul.f32 %v3458, %v3645
      %v3683 = vmul.f32 %v3459, %v3647
      %v3684 = vmul.f32 %v3460, %v3649
      %v3685 = vmul.f32 %v3461, %v3651
      %v3686 = vmul.f32 %v3462, %v3653
      %v3687 = vmul.f32 %v3463, %v3655
      %3688 = vst.msk [vmem:[%s224] sm:$0xff] %vm720, %v3656
      %3689 = vst.msk [vmem:[%s224 + $0x8] sm:$0xff] %vm720, %v3657
      %3690 = vst.msk [vmem:[%s224 + $0x10] sm:$0xff] %vm720, %v3658
      %3691 = vst.msk [vmem:[%s224 + $0x18] sm:$0xff] %vm720, %v3659
      %3692 = vst.msk [vmem:[%s224 + $0x20] sm:$0xff] %vm720, %v3660
      %3693 = vst.msk [vmem:[%s224 + $0x28] sm:$0xff] %vm720, %v3661
      %3694 = vst.msk [vmem:[%s224 + $0x30] sm:$0xff] %vm720, %v3662
      %3695 = vst.msk [vmem:[%s224 + $0x38] sm:$0xff] %vm720, %v3663
      %3696 = vst.msk [vmem:[%s224 + $0x40] sm:$0xff] %vm720, %v3664
      %3697 = vst.msk [vmem:[%s224 + $0x48] sm:$0xff] %vm720, %v3665
      %3698 = vst.msk [vmem:[%s224 + $0x50] sm:$0xff] %vm720, %v3666
      %3699 = vst.msk [vmem:[%s224 + $0x58] sm:$0xff] %vm720, %v3667
      %3700 = vst.msk [vmem:[%s224 + $0x60] sm:$0xff] %vm720, %v3668
      %3701 = vst.msk [vmem:[%s224 + $0x68] sm:$0xff] %vm720, %v3669
      %3702 = vst.msk [vmem:[%s224 + $0x70] sm:$0xff] %vm720, %v3670
      %3703 = vst.msk [vmem:[%s224 + $0x78] sm:$0xff] %vm720, %v3671
      %3704 = vst.msk [vmem:[%s224 + $0x80] sm:$0xff] %vm720, %v3672
      %3705 = vst.msk [vmem:[%s224 + $0x88] sm:$0xff] %vm720, %v3673
      %3706 = vst.msk [vmem:[%s224 + $0x90] sm:$0xff] %vm720, %v3674
      %3707 = vst.msk [vmem:[%s224 + $0x98] sm:$0xff] %vm720, %v3675
      %3708 = vst.msk [vmem:[%s224 + $0xa0] sm:$0xff] %vm720, %v3676
      %3709 = vst.msk [vmem:[%s224 + $0xa8] sm:$0xff] %vm720, %v3677
      %3710 = vst.msk [vmem:[%s224 + $0xb0] sm:$0xff] %vm720, %v3678
      %3711 = vst.msk [vmem:[%s224 + $0xb8] sm:$0xff] %vm720, %v3679
      %3712 = vst.msk [vmem:[%s224 + $0xc0] sm:$0xff] %vm720, %v3680
      %3713 = vst.msk [vmem:[%s224 + $0xc8] sm:$0xff] %vm720, %v3681
      %3714 = vst.msk [vmem:[%s224 + $0xd0] sm:$0xff] %vm720, %v3682
      %3715 = vst.msk [vmem:[%s224 + $0xd8] sm:$0xff] %vm720, %v3683
      %3716 = vst.msk [vmem:[%s224 + $0xe0] sm:$0xff] %vm720, %v3684
      %3717 = vst.msk [vmem:[%s224 + $0xe8] sm:$0xff] %vm720, %v3685
      %3718 = vst.msk [vmem:[%s224 + $0xf0] sm:$0xff] %vm720, %v3686
      %3719 = vst.msk [vmem:[%s224 + $0xf8] sm:$0xff] %vm720, %v3687
      %p3720 = scmp.lt.s32.totalorder %s16, 1
      %s3721 = scalar_select %p3720, %s16, 1
      %s3722 = smul.addr %s3721, 32
      %s3723 = smul.addr %s3722, 8
      %s3724 = scalar_lea.vmem %s5, %s3723
      // Predicated region
      $region41: #{resnet_block_forward.3} parent=39 // pred_check
        %p3725 = pneg %p144
      $region42: #{resnet_block_forward.3} parent=39 // pred_check_branch
        %3727 = sbr.rel (%p3725) target = $region44
      $region43: #{resnet_block_forward.3} parent=39 // pred_region
        _
      $region44: #{resnet_block_forward.3} parent=39 // pred_fallthru
        _
    $region40: #{resnet_block_forward.3} parent=5 // pred_fallthru
      _
    %p3728 = scmp.le.s32.totalorder 2, %s11
    // Predicated region
    $region45: #{resnet_block_forward.3} parent=5 // pred_check
      %p3729 = pneg %p3728
    $region46: #{resnet_block_forward.3} parent=5 // pred_check_branch
      %3731 = sbr.rel (%p3729) target = $region48
    $region47: #{resnet_block_forward.3} parent=5 // pred_region
      %s3732 = ssub.s32 %s11, 2
      // Predicated region
      $region49: #{resnet_block_forward.3} parent=47 // pred_check
        %p3733 = pneg %p150
      $region50: #{resnet_block_forward.3} parent=47 // pred_check_branch
        %3735 = sbr.rel (%p3733) target = $region52
      $region51: #{resnet_block_forward.3} parent=47 // pred_region
        %p3736 = scmp.lt.s32.totalorder %s17, 1
        %s3737 = scalar_select %p3736, %s17, 1
        %s3738 = smul.addr %s3737, 32
        %s3739 = smul.addr %s3738, 8
        %s3740 = scalar_lea.vmem %s5, %s3739
      $region52: #{resnet_block_forward.3} parent=47 // pred_fallthru
        _
    $region48: #{resnet_block_forward.3} parent=5 // pred_fallthru
      _
  $region6: #{resnet_block_forward.3} parent=0 // loop_footer
    %s15 = sadd.s32 1, %s11
  $region7: #{resnet_block_forward.3} parent=0 // loop_footer_branch
    %10 = sbr.rel target = $region3
  $region8: #{resnet_block_forward.3} parent=0 // loop_exit
    _

</llo_original>
